<compile_context>
chip_gen: v5e
topology: v5e:2x2
jax: 0.10.0
libtpu: 0.0.40
codegen_flags: <defaults>
</compile_context>

<pallas_src>
import functools

import jax
import jax.numpy as jnp
from jax import lax
from jax.experimental import pallas as pl
from jax.experimental.pallas import tpu as pltpu

EPS = 1e-5  # torch.nn.LayerNorm default eps


def _layernorm(x, gamma, beta):
    mean = jnp.mean(x, axis=-1, keepdims=True)
    var = jnp.mean(jnp.square(x - mean), axis=-1, keepdims=True)
    return (x - mean) * lax.rsqrt(var + EPS) * gamma + beta


def _deep_transition_kernel(
    n_transitions, t_blk, b, h,
    # ---- inputs ----
    x_ref,                         # (T_BLK*B, Din) block of timesteps
    wx_ref,                        # (Din, 5H)  fused [Wr_x | Wz_x | Wl_x | Cx | Wlt]
    wh_ref,                        # (H, 4H)    fused [Wr_h | Wz_h | Wl_h | Ch_w]
    ln_g_ref, ln_b_ref,            # (1, 3H)    fused LayerNorm gamma/beta for r,z,l
    chb_ref,                       # (1, H)     Ch (nn.Linear) bias
    tw_ref,                        # (L, H, 3H) fused TransitionGRU [Wr | Wz | Wc]
    tg_ref, tb_ref,                # (L, 1, 2H) fused LayerNorm gamma/beta for r,z
    tcb_ref,                       # (L, 1, H)  candidate_gate bias
    # ---- output ----
    out_ref,                       # (T_BLK*B, H)
    # ---- scratch ----
    h_scr,                         # (B, H) f32, carries h_t across grid steps
):
    @pl.when(pl.program_id(0) == 0)
    def _():
        h_scr[...] = jnp.zeros_like(h_scr)

    cdt = wx_ref.dtype  # matmul operand dtype (f32 or bf16); accumulation is f32.

    # Hoist weight loads out of the per-timestep loop (loaded once per grid step).
    wx = wx_ref[...]
    wh = wh_ref[...]
    ln_g = ln_g_ref[...].astype(jnp.float32)
    ln_b = ln_b_ref[...].astype(jnp.float32)
    ch_b = chb_ref[...].astype(jnp.float32)
    tw = tw_ref[...]
    tg = tg_ref[...].astype(jnp.float32)
    tb = tb_ref[...].astype(jnp.float32)
    tcb = tcb_ref[...].astype(jnp.float32)

    def step(t, ht):
        row = pl.multiple_of(t * b, b)
        x = x_ref[pl.ds(row, b), :].astype(cdt)

        # ---- LinearEnchancedGRU: two fused lane-dense matmuls per timestep ----
        gx = jnp.dot(x, wx, preferred_element_type=jnp.float32)               # (B, 5H)
        gh = jnp.dot(ht.astype(cdt), wh, preferred_element_type=jnp.float32)  # (B, 4H)

        r = jax.nn.sigmoid(_layernorm(gx[:, 0:h] + gh[:, 0:h],
                                      ln_g[:, 0:h], ln_b[:, 0:h]))
        z = jax.nn.sigmoid(_layernorm(gx[:, h:2 * h] + gh[:, h:2 * h],
                                      ln_g[:, h:2 * h], ln_b[:, h:2 * h]))
        l = jax.nn.sigmoid(_layernorm(gx[:, 2 * h:3 * h] + gh[:, 2 * h:3 * h],
                                      ln_g[:, 2 * h:3 * h], ln_b[:, 2 * h:3 * h]))
        n = gx[:, 3 * h:4 * h] + r * (gh[:, 3 * h:4 * h] + ch_b)
        n = jnp.tanh(n) + l * gx[:, 4 * h:5 * h]
        # TODO(synk): candidate_drop (nn.Dropout p=0.3) is identity in eval mode; not applied.
        ht = (1.0 - z) * ht + z * n

        # ---- TransitionGRU stack: one fused (H, 3H) matmul per layer ----
        for i in range(n_transitions):  # static transitionNumber (small); use fori_loop at large L
            g3 = jnp.dot(ht.astype(cdt), tw[i], preferred_element_type=jnp.float32)  # (B, 3H)
            rr = jax.nn.sigmoid(_layernorm(g3[:, 0:h], tg[i][:, 0:h], tb[i][:, 0:h]))
            zz = jax.nn.sigmoid(_layernorm(g3[:, h:2 * h], tg[i][:, h:2 * h], tb[i][:, h:2 * h]))
            nn_ = jnp.tanh(rr * (g3[:, 2 * h:3 * h] + tcb[i]))
            ht = (1.0 - zz) * nn_ + zz * ht  # note: (1-z)*n + z*h, as in the PyTorch code

        out_ref[pl.ds(row, b), :] = ht.astype(out_ref.dtype)
        return ht

    h_final = lax.fori_loop(0, t_blk, step, h_scr[...], unroll=True)
    h_scr[...] = h_final


def pack_params(p, compute_dtype=jnp.float32):
    """Fuse per-gate weights into lane-dense wide GEMM weights."""
    wx = jnp.concatenate([p["wr_x"], p["wz_x"], p["wl_x"], p["cx"], p["wlt"]], axis=1)  # (Din, 5H)
    wh = jnp.concatenate([p["wr_h"], p["wz_h"], p["wl_h"], p["ch_w"]], axis=1)          # (H, 4H)
    ln_g = jnp.concatenate([p["g_r"], p["g_z"], p["g_l"]], axis=1)                      # (1, 3H)
    ln_b = jnp.concatenate([p["b_r"], p["b_z"], p["b_l"]], axis=1)
    tw = jnp.concatenate([p["t_wr"], p["t_wz"], p["t_wc"]], axis=2)                     # (L, H, 3H)
    tg = jnp.concatenate([p["t_gr"], p["t_gz"]], axis=2)                                # (L, 1, 2H)
    tb = jnp.concatenate([p["t_br"], p["t_bz"]], axis=2)
    return {
        "wx": wx.astype(compute_dtype), "wh": wh.astype(compute_dtype),
        "ln_g": ln_g, "ln_b": ln_b, "ch_b": p["ch_b"],
        "tw": tw.astype(compute_dtype), "tg": tg, "tb": tb, "tcb": p["t_bc"],
    }


_PACKED_ORDER = ["wx", "wh", "ln_g", "ln_b", "ch_b", "tw", "tg", "tb", "tcb"]


def deep_transition_rnn_forward(packed_x, batch_sizes, params, *,
                                compute_dtype=jnp.float32, t_blk=8):
    """Packed-sequence forward.  batch_sizes must be constant (equal-length seqs)."""
    T = len(batch_sizes)
    B = int(batch_sizes[0])
    assert all(int(s) == B for s in batch_sizes), "kernel assumes equal-length sequences"
    Din = packed_x.shape[-1]
    H = params["cx"].shape[-1]
    L = params["t_wr"].shape[0]

    # Block multiple timesteps per grid step (largest divisor of T <= requested t_blk).
    t_blk = max(d for d in range(1, min(t_blk, T) + 1) if T % d == 0)
    G = T // t_blk

    packed = pack_params(params, compute_dtype)
    weights = [packed[k] for k in _PACKED_ORDER]

    def full_spec(a):
        nd = a.ndim
        return pl.BlockSpec(a.shape, lambda g, _nd=nd: (0,) * _nd)

    in_specs = ([pl.BlockSpec((t_blk * B, Din), lambda g: (g, 0))]
                + [full_spec(a) for a in weights])
    out_spec = pl.BlockSpec((t_blk * B, H), lambda g: (g, 0))

    kernel = functools.partial(_deep_transition_kernel, L, t_blk, B, H)
    return pl.pallas_call(
        kernel,
        out_shape=jax.ShapeDtypeStruct((T * B, H), packed_x.dtype),
        grid=(G,),
        in_specs=in_specs,
        out_specs=out_spec,
        scratch_shapes=[pltpu.VMEM((B, H), jnp.float32)],
        compiler_params=pltpu.CompilerParams(dimension_semantics=("arbitrary",)),
    )(packed_x, *weights)


def init_params(key, Din, H, L):
    ks = jax.random.split(key, 12)

    def w(k, shape, scale=0.1):
        return (scale * jax.random.normal(k, shape)).astype(jnp.float32)

    ones = jnp.ones((1, H), jnp.float32)
    zeros = jnp.zeros((1, H), jnp.float32)
    return {
        # LinearEnchancedGRU: gates take cat([x, h]) -> split weights
        "wr_x": w(ks[0], (Din, H)), "wr_h": w(ks[1], (H, H)), "g_r": ones, "b_r": zeros,
        "wz_x": w(ks[2], (Din, H)), "wz_h": w(ks[3], (H, H)), "g_z": ones, "b_z": zeros,
        "wl_x": w(ks[4], (Din, H)), "wl_h": w(ks[5], (H, H)), "g_l": ones, "b_l": zeros,
        "wlt": w(ks[6], (Din, H)),
        "cx": w(ks[7], (Din, H)),
        "ch_w": w(ks[8], (H, H)),            # nn.Linear weight, transposed for h @ W
        "ch_b": w(ks[9], (1, H), 0.05),
        # TransitionGRU stack (stacked over L layers)
        "t_wr": w(ks[10], (L, H, H)), "t_gr": jnp.ones((L, 1, H), jnp.float32),
        "t_br": jnp.zeros((L, 1, H), jnp.float32),
        "t_wz": w(ks[11], (L, H, H)), "t_gz": jnp.ones((L, 1, H), jnp.float32),
        "t_bz": jnp.zeros((L, 1, H), jnp.float32),
        "t_wc": w(jax.random.fold_in(key, 100), (L, H, H)),
        "t_bc": w(jax.random.fold_in(key, 101), (L, 1, H), 0.05),
    }


def reference_forward(packed_x, batch_sizes, p):
    """Plain-JAX mirror of the PyTorch loop (eval mode), using the UNFUSED params."""
    H = p["cx"].shape[-1]
    L = p["t_wr"].shape[0]
    start, ht, outs = 0, None, []
    for b in batch_sizes:
        b = int(b)
        x = packed_x[start:start + b]
        if ht is None:
            ht = jnp.zeros((x.shape[0], H), x.dtype)
        ht = ht[: x.shape[0]]
        r = jax.nn.sigmoid(_layernorm(x @ p["wr_x"] + ht @ p["wr_h"], p["g_r"], p["b_r"]))
        z = jax.nn.sigmoid(_layernorm(x @ p["wz_x"] + ht @ p["wz_h"], p["g_z"], p["b_z"]))
        l = jax.nn.sigmoid(_layernorm(x @ p["wl_x"] + ht @ p["wl_h"], p["g_l"], p["b_l"]))
        n = x @ p["cx"] + r * (ht @ p["ch_w"] + p["ch_b"])
        n = jnp.tanh(n) + l * (x @ p["wlt"])
        ht = (1 - z) * ht + z * n
        for i in range(L):
            rr = jax.nn.sigmoid(_layernorm(ht @ p["t_wr"][i], p["t_gr"][i], p["t_br"][i]))
            zz = jax.nn.sigmoid(_layernorm(ht @ p["t_wz"][i], p["t_gz"][i], p["t_bz"][i]))
            nn_ = jnp.tanh(rr * (ht @ p["t_wc"][i] + p["t_bc"][i]))
            ht = (1 - zz) * nn_ + zz * ht
        outs.append(ht)
        start += b
    return jnp.concatenate(outs, axis=0)


if __name__ == "__main__":
    # batch, seq len, inputUnits, outputUnits, transitionNumber
    B, T, Din, H, L = 8, 32, 16, 32, 2
    key = jax.random.PRNGKey(0)
    kx, kp = jax.random.split(key)

    packed_x = jax.random.normal(kx, (T * B, Din), dtype=jnp.float32)
    batch_sizes = [B] * T               # equal-length packed sequence
    params = init_params(kp, Din, H, L)

    # f32 path: exact check against the unfused plain-JAX reference.
    out = deep_transition_rnn_forward(packed_x, batch_sizes, params,
                                      compute_dtype=jnp.float32, t_blk=8)
    out = jax.block_until_ready(out)
    ref = reference_forward(packed_x, batch_sizes, params)
    assert out.shape == (T * B, H)
    assert jnp.allclose(out, ref, atol=1e-4, rtol=1e-4), "Pallas kernel mismatch vs reference"

    # bf16-MXU path (weights / matmul operands in bf16, f32 accumulation + elementwise):
    # demonstrates the production configuration; only sanity-checked here.
    out_bf16 = deep_transition_rnn_forward(packed_x, batch_sizes, params,
                                           compute_dtype=jnp.bfloat16, t_blk=8)
    out_bf16 = jax.block_until_ready(out_bf16)
    assert out_bf16.shape == (T * B, H)
    assert bool(jnp.all(jnp.isfinite(out_bf16)))

    print("KERNEL_OK")
</pallas_src>

<mosaic_0001>
module attributes {stable_mosaic.version = 11 : i64} {
  func.func @_deep_transition_kernel(%arg0: i32, %arg1: memref<64x16xf32, #tpu.memory_space<vmem>>, %arg2: memref<16x160xf32, #tpu.memory_space<vmem>>, %arg3: memref<32x128xf32, #tpu.memory_space<vmem>>, %arg4: memref<1x96xf32, #tpu.memory_space<vmem>>, %arg5: memref<1x96xf32, #tpu.memory_space<vmem>>, %arg6: memref<1x32xf32, #tpu.memory_space<vmem>>, %arg7: memref<2x32x96xf32, #tpu.memory_space<vmem>>, %arg8: memref<2x1x64xf32, #tpu.memory_space<vmem>>, %arg9: memref<2x1x64xf32, #tpu.memory_space<vmem>>, %arg10: memref<2x1x32xf32, #tpu.memory_space<vmem>>, %arg11: memref<64x32xf32, #tpu.memory_space<vmem>>, %arg12: memref<8x32xf32, #tpu.memory_space<vmem>>) attributes {dimension_semantics = [#tpu.dimension_semantics<arbitrary>], iteration_bounds = array<i64: 4>, scalar_prefetch = 0 : i64, scratch_operands = 1 : i64, tpu.core_type = #tpu.core_type<tc>, window_params = [{transform_indices = @transform_0, window_bounds = array<i64: 64, 16>}, {pipeline_mode = #tpu.pipeline_mode<synchronous>, transform_indices = @transform_1, window_bounds = array<i64: 16, 160>}, {pipeline_mode = #tpu.pipeline_mode<synchronous>, transform_indices = @transform_2, window_bounds = array<i64: 32, 128>}, {pipeline_mode = #tpu.pipeline_mode<synchronous>, transform_indices = @transform_3, window_bounds = array<i64: 1, 96>}, {pipeline_mode = #tpu.pipeline_mode<synchronous>, transform_indices = @transform_4, window_bounds = array<i64: 1, 96>}, {pipeline_mode = #tpu.pipeline_mode<synchronous>, transform_indices = @transform_5, window_bounds = array<i64: 1, 32>}, {pipeline_mode = #tpu.pipeline_mode<synchronous>, transform_indices = @transform_6, window_bounds = array<i64: 2, 32, 96>}, {pipeline_mode = #tpu.pipeline_mode<synchronous>, transform_indices = @transform_7, window_bounds = array<i64: 2, 1, 64>}, {pipeline_mode = #tpu.pipeline_mode<synchronous>, transform_indices = @transform_8, window_bounds = array<i64: 2, 1, 64>}, {pipeline_mode = #tpu.pipeline_mode<synchronous>, transform_indices = @transform_9, window_bounds = array<i64: 2, 1, 32>}, {transform_indices = @transform_10, window_bounds = array<i64: 64, 32>}]} {
    %c0_i32 = arith.constant 0 : i32
    %0 = arith.cmpi eq, %arg0, %c0_i32 : i32
    %1 = arith.extui %0 : i1 to i32
    %c0_i32_0 = arith.constant 0 : i32
    %2 = arith.cmpi ne, %1, %c0_i32_0 : i32
    scf.if %2 {
      %cst_442 = arith.constant 0.000000e+00 : f32
      %2294 = vector.broadcast %cst_442 : f32 to vector<8x32xf32>
      %c0_443 = arith.constant 0 : index
      %c0_444 = arith.constant 0 : index
      %2295 = vector.load %arg12[%c0_443, %c0_444] : memref<8x32xf32, #tpu.memory_space<vmem>>, vector<8x32xf32>
      tpu.vector_store %arg12[%c0_443, %c0_444], %2294 {strides = array<i32>} : memref<8x32xf32, #tpu.memory_space<vmem>>, vector<8x32xf32>,
    } else {
    }
    %c0 = arith.constant 0 : index
    %c0_1 = arith.constant 0 : index
    %3 = vector.load %arg2[%c0, %c0_1] : memref<16x160xf32, #tpu.memory_space<vmem>>, vector<16x160xf32>
    %c0_2 = arith.constant 0 : index
    %c0_3 = arith.constant 0 : index
    %4 = vector.load %arg3[%c0_2, %c0_3] : memref<32x128xf32, #tpu.memory_space<vmem>>, vector<32x128xf32>
    %c0_4 = arith.constant 0 : index
    %c0_5 = arith.constant 0 : index
    %5 = vector.load %arg4[%c0_4, %c0_5] : memref<1x96xf32, #tpu.memory_space<vmem>>, vector<1x96xf32>
    %c0_6 = arith.constant 0 : index
    %c0_7 = arith.constant 0 : index
    %6 = vector.load %arg5[%c0_6, %c0_7] : memref<1x96xf32, #tpu.memory_space<vmem>>, vector<1x96xf32>
    %c0_8 = arith.constant 0 : index
    %c0_9 = arith.constant 0 : index
    %7 = vector.load %arg6[%c0_8, %c0_9] : memref<1x32xf32, #tpu.memory_space<vmem>>, vector<1x32xf32>
    %c0_10 = arith.constant 0 : index
    %c0_11 = arith.constant 0 : index
    %c0_12 = arith.constant 0 : index
    %8 = vector.load %arg7[%c0_10, %c0_11, %c0_12] : memref<2x32x96xf32, #tpu.memory_space<vmem>>, vector<2x32x96xf32>
    %c0_13 = arith.constant 0 : index
    %c0_14 = arith.constant 0 : index
    %c0_15 = arith.constant 0 : index
    %9 = vector.load %arg8[%c0_13, %c0_14, %c0_15] : memref<2x1x64xf32, #tpu.memory_space<vmem>>, vector<2x1x64xf32>
    %c0_16 = arith.constant 0 : index
    %c0_17 = arith.constant 0 : index
    %c0_18 = arith.constant 0 : index
    %10 = vector.load %arg9[%c0_16, %c0_17, %c0_18] : memref<2x1x64xf32, #tpu.memory_space<vmem>>, vector<2x1x64xf32>
    %c0_19 = arith.constant 0 : index
    %c0_20 = arith.constant 0 : index
    %c0_21 = arith.constant 0 : index
    %11 = vector.load %arg10[%c0_19, %c0_20, %c0_21] : memref<2x1x32xf32, #tpu.memory_space<vmem>>, vector<2x1x32xf32>
    %c0_22 = arith.constant 0 : index
    %c0_23 = arith.constant 0 : index
    %12 = vector.load %arg12[%c0_22, %c0_23] : memref<8x32xf32, #tpu.memory_space<vmem>>, vector<8x32xf32>
    %c0_i32_24 = arith.constant 0 : i32
    %c8_i32 = arith.constant 8 : i32
    %13 = arith.muli %c0_i32_24, %c8_i32 : i32
    %14 = tpu.assume_multiple %13, 8 : i32
    %15 = arith.index_cast %14 : i32 to index
    %c0_25 = arith.constant 0 : index
    %16 = vector.load %arg1[%15, %c0_25] : memref<64x16xf32, #tpu.memory_space<vmem>>, vector<8x16xf32>
    %cst = arith.constant dense<0.000000e+00> : vector<8x160xf32>
    %17 = tpu.matmul %16, %3, %cst {dimension_numbers = #tpu.dot_dimension_numbers<[1], [0], [0], [1], [0, 0, 1, 1], [], []>} : vector<8x16xf32>, vector<16x160xf32>, vector<8x160xf32> -> vector<8x160xf32>
    %cst_26 = arith.constant dense<0.000000e+00> : vector<8x128xf32>
    %18 = tpu.matmul %12, %4, %cst_26 {dimension_numbers = #tpu.dot_dimension_numbers<[1], [0], [0], [1], [0, 0, 1, 1], [], []>} : vector<8x32xf32>, vector<32x128xf32>, vector<8x128xf32> -> vector<8x128xf32>
    %19 = vector.extract_strided_slice %17 {offsets = [0, 0], sizes = [8, 32], strides = [1, 1]} : vector<8x160xf32> to vector<8x32xf32>
    %20 = vector.extract_strided_slice %18 {offsets = [0, 0], sizes = [8, 32], strides = [1, 1]} : vector<8x128xf32> to vector<8x32xf32>
    %21 = arith.addf %19, %20 : vector<8x32xf32>
    %22 = vector.extract_strided_slice %5 {offsets = [0, 0], sizes = [1, 32], strides = [1, 1]} : vector<1x96xf32> to vector<1x32xf32>
    %23 = vector.extract_strided_slice %6 {offsets = [0, 0], sizes = [1, 32], strides = [1, 1]} : vector<1x96xf32> to vector<1x32xf32>
    %cst_27 = arith.constant dense<0.000000e+00> : vector<8xf32>
    %24 = vector.multi_reduction <add>, %21, %cst_27 [1] : vector<8x32xf32> to vector<8xf32>
    %25 = vector.shape_cast %24 : vector<8xf32> to vector<8x1xf32>
    %cst_28 = arith.constant 3.200000e+01 : f32
    %26 = vector.broadcast %cst_28 : f32 to vector<8x1xf32>
    %27 = arith.divf %25, %26 : vector<8x1xf32>
    %28 = vector.broadcast %27 : vector<8x1xf32> to vector<8x32xf32>
    %29 = arith.subf %21, %28 : vector<8x32xf32>
    %30 = arith.mulf %29, %29 : vector<8x32xf32>
    %cst_29 = arith.constant dense<0.000000e+00> : vector<8xf32>
    %31 = vector.multi_reduction <add>, %30, %cst_29 [1] : vector<8x32xf32> to vector<8xf32>
    %32 = vector.shape_cast %31 : vector<8xf32> to vector<8x1xf32>
    %cst_30 = arith.constant 3.200000e+01 : f32
    %33 = vector.broadcast %cst_30 : f32 to vector<8x1xf32>
    %34 = arith.divf %32, %33 : vector<8x1xf32>
    %35 = vector.broadcast %27 : vector<8x1xf32> to vector<8x32xf32>
    %36 = arith.subf %21, %35 : vector<8x32xf32>
    %cst_31 = arith.constant 9.99999974E-6 : f32
    %37 = vector.broadcast %cst_31 : f32 to vector<8x1xf32>
    %38 = arith.addf %34, %37 : vector<8x1xf32>
    %39 = math.rsqrt %38 : vector<8x1xf32>
    %40 = vector.broadcast %39 : vector<8x1xf32> to vector<8x32xf32>
    %41 = arith.mulf %36, %40 : vector<8x32xf32>
    %42 = vector.broadcast %22 : vector<1x32xf32> to vector<8x32xf32>
    %43 = arith.mulf %41, %42 : vector<8x32xf32>
    %44 = vector.broadcast %23 : vector<1x32xf32> to vector<8x32xf32>
    %45 = arith.addf %43, %44 : vector<8x32xf32>
    %46 = arith.negf %45 : vector<8x32xf32>
    %47 = math.exp %46 : vector<8x32xf32>
    %cst_32 = arith.constant 1.000000e+00 : f32
    %48 = vector.broadcast %cst_32 : f32 to vector<8x32xf32>
    %49 = arith.addf %48, %47 : vector<8x32xf32>
    %50 = arith.divf %48, %49 : vector<8x32xf32>
    %51 = vector.extract_strided_slice %17 {offsets = [0, 32], sizes = [8, 32], strides = [1, 1]} : vector<8x160xf32> to vector<8x32xf32>
    %52 = vector.extract_strided_slice %18 {offsets = [0, 32], sizes = [8, 32], strides = [1, 1]} : vector<8x128xf32> to vector<8x32xf32>
    %53 = arith.addf %51, %52 : vector<8x32xf32>
    %54 = vector.extract_strided_slice %5 {offsets = [0, 32], sizes = [1, 32], strides = [1, 1]} : vector<1x96xf32> to vector<1x32xf32>
    %55 = vector.extract_strided_slice %6 {offsets = [0, 32], sizes = [1, 32], strides = [1, 1]} : vector<1x96xf32> to vector<1x32xf32>
    %cst_33 = arith.constant dense<0.000000e+00> : vector<8xf32>
    %56 = vector.multi_reduction <add>, %53, %cst_33 [1] : vector<8x32xf32> to vector<8xf32>
    %57 = vector.shape_cast %56 : vector<8xf32> to vector<8x1xf32>
    %cst_34 = arith.constant 3.200000e+01 : f32
    %58 = vector.broadcast %cst_34 : f32 to vector<8x1xf32>
    %59 = arith.divf %57, %58 : vector<8x1xf32>
    %60 = vector.broadcast %59 : vector<8x1xf32> to vector<8x32xf32>
    %61 = arith.subf %53, %60 : vector<8x32xf32>
    %62 = arith.mulf %61, %61 : vector<8x32xf32>
    %cst_35 = arith.constant dense<0.000000e+00> : vector<8xf32>
    %63 = vector.multi_reduction <add>, %62, %cst_35 [1] : vector<8x32xf32> to vector<8xf32>
    %64 = vector.shape_cast %63 : vector<8xf32> to vector<8x1xf32>
    %cst_36 = arith.constant 3.200000e+01 : f32
    %65 = vector.broadcast %cst_36 : f32 to vector<8x1xf32>
    %66 = arith.divf %64, %65 : vector<8x1xf32>
    %67 = vector.broadcast %59 : vector<8x1xf32> to vector<8x32xf32>
    %68 = arith.subf %53, %67 : vector<8x32xf32>
    %cst_37 = arith.constant 9.99999974E-6 : f32
    %69 = vector.broadcast %cst_37 : f32 to vector<8x1xf32>
    %70 = arith.addf %66, %69 : vector<8x1xf32>
    %71 = math.rsqrt %70 : vector<8x1xf32>
    %72 = vector.broadcast %71 : vector<8x1xf32> to vector<8x32xf32>
    %73 = arith.mulf %68, %72 : vector<8x32xf32>
    %74 = vector.broadcast %54 : vector<1x32xf32> to vector<8x32xf32>
    %75 = arith.mulf %73, %74 : vector<8x32xf32>
    %76 = vector.broadcast %55 : vector<1x32xf32> to vector<8x32xf32>
    %77 = arith.addf %75, %76 : vector<8x32xf32>
    %78 = arith.negf %77 : vector<8x32xf32>
    %79 = math.exp %78 : vector<8x32xf32>
    %cst_38 = arith.constant 1.000000e+00 : f32
    %80 = vector.broadcast %cst_38 : f32 to vector<8x32xf32>
    %81 = arith.addf %80, %79 : vector<8x32xf32>
    %82 = arith.divf %80, %81 : vector<8x32xf32>
    %83 = vector.extract_strided_slice %17 {offsets = [0, 64], sizes = [8, 32], strides = [1, 1]} : vector<8x160xf32> to vector<8x32xf32>
    %84 = vector.extract_strided_slice %18 {offsets = [0, 64], sizes = [8, 32], strides = [1, 1]} : vector<8x128xf32> to vector<8x32xf32>
    %85 = arith.addf %83, %84 : vector<8x32xf32>
    %86 = vector.extract_strided_slice %5 {offsets = [0, 64], sizes = [1, 32], strides = [1, 1]} : vector<1x96xf32> to vector<1x32xf32>
    %87 = vector.extract_strided_slice %6 {offsets = [0, 64], sizes = [1, 32], strides = [1, 1]} : vector<1x96xf32> to vector<1x32xf32>
    %cst_39 = arith.constant dense<0.000000e+00> : vector<8xf32>
    %88 = vector.multi_reduction <add>, %85, %cst_39 [1] : vector<8x32xf32> to vector<8xf32>
    %89 = vector.shape_cast %88 : vector<8xf32> to vector<8x1xf32>
    %cst_40 = arith.constant 3.200000e+01 : f32
    %90 = vector.broadcast %cst_40 : f32 to vector<8x1xf32>
    %91 = arith.divf %89, %90 : vector<8x1xf32>
    %92 = vector.broadcast %91 : vector<8x1xf32> to vector<8x32xf32>
    %93 = arith.subf %85, %92 : vector<8x32xf32>
    %94 = arith.mulf %93, %93 : vector<8x32xf32>
    %cst_41 = arith.constant dense<0.000000e+00> : vector<8xf32>
    %95 = vector.multi_reduction <add>, %94, %cst_41 [1] : vector<8x32xf32> to vector<8xf32>
    %96 = vector.shape_cast %95 : vector<8xf32> to vector<8x1xf32>
    %cst_42 = arith.constant 3.200000e+01 : f32
    %97 = vector.broadcast %cst_42 : f32 to vector<8x1xf32>
    %98 = arith.divf %96, %97 : vector<8x1xf32>
    %99 = vector.broadcast %91 : vector<8x1xf32> to vector<8x32xf32>
    %100 = arith.subf %85, %99 : vector<8x32xf32>
    %cst_43 = arith.constant 9.99999974E-6 : f32
    %101 = vector.broadcast %cst_43 : f32 to vector<8x1xf32>
    %102 = arith.addf %98, %101 : vector<8x1xf32>
    %103 = math.rsqrt %102 : vector<8x1xf32>
    %104 = vector.broadcast %103 : vector<8x1xf32> to vector<8x32xf32>
    %105 = arith.mulf %100, %104 : vector<8x32xf32>
    %106 = vector.broadcast %86 : vector<1x32xf32> to vector<8x32xf32>
    %107 = arith.mulf %105, %106 : vector<8x32xf32>
    %108 = vector.broadcast %87 : vector<1x32xf32> to vector<8x32xf32>
    %109 = arith.addf %107, %108 : vector<8x32xf32>
    %110 = arith.negf %109 : vector<8x32xf32>
    %111 = math.exp %110 : vector<8x32xf32>
    %cst_44 = arith.constant 1.000000e+00 : f32
    %112 = vector.broadcast %cst_44 : f32 to vector<8x32xf32>
    %113 = arith.addf %112, %111 : vector<8x32xf32>
    %114 = arith.divf %112, %113 : vector<8x32xf32>
    %115 = vector.extract_strided_slice %17 {offsets = [0, 96], sizes = [8, 32], strides = [1, 1]} : vector<8x160xf32> to vector<8x32xf32>
    %116 = vector.extract_strided_slice %18 {offsets = [0, 96], sizes = [8, 32], strides = [1, 1]} : vector<8x128xf32> to vector<8x32xf32>
    %117 = vector.broadcast %7 : vector<1x32xf32> to vector<8x32xf32>
    %118 = arith.addf %116, %117 : vector<8x32xf32>
    %119 = arith.mulf %50, %118 : vector<8x32xf32>
    %120 = arith.addf %115, %119 : vector<8x32xf32>
    %121 = math.tanh %120 : vector<8x32xf32>
    %122 = vector.extract_strided_slice %17 {offsets = [0, 128], sizes = [8, 32], strides = [1, 1]} : vector<8x160xf32> to vector<8x32xf32>
    %123 = arith.mulf %114, %122 : vector<8x32xf32>
    %124 = arith.addf %121, %123 : vector<8x32xf32>
    %cst_45 = arith.constant 1.000000e+00 : f32
    %125 = vector.broadcast %cst_45 : f32 to vector<8x32xf32>
    %126 = arith.subf %125, %82 : vector<8x32xf32>
    %127 = arith.mulf %126, %12 : vector<8x32xf32>
    %128 = arith.mulf %82, %124 : vector<8x32xf32>
    %129 = arith.addf %127, %128 : vector<8x32xf32>
    %130 = vector.extract_strided_slice %8 {offsets = [0, 0, 0], sizes = [1, 32, 96], strides = [1, 1, 1]} : vector<2x32x96xf32> to vector<1x32x96xf32>
    %131 = vector.shape_cast %130 : vector<1x32x96xf32> to vector<32x96xf32>
    %cst_46 = arith.constant dense<0.000000e+00> : vector<8x96xf32>
    %132 = tpu.matmul %129, %131, %cst_46 {dimension_numbers = #tpu.dot_dimension_numbers<[1], [0], [0], [1], [0, 0, 1, 1], [], []>} : vector<8x32xf32>, vector<32x96xf32>, vector<8x96xf32> -> vector<8x96xf32>
    %133 = vector.extract_strided_slice %132 {offsets = [0, 0], sizes = [8, 32], strides = [1, 1]} : vector<8x96xf32> to vector<8x32xf32>
    %134 = vector.extract_strided_slice %9 {offsets = [0, 0, 0], sizes = [1, 1, 64], strides = [1, 1, 1]} : vector<2x1x64xf32> to vector<1x1x64xf32>
    %135 = vector.shape_cast %134 : vector<1x1x64xf32> to vector<1x64xf32>
    %136 = vector.extract_strided_slice %135 {offsets = [0, 0], sizes = [1, 32], strides = [1, 1]} : vector<1x64xf32> to vector<1x32xf32>
    %137 = vector.extract_strided_slice %10 {offsets = [0, 0, 0], sizes = [1, 1, 64], strides = [1, 1, 1]} : vector<2x1x64xf32> to vector<1x1x64xf32>
    %138 = vector.shape_cast %137 : vector<1x1x64xf32> to vector<1x64xf32>
    %139 = vector.extract_strided_slice %138 {offsets = [0, 0], sizes = [1, 32], strides = [1, 1]} : vector<1x64xf32> to vector<1x32xf32>
    %cst_47 = arith.constant dense<0.000000e+00> : vector<8xf32>
    %140 = vector.multi_reduction <add>, %133, %cst_47 [1] : vector<8x32xf32> to vector<8xf32>
    %141 = vector.shape_cast %140 : vector<8xf32> to vector<8x1xf32>
    %cst_48 = arith.constant 3.200000e+01 : f32
    %142 = vector.broadcast %cst_48 : f32 to vector<8x1xf32>
    %143 = arith.divf %141, %142 : vector<8x1xf32>
    %144 = vector.broadcast %143 : vector<8x1xf32> to vector<8x32xf32>
    %145 = arith.subf %133, %144 : vector<8x32xf32>
    %146 = arith.mulf %145, %145 : vector<8x32xf32>
    %cst_49 = arith.constant dense<0.000000e+00> : vector<8xf32>
    %147 = vector.multi_reduction <add>, %146, %cst_49 [1] : vector<8x32xf32> to vector<8xf32>
    %148 = vector.shape_cast %147 : vector<8xf32> to vector<8x1xf32>
    %cst_50 = arith.constant 3.200000e+01 : f32
    %149 = vector.broadcast %cst_50 : f32 to vector<8x1xf32>
    %150 = arith.divf %148, %149 : vector<8x1xf32>
    %151 = vector.broadcast %143 : vector<8x1xf32> to vector<8x32xf32>
    %152 = arith.subf %133, %151 : vector<8x32xf32>
    %cst_51 = arith.constant 9.99999974E-6 : f32
    %153 = vector.broadcast %cst_51 : f32 to vector<8x1xf32>
    %154 = arith.addf %150, %153 : vector<8x1xf32>
    %155 = math.rsqrt %154 : vector<8x1xf32>
    %156 = vector.broadcast %155 : vector<8x1xf32> to vector<8x32xf32>
    %157 = arith.mulf %152, %156 : vector<8x32xf32>
    %158 = vector.broadcast %136 : vector<1x32xf32> to vector<8x32xf32>
    %159 = arith.mulf %157, %158 : vector<8x32xf32>
    %160 = vector.broadcast %139 : vector<1x32xf32> to vector<8x32xf32>
    %161 = arith.addf %159, %160 : vector<8x32xf32>
    %162 = arith.negf %161 : vector<8x32xf32>
    %163 = math.exp %162 : vector<8x32xf32>
    %cst_52 = arith.constant 1.000000e+00 : f32
    %164 = vector.broadcast %cst_52 : f32 to vector<8x32xf32>
    %165 = arith.addf %164, %163 : vector<8x32xf32>
    %166 = arith.divf %164, %165 : vector<8x32xf32>
    %167 = vector.extract_strided_slice %132 {offsets = [0, 32], sizes = [8, 32], strides = [1, 1]} : vector<8x96xf32> to vector<8x32xf32>
    %168 = vector.extract_strided_slice %9 {offsets = [0, 0, 0], sizes = [1, 1, 64], strides = [1, 1, 1]} : vector<2x1x64xf32> to vector<1x1x64xf32>
    %169 = vector.shape_cast %168 : vector<1x1x64xf32> to vector<1x64xf32>
    %170 = vector.extract_strided_slice %169 {offsets = [0, 32], sizes = [1, 32], strides = [1, 1]} : vector<1x64xf32> to vector<1x32xf32>
    %171 = vector.extract_strided_slice %10 {offsets = [0, 0, 0], sizes = [1, 1, 64], strides = [1, 1, 1]} : vector<2x1x64xf32> to vector<1x1x64xf32>
    %172 = vector.shape_cast %171 : vector<1x1x64xf32> to vector<1x64xf32>
    %173 = vector.extract_strided_slice %172 {offsets = [0, 32], sizes = [1, 32], strides = [1, 1]} : vector<1x64xf32> to vector<1x32xf32>
    %cst_53 = arith.constant dense<0.000000e+00> : vector<8xf32>
    %174 = vector.multi_reduction <add>, %167, %cst_53 [1] : vector<8x32xf32> to vector<8xf32>
    %175 = vector.shape_cast %174 : vector<8xf32> to vector<8x1xf32>
    %cst_54 = arith.constant 3.200000e+01 : f32
    %176 = vector.broadcast %cst_54 : f32 to vector<8x1xf32>
    %177 = arith.divf %175, %176 : vector<8x1xf32>
    %178 = vector.broadcast %177 : vector<8x1xf32> to vector<8x32xf32>
    %179 = arith.subf %167, %178 : vector<8x32xf32>
    %180 = arith.mulf %179, %179 : vector<8x32xf32>
    %cst_55 = arith.constant dense<0.000000e+00> : vector<8xf32>
    %181 = vector.multi_reduction <add>, %180, %cst_55 [1] : vector<8x32xf32> to vector<8xf32>
    %182 = vector.shape_cast %181 : vector<8xf32> to vector<8x1xf32>
    %cst_56 = arith.constant 3.200000e+01 : f32
    %183 = vector.broadcast %cst_56 : f32 to vector<8x1xf32>
    %184 = arith.divf %182, %183 : vector<8x1xf32>
    %185 = vector.broadcast %177 : vector<8x1xf32> to vector<8x32xf32>
    %186 = arith.subf %167, %185 : vector<8x32xf32>
    %cst_57 = arith.constant 9.99999974E-6 : f32
    %187 = vector.broadcast %cst_57 : f32 to vector<8x1xf32>
    %188 = arith.addf %184, %187 : vector<8x1xf32>
    %189 = math.rsqrt %188 : vector<8x1xf32>
    %190 = vector.broadcast %189 : vector<8x1xf32> to vector<8x32xf32>
    %191 = arith.mulf %186, %190 : vector<8x32xf32>
    %192 = vector.broadcast %170 : vector<1x32xf32> to vector<8x32xf32>
    %193 = arith.mulf %191, %192 : vector<8x32xf32>
    %194 = vector.broadcast %173 : vector<1x32xf32> to vector<8x32xf32>
    %195 = arith.addf %193, %194 : vector<8x32xf32>
    %196 = arith.negf %195 : vector<8x32xf32>
    %197 = math.exp %196 : vector<8x32xf32>
    %cst_58 = arith.constant 1.000000e+00 : f32
    %198 = vector.broadcast %cst_58 : f32 to vector<8x32xf32>
    %199 = arith.addf %198, %197 : vector<8x32xf32>
    %200 = arith.divf %198, %199 : vector<8x32xf32>
    %201 = vector.extract_strided_slice %132 {offsets = [0, 64], sizes = [8, 32], strides = [1, 1]} : vector<8x96xf32> to vector<8x32xf32>
    %202 = vector.extract_strided_slice %11 {offsets = [0, 0, 0], sizes = [1, 1, 32], strides = [1, 1, 1]} : vector<2x1x32xf32> to vector<1x1x32xf32>
    %203 = vector.shape_cast %202 : vector<1x1x32xf32> to vector<1x32xf32>
    %204 = vector.broadcast %203 : vector<1x32xf32> to vector<8x32xf32>
    %205 = arith.addf %201, %204 : vector<8x32xf32>
    %206 = arith.mulf %166, %205 : vector<8x32xf32>
    %207 = math.tanh %206 : vector<8x32xf32>
    %cst_59 = arith.constant 1.000000e+00 : f32
    %208 = vector.broadcast %cst_59 : f32 to vector<8x32xf32>
    %209 = arith.subf %208, %200 : vector<8x32xf32>
    %210 = arith.mulf %209, %207 : vector<8x32xf32>
    %211 = arith.mulf %200, %129 : vector<8x32xf32>
    %212 = arith.addf %210, %211 : vector<8x32xf32>
    %213 = vector.extract_strided_slice %8 {offsets = [1, 0, 0], sizes = [1, 32, 96], strides = [1, 1, 1]} : vector<2x32x96xf32> to vector<1x32x96xf32>
    %214 = vector.shape_cast %213 : vector<1x32x96xf32> to vector<32x96xf32>
    %cst_60 = arith.constant dense<0.000000e+00> : vector<8x96xf32>
    %215 = tpu.matmul %212, %214, %cst_60 {dimension_numbers = #tpu.dot_dimension_numbers<[1], [0], [0], [1], [0, 0, 1, 1], [], []>} : vector<8x32xf32>, vector<32x96xf32>, vector<8x96xf32> -> vector<8x96xf32>
    %216 = vector.extract_strided_slice %215 {offsets = [0, 0], sizes = [8, 32], strides = [1, 1]} : vector<8x96xf32> to vector<8x32xf32>
    %217 = vector.extract_strided_slice %9 {offsets = [1, 0, 0], sizes = [1, 1, 64], strides = [1, 1, 1]} : vector<2x1x64xf32> to vector<1x1x64xf32>
    %218 = vector.shape_cast %217 : vector<1x1x64xf32> to vector<1x64xf32>
    %219 = vector.extract_strided_slice %218 {offsets = [0, 0], sizes = [1, 32], strides = [1, 1]} : vector<1x64xf32> to vector<1x32xf32>
    %220 = vector.extract_strided_slice %10 {offsets = [1, 0, 0], sizes = [1, 1, 64], strides = [1, 1, 1]} : vector<2x1x64xf32> to vector<1x1x64xf32>
    %221 = vector.shape_cast %220 : vector<1x1x64xf32> to vector<1x64xf32>
    %222 = vector.extract_strided_slice %221 {offsets = [0, 0], sizes = [1, 32], strides = [1, 1]} : vector<1x64xf32> to vector<1x32xf32>
    %cst_61 = arith.constant dense<0.000000e+00> : vector<8xf32>
    %223 = vector.multi_reduction <add>, %216, %cst_61 [1] : vector<8x32xf32> to vector<8xf32>
    %224 = vector.shape_cast %223 : vector<8xf32> to vector<8x1xf32>
    %cst_62 = arith.constant 3.200000e+01 : f32
    %225 = vector.broadcast %cst_62 : f32 to vector<8x1xf32>
    %226 = arith.divf %224, %225 : vector<8x1xf32>
    %227 = vector.broadcast %226 : vector<8x1xf32> to vector<8x32xf32>
    %228 = arith.subf %216, %227 : vector<8x32xf32>
    %229 = arith.mulf %228, %228 : vector<8x32xf32>
    %cst_63 = arith.constant dense<0.000000e+00> : vector<8xf32>
    %230 = vector.multi_reduction <add>, %229, %cst_63 [1] : vector<8x32xf32> to vector<8xf32>
    %231 = vector.shape_cast %230 : vector<8xf32> to vector<8x1xf32>
    %cst_64 = arith.constant 3.200000e+01 : f32
    %232 = vector.broadcast %cst_64 : f32 to vector<8x1xf32>
    %233 = arith.divf %231, %232 : vector<8x1xf32>
    %234 = vector.broadcast %226 : vector<8x1xf32> to vector<8x32xf32>
    %235 = arith.subf %216, %234 : vector<8x32xf32>
    %cst_65 = arith.constant 9.99999974E-6 : f32
    %236 = vector.broadcast %cst_65 : f32 to vector<8x1xf32>
    %237 = arith.addf %233, %236 : vector<8x1xf32>
    %238 = math.rsqrt %237 : vector<8x1xf32>
    %239 = vector.broadcast %238 : vector<8x1xf32> to vector<8x32xf32>
    %240 = arith.mulf %235, %239 : vector<8x32xf32>
    %241 = vector.broadcast %219 : vector<1x32xf32> to vector<8x32xf32>
    %242 = arith.mulf %240, %241 : vector<8x32xf32>
    %243 = vector.broadcast %222 : vector<1x32xf32> to vector<8x32xf32>
    %244 = arith.addf %242, %243 : vector<8x32xf32>
    %245 = arith.negf %244 : vector<8x32xf32>
    %246 = math.exp %245 : vector<8x32xf32>
    %cst_66 = arith.constant 1.000000e+00 : f32
    %247 = vector.broadcast %cst_66 : f32 to vector<8x32xf32>
    %248 = arith.addf %247, %246 : vector<8x32xf32>
    %249 = arith.divf %247, %248 : vector<8x32xf32>
    %250 = vector.extract_strided_slice %215 {offsets = [0, 32], sizes = [8, 32], strides = [1, 1]} : vector<8x96xf32> to vector<8x32xf32>
    %251 = vector.extract_strided_slice %9 {offsets = [1, 0, 0], sizes = [1, 1, 64], strides = [1, 1, 1]} : vector<2x1x64xf32> to vector<1x1x64xf32>
    %252 = vector.shape_cast %251 : vector<1x1x64xf32> to vector<1x64xf32>
    %253 = vector.extract_strided_slice %252 {offsets = [0, 32], sizes = [1, 32], strides = [1, 1]} : vector<1x64xf32> to vector<1x32xf32>
    %254 = vector.extract_strided_slice %10 {offsets = [1, 0, 0], sizes = [1, 1, 64], strides = [1, 1, 1]} : vector<2x1x64xf32> to vector<1x1x64xf32>
    %255 = vector.shape_cast %254 : vector<1x1x64xf32> to vector<1x64xf32>
    %256 = vector.extract_strided_slice %255 {offsets = [0, 32], sizes = [1, 32], strides = [1, 1]} : vector<1x64xf32> to vector<1x32xf32>
    %cst_67 = arith.constant dense<0.000000e+00> : vector<8xf32>
    %257 = vector.multi_reduction <add>, %250, %cst_67 [1] : vector<8x32xf32> to vector<8xf32>
    %258 = vector.shape_cast %257 : vector<8xf32> to vector<8x1xf32>
    %cst_68 = arith.constant 3.200000e+01 : f32
    %259 = vector.broadcast %cst_68 : f32 to vector<8x1xf32>
    %260 = arith.divf %258, %259 : vector<8x1xf32>
    %261 = vector.broadcast %260 : vector<8x1xf32> to vector<8x32xf32>
    %262 = arith.subf %250, %261 : vector<8x32xf32>
    %263 = arith.mulf %262, %262 : vector<8x32xf32>
    %cst_69 = arith.constant dense<0.000000e+00> : vector<8xf32>
    %264 = vector.multi_reduction <add>, %263, %cst_69 [1] : vector<8x32xf32> to vector<8xf32>
    %265 = vector.shape_cast %264 : vector<8xf32> to vector<8x1xf32>
    %cst_70 = arith.constant 3.200000e+01 : f32
    %266 = vector.broadcast %cst_70 : f32 to vector<8x1xf32>
    %267 = arith.divf %265, %266 : vector<8x1xf32>
    %268 = vector.broadcast %260 : vector<8x1xf32> to vector<8x32xf32>
    %269 = arith.subf %250, %268 : vector<8x32xf32>
    %cst_71 = arith.constant 9.99999974E-6 : f32
    %270 = vector.broadcast %cst_71 : f32 to vector<8x1xf32>
    %271 = arith.addf %267, %270 : vector<8x1xf32>
    %272 = math.rsqrt %271 : vector<8x1xf32>
    %273 = vector.broadcast %272 : vector<8x1xf32> to vector<8x32xf32>
    %274 = arith.mulf %269, %273 : vector<8x32xf32>
    %275 = vector.broadcast %253 : vector<1x32xf32> to vector<8x32xf32>
    %276 = arith.mulf %274, %275 : vector<8x32xf32>
    %277 = vector.broadcast %256 : vector<1x32xf32> to vector<8x32xf32>
    %278 = arith.addf %276, %277 : vector<8x32xf32>
    %279 = arith.negf %278 : vector<8x32xf32>
    %280 = math.exp %279 : vector<8x32xf32>
    %cst_72 = arith.constant 1.000000e+00 : f32
    %281 = vector.broadcast %cst_72 : f32 to vector<8x32xf32>
    %282 = arith.addf %281, %280 : vector<8x32xf32>
    %283 = arith.divf %281, %282 : vector<8x32xf32>
    %284 = vector.extract_strided_slice %215 {offsets = [0, 64], sizes = [8, 32], strides = [1, 1]} : vector<8x96xf32> to vector<8x32xf32>
    %285 = vector.extract_strided_slice %11 {offsets = [1, 0, 0], sizes = [1, 1, 32], strides = [1, 1, 1]} : vector<2x1x32xf32> to vector<1x1x32xf32>
    %286 = vector.shape_cast %285 : vector<1x1x32xf32> to vector<1x32xf32>
    %287 = vector.broadcast %286 : vector<1x32xf32> to vector<8x32xf32>
    %288 = arith.addf %284, %287 : vector<8x32xf32>
    %289 = arith.mulf %249, %288 : vector<8x32xf32>
    %290 = math.tanh %289 : vector<8x32xf32>
    %cst_73 = arith.constant 1.000000e+00 : f32
    %291 = vector.broadcast %cst_73 : f32 to vector<8x32xf32>
    %292 = arith.subf %291, %283 : vector<8x32xf32>
    %293 = arith.mulf %292, %290 : vector<8x32xf32>
    %294 = arith.mulf %283, %212 : vector<8x32xf32>
    %295 = arith.addf %293, %294 : vector<8x32xf32>
    %296 = arith.index_cast %14 : i32 to index
    %c0_74 = arith.constant 0 : index
    %297 = vector.load %arg11[%296, %c0_74] : memref<64x32xf32, #tpu.memory_space<vmem>>, vector<8x32xf32>
    tpu.vector_store %arg11[%296, %c0_74], %295 {strides = array<i32>} : memref<64x32xf32, #tpu.memory_space<vmem>>, vector<8x32xf32>,
    %c1_i32 = arith.constant 1 : i32
    %c8_i32_75 = arith.constant 8 : i32
    %298 = arith.muli %c1_i32, %c8_i32_75 : i32
    %299 = tpu.assume_multiple %298, 8 : i32
    %300 = arith.index_cast %299 : i32 to index
    %c0_76 = arith.constant 0 : index
    %301 = vector.load %arg1[%300, %c0_76] : memref<64x16xf32, #tpu.memory_space<vmem>>, vector<8x16xf32>
    %cst_77 = arith.constant dense<0.000000e+00> : vector<8x160xf32>
    %302 = tpu.matmul %301, %3, %cst_77 {dimension_numbers = #tpu.dot_dimension_numbers<[1], [0], [0], [1], [0, 0, 1, 1], [], []>} : vector<8x16xf32>, vector<16x160xf32>, vector<8x160xf32> -> vector<8x160xf32>
    %cst_78 = arith.constant dense<0.000000e+00> : vector<8x128xf32>
    %303 = tpu.matmul %295, %4, %cst_78 {dimension_numbers = #tpu.dot_dimension_numbers<[1], [0], [0], [1], [0, 0, 1, 1], [], []>} : vector<8x32xf32>, vector<32x128xf32>, vector<8x128xf32> -> vector<8x128xf32>
    %304 = vector.extract_strided_slice %302 {offsets = [0, 0], sizes = [8, 32], strides = [1, 1]} : vector<8x160xf32> to vector<8x32xf32>
    %305 = vector.extract_strided_slice %303 {offsets = [0, 0], sizes = [8, 32], strides = [1, 1]} : vector<8x128xf32> to vector<8x32xf32>
    %306 = arith.addf %304, %305 : vector<8x32xf32>
    %307 = vector.extract_strided_slice %5 {offsets = [0, 0], sizes = [1, 32], strides = [1, 1]} : vector<1x96xf32> to vector<1x32xf32>
    %308 = vector.extract_strided_slice %6 {offsets = [0, 0], sizes = [1, 32], strides = [1, 1]} : vector<1x96xf32> to vector<1x32xf32>
    %cst_79 = arith.constant dense<0.000000e+00> : vector<8xf32>
    %309 = vector.multi_reduction <add>, %306, %cst_79 [1] : vector<8x32xf32> to vector<8xf32>
    %310 = vector.shape_cast %309 : vector<8xf32> to vector<8x1xf32>
    %cst_80 = arith.constant 3.200000e+01 : f32
    %311 = vector.broadcast %cst_80 : f32 to vector<8x1xf32>
    %312 = arith.divf %310, %311 : vector<8x1xf32>
    %313 = vector.broadcast %312 : vector<8x1xf32> to vector<8x32xf32>
    %314 = arith.subf %306, %313 : vector<8x32xf32>
    %315 = arith.mulf %314, %314 : vector<8x32xf32>
    %cst_81 = arith.constant dense<0.000000e+00> : vector<8xf32>
    %316 = vector.multi_reduction <add>, %315, %cst_81 [1] : vector<8x32xf32> to vector<8xf32>
    %317 = vector.shape_cast %316 : vector<8xf32> to vector<8x1xf32>
    %cst_82 = arith.constant 3.200000e+01 : f32
    %318 = vector.broadcast %cst_82 : f32 to vector<8x1xf32>
    %319 = arith.divf %317, %318 : vector<8x1xf32>
    %320 = vector.broadcast %312 : vector<8x1xf32> to vector<8x32xf32>
    %321 = arith.subf %306, %320 : vector<8x32xf32>
    %cst_83 = arith.constant 9.99999974E-6 : f32
    %322 = vector.broadcast %cst_83 : f32 to vector<8x1xf32>
    %323 = arith.addf %319, %322 : vector<8x1xf32>
    %324 = math.rsqrt %323 : vector<8x1xf32>
    %325 = vector.broadcast %324 : vector<8x1xf32> to vector<8x32xf32>
    %326 = arith.mulf %321, %325 : vector<8x32xf32>
    %327 = vector.broadcast %307 : vector<1x32xf32> to vector<8x32xf32>
    %328 = arith.mulf %326, %327 : vector<8x32xf32>
    %329 = vector.broadcast %308 : vector<1x32xf32> to vector<8x32xf32>
    %330 = arith.addf %328, %329 : vector<8x32xf32>
    %331 = arith.negf %330 : vector<8x32xf32>
    %332 = math.exp %331 : vector<8x32xf32>
    %cst_84 = arith.constant 1.000000e+00 : f32
    %333 = vector.broadcast %cst_84 : f32 to vector<8x32xf32>
    %334 = arith.addf %333, %332 : vector<8x32xf32>
    %335 = arith.divf %333, %334 : vector<8x32xf32>
    %336 = vector.extract_strided_slice %302 {offsets = [0, 32], sizes = [8, 32], strides = [1, 1]} : vector<8x160xf32> to vector<8x32xf32>
    %337 = vector.extract_strided_slice %303 {offsets = [0, 32], sizes = [8, 32], strides = [1, 1]} : vector<8x128xf32> to vector<8x32xf32>
    %338 = arith.addf %336, %337 : vector<8x32xf32>
    %339 = vector.extract_strided_slice %5 {offsets = [0, 32], sizes = [1, 32], strides = [1, 1]} : vector<1x96xf32> to vector<1x32xf32>
    %340 = vector.extract_strided_slice %6 {offsets = [0, 32], sizes = [1, 32], strides = [1, 1]} : vector<1x96xf32> to vector<1x32xf32>
    %cst_85 = arith.constant dense<0.000000e+00> : vector<8xf32>
    %341 = vector.multi_reduction <add>, %338, %cst_85 [1] : vector<8x32xf32> to vector<8xf32>
    %342 = vector.shape_cast %341 : vector<8xf32> to vector<8x1xf32>
    %cst_86 = arith.constant 3.200000e+01 : f32
    %343 = vector.broadcast %cst_86 : f32 to vector<8x1xf32>
    %344 = arith.divf %342, %343 : vector<8x1xf32>
    %345 = vector.broadcast %344 : vector<8x1xf32> to vector<8x32xf32>
    %346 = arith.subf %338, %345 : vector<8x32xf32>
    %347 = arith.mulf %346, %346 : vector<8x32xf32>
    %cst_87 = arith.constant dense<0.000000e+00> : vector<8xf32>
    %348 = vector.multi_reduction <add>, %347, %cst_87 [1] : vector<8x32xf32> to vector<8xf32>
    %349 = vector.shape_cast %348 : vector<8xf32> to vector<8x1xf32>
    %cst_88 = arith.constant 3.200000e+01 : f32
    %350 = vector.broadcast %cst_88 : f32 to vector<8x1xf32>
    %351 = arith.divf %349, %350 : vector<8x1xf32>
    %352 = vector.broadcast %344 : vector<8x1xf32> to vector<8x32xf32>
    %353 = arith.subf %338, %352 : vector<8x32xf32>
    %cst_89 = arith.constant 9.99999974E-6 : f32
    %354 = vector.broadcast %cst_89 : f32 to vector<8x1xf32>
    %355 = arith.addf %351, %354 : vector<8x1xf32>
    %356 = math.rsqrt %355 : vector<8x1xf32>
    %357 = vector.broadcast %356 : vector<8x1xf32> to vector<8x32xf32>
    %358 = arith.mulf %353, %357 : vector<8x32xf32>
    %359 = vector.broadcast %339 : vector<1x32xf32> to vector<8x32xf32>
    %360 = arith.mulf %358, %359 : vector<8x32xf32>
    %361 = vector.broadcast %340 : vector<1x32xf32> to vector<8x32xf32>
    %362 = arith.addf %360, %361 : vector<8x32xf32>
    %363 = arith.negf %362 : vector<8x32xf32>
    %364 = math.exp %363 : vector<8x32xf32>
    %cst_90 = arith.constant 1.000000e+00 : f32
    %365 = vector.broadcast %cst_90 : f32 to vector<8x32xf32>
    %366 = arith.addf %365, %364 : vector<8x32xf32>
    %367 = arith.divf %365, %366 : vector<8x32xf32>
    %368 = vector.extract_strided_slice %302 {offsets = [0, 64], sizes = [8, 32], strides = [1, 1]} : vector<8x160xf32> to vector<8x32xf32>
    %369 = vector.extract_strided_slice %303 {offsets = [0, 64], sizes = [8, 32], strides = [1, 1]} : vector<8x128xf32> to vector<8x32xf32>
    %370 = arith.addf %368, %369 : vector<8x32xf32>
    %371 = vector.extract_strided_slice %5 {offsets = [0, 64], sizes = [1, 32], strides = [1, 1]} : vector<1x96xf32> to vector<1x32xf32>
    %372 = vector.extract_strided_slice %6 {offsets = [0, 64], sizes = [1, 32], strides = [1, 1]} : vector<1x96xf32> to vector<1x32xf32>
    %cst_91 = arith.constant dense<0.000000e+00> : vector<8xf32>
    %373 = vector.multi_reduction <add>, %370, %cst_91 [1] : vector<8x32xf32> to vector<8xf32>
    %374 = vector.shape_cast %373 : vector<8xf32> to vector<8x1xf32>
    %cst_92 = arith.constant 3.200000e+01 : f32
    %375 = vector.broadcast %cst_92 : f32 to vector<8x1xf32>
    %376 = arith.divf %374, %375 : vector<8x1xf32>
    %377 = vector.broadcast %376 : vector<8x1xf32> to vector<8x32xf32>
    %378 = arith.subf %370, %377 : vector<8x32xf32>
    %379 = arith.mulf %378, %378 : vector<8x32xf32>
    %cst_93 = arith.constant dense<0.000000e+00> : vector<8xf32>
    %380 = vector.multi_reduction <add>, %379, %cst_93 [1] : vector<8x32xf32> to vector<8xf32>
    %381 = vector.shape_cast %380 : vector<8xf32> to vector<8x1xf32>
    %cst_94 = arith.constant 3.200000e+01 : f32
    %382 = vector.broadcast %cst_94 : f32 to vector<8x1xf32>
    %383 = arith.divf %381, %382 : vector<8x1xf32>
    %384 = vector.broadcast %376 : vector<8x1xf32> to vector<8x32xf32>
    %385 = arith.subf %370, %384 : vector<8x32xf32>
    %cst_95 = arith.constant 9.99999974E-6 : f32
    %386 = vector.broadcast %cst_95 : f32 to vector<8x1xf32>
    %387 = arith.addf %383, %386 : vector<8x1xf32>
    %388 = math.rsqrt %387 : vector<8x1xf32>
    %389 = vector.broadcast %388 : vector<8x1xf32> to vector<8x32xf32>
    %390 = arith.mulf %385, %389 : vector<8x32xf32>
    %391 = vector.broadcast %371 : vector<1x32xf32> to vector<8x32xf32>
    %392 = arith.mulf %390, %391 : vector<8x32xf32>
    %393 = vector.broadcast %372 : vector<1x32xf32> to vector<8x32xf32>
    %394 = arith.addf %392, %393 : vector<8x32xf32>
    %395 = arith.negf %394 : vector<8x32xf32>
    %396 = math.exp %395 : vector<8x32xf32>
    %cst_96 = arith.constant 1.000000e+00 : f32
    %397 = vector.broadcast %cst_96 : f32 to vector<8x32xf32>
    %398 = arith.addf %397, %396 : vector<8x32xf32>
    %399 = arith.divf %397, %398 : vector<8x32xf32>
    %400 = vector.extract_strided_slice %302 {offsets = [0, 96], sizes = [8, 32], strides = [1, 1]} : vector<8x160xf32> to vector<8x32xf32>
    %401 = vector.extract_strided_slice %303 {offsets = [0, 96], sizes = [8, 32], strides = [1, 1]} : vector<8x128xf32> to vector<8x32xf32>
    %402 = vector.broadcast %7 : vector<1x32xf32> to vector<8x32xf32>
    %403 = arith.addf %401, %402 : vector<8x32xf32>
    %404 = arith.mulf %335, %403 : vector<8x32xf32>
    %405 = arith.addf %400, %404 : vector<8x32xf32>
    %406 = math.tanh %405 : vector<8x32xf32>
    %407 = vector.extract_strided_slice %302 {offsets = [0, 128], sizes = [8, 32], strides = [1, 1]} : vector<8x160xf32> to vector<8x32xf32>
    %408 = arith.mulf %399, %407 : vector<8x32xf32>
    %409 = arith.addf %406, %408 : vector<8x32xf32>
    %cst_97 = arith.constant 1.000000e+00 : f32
    %410 = vector.broadcast %cst_97 : f32 to vector<8x32xf32>
    %411 = arith.subf %410, %367 : vector<8x32xf32>
    %412 = arith.mulf %411, %295 : vector<8x32xf32>
    %413 = arith.mulf %367, %409 : vector<8x32xf32>
    %414 = arith.addf %412, %413 : vector<8x32xf32>
    %415 = vector.extract_strided_slice %8 {offsets = [0, 0, 0], sizes = [1, 32, 96], strides = [1, 1, 1]} : vector<2x32x96xf32> to vector<1x32x96xf32>
    %416 = vector.shape_cast %415 : vector<1x32x96xf32> to vector<32x96xf32>
    %cst_98 = arith.constant dense<0.000000e+00> : vector<8x96xf32>
    %417 = tpu.matmul %414, %416, %cst_98 {dimension_numbers = #tpu.dot_dimension_numbers<[1], [0], [0], [1], [0, 0, 1, 1], [], []>} : vector<8x32xf32>, vector<32x96xf32>, vector<8x96xf32> -> vector<8x96xf32>
    %418 = vector.extract_strided_slice %417 {offsets = [0, 0], sizes = [8, 32], strides = [1, 1]} : vector<8x96xf32> to vector<8x32xf32>
    %419 = vector.extract_strided_slice %9 {offsets = [0, 0, 0], sizes = [1, 1, 64], strides = [1, 1, 1]} : vector<2x1x64xf32> to vector<1x1x64xf32>
    %420 = vector.shape_cast %419 : vector<1x1x64xf32> to vector<1x64xf32>
    %421 = vector.extract_strided_slice %420 {offsets = [0, 0], sizes = [1, 32], strides = [1, 1]} : vector<1x64xf32> to vector<1x32xf32>
    %422 = vector.extract_strided_slice %10 {offsets = [0, 0, 0], sizes = [1, 1, 64], strides = [1, 1, 1]} : vector<2x1x64xf32> to vector<1x1x64xf32>
    %423 = vector.shape_cast %422 : vector<1x1x64xf32> to vector<1x64xf32>
    %424 = vector.extract_strided_slice %423 {offsets = [0, 0], sizes = [1, 32], strides = [1, 1]} : vector<1x64xf32> to vector<1x32xf32>
    %cst_99 = arith.constant dense<0.000000e+00> : vector<8xf32>
    %425 = vector.multi_reduction <add>, %418, %cst_99 [1] : vector<8x32xf32> to vector<8xf32>
    %426 = vector.shape_cast %425 : vector<8xf32> to vector<8x1xf32>
    %cst_100 = arith.constant 3.200000e+01 : f32
    %427 = vector.broadcast %cst_100 : f32 to vector<8x1xf32>
    %428 = arith.divf %426, %427 : vector<8x1xf32>
    %429 = vector.broadcast %428 : vector<8x1xf32> to vector<8x32xf32>
    %430 = arith.subf %418, %429 : vector<8x32xf32>
    %431 = arith.mulf %430, %430 : vector<8x32xf32>
    %cst_101 = arith.constant dense<0.000000e+00> : vector<8xf32>
    %432 = vector.multi_reduction <add>, %431, %cst_101 [1] : vector<8x32xf32> to vector<8xf32>
    %433 = vector.shape_cast %432 : vector<8xf32> to vector<8x1xf32>
    %cst_102 = arith.constant 3.200000e+01 : f32
    %434 = vector.broadcast %cst_102 : f32 to vector<8x1xf32>
    %435 = arith.divf %433, %434 : vector<8x1xf32>
    %436 = vector.broadcast %428 : vector<8x1xf32> to vector<8x32xf32>
    %437 = arith.subf %418, %436 : vector<8x32xf32>
    %cst_103 = arith.constant 9.99999974E-6 : f32
    %438 = vector.broadcast %cst_103 : f32 to vector<8x1xf32>
    %439 = arith.addf %435, %438 : vector<8x1xf32>
    %440 = math.rsqrt %439 : vector<8x1xf32>
    %441 = vector.broadcast %440 : vector<8x1xf32> to vector<8x32xf32>
    %442 = arith.mulf %437, %441 : vector<8x32xf32>
    %443 = vector.broadcast %421 : vector<1x32xf32> to vector<8x32xf32>
    %444 = arith.mulf %442, %443 : vector<8x32xf32>
    %445 = vector.broadcast %424 : vector<1x32xf32> to vector<8x32xf32>
    %446 = arith.addf %444, %445 : vector<8x32xf32>
    %447 = arith.negf %446 : vector<8x32xf32>
    %448 = math.exp %447 : vector<8x32xf32>
    %cst_104 = arith.constant 1.000000e+00 : f32
    %449 = vector.broadcast %cst_104 : f32 to vector<8x32xf32>
    %450 = arith.addf %449, %448 : vector<8x32xf32>
    %451 = arith.divf %449, %450 : vector<8x32xf32>
    %452 = vector.extract_strided_slice %417 {offsets = [0, 32], sizes = [8, 32], strides = [1, 1]} : vector<8x96xf32> to vector<8x32xf32>
    %453 = vector.extract_strided_slice %9 {offsets = [0, 0, 0], sizes = [1, 1, 64], strides = [1, 1, 1]} : vector<2x1x64xf32> to vector<1x1x64xf32>
    %454 = vector.shape_cast %453 : vector<1x1x64xf32> to vector<1x64xf32>
    %455 = vector.extract_strided_slice %454 {offsets = [0, 32], sizes = [1, 32], strides = [1, 1]} : vector<1x64xf32> to vector<1x32xf32>
    %456 = vector.extract_strided_slice %10 {offsets = [0, 0, 0], sizes = [1, 1, 64], strides = [1, 1, 1]} : vector<2x1x64xf32> to vector<1x1x64xf32>
    %457 = vector.shape_cast %456 : vector<1x1x64xf32> to vector<1x64xf32>
    %458 = vector.extract_strided_slice %457 {offsets = [0, 32], sizes = [1, 32], strides = [1, 1]} : vector<1x64xf32> to vector<1x32xf32>
    %cst_105 = arith.constant dense<0.000000e+00> : vector<8xf32>
    %459 = vector.multi_reduction <add>, %452, %cst_105 [1] : vector<8x32xf32> to vector<8xf32>
    %460 = vector.shape_cast %459 : vector<8xf32> to vector<8x1xf32>
    %cst_106 = arith.constant 3.200000e+01 : f32
    %461 = vector.broadcast %cst_106 : f32 to vector<8x1xf32>
    %462 = arith.divf %460, %461 : vector<8x1xf32>
    %463 = vector.broadcast %462 : vector<8x1xf32> to vector<8x32xf32>
    %464 = arith.subf %452, %463 : vector<8x32xf32>
    %465 = arith.mulf %464, %464 : vector<8x32xf32>
    %cst_107 = arith.constant dense<0.000000e+00> : vector<8xf32>
    %466 = vector.multi_reduction <add>, %465, %cst_107 [1] : vector<8x32xf32> to vector<8xf32>
    %467 = vector.shape_cast %466 : vector<8xf32> to vector<8x1xf32>
    %cst_108 = arith.constant 3.200000e+01 : f32
    %468 = vector.broadcast %cst_108 : f32 to vector<8x1xf32>
    %469 = arith.divf %467, %468 : vector<8x1xf32>
    %470 = vector.broadcast %462 : vector<8x1xf32> to vector<8x32xf32>
    %471 = arith.subf %452, %470 : vector<8x32xf32>
    %cst_109 = arith.constant 9.99999974E-6 : f32
    %472 = vector.broadcast %cst_109 : f32 to vector<8x1xf32>
    %473 = arith.addf %469, %472 : vector<8x1xf32>
    %474 = math.rsqrt %473 : vector<8x1xf32>
    %475 = vector.broadcast %474 : vector<8x1xf32> to vector<8x32xf32>
    %476 = arith.mulf %471, %475 : vector<8x32xf32>
    %477 = vector.broadcast %455 : vector<1x32xf32> to vector<8x32xf32>
    %478 = arith.mulf %476, %477 : vector<8x32xf32>
    %479 = vector.broadcast %458 : vector<1x32xf32> to vector<8x32xf32>
    %480 = arith.addf %478, %479 : vector<8x32xf32>
    %481 = arith.negf %480 : vector<8x32xf32>
    %482 = math.exp %481 : vector<8x32xf32>
    %cst_110 = arith.constant 1.000000e+00 : f32
    %483 = vector.broadcast %cst_110 : f32 to vector<8x32xf32>
    %484 = arith.addf %483, %482 : vector<8x32xf32>
    %485 = arith.divf %483, %484 : vector<8x32xf32>
    %486 = vector.extract_strided_slice %417 {offsets = [0, 64], sizes = [8, 32], strides = [1, 1]} : vector<8x96xf32> to vector<8x32xf32>
    %487 = vector.extract_strided_slice %11 {offsets = [0, 0, 0], sizes = [1, 1, 32], strides = [1, 1, 1]} : vector<2x1x32xf32> to vector<1x1x32xf32>
    %488 = vector.shape_cast %487 : vector<1x1x32xf32> to vector<1x32xf32>
    %489 = vector.broadcast %488 : vector<1x32xf32> to vector<8x32xf32>
    %490 = arith.addf %486, %489 : vector<8x32xf32>
    %491 = arith.mulf %451, %490 : vector<8x32xf32>
    %492 = math.tanh %491 : vector<8x32xf32>
    %cst_111 = arith.constant 1.000000e+00 : f32
    %493 = vector.broadcast %cst_111 : f32 to vector<8x32xf32>
    %494 = arith.subf %493, %485 : vector<8x32xf32>
    %495 = arith.mulf %494, %492 : vector<8x32xf32>
    %496 = arith.mulf %485, %414 : vector<8x32xf32>
    %497 = arith.addf %495, %496 : vector<8x32xf32>
    %498 = vector.extract_strided_slice %8 {offsets = [1, 0, 0], sizes = [1, 32, 96], strides = [1, 1, 1]} : vector<2x32x96xf32> to vector<1x32x96xf32>
    %499 = vector.shape_cast %498 : vector<1x32x96xf32> to vector<32x96xf32>
    %cst_112 = arith.constant dense<0.000000e+00> : vector<8x96xf32>
    %500 = tpu.matmul %497, %499, %cst_112 {dimension_numbers = #tpu.dot_dimension_numbers<[1], [0], [0], [1], [0, 0, 1, 1], [], []>} : vector<8x32xf32>, vector<32x96xf32>, vector<8x96xf32> -> vector<8x96xf32>
    %501 = vector.extract_strided_slice %500 {offsets = [0, 0], sizes = [8, 32], strides = [1, 1]} : vector<8x96xf32> to vector<8x32xf32>
    %502 = vector.extract_strided_slice %9 {offsets = [1, 0, 0], sizes = [1, 1, 64], strides = [1, 1, 1]} : vector<2x1x64xf32> to vector<1x1x64xf32>
    %503 = vector.shape_cast %502 : vector<1x1x64xf32> to vector<1x64xf32>
    %504 = vector.extract_strided_slice %503 {offsets = [0, 0], sizes = [1, 32], strides = [1, 1]} : vector<1x64xf32> to vector<1x32xf32>
    %505 = vector.extract_strided_slice %10 {offsets = [1, 0, 0], sizes = [1, 1, 64], strides = [1, 1, 1]} : vector<2x1x64xf32> to vector<1x1x64xf32>
    %506 = vector.shape_cast %505 : vector<1x1x64xf32> to vector<1x64xf32>
    %507 = vector.extract_strided_slice %506 {offsets = [0, 0], sizes = [1, 32], strides = [1, 1]} : vector<1x64xf32> to vector<1x32xf32>
    %cst_113 = arith.constant dense<0.000000e+00> : vector<8xf32>
    %508 = vector.multi_reduction <add>, %501, %cst_113 [1] : vector<8x32xf32> to vector<8xf32>
    %509 = vector.shape_cast %508 : vector<8xf32> to vector<8x1xf32>
    %cst_114 = arith.constant 3.200000e+01 : f32
    %510 = vector.broadcast %cst_114 : f32 to vector<8x1xf32>
    %511 = arith.divf %509, %510 : vector<8x1xf32>
    %512 = vector.broadcast %511 : vector<8x1xf32> to vector<8x32xf32>
    %513 = arith.subf %501, %512 : vector<8x32xf32>
    %514 = arith.mulf %513, %513 : vector<8x32xf32>
    %cst_115 = arith.constant dense<0.000000e+00> : vector<8xf32>
    %515 = vector.multi_reduction <add>, %514, %cst_115 [1] : vector<8x32xf32> to vector<8xf32>
    %516 = vector.shape_cast %515 : vector<8xf32> to vector<8x1xf32>
    %cst_116 = arith.constant 3.200000e+01 : f32
    %517 = vector.broadcast %cst_116 : f32 to vector<8x1xf32>
    %518 = arith.divf %516, %517 : vector<8x1xf32>
    %519 = vector.broadcast %511 : vector<8x1xf32> to vector<8x32xf32>
    %520 = arith.subf %501, %519 : vector<8x32xf32>
    %cst_117 = arith.constant 9.99999974E-6 : f32
    %521 = vector.broadcast %cst_117 : f32 to vector<8x1xf32>
    %522 = arith.addf %518, %521 : vector<8x1xf32>
    %523 = math.rsqrt %522 : vector<8x1xf32>
    %524 = vector.broadcast %523 : vector<8x1xf32> to vector<8x32xf32>
    %525 = arith.mulf %520, %524 : vector<8x32xf32>
    %526 = vector.broadcast %504 : vector<1x32xf32> to vector<8x32xf32>
    %527 = arith.mulf %525, %526 : vector<8x32xf32>
    %528 = vector.broadcast %507 : vector<1x32xf32> to vector<8x32xf32>
    %529 = arith.addf %527, %528 : vector<8x32xf32>
    %530 = arith.negf %529 : vector<8x32xf32>
    %531 = math.exp %530 : vector<8x32xf32>
    %cst_118 = arith.constant 1.000000e+00 : f32
    %532 = vector.broadcast %cst_118 : f32 to vector<8x32xf32>
    %533 = arith.addf %532, %531 : vector<8x32xf32>
    %534 = arith.divf %532, %533 : vector<8x32xf32>
    %535 = vector.extract_strided_slice %500 {offsets = [0, 32], sizes = [8, 32], strides = [1, 1]} : vector<8x96xf32> to vector<8x32xf32>
    %536 = vector.extract_strided_slice %9 {offsets = [1, 0, 0], sizes = [1, 1, 64], strides = [1, 1, 1]} : vector<2x1x64xf32> to vector<1x1x64xf32>
    %537 = vector.shape_cast %536 : vector<1x1x64xf32> to vector<1x64xf32>
    %538 = vector.extract_strided_slice %537 {offsets = [0, 32], sizes = [1, 32], strides = [1, 1]} : vector<1x64xf32> to vector<1x32xf32>
    %539 = vector.extract_strided_slice %10 {offsets = [1, 0, 0], sizes = [1, 1, 64], strides = [1, 1, 1]} : vector<2x1x64xf32> to vector<1x1x64xf32>
    %540 = vector.shape_cast %539 : vector<1x1x64xf32> to vector<1x64xf32>
    %541 = vector.extract_strided_slice %540 {offsets = [0, 32], sizes = [1, 32], strides = [1, 1]} : vector<1x64xf32> to vector<1x32xf32>
    %cst_119 = arith.constant dense<0.000000e+00> : vector<8xf32>
    %542 = vector.multi_reduction <add>, %535, %cst_119 [1] : vector<8x32xf32> to vector<8xf32>
    %543 = vector.shape_cast %542 : vector<8xf32> to vector<8x1xf32>
    %cst_120 = arith.constant 3.200000e+01 : f32
    %544 = vector.broadcast %cst_120 : f32 to vector<8x1xf32>
    %545 = arith.divf %543, %544 : vector<8x1xf32>
    %546 = vector.broadcast %545 : vector<8x1xf32> to vector<8x32xf32>
    %547 = arith.subf %535, %546 : vector<8x32xf32>
    %548 = arith.mulf %547, %547 : vector<8x32xf32>
    %cst_121 = arith.constant dense<0.000000e+00> : vector<8xf32>
    %549 = vector.multi_reduction <add>, %548, %cst_121 [1] : vector<8x32xf32> to vector<8xf32>
    %550 = vector.shape_cast %549 : vector<8xf32> to vector<8x1xf32>
    %cst_122 = arith.constant 3.200000e+01 : f32
    %551 = vector.broadcast %cst_122 : f32 to vector<8x1xf32>
    %552 = arith.divf %550, %551 : vector<8x1xf32>
    %553 = vector.broadcast %545 : vector<8x1xf32> to vector<8x32xf32>
    %554 = arith.subf %535, %553 : vector<8x32xf32>
    %cst_123 = arith.constant 9.99999974E-6 : f32
    %555 = vector.broadcast %cst_123 : f32 to vector<8x1xf32>
    %556 = arith.addf %552, %555 : vector<8x1xf32>
    %557 = math.rsqrt %556 : vector<8x1xf32>
    %558 = vector.broadcast %557 : vector<8x1xf32> to vector<8x32xf32>
    %559 = arith.mulf %554, %558 : vector<8x32xf32>
    %560 = vector.broadcast %538 : vector<1x32xf32> to vector<8x32xf32>
    %561 = arith.mulf %559, %560 : vector<8x32xf32>
    %562 = vector.broadcast %541 : vector<1x32xf32> to vector<8x32xf32>
    %563 = arith.addf %561, %562 : vector<8x32xf32>
    %564 = arith.negf %563 : vector<8x32xf32>
    %565 = math.exp %564 : vector<8x32xf32>
    %cst_124 = arith.constant 1.000000e+00 : f32
    %566 = vector.broadcast %cst_124 : f32 to vector<8x32xf32>
    %567 = arith.addf %566, %565 : vector<8x32xf32>
    %568 = arith.divf %566, %567 : vector<8x32xf32>
    %569 = vector.extract_strided_slice %500 {offsets = [0, 64], sizes = [8, 32], strides = [1, 1]} : vector<8x96xf32> to vector<8x32xf32>
    %570 = vector.extract_strided_slice %11 {offsets = [1, 0, 0], sizes = [1, 1, 32], strides = [1, 1, 1]} : vector<2x1x32xf32> to vector<1x1x32xf32>
    %571 = vector.shape_cast %570 : vector<1x1x32xf32> to vector<1x32xf32>
    %572 = vector.broadcast %571 : vector<1x32xf32> to vector<8x32xf32>
    %573 = arith.addf %569, %572 : vector<8x32xf32>
    %574 = arith.mulf %534, %573 : vector<8x32xf32>
    %575 = math.tanh %574 : vector<8x32xf32>
    %cst_125 = arith.constant 1.000000e+00 : f32
    %576 = vector.broadcast %cst_125 : f32 to vector<8x32xf32>
    %577 = arith.subf %576, %568 : vector<8x32xf32>
    %578 = arith.mulf %577, %575 : vector<8x32xf32>
    %579 = arith.mulf %568, %497 : vector<8x32xf32>
    %580 = arith.addf %578, %579 : vector<8x32xf32>
    %581 = arith.index_cast %299 : i32 to index
    %c0_126 = arith.constant 0 : index
    %582 = vector.load %arg11[%581, %c0_126] : memref<64x32xf32, #tpu.memory_space<vmem>>, vector<8x32xf32>
    tpu.vector_store %arg11[%581, %c0_126], %580 {strides = array<i32>} : memref<64x32xf32, #tpu.memory_space<vmem>>, vector<8x32xf32>,
    %c2_i32 = arith.constant 2 : i32
    %c8_i32_127 = arith.constant 8 : i32
    %583 = arith.muli %c2_i32, %c8_i32_127 : i32
    %584 = tpu.assume_multiple %583, 8 : i32
    %585 = arith.index_cast %584 : i32 to index
    %c0_128 = arith.constant 0 : index
    %586 = vector.load %arg1[%585, %c0_128] : memref<64x16xf32, #tpu.memory_space<vmem>>, vector<8x16xf32>
    %cst_129 = arith.constant dense<0.000000e+00> : vector<8x160xf32>
    %587 = tpu.matmul %586, %3, %cst_129 {dimension_numbers = #tpu.dot_dimension_numbers<[1], [0], [0], [1], [0, 0, 1, 1], [], []>} : vector<8x16xf32>, vector<16x160xf32>, vector<8x160xf32> -> vector<8x160xf32>
    %cst_130 = arith.constant dense<0.000000e+00> : vector<8x128xf32>
    %588 = tpu.matmul %580, %4, %cst_130 {dimension_numbers = #tpu.dot_dimension_numbers<[1], [0], [0], [1], [0, 0, 1, 1], [], []>} : vector<8x32xf32>, vector<32x128xf32>, vector<8x128xf32> -> vector<8x128xf32>
    %589 = vector.extract_strided_slice %587 {offsets = [0, 0], sizes = [8, 32], strides = [1, 1]} : vector<8x160xf32> to vector<8x32xf32>
    %590 = vector.extract_strided_slice %588 {offsets = [0, 0], sizes = [8, 32], strides = [1, 1]} : vector<8x128xf32> to vector<8x32xf32>
    %591 = arith.addf %589, %590 : vector<8x32xf32>
    %592 = vector.extract_strided_slice %5 {offsets = [0, 0], sizes = [1, 32], strides = [1, 1]} : vector<1x96xf32> to vector<1x32xf32>
    %593 = vector.extract_strided_slice %6 {offsets = [0, 0], sizes = [1, 32], strides = [1, 1]} : vector<1x96xf32> to vector<1x32xf32>
    %cst_131 = arith.constant dense<0.000000e+00> : vector<8xf32>
    %594 = vector.multi_reduction <add>, %591, %cst_131 [1] : vector<8x32xf32> to vector<8xf32>
    %595 = vector.shape_cast %594 : vector<8xf32> to vector<8x1xf32>
    %cst_132 = arith.constant 3.200000e+01 : f32
    %596 = vector.broadcast %cst_132 : f32 to vector<8x1xf32>
    %597 = arith.divf %595, %596 : vector<8x1xf32>
    %598 = vector.broadcast %597 : vector<8x1xf32> to vector<8x32xf32>
    %599 = arith.subf %591, %598 : vector<8x32xf32>
    %600 = arith.mulf %599, %599 : vector<8x32xf32>
    %cst_133 = arith.constant dense<0.000000e+00> : vector<8xf32>
    %601 = vector.multi_reduction <add>, %600, %cst_133 [1] : vector<8x32xf32> to vector<8xf32>
    %602 = vector.shape_cast %601 : vector<8xf32> to vector<8x1xf32>
    %cst_134 = arith.constant 3.200000e+01 : f32
    %603 = vector.broadcast %cst_134 : f32 to vector<8x1xf32>
    %604 = arith.divf %602, %603 : vector<8x1xf32>
    %605 = vector.broadcast %597 : vector<8x1xf32> to vector<8x32xf32>
    %606 = arith.subf %591, %605 : vector<8x32xf32>
    %cst_135 = arith.constant 9.99999974E-6 : f32
    %607 = vector.broadcast %cst_135 : f32 to vector<8x1xf32>
    %608 = arith.addf %604, %607 : vector<8x1xf32>
    %609 = math.rsqrt %608 : vector<8x1xf32>
    %610 = vector.broadcast %609 : vector<8x1xf32> to vector<8x32xf32>
    %611 = arith.mulf %606, %610 : vector<8x32xf32>
    %612 = vector.broadcast %592 : vector<1x32xf32> to vector<8x32xf32>
    %613 = arith.mulf %611, %612 : vector<8x32xf32>
    %614 = vector.broadcast %593 : vector<1x32xf32> to vector<8x32xf32>
    %615 = arith.addf %613, %614 : vector<8x32xf32>
    %616 = arith.negf %615 : vector<8x32xf32>
    %617 = math.exp %616 : vector<8x32xf32>
    %cst_136 = arith.constant 1.000000e+00 : f32
    %618 = vector.broadcast %cst_136 : f32 to vector<8x32xf32>
    %619 = arith.addf %618, %617 : vector<8x32xf32>
    %620 = arith.divf %618, %619 : vector<8x32xf32>
    %621 = vector.extract_strided_slice %587 {offsets = [0, 32], sizes = [8, 32], strides = [1, 1]} : vector<8x160xf32> to vector<8x32xf32>
    %622 = vector.extract_strided_slice %588 {offsets = [0, 32], sizes = [8, 32], strides = [1, 1]} : vector<8x128xf32> to vector<8x32xf32>
    %623 = arith.addf %621, %622 : vector<8x32xf32>
    %624 = vector.extract_strided_slice %5 {offsets = [0, 32], sizes = [1, 32], strides = [1, 1]} : vector<1x96xf32> to vector<1x32xf32>
    %625 = vector.extract_strided_slice %6 {offsets = [0, 32], sizes = [1, 32], strides = [1, 1]} : vector<1x96xf32> to vector<1x32xf32>
    %cst_137 = arith.constant dense<0.000000e+00> : vector<8xf32>
    %626 = vector.multi_reduction <add>, %623, %cst_137 [1] : vector<8x32xf32> to vector<8xf32>
    %627 = vector.shape_cast %626 : vector<8xf32> to vector<8x1xf32>
    %cst_138 = arith.constant 3.200000e+01 : f32
    %628 = vector.broadcast %cst_138 : f32 to vector<8x1xf32>
    %629 = arith.divf %627, %628 : vector<8x1xf32>
    %630 = vector.broadcast %629 : vector<8x1xf32> to vector<8x32xf32>
    %631 = arith.subf %623, %630 : vector<8x32xf32>
    %632 = arith.mulf %631, %631 : vector<8x32xf32>
    %cst_139 = arith.constant dense<0.000000e+00> : vector<8xf32>
    %633 = vector.multi_reduction <add>, %632, %cst_139 [1] : vector<8x32xf32> to vector<8xf32>
    %634 = vector.shape_cast %633 : vector<8xf32> to vector<8x1xf32>
    %cst_140 = arith.constant 3.200000e+01 : f32
    %635 = vector.broadcast %cst_140 : f32 to vector<8x1xf32>
    %636 = arith.divf %634, %635 : vector<8x1xf32>
    %637 = vector.broadcast %629 : vector<8x1xf32> to vector<8x32xf32>
    %638 = arith.subf %623, %637 : vector<8x32xf32>
    %cst_141 = arith.constant 9.99999974E-6 : f32
    %639 = vector.broadcast %cst_141 : f32 to vector<8x1xf32>
    %640 = arith.addf %636, %639 : vector<8x1xf32>
    %641 = math.rsqrt %640 : vector<8x1xf32>
    %642 = vector.broadcast %641 : vector<8x1xf32> to vector<8x32xf32>
    %643 = arith.mulf %638, %642 : vector<8x32xf32>
    %644 = vector.broadcast %624 : vector<1x32xf32> to vector<8x32xf32>
    %645 = arith.mulf %643, %644 : vector<8x32xf32>
    %646 = vector.broadcast %625 : vector<1x32xf32> to vector<8x32xf32>
    %647 = arith.addf %645, %646 : vector<8x32xf32>
    %648 = arith.negf %647 : vector<8x32xf32>
    %649 = math.exp %648 : vector<8x32xf32>
    %cst_142 = arith.constant 1.000000e+00 : f32
    %650 = vector.broadcast %cst_142 : f32 to vector<8x32xf32>
    %651 = arith.addf %650, %649 : vector<8x32xf32>
    %652 = arith.divf %650, %651 : vector<8x32xf32>
    %653 = vector.extract_strided_slice %587 {offsets = [0, 64], sizes = [8, 32], strides = [1, 1]} : vector<8x160xf32> to vector<8x32xf32>
    %654 = vector.extract_strided_slice %588 {offsets = [0, 64], sizes = [8, 32], strides = [1, 1]} : vector<8x128xf32> to vector<8x32xf32>
    %655 = arith.addf %653, %654 : vector<8x32xf32>
    %656 = vector.extract_strided_slice %5 {offsets = [0, 64], sizes = [1, 32], strides = [1, 1]} : vector<1x96xf32> to vector<1x32xf32>
    %657 = vector.extract_strided_slice %6 {offsets = [0, 64], sizes = [1, 32], strides = [1, 1]} : vector<1x96xf32> to vector<1x32xf32>
    %cst_143 = arith.constant dense<0.000000e+00> : vector<8xf32>
    %658 = vector.multi_reduction <add>, %655, %cst_143 [1] : vector<8x32xf32> to vector<8xf32>
    %659 = vector.shape_cast %658 : vector<8xf32> to vector<8x1xf32>
    %cst_144 = arith.constant 3.200000e+01 : f32
    %660 = vector.broadcast %cst_144 : f32 to vector<8x1xf32>
    %661 = arith.divf %659, %660 : vector<8x1xf32>
    %662 = vector.broadcast %661 : vector<8x1xf32> to vector<8x32xf32>
    %663 = arith.subf %655, %662 : vector<8x32xf32>
    %664 = arith.mulf %663, %663 : vector<8x32xf32>
    %cst_145 = arith.constant dense<0.000000e+00> : vector<8xf32>
    %665 = vector.multi_reduction <add>, %664, %cst_145 [1] : vector<8x32xf32> to vector<8xf32>
    %666 = vector.shape_cast %665 : vector<8xf32> to vector<8x1xf32>
    %cst_146 = arith.constant 3.200000e+01 : f32
    %667 = vector.broadcast %cst_146 : f32 to vector<8x1xf32>
    %668 = arith.divf %666, %667 : vector<8x1xf32>
    %669 = vector.broadcast %661 : vector<8x1xf32> to vector<8x32xf32>
    %670 = arith.subf %655, %669 : vector<8x32xf32>
    %cst_147 = arith.constant 9.99999974E-6 : f32
    %671 = vector.broadcast %cst_147 : f32 to vector<8x1xf32>
    %672 = arith.addf %668, %671 : vector<8x1xf32>
    %673 = math.rsqrt %672 : vector<8x1xf32>
    %674 = vector.broadcast %673 : vector<8x1xf32> to vector<8x32xf32>
    %675 = arith.mulf %670, %674 : vector<8x32xf32>
    %676 = vector.broadcast %656 : vector<1x32xf32> to vector<8x32xf32>
    %677 = arith.mulf %675, %676 : vector<8x32xf32>
    %678 = vector.broadcast %657 : vector<1x32xf32> to vector<8x32xf32>
    %679 = arith.addf %677, %678 : vector<8x32xf32>
    %680 = arith.negf %679 : vector<8x32xf32>
    %681 = math.exp %680 : vector<8x32xf32>
    %cst_148 = arith.constant 1.000000e+00 : f32
    %682 = vector.broadcast %cst_148 : f32 to vector<8x32xf32>
    %683 = arith.addf %682, %681 : vector<8x32xf32>
    %684 = arith.divf %682, %683 : vector<8x32xf32>
    %685 = vector.extract_strided_slice %587 {offsets = [0, 96], sizes = [8, 32], strides = [1, 1]} : vector<8x160xf32> to vector<8x32xf32>
    %686 = vector.extract_strided_slice %588 {offsets = [0, 96], sizes = [8, 32], strides = [1, 1]} : vector<8x128xf32> to vector<8x32xf32>
    %687 = vector.broadcast %7 : vector<1x32xf32> to vector<8x32xf32>
    %688 = arith.addf %686, %687 : vector<8x32xf32>
    %689 = arith.mulf %620, %688 : vector<8x32xf32>
    %690 = arith.addf %685, %689 : vector<8x32xf32>
    %691 = math.tanh %690 : vector<8x32xf32>
    %692 = vector.extract_strided_slice %587 {offsets = [0, 128], sizes = [8, 32], strides = [1, 1]} : vector<8x160xf32> to vector<8x32xf32>
    %693 = arith.mulf %684, %692 : vector<8x32xf32>
    %694 = arith.addf %691, %693 : vector<8x32xf32>
    %cst_149 = arith.constant 1.000000e+00 : f32
    %695 = vector.broadcast %cst_149 : f32 to vector<8x32xf32>
    %696 = arith.subf %695, %652 : vector<8x32xf32>
    %697 = arith.mulf %696, %580 : vector<8x32xf32>
    %698 = arith.mulf %652, %694 : vector<8x32xf32>
    %699 = arith.addf %697, %698 : vector<8x32xf32>
    %700 = vector.extract_strided_slice %8 {offsets = [0, 0, 0], sizes = [1, 32, 96], strides = [1, 1, 1]} : vector<2x32x96xf32> to vector<1x32x96xf32>
    %701 = vector.shape_cast %700 : vector<1x32x96xf32> to vector<32x96xf32>
    %cst_150 = arith.constant dense<0.000000e+00> : vector<8x96xf32>
    %702 = tpu.matmul %699, %701, %cst_150 {dimension_numbers = #tpu.dot_dimension_numbers<[1], [0], [0], [1], [0, 0, 1, 1], [], []>} : vector<8x32xf32>, vector<32x96xf32>, vector<8x96xf32> -> vector<8x96xf32>
    %703 = vector.extract_strided_slice %702 {offsets = [0, 0], sizes = [8, 32], strides = [1, 1]} : vector<8x96xf32> to vector<8x32xf32>
    %704 = vector.extract_strided_slice %9 {offsets = [0, 0, 0], sizes = [1, 1, 64], strides = [1, 1, 1]} : vector<2x1x64xf32> to vector<1x1x64xf32>
    %705 = vector.shape_cast %704 : vector<1x1x64xf32> to vector<1x64xf32>
    %706 = vector.extract_strided_slice %705 {offsets = [0, 0], sizes = [1, 32], strides = [1, 1]} : vector<1x64xf32> to vector<1x32xf32>
    %707 = vector.extract_strided_slice %10 {offsets = [0, 0, 0], sizes = [1, 1, 64], strides = [1, 1, 1]} : vector<2x1x64xf32> to vector<1x1x64xf32>
    %708 = vector.shape_cast %707 : vector<1x1x64xf32> to vector<1x64xf32>
    %709 = vector.extract_strided_slice %708 {offsets = [0, 0], sizes = [1, 32], strides = [1, 1]} : vector<1x64xf32> to vector<1x32xf32>
    %cst_151 = arith.constant dense<0.000000e+00> : vector<8xf32>
    %710 = vector.multi_reduction <add>, %703, %cst_151 [1] : vector<8x32xf32> to vector<8xf32>
    %711 = vector.shape_cast %710 : vector<8xf32> to vector<8x1xf32>
    %cst_152 = arith.constant 3.200000e+01 : f32
    %712 = vector.broadcast %cst_152 : f32 to vector<8x1xf32>
    %713 = arith.divf %711, %712 : vector<8x1xf32>
    %714 = vector.broadcast %713 : vector<8x1xf32> to vector<8x32xf32>
    %715 = arith.subf %703, %714 : vector<8x32xf32>
    %716 = arith.mulf %715, %715 : vector<8x32xf32>
    %cst_153 = arith.constant dense<0.000000e+00> : vector<8xf32>
    %717 = vector.multi_reduction <add>, %716, %cst_153 [1] : vector<8x32xf32> to vector<8xf32>
    %718 = vector.shape_cast %717 : vector<8xf32> to vector<8x1xf32>
    %cst_154 = arith.constant 3.200000e+01 : f32
    %719 = vector.broadcast %cst_154 : f32 to vector<8x1xf32>
    %720 = arith.divf %718, %719 : vector<8x1xf32>
    %721 = vector.broadcast %713 : vector<8x1xf32> to vector<8x32xf32>
    %722 = arith.subf %703, %721 : vector<8x32xf32>
    %cst_155 = arith.constant 9.99999974E-6 : f32
    %723 = vector.broadcast %cst_155 : f32 to vector<8x1xf32>
    %724 = arith.addf %720, %723 : vector<8x1xf32>
    %725 = math.rsqrt %724 : vector<8x1xf32>
    %726 = vector.broadcast %725 : vector<8x1xf32> to vector<8x32xf32>
    %727 = arith.mulf %722, %726 : vector<8x32xf32>
    %728 = vector.broadcast %706 : vector<1x32xf32> to vector<8x32xf32>
    %729 = arith.mulf %727, %728 : vector<8x32xf32>
    %730 = vector.broadcast %709 : vector<1x32xf32> to vector<8x32xf32>
    %731 = arith.addf %729, %730 : vector<8x32xf32>
    %732 = arith.negf %731 : vector<8x32xf32>
    %733 = math.exp %732 : vector<8x32xf32>
    %cst_156 = arith.constant 1.000000e+00 : f32
    %734 = vector.broadcast %cst_156 : f32 to vector<8x32xf32>
    %735 = arith.addf %734, %733 : vector<8x32xf32>
    %736 = arith.divf %734, %735 : vector<8x32xf32>
    %737 = vector.extract_strided_slice %702 {offsets = [0, 32], sizes = [8, 32], strides = [1, 1]} : vector<8x96xf32> to vector<8x32xf32>
    %738 = vector.extract_strided_slice %9 {offsets = [0, 0, 0], sizes = [1, 1, 64], strides = [1, 1, 1]} : vector<2x1x64xf32> to vector<1x1x64xf32>
    %739 = vector.shape_cast %738 : vector<1x1x64xf32> to vector<1x64xf32>
    %740 = vector.extract_strided_slice %739 {offsets = [0, 32], sizes = [1, 32], strides = [1, 1]} : vector<1x64xf32> to vector<1x32xf32>
    %741 = vector.extract_strided_slice %10 {offsets = [0, 0, 0], sizes = [1, 1, 64], strides = [1, 1, 1]} : vector<2x1x64xf32> to vector<1x1x64xf32>
    %742 = vector.shape_cast %741 : vector<1x1x64xf32> to vector<1x64xf32>
    %743 = vector.extract_strided_slice %742 {offsets = [0, 32], sizes = [1, 32], strides = [1, 1]} : vector<1x64xf32> to vector<1x32xf32>
    %cst_157 = arith.constant dense<0.000000e+00> : vector<8xf32>
    %744 = vector.multi_reduction <add>, %737, %cst_157 [1] : vector<8x32xf32> to vector<8xf32>
    %745 = vector.shape_cast %744 : vector<8xf32> to vector<8x1xf32>
    %cst_158 = arith.constant 3.200000e+01 : f32
    %746 = vector.broadcast %cst_158 : f32 to vector<8x1xf32>
    %747 = arith.divf %745, %746 : vector<8x1xf32>
    %748 = vector.broadcast %747 : vector<8x1xf32> to vector<8x32xf32>
    %749 = arith.subf %737, %748 : vector<8x32xf32>
    %750 = arith.mulf %749, %749 : vector<8x32xf32>
    %cst_159 = arith.constant dense<0.000000e+00> : vector<8xf32>
    %751 = vector.multi_reduction <add>, %750, %cst_159 [1] : vector<8x32xf32> to vector<8xf32>
    %752 = vector.shape_cast %751 : vector<8xf32> to vector<8x1xf32>
    %cst_160 = arith.constant 3.200000e+01 : f32
    %753 = vector.broadcast %cst_160 : f32 to vector<8x1xf32>
    %754 = arith.divf %752, %753 : vector<8x1xf32>
    %755 = vector.broadcast %747 : vector<8x1xf32> to vector<8x32xf32>
    %756 = arith.subf %737, %755 : vector<8x32xf32>
    %cst_161 = arith.constant 9.99999974E-6 : f32
    %757 = vector.broadcast %cst_161 : f32 to vector<8x1xf32>
    %758 = arith.addf %754, %757 : vector<8x1xf32>
    %759 = math.rsqrt %758 : vector<8x1xf32>
    %760 = vector.broadcast %759 : vector<8x1xf32> to vector<8x32xf32>
    %761 = arith.mulf %756, %760 : vector<8x32xf32>
    %762 = vector.broadcast %740 : vector<1x32xf32> to vector<8x32xf32>
    %763 = arith.mulf %761, %762 : vector<8x32xf32>
    %764 = vector.broadcast %743 : vector<1x32xf32> to vector<8x32xf32>
    %765 = arith.addf %763, %764 : vector<8x32xf32>
    %766 = arith.negf %765 : vector<8x32xf32>
    %767 = math.exp %766 : vector<8x32xf32>
    %cst_162 = arith.constant 1.000000e+00 : f32
    %768 = vector.broadcast %cst_162 : f32 to vector<8x32xf32>
    %769 = arith.addf %768, %767 : vector<8x32xf32>
    %770 = arith.divf %768, %769 : vector<8x32xf32>
    %771 = vector.extract_strided_slice %702 {offsets = [0, 64], sizes = [8, 32], strides = [1, 1]} : vector<8x96xf32> to vector<8x32xf32>
    %772 = vector.extract_strided_slice %11 {offsets = [0, 0, 0], sizes = [1, 1, 32], strides = [1, 1, 1]} : vector<2x1x32xf32> to vector<1x1x32xf32>
    %773 = vector.shape_cast %772 : vector<1x1x32xf32> to vector<1x32xf32>
    %774 = vector.broadcast %773 : vector<1x32xf32> to vector<8x32xf32>
    %775 = arith.addf %771, %774 : vector<8x32xf32>
    %776 = arith.mulf %736, %775 : vector<8x32xf32>
    %777 = math.tanh %776 : vector<8x32xf32>
    %cst_163 = arith.constant 1.000000e+00 : f32
    %778 = vector.broadcast %cst_163 : f32 to vector<8x32xf32>
    %779 = arith.subf %778, %770 : vector<8x32xf32>
    %780 = arith.mulf %779, %777 : vector<8x32xf32>
    %781 = arith.mulf %770, %699 : vector<8x32xf32>
    %782 = arith.addf %780, %781 : vector<8x32xf32>
    %783 = vector.extract_strided_slice %8 {offsets = [1, 0, 0], sizes = [1, 32, 96], strides = [1, 1, 1]} : vector<2x32x96xf32> to vector<1x32x96xf32>
    %784 = vector.shape_cast %783 : vector<1x32x96xf32> to vector<32x96xf32>
    %cst_164 = arith.constant dense<0.000000e+00> : vector<8x96xf32>
    %785 = tpu.matmul %782, %784, %cst_164 {dimension_numbers = #tpu.dot_dimension_numbers<[1], [0], [0], [1], [0, 0, 1, 1], [], []>} : vector<8x32xf32>, vector<32x96xf32>, vector<8x96xf32> -> vector<8x96xf32>
    %786 = vector.extract_strided_slice %785 {offsets = [0, 0], sizes = [8, 32], strides = [1, 1]} : vector<8x96xf32> to vector<8x32xf32>
    %787 = vector.extract_strided_slice %9 {offsets = [1, 0, 0], sizes = [1, 1, 64], strides = [1, 1, 1]} : vector<2x1x64xf32> to vector<1x1x64xf32>
    %788 = vector.shape_cast %787 : vector<1x1x64xf32> to vector<1x64xf32>
    %789 = vector.extract_strided_slice %788 {offsets = [0, 0], sizes = [1, 32], strides = [1, 1]} : vector<1x64xf32> to vector<1x32xf32>
    %790 = vector.extract_strided_slice %10 {offsets = [1, 0, 0], sizes = [1, 1, 64], strides = [1, 1, 1]} : vector<2x1x64xf32> to vector<1x1x64xf32>
    %791 = vector.shape_cast %790 : vector<1x1x64xf32> to vector<1x64xf32>
    %792 = vector.extract_strided_slice %791 {offsets = [0, 0], sizes = [1, 32], strides = [1, 1]} : vector<1x64xf32> to vector<1x32xf32>
    %cst_165 = arith.constant dense<0.000000e+00> : vector<8xf32>
    %793 = vector.multi_reduction <add>, %786, %cst_165 [1] : vector<8x32xf32> to vector<8xf32>
    %794 = vector.shape_cast %793 : vector<8xf32> to vector<8x1xf32>
    %cst_166 = arith.constant 3.200000e+01 : f32
    %795 = vector.broadcast %cst_166 : f32 to vector<8x1xf32>
    %796 = arith.divf %794, %795 : vector<8x1xf32>
    %797 = vector.broadcast %796 : vector<8x1xf32> to vector<8x32xf32>
    %798 = arith.subf %786, %797 : vector<8x32xf32>
    %799 = arith.mulf %798, %798 : vector<8x32xf32>
    %cst_167 = arith.constant dense<0.000000e+00> : vector<8xf32>
    %800 = vector.multi_reduction <add>, %799, %cst_167 [1] : vector<8x32xf32> to vector<8xf32>
    %801 = vector.shape_cast %800 : vector<8xf32> to vector<8x1xf32>
    %cst_168 = arith.constant 3.200000e+01 : f32
    %802 = vector.broadcast %cst_168 : f32 to vector<8x1xf32>
    %803 = arith.divf %801, %802 : vector<8x1xf32>
    %804 = vector.broadcast %796 : vector<8x1xf32> to vector<8x32xf32>
    %805 = arith.subf %786, %804 : vector<8x32xf32>
    %cst_169 = arith.constant 9.99999974E-6 : f32
    %806 = vector.broadcast %cst_169 : f32 to vector<8x1xf32>
    %807 = arith.addf %803, %806 : vector<8x1xf32>
    %808 = math.rsqrt %807 : vector<8x1xf32>
    %809 = vector.broadcast %808 : vector<8x1xf32> to vector<8x32xf32>
    %810 = arith.mulf %805, %809 : vector<8x32xf32>
    %811 = vector.broadcast %789 : vector<1x32xf32> to vector<8x32xf32>
    %812 = arith.mulf %810, %811 : vector<8x32xf32>
    %813 = vector.broadcast %792 : vector<1x32xf32> to vector<8x32xf32>
    %814 = arith.addf %812, %813 : vector<8x32xf32>
    %815 = arith.negf %814 : vector<8x32xf32>
    %816 = math.exp %815 : vector<8x32xf32>
    %cst_170 = arith.constant 1.000000e+00 : f32
    %817 = vector.broadcast %cst_170 : f32 to vector<8x32xf32>
    %818 = arith.addf %817, %816 : vector<8x32xf32>
    %819 = arith.divf %817, %818 : vector<8x32xf32>
    %820 = vector.extract_strided_slice %785 {offsets = [0, 32], sizes = [8, 32], strides = [1, 1]} : vector<8x96xf32> to vector<8x32xf32>
    %821 = vector.extract_strided_slice %9 {offsets = [1, 0, 0], sizes = [1, 1, 64], strides = [1, 1, 1]} : vector<2x1x64xf32> to vector<1x1x64xf32>
    %822 = vector.shape_cast %821 : vector<1x1x64xf32> to vector<1x64xf32>
    %823 = vector.extract_strided_slice %822 {offsets = [0, 32], sizes = [1, 32], strides = [1, 1]} : vector<1x64xf32> to vector<1x32xf32>
    %824 = vector.extract_strided_slice %10 {offsets = [1, 0, 0], sizes = [1, 1, 64], strides = [1, 1, 1]} : vector<2x1x64xf32> to vector<1x1x64xf32>
    %825 = vector.shape_cast %824 : vector<1x1x64xf32> to vector<1x64xf32>
    %826 = vector.extract_strided_slice %825 {offsets = [0, 32], sizes = [1, 32], strides = [1, 1]} : vector<1x64xf32> to vector<1x32xf32>
    %cst_171 = arith.constant dense<0.000000e+00> : vector<8xf32>
    %827 = vector.multi_reduction <add>, %820, %cst_171 [1] : vector<8x32xf32> to vector<8xf32>
    %828 = vector.shape_cast %827 : vector<8xf32> to vector<8x1xf32>
    %cst_172 = arith.constant 3.200000e+01 : f32
    %829 = vector.broadcast %cst_172 : f32 to vector<8x1xf32>
    %830 = arith.divf %828, %829 : vector<8x1xf32>
    %831 = vector.broadcast %830 : vector<8x1xf32> to vector<8x32xf32>
    %832 = arith.subf %820, %831 : vector<8x32xf32>
    %833 = arith.mulf %832, %832 : vector<8x32xf32>
    %cst_173 = arith.constant dense<0.000000e+00> : vector<8xf32>
    %834 = vector.multi_reduction <add>, %833, %cst_173 [1] : vector<8x32xf32> to vector<8xf32>
    %835 = vector.shape_cast %834 : vector<8xf32> to vector<8x1xf32>
    %cst_174 = arith.constant 3.200000e+01 : f32
    %836 = vector.broadcast %cst_174 : f32 to vector<8x1xf32>
    %837 = arith.divf %835, %836 : vector<8x1xf32>
    %838 = vector.broadcast %830 : vector<8x1xf32> to vector<8x32xf32>
    %839 = arith.subf %820, %838 : vector<8x32xf32>
    %cst_175 = arith.constant 9.99999974E-6 : f32
    %840 = vector.broadcast %cst_175 : f32 to vector<8x1xf32>
    %841 = arith.addf %837, %840 : vector<8x1xf32>
    %842 = math.rsqrt %841 : vector<8x1xf32>
    %843 = vector.broadcast %842 : vector<8x1xf32> to vector<8x32xf32>
    %844 = arith.mulf %839, %843 : vector<8x32xf32>
    %845 = vector.broadcast %823 : vector<1x32xf32> to vector<8x32xf32>
    %846 = arith.mulf %844, %845 : vector<8x32xf32>
    %847 = vector.broadcast %826 : vector<1x32xf32> to vector<8x32xf32>
    %848 = arith.addf %846, %847 : vector<8x32xf32>
    %849 = arith.negf %848 : vector<8x32xf32>
    %850 = math.exp %849 : vector<8x32xf32>
    %cst_176 = arith.constant 1.000000e+00 : f32
    %851 = vector.broadcast %cst_176 : f32 to vector<8x32xf32>
    %852 = arith.addf %851, %850 : vector<8x32xf32>
    %853 = arith.divf %851, %852 : vector<8x32xf32>
    %854 = vector.extract_strided_slice %785 {offsets = [0, 64], sizes = [8, 32], strides = [1, 1]} : vector<8x96xf32> to vector<8x32xf32>
    %855 = vector.extract_strided_slice %11 {offsets = [1, 0, 0], sizes = [1, 1, 32], strides = [1, 1, 1]} : vector<2x1x32xf32> to vector<1x1x32xf32>
    %856 = vector.shape_cast %855 : vector<1x1x32xf32> to vector<1x32xf32>
    %857 = vector.broadcast %856 : vector<1x32xf32> to vector<8x32xf32>
    %858 = arith.addf %854, %857 : vector<8x32xf32>
    %859 = arith.mulf %819, %858 : vector<8x32xf32>
    %860 = math.tanh %859 : vector<8x32xf32>
    %cst_177 = arith.constant 1.000000e+00 : f32
    %861 = vector.broadcast %cst_177 : f32 to vector<8x32xf32>
    %862 = arith.subf %861, %853 : vector<8x32xf32>
    %863 = arith.mulf %862, %860 : vector<8x32xf32>
    %864 = arith.mulf %853, %782 : vector<8x32xf32>
    %865 = arith.addf %863, %864 : vector<8x32xf32>
    %866 = arith.index_cast %584 : i32 to index
    %c0_178 = arith.constant 0 : index
    %867 = vector.load %arg11[%866, %c0_178] : memref<64x32xf32, #tpu.memory_space<vmem>>, vector<8x32xf32>
    tpu.vector_store %arg11[%866, %c0_178], %865 {strides = array<i32>} : memref<64x32xf32, #tpu.memory_space<vmem>>, vector<8x32xf32>,
    %c3_i32 = arith.constant 3 : i32
    %c8_i32_179 = arith.constant 8 : i32
    %868 = arith.muli %c3_i32, %c8_i32_179 : i32
    %869 = tpu.assume_multiple %868, 8 : i32
    %870 = arith.index_cast %869 : i32 to index
    %c0_180 = arith.constant 0 : index
    %871 = vector.load %arg1[%870, %c0_180] : memref<64x16xf32, #tpu.memory_space<vmem>>, vector<8x16xf32>
    %cst_181 = arith.constant dense<0.000000e+00> : vector<8x160xf32>
    %872 = tpu.matmul %871, %3, %cst_181 {dimension_numbers = #tpu.dot_dimension_numbers<[1], [0], [0], [1], [0, 0, 1, 1], [], []>} : vector<8x16xf32>, vector<16x160xf32>, vector<8x160xf32> -> vector<8x160xf32>
    %cst_182 = arith.constant dense<0.000000e+00> : vector<8x128xf32>
    %873 = tpu.matmul %865, %4, %cst_182 {dimension_numbers = #tpu.dot_dimension_numbers<[1], [0], [0], [1], [0, 0, 1, 1], [], []>} : vector<8x32xf32>, vector<32x128xf32>, vector<8x128xf32> -> vector<8x128xf32>
    %874 = vector.extract_strided_slice %872 {offsets = [0, 0], sizes = [8, 32], strides = [1, 1]} : vector<8x160xf32> to vector<8x32xf32>
    %875 = vector.extract_strided_slice %873 {offsets = [0, 0], sizes = [8, 32], strides = [1, 1]} : vector<8x128xf32> to vector<8x32xf32>
    %876 = arith.addf %874, %875 : vector<8x32xf32>
    %877 = vector.extract_strided_slice %5 {offsets = [0, 0], sizes = [1, 32], strides = [1, 1]} : vector<1x96xf32> to vector<1x32xf32>
    %878 = vector.extract_strided_slice %6 {offsets = [0, 0], sizes = [1, 32], strides = [1, 1]} : vector<1x96xf32> to vector<1x32xf32>
    %cst_183 = arith.constant dense<0.000000e+00> : vector<8xf32>
    %879 = vector.multi_reduction <add>, %876, %cst_183 [1] : vector<8x32xf32> to vector<8xf32>
    %880 = vector.shape_cast %879 : vector<8xf32> to vector<8x1xf32>
    %cst_184 = arith.constant 3.200000e+01 : f32
    %881 = vector.broadcast %cst_184 : f32 to vector<8x1xf32>
    %882 = arith.divf %880, %881 : vector<8x1xf32>
    %883 = vector.broadcast %882 : vector<8x1xf32> to vector<8x32xf32>
    %884 = arith.subf %876, %883 : vector<8x32xf32>
    %885 = arith.mulf %884, %884 : vector<8x32xf32>
    %cst_185 = arith.constant dense<0.000000e+00> : vector<8xf32>
    %886 = vector.multi_reduction <add>, %885, %cst_185 [1] : vector<8x32xf32> to vector<8xf32>
    %887 = vector.shape_cast %886 : vector<8xf32> to vector<8x1xf32>
    %cst_186 = arith.constant 3.200000e+01 : f32
    %888 = vector.broadcast %cst_186 : f32 to vector<8x1xf32>
    %889 = arith.divf %887, %888 : vector<8x1xf32>
    %890 = vector.broadcast %882 : vector<8x1xf32> to vector<8x32xf32>
    %891 = arith.subf %876, %890 : vector<8x32xf32>
    %cst_187 = arith.constant 9.99999974E-6 : f32
    %892 = vector.broadcast %cst_187 : f32 to vector<8x1xf32>
    %893 = arith.addf %889, %892 : vector<8x1xf32>
    %894 = math.rsqrt %893 : vector<8x1xf32>
    %895 = vector.broadcast %894 : vector<8x1xf32> to vector<8x32xf32>
    %896 = arith.mulf %891, %895 : vector<8x32xf32>
    %897 = vector.broadcast %877 : vector<1x32xf32> to vector<8x32xf32>
    %898 = arith.mulf %896, %897 : vector<8x32xf32>
    %899 = vector.broadcast %878 : vector<1x32xf32> to vector<8x32xf32>
    %900 = arith.addf %898, %899 : vector<8x32xf32>
    %901 = arith.negf %900 : vector<8x32xf32>
    %902 = math.exp %901 : vector<8x32xf32>
    %cst_188 = arith.constant 1.000000e+00 : f32
    %903 = vector.broadcast %cst_188 : f32 to vector<8x32xf32>
    %904 = arith.addf %903, %902 : vector<8x32xf32>
    %905 = arith.divf %903, %904 : vector<8x32xf32>
    %906 = vector.extract_strided_slice %872 {offsets = [0, 32], sizes = [8, 32], strides = [1, 1]} : vector<8x160xf32> to vector<8x32xf32>
    %907 = vector.extract_strided_slice %873 {offsets = [0, 32], sizes = [8, 32], strides = [1, 1]} : vector<8x128xf32> to vector<8x32xf32>
    %908 = arith.addf %906, %907 : vector<8x32xf32>
    %909 = vector.extract_strided_slice %5 {offsets = [0, 32], sizes = [1, 32], strides = [1, 1]} : vector<1x96xf32> to vector<1x32xf32>
    %910 = vector.extract_strided_slice %6 {offsets = [0, 32], sizes = [1, 32], strides = [1, 1]} : vector<1x96xf32> to vector<1x32xf32>
    %cst_189 = arith.constant dense<0.000000e+00> : vector<8xf32>
    %911 = vector.multi_reduction <add>, %908, %cst_189 [1] : vector<8x32xf32> to vector<8xf32>
    %912 = vector.shape_cast %911 : vector<8xf32> to vector<8x1xf32>
    %cst_190 = arith.constant 3.200000e+01 : f32
    %913 = vector.broadcast %cst_190 : f32 to vector<8x1xf32>
    %914 = arith.divf %912, %913 : vector<8x1xf32>
    %915 = vector.broadcast %914 : vector<8x1xf32> to vector<8x32xf32>
    %916 = arith.subf %908, %915 : vector<8x32xf32>
    %917 = arith.mulf %916, %916 : vector<8x32xf32>
    %cst_191 = arith.constant dense<0.000000e+00> : vector<8xf32>
    %918 = vector.multi_reduction <add>, %917, %cst_191 [1] : vector<8x32xf32> to vector<8xf32>
    %919 = vector.shape_cast %918 : vector<8xf32> to vector<8x1xf32>
    %cst_192 = arith.constant 3.200000e+01 : f32
    %920 = vector.broadcast %cst_192 : f32 to vector<8x1xf32>
    %921 = arith.divf %919, %920 : vector<8x1xf32>
    %922 = vector.broadcast %914 : vector<8x1xf32> to vector<8x32xf32>
    %923 = arith.subf %908, %922 : vector<8x32xf32>
    %cst_193 = arith.constant 9.99999974E-6 : f32
    %924 = vector.broadcast %cst_193 : f32 to vector<8x1xf32>
    %925 = arith.addf %921, %924 : vector<8x1xf32>
    %926 = math.rsqrt %925 : vector<8x1xf32>
    %927 = vector.broadcast %926 : vector<8x1xf32> to vector<8x32xf32>
    %928 = arith.mulf %923, %927 : vector<8x32xf32>
    %929 = vector.broadcast %909 : vector<1x32xf32> to vector<8x32xf32>
    %930 = arith.mulf %928, %929 : vector<8x32xf32>
    %931 = vector.broadcast %910 : vector<1x32xf32> to vector<8x32xf32>
    %932 = arith.addf %930, %931 : vector<8x32xf32>
    %933 = arith.negf %932 : vector<8x32xf32>
    %934 = math.exp %933 : vector<8x32xf32>
    %cst_194 = arith.constant 1.000000e+00 : f32
    %935 = vector.broadcast %cst_194 : f32 to vector<8x32xf32>
    %936 = arith.addf %935, %934 : vector<8x32xf32>
    %937 = arith.divf %935, %936 : vector<8x32xf32>
    %938 = vector.extract_strided_slice %872 {offsets = [0, 64], sizes = [8, 32], strides = [1, 1]} : vector<8x160xf32> to vector<8x32xf32>
    %939 = vector.extract_strided_slice %873 {offsets = [0, 64], sizes = [8, 32], strides = [1, 1]} : vector<8x128xf32> to vector<8x32xf32>
    %940 = arith.addf %938, %939 : vector<8x32xf32>
    %941 = vector.extract_strided_slice %5 {offsets = [0, 64], sizes = [1, 32], strides = [1, 1]} : vector<1x96xf32> to vector<1x32xf32>
    %942 = vector.extract_strided_slice %6 {offsets = [0, 64], sizes = [1, 32], strides = [1, 1]} : vector<1x96xf32> to vector<1x32xf32>
    %cst_195 = arith.constant dense<0.000000e+00> : vector<8xf32>
    %943 = vector.multi_reduction <add>, %940, %cst_195 [1] : vector<8x32xf32> to vector<8xf32>
    %944 = vector.shape_cast %943 : vector<8xf32> to vector<8x1xf32>
    %cst_196 = arith.constant 3.200000e+01 : f32
    %945 = vector.broadcast %cst_196 : f32 to vector<8x1xf32>
    %946 = arith.divf %944, %945 : vector<8x1xf32>
    %947 = vector.broadcast %946 : vector<8x1xf32> to vector<8x32xf32>
    %948 = arith.subf %940, %947 : vector<8x32xf32>
    %949 = arith.mulf %948, %948 : vector<8x32xf32>
    %cst_197 = arith.constant dense<0.000000e+00> : vector<8xf32>
    %950 = vector.multi_reduction <add>, %949, %cst_197 [1] : vector<8x32xf32> to vector<8xf32>
    %951 = vector.shape_cast %950 : vector<8xf32> to vector<8x1xf32>
    %cst_198 = arith.constant 3.200000e+01 : f32
    %952 = vector.broadcast %cst_198 : f32 to vector<8x1xf32>
    %953 = arith.divf %951, %952 : vector<8x1xf32>
    %954 = vector.broadcast %946 : vector<8x1xf32> to vector<8x32xf32>
    %955 = arith.subf %940, %954 : vector<8x32xf32>
    %cst_199 = arith.constant 9.99999974E-6 : f32
    %956 = vector.broadcast %cst_199 : f32 to vector<8x1xf32>
    %957 = arith.addf %953, %956 : vector<8x1xf32>
    %958 = math.rsqrt %957 : vector<8x1xf32>
    %959 = vector.broadcast %958 : vector<8x1xf32> to vector<8x32xf32>
    %960 = arith.mulf %955, %959 : vector<8x32xf32>
    %961 = vector.broadcast %941 : vector<1x32xf32> to vector<8x32xf32>
    %962 = arith.mulf %960, %961 : vector<8x32xf32>
    %963 = vector.broadcast %942 : vector<1x32xf32> to vector<8x32xf32>
    %964 = arith.addf %962, %963 : vector<8x32xf32>
    %965 = arith.negf %964 : vector<8x32xf32>
    %966 = math.exp %965 : vector<8x32xf32>
    %cst_200 = arith.constant 1.000000e+00 : f32
    %967 = vector.broadcast %cst_200 : f32 to vector<8x32xf32>
    %968 = arith.addf %967, %966 : vector<8x32xf32>
    %969 = arith.divf %967, %968 : vector<8x32xf32>
    %970 = vector.extract_strided_slice %872 {offsets = [0, 96], sizes = [8, 32], strides = [1, 1]} : vector<8x160xf32> to vector<8x32xf32>
    %971 = vector.extract_strided_slice %873 {offsets = [0, 96], sizes = [8, 32], strides = [1, 1]} : vector<8x128xf32> to vector<8x32xf32>
    %972 = vector.broadcast %7 : vector<1x32xf32> to vector<8x32xf32>
    %973 = arith.addf %971, %972 : vector<8x32xf32>
    %974 = arith.mulf %905, %973 : vector<8x32xf32>
    %975 = arith.addf %970, %974 : vector<8x32xf32>
    %976 = math.tanh %975 : vector<8x32xf32>
    %977 = vector.extract_strided_slice %872 {offsets = [0, 128], sizes = [8, 32], strides = [1, 1]} : vector<8x160xf32> to vector<8x32xf32>
    %978 = arith.mulf %969, %977 : vector<8x32xf32>
    %979 = arith.addf %976, %978 : vector<8x32xf32>
    %cst_201 = arith.constant 1.000000e+00 : f32
    %980 = vector.broadcast %cst_201 : f32 to vector<8x32xf32>
    %981 = arith.subf %980, %937 : vector<8x32xf32>
    %982 = arith.mulf %981, %865 : vector<8x32xf32>
    %983 = arith.mulf %937, %979 : vector<8x32xf32>
    %984 = arith.addf %982, %983 : vector<8x32xf32>
    %985 = vector.extract_strided_slice %8 {offsets = [0, 0, 0], sizes = [1, 32, 96], strides = [1, 1, 1]} : vector<2x32x96xf32> to vector<1x32x96xf32>
    %986 = vector.shape_cast %985 : vector<1x32x96xf32> to vector<32x96xf32>
    %cst_202 = arith.constant dense<0.000000e+00> : vector<8x96xf32>
    %987 = tpu.matmul %984, %986, %cst_202 {dimension_numbers = #tpu.dot_dimension_numbers<[1], [0], [0], [1], [0, 0, 1, 1], [], []>} : vector<8x32xf32>, vector<32x96xf32>, vector<8x96xf32> -> vector<8x96xf32>
    %988 = vector.extract_strided_slice %987 {offsets = [0, 0], sizes = [8, 32], strides = [1, 1]} : vector<8x96xf32> to vector<8x32xf32>
    %989 = vector.extract_strided_slice %9 {offsets = [0, 0, 0], sizes = [1, 1, 64], strides = [1, 1, 1]} : vector<2x1x64xf32> to vector<1x1x64xf32>
    %990 = vector.shape_cast %989 : vector<1x1x64xf32> to vector<1x64xf32>
    %991 = vector.extract_strided_slice %990 {offsets = [0, 0], sizes = [1, 32], strides = [1, 1]} : vector<1x64xf32> to vector<1x32xf32>
    %992 = vector.extract_strided_slice %10 {offsets = [0, 0, 0], sizes = [1, 1, 64], strides = [1, 1, 1]} : vector<2x1x64xf32> to vector<1x1x64xf32>
    %993 = vector.shape_cast %992 : vector<1x1x64xf32> to vector<1x64xf32>
    %994 = vector.extract_strided_slice %993 {offsets = [0, 0], sizes = [1, 32], strides = [1, 1]} : vector<1x64xf32> to vector<1x32xf32>
    %cst_203 = arith.constant dense<0.000000e+00> : vector<8xf32>
    %995 = vector.multi_reduction <add>, %988, %cst_203 [1] : vector<8x32xf32> to vector<8xf32>
    %996 = vector.shape_cast %995 : vector<8xf32> to vector<8x1xf32>
    %cst_204 = arith.constant 3.200000e+01 : f32
    %997 = vector.broadcast %cst_204 : f32 to vector<8x1xf32>
    %998 = arith.divf %996, %997 : vector<8x1xf32>
    %999 = vector.broadcast %998 : vector<8x1xf32> to vector<8x32xf32>
    %1000 = arith.subf %988, %999 : vector<8x32xf32>
    %1001 = arith.mulf %1000, %1000 : vector<8x32xf32>
    %cst_205 = arith.constant dense<0.000000e+00> : vector<8xf32>
    %1002 = vector.multi_reduction <add>, %1001, %cst_205 [1] : vector<8x32xf32> to vector<8xf32>
    %1003 = vector.shape_cast %1002 : vector<8xf32> to vector<8x1xf32>
    %cst_206 = arith.constant 3.200000e+01 : f32
    %1004 = vector.broadcast %cst_206 : f32 to vector<8x1xf32>
    %1005 = arith.divf %1003, %1004 : vector<8x1xf32>
    %1006 = vector.broadcast %998 : vector<8x1xf32> to vector<8x32xf32>
    %1007 = arith.subf %988, %1006 : vector<8x32xf32>
    %cst_207 = arith.constant 9.99999974E-6 : f32
    %1008 = vector.broadcast %cst_207 : f32 to vector<8x1xf32>
    %1009 = arith.addf %1005, %1008 : vector<8x1xf32>
    %1010 = math.rsqrt %1009 : vector<8x1xf32>
    %1011 = vector.broadcast %1010 : vector<8x1xf32> to vector<8x32xf32>
    %1012 = arith.mulf %1007, %1011 : vector<8x32xf32>
    %1013 = vector.broadcast %991 : vector<1x32xf32> to vector<8x32xf32>
    %1014 = arith.mulf %1012, %1013 : vector<8x32xf32>
    %1015 = vector.broadcast %994 : vector<1x32xf32> to vector<8x32xf32>
    %1016 = arith.addf %1014, %1015 : vector<8x32xf32>
    %1017 = arith.negf %1016 : vector<8x32xf32>
    %1018 = math.exp %1017 : vector<8x32xf32>
    %cst_208 = arith.constant 1.000000e+00 : f32
    %1019 = vector.broadcast %cst_208 : f32 to vector<8x32xf32>
    %1020 = arith.addf %1019, %1018 : vector<8x32xf32>
    %1021 = arith.divf %1019, %1020 : vector<8x32xf32>
    %1022 = vector.extract_strided_slice %987 {offsets = [0, 32], sizes = [8, 32], strides = [1, 1]} : vector<8x96xf32> to vector<8x32xf32>
    %1023 = vector.extract_strided_slice %9 {offsets = [0, 0, 0], sizes = [1, 1, 64], strides = [1, 1, 1]} : vector<2x1x64xf32> to vector<1x1x64xf32>
    %1024 = vector.shape_cast %1023 : vector<1x1x64xf32> to vector<1x64xf32>
    %1025 = vector.extract_strided_slice %1024 {offsets = [0, 32], sizes = [1, 32], strides = [1, 1]} : vector<1x64xf32> to vector<1x32xf32>
    %1026 = vector.extract_strided_slice %10 {offsets = [0, 0, 0], sizes = [1, 1, 64], strides = [1, 1, 1]} : vector<2x1x64xf32> to vector<1x1x64xf32>
    %1027 = vector.shape_cast %1026 : vector<1x1x64xf32> to vector<1x64xf32>
    %1028 = vector.extract_strided_slice %1027 {offsets = [0, 32], sizes = [1, 32], strides = [1, 1]} : vector<1x64xf32> to vector<1x32xf32>
    %cst_209 = arith.constant dense<0.000000e+00> : vector<8xf32>
    %1029 = vector.multi_reduction <add>, %1022, %cst_209 [1] : vector<8x32xf32> to vector<8xf32>
    %1030 = vector.shape_cast %1029 : vector<8xf32> to vector<8x1xf32>
    %cst_210 = arith.constant 3.200000e+01 : f32
    %1031 = vector.broadcast %cst_210 : f32 to vector<8x1xf32>
    %1032 = arith.divf %1030, %1031 : vector<8x1xf32>
    %1033 = vector.broadcast %1032 : vector<8x1xf32> to vector<8x32xf32>
    %1034 = arith.subf %1022, %1033 : vector<8x32xf32>
    %1035 = arith.mulf %1034, %1034 : vector<8x32xf32>
    %cst_211 = arith.constant dense<0.000000e+00> : vector<8xf32>
    %1036 = vector.multi_reduction <add>, %1035, %cst_211 [1] : vector<8x32xf32> to vector<8xf32>
    %1037 = vector.shape_cast %1036 : vector<8xf32> to vector<8x1xf32>
    %cst_212 = arith.constant 3.200000e+01 : f32
    %1038 = vector.broadcast %cst_212 : f32 to vector<8x1xf32>
    %1039 = arith.divf %1037, %1038 : vector<8x1xf32>
    %1040 = vector.broadcast %1032 : vector<8x1xf32> to vector<8x32xf32>
    %1041 = arith.subf %1022, %1040 : vector<8x32xf32>
    %cst_213 = arith.constant 9.99999974E-6 : f32
    %1042 = vector.broadcast %cst_213 : f32 to vector<8x1xf32>
    %1043 = arith.addf %1039, %1042 : vector<8x1xf32>
    %1044 = math.rsqrt %1043 : vector<8x1xf32>
    %1045 = vector.broadcast %1044 : vector<8x1xf32> to vector<8x32xf32>
    %1046 = arith.mulf %1041, %1045 : vector<8x32xf32>
    %1047 = vector.broadcast %1025 : vector<1x32xf32> to vector<8x32xf32>
    %1048 = arith.mulf %1046, %1047 : vector<8x32xf32>
    %1049 = vector.broadcast %1028 : vector<1x32xf32> to vector<8x32xf32>
    %1050 = arith.addf %1048, %1049 : vector<8x32xf32>
    %1051 = arith.negf %1050 : vector<8x32xf32>
    %1052 = math.exp %1051 : vector<8x32xf32>
    %cst_214 = arith.constant 1.000000e+00 : f32
    %1053 = vector.broadcast %cst_214 : f32 to vector<8x32xf32>
    %1054 = arith.addf %1053, %1052 : vector<8x32xf32>
    %1055 = arith.divf %1053, %1054 : vector<8x32xf32>
    %1056 = vector.extract_strided_slice %987 {offsets = [0, 64], sizes = [8, 32], strides = [1, 1]} : vector<8x96xf32> to vector<8x32xf32>
    %1057 = vector.extract_strided_slice %11 {offsets = [0, 0, 0], sizes = [1, 1, 32], strides = [1, 1, 1]} : vector<2x1x32xf32> to vector<1x1x32xf32>
    %1058 = vector.shape_cast %1057 : vector<1x1x32xf32> to vector<1x32xf32>
    %1059 = vector.broadcast %1058 : vector<1x32xf32> to vector<8x32xf32>
    %1060 = arith.addf %1056, %1059 : vector<8x32xf32>
    %1061 = arith.mulf %1021, %1060 : vector<8x32xf32>
    %1062 = math.tanh %1061 : vector<8x32xf32>
    %cst_215 = arith.constant 1.000000e+00 : f32
    %1063 = vector.broadcast %cst_215 : f32 to vector<8x32xf32>
    %1064 = arith.subf %1063, %1055 : vector<8x32xf32>
    %1065 = arith.mulf %1064, %1062 : vector<8x32xf32>
    %1066 = arith.mulf %1055, %984 : vector<8x32xf32>
    %1067 = arith.addf %1065, %1066 : vector<8x32xf32>
    %1068 = vector.extract_strided_slice %8 {offsets = [1, 0, 0], sizes = [1, 32, 96], strides = [1, 1, 1]} : vector<2x32x96xf32> to vector<1x32x96xf32>
    %1069 = vector.shape_cast %1068 : vector<1x32x96xf32> to vector<32x96xf32>
    %cst_216 = arith.constant dense<0.000000e+00> : vector<8x96xf32>
    %1070 = tpu.matmul %1067, %1069, %cst_216 {dimension_numbers = #tpu.dot_dimension_numbers<[1], [0], [0], [1], [0, 0, 1, 1], [], []>} : vector<8x32xf32>, vector<32x96xf32>, vector<8x96xf32> -> vector<8x96xf32>
    %1071 = vector.extract_strided_slice %1070 {offsets = [0, 0], sizes = [8, 32], strides = [1, 1]} : vector<8x96xf32> to vector<8x32xf32>
    %1072 = vector.extract_strided_slice %9 {offsets = [1, 0, 0], sizes = [1, 1, 64], strides = [1, 1, 1]} : vector<2x1x64xf32> to vector<1x1x64xf32>
    %1073 = vector.shape_cast %1072 : vector<1x1x64xf32> to vector<1x64xf32>
    %1074 = vector.extract_strided_slice %1073 {offsets = [0, 0], sizes = [1, 32], strides = [1, 1]} : vector<1x64xf32> to vector<1x32xf32>
    %1075 = vector.extract_strided_slice %10 {offsets = [1, 0, 0], sizes = [1, 1, 64], strides = [1, 1, 1]} : vector<2x1x64xf32> to vector<1x1x64xf32>
    %1076 = vector.shape_cast %1075 : vector<1x1x64xf32> to vector<1x64xf32>
    %1077 = vector.extract_strided_slice %1076 {offsets = [0, 0], sizes = [1, 32], strides = [1, 1]} : vector<1x64xf32> to vector<1x32xf32>
    %cst_217 = arith.constant dense<0.000000e+00> : vector<8xf32>
    %1078 = vector.multi_reduction <add>, %1071, %cst_217 [1] : vector<8x32xf32> to vector<8xf32>
    %1079 = vector.shape_cast %1078 : vector<8xf32> to vector<8x1xf32>
    %cst_218 = arith.constant 3.200000e+01 : f32
    %1080 = vector.broadcast %cst_218 : f32 to vector<8x1xf32>
    %1081 = arith.divf %1079, %1080 : vector<8x1xf32>
    %1082 = vector.broadcast %1081 : vector<8x1xf32> to vector<8x32xf32>
    %1083 = arith.subf %1071, %1082 : vector<8x32xf32>
    %1084 = arith.mulf %1083, %1083 : vector<8x32xf32>
    %cst_219 = arith.constant dense<0.000000e+00> : vector<8xf32>
    %1085 = vector.multi_reduction <add>, %1084, %cst_219 [1] : vector<8x32xf32> to vector<8xf32>
    %1086 = vector.shape_cast %1085 : vector<8xf32> to vector<8x1xf32>
    %cst_220 = arith.constant 3.200000e+01 : f32
    %1087 = vector.broadcast %cst_220 : f32 to vector<8x1xf32>
    %1088 = arith.divf %1086, %1087 : vector<8x1xf32>
    %1089 = vector.broadcast %1081 : vector<8x1xf32> to vector<8x32xf32>
    %1090 = arith.subf %1071, %1089 : vector<8x32xf32>
    %cst_221 = arith.constant 9.99999974E-6 : f32
    %1091 = vector.broadcast %cst_221 : f32 to vector<8x1xf32>
    %1092 = arith.addf %1088, %1091 : vector<8x1xf32>
    %1093 = math.rsqrt %1092 : vector<8x1xf32>
    %1094 = vector.broadcast %1093 : vector<8x1xf32> to vector<8x32xf32>
    %1095 = arith.mulf %1090, %1094 : vector<8x32xf32>
    %1096 = vector.broadcast %1074 : vector<1x32xf32> to vector<8x32xf32>
    %1097 = arith.mulf %1095, %1096 : vector<8x32xf32>
    %1098 = vector.broadcast %1077 : vector<1x32xf32> to vector<8x32xf32>
    %1099 = arith.addf %1097, %1098 : vector<8x32xf32>
    %1100 = arith.negf %1099 : vector<8x32xf32>
    %1101 = math.exp %1100 : vector<8x32xf32>
    %cst_222 = arith.constant 1.000000e+00 : f32
    %1102 = vector.broadcast %cst_222 : f32 to vector<8x32xf32>
    %1103 = arith.addf %1102, %1101 : vector<8x32xf32>
    %1104 = arith.divf %1102, %1103 : vector<8x32xf32>
    %1105 = vector.extract_strided_slice %1070 {offsets = [0, 32], sizes = [8, 32], strides = [1, 1]} : vector<8x96xf32> to vector<8x32xf32>
    %1106 = vector.extract_strided_slice %9 {offsets = [1, 0, 0], sizes = [1, 1, 64], strides = [1, 1, 1]} : vector<2x1x64xf32> to vector<1x1x64xf32>
    %1107 = vector.shape_cast %1106 : vector<1x1x64xf32> to vector<1x64xf32>
    %1108 = vector.extract_strided_slice %1107 {offsets = [0, 32], sizes = [1, 32], strides = [1, 1]} : vector<1x64xf32> to vector<1x32xf32>
    %1109 = vector.extract_strided_slice %10 {offsets = [1, 0, 0], sizes = [1, 1, 64], strides = [1, 1, 1]} : vector<2x1x64xf32> to vector<1x1x64xf32>
    %1110 = vector.shape_cast %1109 : vector<1x1x64xf32> to vector<1x64xf32>
    %1111 = vector.extract_strided_slice %1110 {offsets = [0, 32], sizes = [1, 32], strides = [1, 1]} : vector<1x64xf32> to vector<1x32xf32>
    %cst_223 = arith.constant dense<0.000000e+00> : vector<8xf32>
    %1112 = vector.multi_reduction <add>, %1105, %cst_223 [1] : vector<8x32xf32> to vector<8xf32>
    %1113 = vector.shape_cast %1112 : vector<8xf32> to vector<8x1xf32>
    %cst_224 = arith.constant 3.200000e+01 : f32
    %1114 = vector.broadcast %cst_224 : f32 to vector<8x1xf32>
    %1115 = arith.divf %1113, %1114 : vector<8x1xf32>
    %1116 = vector.broadcast %1115 : vector<8x1xf32> to vector<8x32xf32>
    %1117 = arith.subf %1105, %1116 : vector<8x32xf32>
    %1118 = arith.mulf %1117, %1117 : vector<8x32xf32>
    %cst_225 = arith.constant dense<0.000000e+00> : vector<8xf32>
    %1119 = vector.multi_reduction <add>, %1118, %cst_225 [1] : vector<8x32xf32> to vector<8xf32>
    %1120 = vector.shape_cast %1119 : vector<8xf32> to vector<8x1xf32>
    %cst_226 = arith.constant 3.200000e+01 : f32
    %1121 = vector.broadcast %cst_226 : f32 to vector<8x1xf32>
    %1122 = arith.divf %1120, %1121 : vector<8x1xf32>
    %1123 = vector.broadcast %1115 : vector<8x1xf32> to vector<8x32xf32>
    %1124 = arith.subf %1105, %1123 : vector<8x32xf32>
    %cst_227 = arith.constant 9.99999974E-6 : f32
    %1125 = vector.broadcast %cst_227 : f32 to vector<8x1xf32>
    %1126 = arith.addf %1122, %1125 : vector<8x1xf32>
    %1127 = math.rsqrt %1126 : vector<8x1xf32>
    %1128 = vector.broadcast %1127 : vector<8x1xf32> to vector<8x32xf32>
    %1129 = arith.mulf %1124, %1128 : vector<8x32xf32>
    %1130 = vector.broadcast %1108 : vector<1x32xf32> to vector<8x32xf32>
    %1131 = arith.mulf %1129, %1130 : vector<8x32xf32>
    %1132 = vector.broadcast %1111 : vector<1x32xf32> to vector<8x32xf32>
    %1133 = arith.addf %1131, %1132 : vector<8x32xf32>
    %1134 = arith.negf %1133 : vector<8x32xf32>
    %1135 = math.exp %1134 : vector<8x32xf32>
    %cst_228 = arith.constant 1.000000e+00 : f32
    %1136 = vector.broadcast %cst_228 : f32 to vector<8x32xf32>
    %1137 = arith.addf %1136, %1135 : vector<8x32xf32>
    %1138 = arith.divf %1136, %1137 : vector<8x32xf32>
    %1139 = vector.extract_strided_slice %1070 {offsets = [0, 64], sizes = [8, 32], strides = [1, 1]} : vector<8x96xf32> to vector<8x32xf32>
    %1140 = vector.extract_strided_slice %11 {offsets = [1, 0, 0], sizes = [1, 1, 32], strides = [1, 1, 1]} : vector<2x1x32xf32> to vector<1x1x32xf32>
    %1141 = vector.shape_cast %1140 : vector<1x1x32xf32> to vector<1x32xf32>
    %1142 = vector.broadcast %1141 : vector<1x32xf32> to vector<8x32xf32>
    %1143 = arith.addf %1139, %1142 : vector<8x32xf32>
    %1144 = arith.mulf %1104, %1143 : vector<8x32xf32>
    %1145 = math.tanh %1144 : vector<8x32xf32>
    %cst_229 = arith.constant 1.000000e+00 : f32
    %1146 = vector.broadcast %cst_229 : f32 to vector<8x32xf32>
    %1147 = arith.subf %1146, %1138 : vector<8x32xf32>
    %1148 = arith.mulf %1147, %1145 : vector<8x32xf32>
    %1149 = arith.mulf %1138, %1067 : vector<8x32xf32>
    %1150 = arith.addf %1148, %1149 : vector<8x32xf32>
    %1151 = arith.index_cast %869 : i32 to index
    %c0_230 = arith.constant 0 : index
    %1152 = vector.load %arg11[%1151, %c0_230] : memref<64x32xf32, #tpu.memory_space<vmem>>, vector<8x32xf32>
    tpu.vector_store %arg11[%1151, %c0_230], %1150 {strides = array<i32>} : memref<64x32xf32, #tpu.memory_space<vmem>>, vector<8x32xf32>,
    %c4_i32 = arith.constant 4 : i32
    %c8_i32_231 = arith.constant 8 : i32
    %1153 = arith.muli %c4_i32, %c8_i32_231 : i32
    %1154 = tpu.assume_multiple %1153, 8 : i32
    %1155 = arith.index_cast %1154 : i32 to index
    %c0_232 = arith.constant 0 : index
    %1156 = vector.load %arg1[%1155, %c0_232] : memref<64x16xf32, #tpu.memory_space<vmem>>, vector<8x16xf32>
    %cst_233 = arith.constant dense<0.000000e+00> : vector<8x160xf32>
    %1157 = tpu.matmul %1156, %3, %cst_233 {dimension_numbers = #tpu.dot_dimension_numbers<[1], [0], [0], [1], [0, 0, 1, 1], [], []>} : vector<8x16xf32>, vector<16x160xf32>, vector<8x160xf32> -> vector<8x160xf32>
    %cst_234 = arith.constant dense<0.000000e+00> : vector<8x128xf32>
    %1158 = tpu.matmul %1150, %4, %cst_234 {dimension_numbers = #tpu.dot_dimension_numbers<[1], [0], [0], [1], [0, 0, 1, 1], [], []>} : vector<8x32xf32>, vector<32x128xf32>, vector<8x128xf32> -> vector<8x128xf32>
    %1159 = vector.extract_strided_slice %1157 {offsets = [0, 0], sizes = [8, 32], strides = [1, 1]} : vector<8x160xf32> to vector<8x32xf32>
    %1160 = vector.extract_strided_slice %1158 {offsets = [0, 0], sizes = [8, 32], strides = [1, 1]} : vector<8x128xf32> to vector<8x32xf32>
    %1161 = arith.addf %1159, %1160 : vector<8x32xf32>
    %1162 = vector.extract_strided_slice %5 {offsets = [0, 0], sizes = [1, 32], strides = [1, 1]} : vector<1x96xf32> to vector<1x32xf32>
    %1163 = vector.extract_strided_slice %6 {offsets = [0, 0], sizes = [1, 32], strides = [1, 1]} : vector<1x96xf32> to vector<1x32xf32>
    %cst_235 = arith.constant dense<0.000000e+00> : vector<8xf32>
    %1164 = vector.multi_reduction <add>, %1161, %cst_235 [1] : vector<8x32xf32> to vector<8xf32>
    %1165 = vector.shape_cast %1164 : vector<8xf32> to vector<8x1xf32>
    %cst_236 = arith.constant 3.200000e+01 : f32
    %1166 = vector.broadcast %cst_236 : f32 to vector<8x1xf32>
    %1167 = arith.divf %1165, %1166 : vector<8x1xf32>
    %1168 = vector.broadcast %1167 : vector<8x1xf32> to vector<8x32xf32>
    %1169 = arith.subf %1161, %1168 : vector<8x32xf32>
    %1170 = arith.mulf %1169, %1169 : vector<8x32xf32>
    %cst_237 = arith.constant dense<0.000000e+00> : vector<8xf32>
    %1171 = vector.multi_reduction <add>, %1170, %cst_237 [1] : vector<8x32xf32> to vector<8xf32>
    %1172 = vector.shape_cast %1171 : vector<8xf32> to vector<8x1xf32>
    %cst_238 = arith.constant 3.200000e+01 : f32
    %1173 = vector.broadcast %cst_238 : f32 to vector<8x1xf32>
    %1174 = arith.divf %1172, %1173 : vector<8x1xf32>
    %1175 = vector.broadcast %1167 : vector<8x1xf32> to vector<8x32xf32>
    %1176 = arith.subf %1161, %1175 : vector<8x32xf32>
    %cst_239 = arith.constant 9.99999974E-6 : f32
    %1177 = vector.broadcast %cst_239 : f32 to vector<8x1xf32>
    %1178 = arith.addf %1174, %1177 : vector<8x1xf32>
    %1179 = math.rsqrt %1178 : vector<8x1xf32>
    %1180 = vector.broadcast %1179 : vector<8x1xf32> to vector<8x32xf32>
    %1181 = arith.mulf %1176, %1180 : vector<8x32xf32>
    %1182 = vector.broadcast %1162 : vector<1x32xf32> to vector<8x32xf32>
    %1183 = arith.mulf %1181, %1182 : vector<8x32xf32>
    %1184 = vector.broadcast %1163 : vector<1x32xf32> to vector<8x32xf32>
    %1185 = arith.addf %1183, %1184 : vector<8x32xf32>
    %1186 = arith.negf %1185 : vector<8x32xf32>
    %1187 = math.exp %1186 : vector<8x32xf32>
    %cst_240 = arith.constant 1.000000e+00 : f32
    %1188 = vector.broadcast %cst_240 : f32 to vector<8x32xf32>
    %1189 = arith.addf %1188, %1187 : vector<8x32xf32>
    %1190 = arith.divf %1188, %1189 : vector<8x32xf32>
    %1191 = vector.extract_strided_slice %1157 {offsets = [0, 32], sizes = [8, 32], strides = [1, 1]} : vector<8x160xf32> to vector<8x32xf32>
    %1192 = vector.extract_strided_slice %1158 {offsets = [0, 32], sizes = [8, 32], strides = [1, 1]} : vector<8x128xf32> to vector<8x32xf32>
    %1193 = arith.addf %1191, %1192 : vector<8x32xf32>
    %1194 = vector.extract_strided_slice %5 {offsets = [0, 32], sizes = [1, 32], strides = [1, 1]} : vector<1x96xf32> to vector<1x32xf32>
    %1195 = vector.extract_strided_slice %6 {offsets = [0, 32], sizes = [1, 32], strides = [1, 1]} : vector<1x96xf32> to vector<1x32xf32>
    %cst_241 = arith.constant dense<0.000000e+00> : vector<8xf32>
    %1196 = vector.multi_reduction <add>, %1193, %cst_241 [1] : vector<8x32xf32> to vector<8xf32>
    %1197 = vector.shape_cast %1196 : vector<8xf32> to vector<8x1xf32>
    %cst_242 = arith.constant 3.200000e+01 : f32
    %1198 = vector.broadcast %cst_242 : f32 to vector<8x1xf32>
    %1199 = arith.divf %1197, %1198 : vector<8x1xf32>
    %1200 = vector.broadcast %1199 : vector<8x1xf32> to vector<8x32xf32>
    %1201 = arith.subf %1193, %1200 : vector<8x32xf32>
    %1202 = arith.mulf %1201, %1201 : vector<8x32xf32>
    %cst_243 = arith.constant dense<0.000000e+00> : vector<8xf32>
    %1203 = vector.multi_reduction <add>, %1202, %cst_243 [1] : vector<8x32xf32> to vector<8xf32>
    %1204 = vector.shape_cast %1203 : vector<8xf32> to vector<8x1xf32>
    %cst_244 = arith.constant 3.200000e+01 : f32
    %1205 = vector.broadcast %cst_244 : f32 to vector<8x1xf32>
    %1206 = arith.divf %1204, %1205 : vector<8x1xf32>
    %1207 = vector.broadcast %1199 : vector<8x1xf32> to vector<8x32xf32>
    %1208 = arith.subf %1193, %1207 : vector<8x32xf32>
    %cst_245 = arith.constant 9.99999974E-6 : f32
    %1209 = vector.broadcast %cst_245 : f32 to vector<8x1xf32>
    %1210 = arith.addf %1206, %1209 : vector<8x1xf32>
    %1211 = math.rsqrt %1210 : vector<8x1xf32>
    %1212 = vector.broadcast %1211 : vector<8x1xf32> to vector<8x32xf32>
    %1213 = arith.mulf %1208, %1212 : vector<8x32xf32>
    %1214 = vector.broadcast %1194 : vector<1x32xf32> to vector<8x32xf32>
    %1215 = arith.mulf %1213, %1214 : vector<8x32xf32>
    %1216 = vector.broadcast %1195 : vector<1x32xf32> to vector<8x32xf32>
    %1217 = arith.addf %1215, %1216 : vector<8x32xf32>
    %1218 = arith.negf %1217 : vector<8x32xf32>
    %1219 = math.exp %1218 : vector<8x32xf32>
    %cst_246 = arith.constant 1.000000e+00 : f32
    %1220 = vector.broadcast %cst_246 : f32 to vector<8x32xf32>
    %1221 = arith.addf %1220, %1219 : vector<8x32xf32>
    %1222 = arith.divf %1220, %1221 : vector<8x32xf32>
    %1223 = vector.extract_strided_slice %1157 {offsets = [0, 64], sizes = [8, 32], strides = [1, 1]} : vector<8x160xf32> to vector<8x32xf32>
    %1224 = vector.extract_strided_slice %1158 {offsets = [0, 64], sizes = [8, 32], strides = [1, 1]} : vector<8x128xf32> to vector<8x32xf32>
    %1225 = arith.addf %1223, %1224 : vector<8x32xf32>
    %1226 = vector.extract_strided_slice %5 {offsets = [0, 64], sizes = [1, 32], strides = [1, 1]} : vector<1x96xf32> to vector<1x32xf32>
    %1227 = vector.extract_strided_slice %6 {offsets = [0, 64], sizes = [1, 32], strides = [1, 1]} : vector<1x96xf32> to vector<1x32xf32>
    %cst_247 = arith.constant dense<0.000000e+00> : vector<8xf32>
    %1228 = vector.multi_reduction <add>, %1225, %cst_247 [1] : vector<8x32xf32> to vector<8xf32>
    %1229 = vector.shape_cast %1228 : vector<8xf32> to vector<8x1xf32>
    %cst_248 = arith.constant 3.200000e+01 : f32
    %1230 = vector.broadcast %cst_248 : f32 to vector<8x1xf32>
    %1231 = arith.divf %1229, %1230 : vector<8x1xf32>
    %1232 = vector.broadcast %1231 : vector<8x1xf32> to vector<8x32xf32>
    %1233 = arith.subf %1225, %1232 : vector<8x32xf32>
    %1234 = arith.mulf %1233, %1233 : vector<8x32xf32>
    %cst_249 = arith.constant dense<0.000000e+00> : vector<8xf32>
    %1235 = vector.multi_reduction <add>, %1234, %cst_249 [1] : vector<8x32xf32> to vector<8xf32>
    %1236 = vector.shape_cast %1235 : vector<8xf32> to vector<8x1xf32>
    %cst_250 = arith.constant 3.200000e+01 : f32
    %1237 = vector.broadcast %cst_250 : f32 to vector<8x1xf32>
    %1238 = arith.divf %1236, %1237 : vector<8x1xf32>
    %1239 = vector.broadcast %1231 : vector<8x1xf32> to vector<8x32xf32>
    %1240 = arith.subf %1225, %1239 : vector<8x32xf32>
    %cst_251 = arith.constant 9.99999974E-6 : f32
    %1241 = vector.broadcast %cst_251 : f32 to vector<8x1xf32>
    %1242 = arith.addf %1238, %1241 : vector<8x1xf32>
    %1243 = math.rsqrt %1242 : vector<8x1xf32>
    %1244 = vector.broadcast %1243 : vector<8x1xf32> to vector<8x32xf32>
    %1245 = arith.mulf %1240, %1244 : vector<8x32xf32>
    %1246 = vector.broadcast %1226 : vector<1x32xf32> to vector<8x32xf32>
    %1247 = arith.mulf %1245, %1246 : vector<8x32xf32>
    %1248 = vector.broadcast %1227 : vector<1x32xf32> to vector<8x32xf32>
    %1249 = arith.addf %1247, %1248 : vector<8x32xf32>
    %1250 = arith.negf %1249 : vector<8x32xf32>
    %1251 = math.exp %1250 : vector<8x32xf32>
    %cst_252 = arith.constant 1.000000e+00 : f32
    %1252 = vector.broadcast %cst_252 : f32 to vector<8x32xf32>
    %1253 = arith.addf %1252, %1251 : vector<8x32xf32>
    %1254 = arith.divf %1252, %1253 : vector<8x32xf32>
    %1255 = vector.extract_strided_slice %1157 {offsets = [0, 96], sizes = [8, 32], strides = [1, 1]} : vector<8x160xf32> to vector<8x32xf32>
    %1256 = vector.extract_strided_slice %1158 {offsets = [0, 96], sizes = [8, 32], strides = [1, 1]} : vector<8x128xf32> to vector<8x32xf32>
    %1257 = vector.broadcast %7 : vector<1x32xf32> to vector<8x32xf32>
    %1258 = arith.addf %1256, %1257 : vector<8x32xf32>
    %1259 = arith.mulf %1190, %1258 : vector<8x32xf32>
    %1260 = arith.addf %1255, %1259 : vector<8x32xf32>
    %1261 = math.tanh %1260 : vector<8x32xf32>
    %1262 = vector.extract_strided_slice %1157 {offsets = [0, 128], sizes = [8, 32], strides = [1, 1]} : vector<8x160xf32> to vector<8x32xf32>
    %1263 = arith.mulf %1254, %1262 : vector<8x32xf32>
    %1264 = arith.addf %1261, %1263 : vector<8x32xf32>
    %cst_253 = arith.constant 1.000000e+00 : f32
    %1265 = vector.broadcast %cst_253 : f32 to vector<8x32xf32>
    %1266 = arith.subf %1265, %1222 : vector<8x32xf32>
    %1267 = arith.mulf %1266, %1150 : vector<8x32xf32>
    %1268 = arith.mulf %1222, %1264 : vector<8x32xf32>
    %1269 = arith.addf %1267, %1268 : vector<8x32xf32>
    %1270 = vector.extract_strided_slice %8 {offsets = [0, 0, 0], sizes = [1, 32, 96], strides = [1, 1, 1]} : vector<2x32x96xf32> to vector<1x32x96xf32>
    %1271 = vector.shape_cast %1270 : vector<1x32x96xf32> to vector<32x96xf32>
    %cst_254 = arith.constant dense<0.000000e+00> : vector<8x96xf32>
    %1272 = tpu.matmul %1269, %1271, %cst_254 {dimension_numbers = #tpu.dot_dimension_numbers<[1], [0], [0], [1], [0, 0, 1, 1], [], []>} : vector<8x32xf32>, vector<32x96xf32>, vector<8x96xf32> -> vector<8x96xf32>
    %1273 = vector.extract_strided_slice %1272 {offsets = [0, 0], sizes = [8, 32], strides = [1, 1]} : vector<8x96xf32> to vector<8x32xf32>
    %1274 = vector.extract_strided_slice %9 {offsets = [0, 0, 0], sizes = [1, 1, 64], strides = [1, 1, 1]} : vector<2x1x64xf32> to vector<1x1x64xf32>
    %1275 = vector.shape_cast %1274 : vector<1x1x64xf32> to vector<1x64xf32>
    %1276 = vector.extract_strided_slice %1275 {offsets = [0, 0], sizes = [1, 32], strides = [1, 1]} : vector<1x64xf32> to vector<1x32xf32>
    %1277 = vector.extract_strided_slice %10 {offsets = [0, 0, 0], sizes = [1, 1, 64], strides = [1, 1, 1]} : vector<2x1x64xf32> to vector<1x1x64xf32>
    %1278 = vector.shape_cast %1277 : vector<1x1x64xf32> to vector<1x64xf32>
    %1279 = vector.extract_strided_slice %1278 {offsets = [0, 0], sizes = [1, 32], strides = [1, 1]} : vector<1x64xf32> to vector<1x32xf32>
    %cst_255 = arith.constant dense<0.000000e+00> : vector<8xf32>
    %1280 = vector.multi_reduction <add>, %1273, %cst_255 [1] : vector<8x32xf32> to vector<8xf32>
    %1281 = vector.shape_cast %1280 : vector<8xf32> to vector<8x1xf32>
    %cst_256 = arith.constant 3.200000e+01 : f32
    %1282 = vector.broadcast %cst_256 : f32 to vector<8x1xf32>
    %1283 = arith.divf %1281, %1282 : vector<8x1xf32>
    %1284 = vector.broadcast %1283 : vector<8x1xf32> to vector<8x32xf32>
    %1285 = arith.subf %1273, %1284 : vector<8x32xf32>
    %1286 = arith.mulf %1285, %1285 : vector<8x32xf32>
    %cst_257 = arith.constant dense<0.000000e+00> : vector<8xf32>
    %1287 = vector.multi_reduction <add>, %1286, %cst_257 [1] : vector<8x32xf32> to vector<8xf32>
    %1288 = vector.shape_cast %1287 : vector<8xf32> to vector<8x1xf32>
    %cst_258 = arith.constant 3.200000e+01 : f32
    %1289 = vector.broadcast %cst_258 : f32 to vector<8x1xf32>
    %1290 = arith.divf %1288, %1289 : vector<8x1xf32>
    %1291 = vector.broadcast %1283 : vector<8x1xf32> to vector<8x32xf32>
    %1292 = arith.subf %1273, %1291 : vector<8x32xf32>
    %cst_259 = arith.constant 9.99999974E-6 : f32
    %1293 = vector.broadcast %cst_259 : f32 to vector<8x1xf32>
    %1294 = arith.addf %1290, %1293 : vector<8x1xf32>
    %1295 = math.rsqrt %1294 : vector<8x1xf32>
    %1296 = vector.broadcast %1295 : vector<8x1xf32> to vector<8x32xf32>
    %1297 = arith.mulf %1292, %1296 : vector<8x32xf32>
    %1298 = vector.broadcast %1276 : vector<1x32xf32> to vector<8x32xf32>
    %1299 = arith.mulf %1297, %1298 : vector<8x32xf32>
    %1300 = vector.broadcast %1279 : vector<1x32xf32> to vector<8x32xf32>
    %1301 = arith.addf %1299, %1300 : vector<8x32xf32>
    %1302 = arith.negf %1301 : vector<8x32xf32>
    %1303 = math.exp %1302 : vector<8x32xf32>
    %cst_260 = arith.constant 1.000000e+00 : f32
    %1304 = vector.broadcast %cst_260 : f32 to vector<8x32xf32>
    %1305 = arith.addf %1304, %1303 : vector<8x32xf32>
    %1306 = arith.divf %1304, %1305 : vector<8x32xf32>
    %1307 = vector.extract_strided_slice %1272 {offsets = [0, 32], sizes = [8, 32], strides = [1, 1]} : vector<8x96xf32> to vector<8x32xf32>
    %1308 = vector.extract_strided_slice %9 {offsets = [0, 0, 0], sizes = [1, 1, 64], strides = [1, 1, 1]} : vector<2x1x64xf32> to vector<1x1x64xf32>
    %1309 = vector.shape_cast %1308 : vector<1x1x64xf32> to vector<1x64xf32>
    %1310 = vector.extract_strided_slice %1309 {offsets = [0, 32], sizes = [1, 32], strides = [1, 1]} : vector<1x64xf32> to vector<1x32xf32>
    %1311 = vector.extract_strided_slice %10 {offsets = [0, 0, 0], sizes = [1, 1, 64], strides = [1, 1, 1]} : vector<2x1x64xf32> to vector<1x1x64xf32>
    %1312 = vector.shape_cast %1311 : vector<1x1x64xf32> to vector<1x64xf32>
    %1313 = vector.extract_strided_slice %1312 {offsets = [0, 32], sizes = [1, 32], strides = [1, 1]} : vector<1x64xf32> to vector<1x32xf32>
    %cst_261 = arith.constant dense<0.000000e+00> : vector<8xf32>
    %1314 = vector.multi_reduction <add>, %1307, %cst_261 [1] : vector<8x32xf32> to vector<8xf32>
    %1315 = vector.shape_cast %1314 : vector<8xf32> to vector<8x1xf32>
    %cst_262 = arith.constant 3.200000e+01 : f32
    %1316 = vector.broadcast %cst_262 : f32 to vector<8x1xf32>
    %1317 = arith.divf %1315, %1316 : vector<8x1xf32>
    %1318 = vector.broadcast %1317 : vector<8x1xf32> to vector<8x32xf32>
    %1319 = arith.subf %1307, %1318 : vector<8x32xf32>
    %1320 = arith.mulf %1319, %1319 : vector<8x32xf32>
    %cst_263 = arith.constant dense<0.000000e+00> : vector<8xf32>
    %1321 = vector.multi_reduction <add>, %1320, %cst_263 [1] : vector<8x32xf32> to vector<8xf32>
    %1322 = vector.shape_cast %1321 : vector<8xf32> to vector<8x1xf32>
    %cst_264 = arith.constant 3.200000e+01 : f32
    %1323 = vector.broadcast %cst_264 : f32 to vector<8x1xf32>
    %1324 = arith.divf %1322, %1323 : vector<8x1xf32>
    %1325 = vector.broadcast %1317 : vector<8x1xf32> to vector<8x32xf32>
    %1326 = arith.subf %1307, %1325 : vector<8x32xf32>
    %cst_265 = arith.constant 9.99999974E-6 : f32
    %1327 = vector.broadcast %cst_265 : f32 to vector<8x1xf32>
    %1328 = arith.addf %1324, %1327 : vector<8x1xf32>
    %1329 = math.rsqrt %1328 : vector<8x1xf32>
    %1330 = vector.broadcast %1329 : vector<8x1xf32> to vector<8x32xf32>
    %1331 = arith.mulf %1326, %1330 : vector<8x32xf32>
    %1332 = vector.broadcast %1310 : vector<1x32xf32> to vector<8x32xf32>
    %1333 = arith.mulf %1331, %1332 : vector<8x32xf32>
    %1334 = vector.broadcast %1313 : vector<1x32xf32> to vector<8x32xf32>
    %1335 = arith.addf %1333, %1334 : vector<8x32xf32>
    %1336 = arith.negf %1335 : vector<8x32xf32>
    %1337 = math.exp %1336 : vector<8x32xf32>
    %cst_266 = arith.constant 1.000000e+00 : f32
    %1338 = vector.broadcast %cst_266 : f32 to vector<8x32xf32>
    %1339 = arith.addf %1338, %1337 : vector<8x32xf32>
    %1340 = arith.divf %1338, %1339 : vector<8x32xf32>
    %1341 = vector.extract_strided_slice %1272 {offsets = [0, 64], sizes = [8, 32], strides = [1, 1]} : vector<8x96xf32> to vector<8x32xf32>
    %1342 = vector.extract_strided_slice %11 {offsets = [0, 0, 0], sizes = [1, 1, 32], strides = [1, 1, 1]} : vector<2x1x32xf32> to vector<1x1x32xf32>
    %1343 = vector.shape_cast %1342 : vector<1x1x32xf32> to vector<1x32xf32>
    %1344 = vector.broadcast %1343 : vector<1x32xf32> to vector<8x32xf32>
    %1345 = arith.addf %1341, %1344 : vector<8x32xf32>
    %1346 = arith.mulf %1306, %1345 : vector<8x32xf32>
    %1347 = math.tanh %1346 : vector<8x32xf32>
    %cst_267 = arith.constant 1.000000e+00 : f32
    %1348 = vector.broadcast %cst_267 : f32 to vector<8x32xf32>
    %1349 = arith.subf %1348, %1340 : vector<8x32xf32>
    %1350 = arith.mulf %1349, %1347 : vector<8x32xf32>
    %1351 = arith.mulf %1340, %1269 : vector<8x32xf32>
    %1352 = arith.addf %1350, %1351 : vector<8x32xf32>
    %1353 = vector.extract_strided_slice %8 {offsets = [1, 0, 0], sizes = [1, 32, 96], strides = [1, 1, 1]} : vector<2x32x96xf32> to vector<1x32x96xf32>
    %1354 = vector.shape_cast %1353 : vector<1x32x96xf32> to vector<32x96xf32>
    %cst_268 = arith.constant dense<0.000000e+00> : vector<8x96xf32>
    %1355 = tpu.matmul %1352, %1354, %cst_268 {dimension_numbers = #tpu.dot_dimension_numbers<[1], [0], [0], [1], [0, 0, 1, 1], [], []>} : vector<8x32xf32>, vector<32x96xf32>, vector<8x96xf32> -> vector<8x96xf32>
    %1356 = vector.extract_strided_slice %1355 {offsets = [0, 0], sizes = [8, 32], strides = [1, 1]} : vector<8x96xf32> to vector<8x32xf32>
    %1357 = vector.extract_strided_slice %9 {offsets = [1, 0, 0], sizes = [1, 1, 64], strides = [1, 1, 1]} : vector<2x1x64xf32> to vector<1x1x64xf32>
    %1358 = vector.shape_cast %1357 : vector<1x1x64xf32> to vector<1x64xf32>
    %1359 = vector.extract_strided_slice %1358 {offsets = [0, 0], sizes = [1, 32], strides = [1, 1]} : vector<1x64xf32> to vector<1x32xf32>
    %1360 = vector.extract_strided_slice %10 {offsets = [1, 0, 0], sizes = [1, 1, 64], strides = [1, 1, 1]} : vector<2x1x64xf32> to vector<1x1x64xf32>
    %1361 = vector.shape_cast %1360 : vector<1x1x64xf32> to vector<1x64xf32>
    %1362 = vector.extract_strided_slice %1361 {offsets = [0, 0], sizes = [1, 32], strides = [1, 1]} : vector<1x64xf32> to vector<1x32xf32>
    %cst_269 = arith.constant dense<0.000000e+00> : vector<8xf32>
    %1363 = vector.multi_reduction <add>, %1356, %cst_269 [1] : vector<8x32xf32> to vector<8xf32>
    %1364 = vector.shape_cast %1363 : vector<8xf32> to vector<8x1xf32>
    %cst_270 = arith.constant 3.200000e+01 : f32
    %1365 = vector.broadcast %cst_270 : f32 to vector<8x1xf32>
    %1366 = arith.divf %1364, %1365 : vector<8x1xf32>
    %1367 = vector.broadcast %1366 : vector<8x1xf32> to vector<8x32xf32>
    %1368 = arith.subf %1356, %1367 : vector<8x32xf32>
    %1369 = arith.mulf %1368, %1368 : vector<8x32xf32>
    %cst_271 = arith.constant dense<0.000000e+00> : vector<8xf32>
    %1370 = vector.multi_reduction <add>, %1369, %cst_271 [1] : vector<8x32xf32> to vector<8xf32>
    %1371 = vector.shape_cast %1370 : vector<8xf32> to vector<8x1xf32>
    %cst_272 = arith.constant 3.200000e+01 : f32
    %1372 = vector.broadcast %cst_272 : f32 to vector<8x1xf32>
    %1373 = arith.divf %1371, %1372 : vector<8x1xf32>
    %1374 = vector.broadcast %1366 : vector<8x1xf32> to vector<8x32xf32>
    %1375 = arith.subf %1356, %1374 : vector<8x32xf32>
    %cst_273 = arith.constant 9.99999974E-6 : f32
    %1376 = vector.broadcast %cst_273 : f32 to vector<8x1xf32>
    %1377 = arith.addf %1373, %1376 : vector<8x1xf32>
    %1378 = math.rsqrt %1377 : vector<8x1xf32>
    %1379 = vector.broadcast %1378 : vector<8x1xf32> to vector<8x32xf32>
    %1380 = arith.mulf %1375, %1379 : vector<8x32xf32>
    %1381 = vector.broadcast %1359 : vector<1x32xf32> to vector<8x32xf32>
    %1382 = arith.mulf %1380, %1381 : vector<8x32xf32>
    %1383 = vector.broadcast %1362 : vector<1x32xf32> to vector<8x32xf32>
    %1384 = arith.addf %1382, %1383 : vector<8x32xf32>
    %1385 = arith.negf %1384 : vector<8x32xf32>
    %1386 = math.exp %1385 : vector<8x32xf32>
    %cst_274 = arith.constant 1.000000e+00 : f32
    %1387 = vector.broadcast %cst_274 : f32 to vector<8x32xf32>
    %1388 = arith.addf %1387, %1386 : vector<8x32xf32>
    %1389 = arith.divf %1387, %1388 : vector<8x32xf32>
    %1390 = vector.extract_strided_slice %1355 {offsets = [0, 32], sizes = [8, 32], strides = [1, 1]} : vector<8x96xf32> to vector<8x32xf32>
    %1391 = vector.extract_strided_slice %9 {offsets = [1, 0, 0], sizes = [1, 1, 64], strides = [1, 1, 1]} : vector<2x1x64xf32> to vector<1x1x64xf32>
    %1392 = vector.shape_cast %1391 : vector<1x1x64xf32> to vector<1x64xf32>
    %1393 = vector.extract_strided_slice %1392 {offsets = [0, 32], sizes = [1, 32], strides = [1, 1]} : vector<1x64xf32> to vector<1x32xf32>
    %1394 = vector.extract_strided_slice %10 {offsets = [1, 0, 0], sizes = [1, 1, 64], strides = [1, 1, 1]} : vector<2x1x64xf32> to vector<1x1x64xf32>
    %1395 = vector.shape_cast %1394 : vector<1x1x64xf32> to vector<1x64xf32>
    %1396 = vector.extract_strided_slice %1395 {offsets = [0, 32], sizes = [1, 32], strides = [1, 1]} : vector<1x64xf32> to vector<1x32xf32>
    %cst_275 = arith.constant dense<0.000000e+00> : vector<8xf32>
    %1397 = vector.multi_reduction <add>, %1390, %cst_275 [1] : vector<8x32xf32> to vector<8xf32>
    %1398 = vector.shape_cast %1397 : vector<8xf32> to vector<8x1xf32>
    %cst_276 = arith.constant 3.200000e+01 : f32
    %1399 = vector.broadcast %cst_276 : f32 to vector<8x1xf32>
    %1400 = arith.divf %1398, %1399 : vector<8x1xf32>
    %1401 = vector.broadcast %1400 : vector<8x1xf32> to vector<8x32xf32>
    %1402 = arith.subf %1390, %1401 : vector<8x32xf32>
    %1403 = arith.mulf %1402, %1402 : vector<8x32xf32>
    %cst_277 = arith.constant dense<0.000000e+00> : vector<8xf32>
    %1404 = vector.multi_reduction <add>, %1403, %cst_277 [1] : vector<8x32xf32> to vector<8xf32>
    %1405 = vector.shape_cast %1404 : vector<8xf32> to vector<8x1xf32>
    %cst_278 = arith.constant 3.200000e+01 : f32
    %1406 = vector.broadcast %cst_278 : f32 to vector<8x1xf32>
    %1407 = arith.divf %1405, %1406 : vector<8x1xf32>
    %1408 = vector.broadcast %1400 : vector<8x1xf32> to vector<8x32xf32>
    %1409 = arith.subf %1390, %1408 : vector<8x32xf32>
    %cst_279 = arith.constant 9.99999974E-6 : f32
    %1410 = vector.broadcast %cst_279 : f32 to vector<8x1xf32>
    %1411 = arith.addf %1407, %1410 : vector<8x1xf32>
    %1412 = math.rsqrt %1411 : vector<8x1xf32>
    %1413 = vector.broadcast %1412 : vector<8x1xf32> to vector<8x32xf32>
    %1414 = arith.mulf %1409, %1413 : vector<8x32xf32>
    %1415 = vector.broadcast %1393 : vector<1x32xf32> to vector<8x32xf32>
    %1416 = arith.mulf %1414, %1415 : vector<8x32xf32>
    %1417 = vector.broadcast %1396 : vector<1x32xf32> to vector<8x32xf32>
    %1418 = arith.addf %1416, %1417 : vector<8x32xf32>
    %1419 = arith.negf %1418 : vector<8x32xf32>
    %1420 = math.exp %1419 : vector<8x32xf32>
    %cst_280 = arith.constant 1.000000e+00 : f32
    %1421 = vector.broadcast %cst_280 : f32 to vector<8x32xf32>
    %1422 = arith.addf %1421, %1420 : vector<8x32xf32>
    %1423 = arith.divf %1421, %1422 : vector<8x32xf32>
    %1424 = vector.extract_strided_slice %1355 {offsets = [0, 64], sizes = [8, 32], strides = [1, 1]} : vector<8x96xf32> to vector<8x32xf32>
    %1425 = vector.extract_strided_slice %11 {offsets = [1, 0, 0], sizes = [1, 1, 32], strides = [1, 1, 1]} : vector<2x1x32xf32> to vector<1x1x32xf32>
    %1426 = vector.shape_cast %1425 : vector<1x1x32xf32> to vector<1x32xf32>
    %1427 = vector.broadcast %1426 : vector<1x32xf32> to vector<8x32xf32>
    %1428 = arith.addf %1424, %1427 : vector<8x32xf32>
    %1429 = arith.mulf %1389, %1428 : vector<8x32xf32>
    %1430 = math.tanh %1429 : vector<8x32xf32>
    %cst_281 = arith.constant 1.000000e+00 : f32
    %1431 = vector.broadcast %cst_281 : f32 to vector<8x32xf32>
    %1432 = arith.subf %1431, %1423 : vector<8x32xf32>
    %1433 = arith.mulf %1432, %1430 : vector<8x32xf32>
    %1434 = arith.mulf %1423, %1352 : vector<8x32xf32>
    %1435 = arith.addf %1433, %1434 : vector<8x32xf32>
    %1436 = arith.index_cast %1154 : i32 to index
    %c0_282 = arith.constant 0 : index
    %1437 = vector.load %arg11[%1436, %c0_282] : memref<64x32xf32, #tpu.memory_space<vmem>>, vector<8x32xf32>
    tpu.vector_store %arg11[%1436, %c0_282], %1435 {strides = array<i32>} : memref<64x32xf32, #tpu.memory_space<vmem>>, vector<8x32xf32>,
    %c5_i32 = arith.constant 5 : i32
    %c8_i32_283 = arith.constant 8 : i32
    %1438 = arith.muli %c5_i32, %c8_i32_283 : i32
    %1439 = tpu.assume_multiple %1438, 8 : i32
    %1440 = arith.index_cast %1439 : i32 to index
    %c0_284 = arith.constant 0 : index
    %1441 = vector.load %arg1[%1440, %c0_284] : memref<64x16xf32, #tpu.memory_space<vmem>>, vector<8x16xf32>
    %cst_285 = arith.constant dense<0.000000e+00> : vector<8x160xf32>
    %1442 = tpu.matmul %1441, %3, %cst_285 {dimension_numbers = #tpu.dot_dimension_numbers<[1], [0], [0], [1], [0, 0, 1, 1], [], []>} : vector<8x16xf32>, vector<16x160xf32>, vector<8x160xf32> -> vector<8x160xf32>
    %cst_286 = arith.constant dense<0.000000e+00> : vector<8x128xf32>
    %1443 = tpu.matmul %1435, %4, %cst_286 {dimension_numbers = #tpu.dot_dimension_numbers<[1], [0], [0], [1], [0, 0, 1, 1], [], []>} : vector<8x32xf32>, vector<32x128xf32>, vector<8x128xf32> -> vector<8x128xf32>
    %1444 = vector.extract_strided_slice %1442 {offsets = [0, 0], sizes = [8, 32], strides = [1, 1]} : vector<8x160xf32> to vector<8x32xf32>
    %1445 = vector.extract_strided_slice %1443 {offsets = [0, 0], sizes = [8, 32], strides = [1, 1]} : vector<8x128xf32> to vector<8x32xf32>
    %1446 = arith.addf %1444, %1445 : vector<8x32xf32>
    %1447 = vector.extract_strided_slice %5 {offsets = [0, 0], sizes = [1, 32], strides = [1, 1]} : vector<1x96xf32> to vector<1x32xf32>
    %1448 = vector.extract_strided_slice %6 {offsets = [0, 0], sizes = [1, 32], strides = [1, 1]} : vector<1x96xf32> to vector<1x32xf32>
    %cst_287 = arith.constant dense<0.000000e+00> : vector<8xf32>
    %1449 = vector.multi_reduction <add>, %1446, %cst_287 [1] : vector<8x32xf32> to vector<8xf32>
    %1450 = vector.shape_cast %1449 : vector<8xf32> to vector<8x1xf32>
    %cst_288 = arith.constant 3.200000e+01 : f32
    %1451 = vector.broadcast %cst_288 : f32 to vector<8x1xf32>
    %1452 = arith.divf %1450, %1451 : vector<8x1xf32>
    %1453 = vector.broadcast %1452 : vector<8x1xf32> to vector<8x32xf32>
    %1454 = arith.subf %1446, %1453 : vector<8x32xf32>
    %1455 = arith.mulf %1454, %1454 : vector<8x32xf32>
    %cst_289 = arith.constant dense<0.000000e+00> : vector<8xf32>
    %1456 = vector.multi_reduction <add>, %1455, %cst_289 [1] : vector<8x32xf32> to vector<8xf32>
    %1457 = vector.shape_cast %1456 : vector<8xf32> to vector<8x1xf32>
    %cst_290 = arith.constant 3.200000e+01 : f32
    %1458 = vector.broadcast %cst_290 : f32 to vector<8x1xf32>
    %1459 = arith.divf %1457, %1458 : vector<8x1xf32>
    %1460 = vector.broadcast %1452 : vector<8x1xf32> to vector<8x32xf32>
    %1461 = arith.subf %1446, %1460 : vector<8x32xf32>
    %cst_291 = arith.constant 9.99999974E-6 : f32
    %1462 = vector.broadcast %cst_291 : f32 to vector<8x1xf32>
    %1463 = arith.addf %1459, %1462 : vector<8x1xf32>
    %1464 = math.rsqrt %1463 : vector<8x1xf32>
    %1465 = vector.broadcast %1464 : vector<8x1xf32> to vector<8x32xf32>
    %1466 = arith.mulf %1461, %1465 : vector<8x32xf32>
    %1467 = vector.broadcast %1447 : vector<1x32xf32> to vector<8x32xf32>
    %1468 = arith.mulf %1466, %1467 : vector<8x32xf32>
    %1469 = vector.broadcast %1448 : vector<1x32xf32> to vector<8x32xf32>
    %1470 = arith.addf %1468, %1469 : vector<8x32xf32>
    %1471 = arith.negf %1470 : vector<8x32xf32>
    %1472 = math.exp %1471 : vector<8x32xf32>
    %cst_292 = arith.constant 1.000000e+00 : f32
    %1473 = vector.broadcast %cst_292 : f32 to vector<8x32xf32>
    %1474 = arith.addf %1473, %1472 : vector<8x32xf32>
    %1475 = arith.divf %1473, %1474 : vector<8x32xf32>
    %1476 = vector.extract_strided_slice %1442 {offsets = [0, 32], sizes = [8, 32], strides = [1, 1]} : vector<8x160xf32> to vector<8x32xf32>
    %1477 = vector.extract_strided_slice %1443 {offsets = [0, 32], sizes = [8, 32], strides = [1, 1]} : vector<8x128xf32> to vector<8x32xf32>
    %1478 = arith.addf %1476, %1477 : vector<8x32xf32>
    %1479 = vector.extract_strided_slice %5 {offsets = [0, 32], sizes = [1, 32], strides = [1, 1]} : vector<1x96xf32> to vector<1x32xf32>
    %1480 = vector.extract_strided_slice %6 {offsets = [0, 32], sizes = [1, 32], strides = [1, 1]} : vector<1x96xf32> to vector<1x32xf32>
    %cst_293 = arith.constant dense<0.000000e+00> : vector<8xf32>
    %1481 = vector.multi_reduction <add>, %1478, %cst_293 [1] : vector<8x32xf32> to vector<8xf32>
    %1482 = vector.shape_cast %1481 : vector<8xf32> to vector<8x1xf32>
    %cst_294 = arith.constant 3.200000e+01 : f32
    %1483 = vector.broadcast %cst_294 : f32 to vector<8x1xf32>
    %1484 = arith.divf %1482, %1483 : vector<8x1xf32>
    %1485 = vector.broadcast %1484 : vector<8x1xf32> to vector<8x32xf32>
    %1486 = arith.subf %1478, %1485 : vector<8x32xf32>
    %1487 = arith.mulf %1486, %1486 : vector<8x32xf32>
    %cst_295 = arith.constant dense<0.000000e+00> : vector<8xf32>
    %1488 = vector.multi_reduction <add>, %1487, %cst_295 [1] : vector<8x32xf32> to vector<8xf32>
    %1489 = vector.shape_cast %1488 : vector<8xf32> to vector<8x1xf32>
    %cst_296 = arith.constant 3.200000e+01 : f32
    %1490 = vector.broadcast %cst_296 : f32 to vector<8x1xf32>
    %1491 = arith.divf %1489, %1490 : vector<8x1xf32>
    %1492 = vector.broadcast %1484 : vector<8x1xf32> to vector<8x32xf32>
    %1493 = arith.subf %1478, %1492 : vector<8x32xf32>
    %cst_297 = arith.constant 9.99999974E-6 : f32
    %1494 = vector.broadcast %cst_297 : f32 to vector<8x1xf32>
    %1495 = arith.addf %1491, %1494 : vector<8x1xf32>
    %1496 = math.rsqrt %1495 : vector<8x1xf32>
    %1497 = vector.broadcast %1496 : vector<8x1xf32> to vector<8x32xf32>
    %1498 = arith.mulf %1493, %1497 : vector<8x32xf32>
    %1499 = vector.broadcast %1479 : vector<1x32xf32> to vector<8x32xf32>
    %1500 = arith.mulf %1498, %1499 : vector<8x32xf32>
    %1501 = vector.broadcast %1480 : vector<1x32xf32> to vector<8x32xf32>
    %1502 = arith.addf %1500, %1501 : vector<8x32xf32>
    %1503 = arith.negf %1502 : vector<8x32xf32>
    %1504 = math.exp %1503 : vector<8x32xf32>
    %cst_298 = arith.constant 1.000000e+00 : f32
    %1505 = vector.broadcast %cst_298 : f32 to vector<8x32xf32>
    %1506 = arith.addf %1505, %1504 : vector<8x32xf32>
    %1507 = arith.divf %1505, %1506 : vector<8x32xf32>
    %1508 = vector.extract_strided_slice %1442 {offsets = [0, 64], sizes = [8, 32], strides = [1, 1]} : vector<8x160xf32> to vector<8x32xf32>
    %1509 = vector.extract_strided_slice %1443 {offsets = [0, 64], sizes = [8, 32], strides = [1, 1]} : vector<8x128xf32> to vector<8x32xf32>
    %1510 = arith.addf %1508, %1509 : vector<8x32xf32>
    %1511 = vector.extract_strided_slice %5 {offsets = [0, 64], sizes = [1, 32], strides = [1, 1]} : vector<1x96xf32> to vector<1x32xf32>
    %1512 = vector.extract_strided_slice %6 {offsets = [0, 64], sizes = [1, 32], strides = [1, 1]} : vector<1x96xf32> to vector<1x32xf32>
    %cst_299 = arith.constant dense<0.000000e+00> : vector<8xf32>
    %1513 = vector.multi_reduction <add>, %1510, %cst_299 [1] : vector<8x32xf32> to vector<8xf32>
    %1514 = vector.shape_cast %1513 : vector<8xf32> to vector<8x1xf32>
    %cst_300 = arith.constant 3.200000e+01 : f32
    %1515 = vector.broadcast %cst_300 : f32 to vector<8x1xf32>
    %1516 = arith.divf %1514, %1515 : vector<8x1xf32>
    %1517 = vector.broadcast %1516 : vector<8x1xf32> to vector<8x32xf32>
    %1518 = arith.subf %1510, %1517 : vector<8x32xf32>
    %1519 = arith.mulf %1518, %1518 : vector<8x32xf32>
    %cst_301 = arith.constant dense<0.000000e+00> : vector<8xf32>
    %1520 = vector.multi_reduction <add>, %1519, %cst_301 [1] : vector<8x32xf32> to vector<8xf32>
    %1521 = vector.shape_cast %1520 : vector<8xf32> to vector<8x1xf32>
    %cst_302 = arith.constant 3.200000e+01 : f32
    %1522 = vector.broadcast %cst_302 : f32 to vector<8x1xf32>
    %1523 = arith.divf %1521, %1522 : vector<8x1xf32>
    %1524 = vector.broadcast %1516 : vector<8x1xf32> to vector<8x32xf32>
    %1525 = arith.subf %1510, %1524 : vector<8x32xf32>
    %cst_303 = arith.constant 9.99999974E-6 : f32
    %1526 = vector.broadcast %cst_303 : f32 to vector<8x1xf32>
    %1527 = arith.addf %1523, %1526 : vector<8x1xf32>
    %1528 = math.rsqrt %1527 : vector<8x1xf32>
    %1529 = vector.broadcast %1528 : vector<8x1xf32> to vector<8x32xf32>
    %1530 = arith.mulf %1525, %1529 : vector<8x32xf32>
    %1531 = vector.broadcast %1511 : vector<1x32xf32> to vector<8x32xf32>
    %1532 = arith.mulf %1530, %1531 : vector<8x32xf32>
    %1533 = vector.broadcast %1512 : vector<1x32xf32> to vector<8x32xf32>
    %1534 = arith.addf %1532, %1533 : vector<8x32xf32>
    %1535 = arith.negf %1534 : vector<8x32xf32>
    %1536 = math.exp %1535 : vector<8x32xf32>
    %cst_304 = arith.constant 1.000000e+00 : f32
    %1537 = vector.broadcast %cst_304 : f32 to vector<8x32xf32>
    %1538 = arith.addf %1537, %1536 : vector<8x32xf32>
    %1539 = arith.divf %1537, %1538 : vector<8x32xf32>
    %1540 = vector.extract_strided_slice %1442 {offsets = [0, 96], sizes = [8, 32], strides = [1, 1]} : vector<8x160xf32> to vector<8x32xf32>
    %1541 = vector.extract_strided_slice %1443 {offsets = [0, 96], sizes = [8, 32], strides = [1, 1]} : vector<8x128xf32> to vector<8x32xf32>
    %1542 = vector.broadcast %7 : vector<1x32xf32> to vector<8x32xf32>
    %1543 = arith.addf %1541, %1542 : vector<8x32xf32>
    %1544 = arith.mulf %1475, %1543 : vector<8x32xf32>
    %1545 = arith.addf %1540, %1544 : vector<8x32xf32>
    %1546 = math.tanh %1545 : vector<8x32xf32>
    %1547 = vector.extract_strided_slice %1442 {offsets = [0, 128], sizes = [8, 32], strides = [1, 1]} : vector<8x160xf32> to vector<8x32xf32>
    %1548 = arith.mulf %1539, %1547 : vector<8x32xf32>
    %1549 = arith.addf %1546, %1548 : vector<8x32xf32>
    %cst_305 = arith.constant 1.000000e+00 : f32
    %1550 = vector.broadcast %cst_305 : f32 to vector<8x32xf32>
    %1551 = arith.subf %1550, %1507 : vector<8x32xf32>
    %1552 = arith.mulf %1551, %1435 : vector<8x32xf32>
    %1553 = arith.mulf %1507, %1549 : vector<8x32xf32>
    %1554 = arith.addf %1552, %1553 : vector<8x32xf32>
    %1555 = vector.extract_strided_slice %8 {offsets = [0, 0, 0], sizes = [1, 32, 96], strides = [1, 1, 1]} : vector<2x32x96xf32> to vector<1x32x96xf32>
    %1556 = vector.shape_cast %1555 : vector<1x32x96xf32> to vector<32x96xf32>
    %cst_306 = arith.constant dense<0.000000e+00> : vector<8x96xf32>
    %1557 = tpu.matmul %1554, %1556, %cst_306 {dimension_numbers = #tpu.dot_dimension_numbers<[1], [0], [0], [1], [0, 0, 1, 1], [], []>} : vector<8x32xf32>, vector<32x96xf32>, vector<8x96xf32> -> vector<8x96xf32>
    %1558 = vector.extract_strided_slice %1557 {offsets = [0, 0], sizes = [8, 32], strides = [1, 1]} : vector<8x96xf32> to vector<8x32xf32>
    %1559 = vector.extract_strided_slice %9 {offsets = [0, 0, 0], sizes = [1, 1, 64], strides = [1, 1, 1]} : vector<2x1x64xf32> to vector<1x1x64xf32>
    %1560 = vector.shape_cast %1559 : vector<1x1x64xf32> to vector<1x64xf32>
    %1561 = vector.extract_strided_slice %1560 {offsets = [0, 0], sizes = [1, 32], strides = [1, 1]} : vector<1x64xf32> to vector<1x32xf32>
    %1562 = vector.extract_strided_slice %10 {offsets = [0, 0, 0], sizes = [1, 1, 64], strides = [1, 1, 1]} : vector<2x1x64xf32> to vector<1x1x64xf32>
    %1563 = vector.shape_cast %1562 : vector<1x1x64xf32> to vector<1x64xf32>
    %1564 = vector.extract_strided_slice %1563 {offsets = [0, 0], sizes = [1, 32], strides = [1, 1]} : vector<1x64xf32> to vector<1x32xf32>
    %cst_307 = arith.constant dense<0.000000e+00> : vector<8xf32>
    %1565 = vector.multi_reduction <add>, %1558, %cst_307 [1] : vector<8x32xf32> to vector<8xf32>
    %1566 = vector.shape_cast %1565 : vector<8xf32> to vector<8x1xf32>
    %cst_308 = arith.constant 3.200000e+01 : f32
    %1567 = vector.broadcast %cst_308 : f32 to vector<8x1xf32>
    %1568 = arith.divf %1566, %1567 : vector<8x1xf32>
    %1569 = vector.broadcast %1568 : vector<8x1xf32> to vector<8x32xf32>
    %1570 = arith.subf %1558, %1569 : vector<8x32xf32>
    %1571 = arith.mulf %1570, %1570 : vector<8x32xf32>
    %cst_309 = arith.constant dense<0.000000e+00> : vector<8xf32>
    %1572 = vector.multi_reduction <add>, %1571, %cst_309 [1] : vector<8x32xf32> to vector<8xf32>
    %1573 = vector.shape_cast %1572 : vector<8xf32> to vector<8x1xf32>
    %cst_310 = arith.constant 3.200000e+01 : f32
    %1574 = vector.broadcast %cst_310 : f32 to vector<8x1xf32>
    %1575 = arith.divf %1573, %1574 : vector<8x1xf32>
    %1576 = vector.broadcast %1568 : vector<8x1xf32> to vector<8x32xf32>
    %1577 = arith.subf %1558, %1576 : vector<8x32xf32>
    %cst_311 = arith.constant 9.99999974E-6 : f32
    %1578 = vector.broadcast %cst_311 : f32 to vector<8x1xf32>
    %1579 = arith.addf %1575, %1578 : vector<8x1xf32>
    %1580 = math.rsqrt %1579 : vector<8x1xf32>
    %1581 = vector.broadcast %1580 : vector<8x1xf32> to vector<8x32xf32>
    %1582 = arith.mulf %1577, %1581 : vector<8x32xf32>
    %1583 = vector.broadcast %1561 : vector<1x32xf32> to vector<8x32xf32>
    %1584 = arith.mulf %1582, %1583 : vector<8x32xf32>
    %1585 = vector.broadcast %1564 : vector<1x32xf32> to vector<8x32xf32>
    %1586 = arith.addf %1584, %1585 : vector<8x32xf32>
    %1587 = arith.negf %1586 : vector<8x32xf32>
    %1588 = math.exp %1587 : vector<8x32xf32>
    %cst_312 = arith.constant 1.000000e+00 : f32
    %1589 = vector.broadcast %cst_312 : f32 to vector<8x32xf32>
    %1590 = arith.addf %1589, %1588 : vector<8x32xf32>
    %1591 = arith.divf %1589, %1590 : vector<8x32xf32>
    %1592 = vector.extract_strided_slice %1557 {offsets = [0, 32], sizes = [8, 32], strides = [1, 1]} : vector<8x96xf32> to vector<8x32xf32>
    %1593 = vector.extract_strided_slice %9 {offsets = [0, 0, 0], sizes = [1, 1, 64], strides = [1, 1, 1]} : vector<2x1x64xf32> to vector<1x1x64xf32>
    %1594 = vector.shape_cast %1593 : vector<1x1x64xf32> to vector<1x64xf32>
    %1595 = vector.extract_strided_slice %1594 {offsets = [0, 32], sizes = [1, 32], strides = [1, 1]} : vector<1x64xf32> to vector<1x32xf32>
    %1596 = vector.extract_strided_slice %10 {offsets = [0, 0, 0], sizes = [1, 1, 64], strides = [1, 1, 1]} : vector<2x1x64xf32> to vector<1x1x64xf32>
    %1597 = vector.shape_cast %1596 : vector<1x1x64xf32> to vector<1x64xf32>
    %1598 = vector.extract_strided_slice %1597 {offsets = [0, 32], sizes = [1, 32], strides = [1, 1]} : vector<1x64xf32> to vector<1x32xf32>
    %cst_313 = arith.constant dense<0.000000e+00> : vector<8xf32>
    %1599 = vector.multi_reduction <add>, %1592, %cst_313 [1] : vector<8x32xf32> to vector<8xf32>
    %1600 = vector.shape_cast %1599 : vector<8xf32> to vector<8x1xf32>
    %cst_314 = arith.constant 3.200000e+01 : f32
    %1601 = vector.broadcast %cst_314 : f32 to vector<8x1xf32>
    %1602 = arith.divf %1600, %1601 : vector<8x1xf32>
    %1603 = vector.broadcast %1602 : vector<8x1xf32> to vector<8x32xf32>
    %1604 = arith.subf %1592, %1603 : vector<8x32xf32>
    %1605 = arith.mulf %1604, %1604 : vector<8x32xf32>
    %cst_315 = arith.constant dense<0.000000e+00> : vector<8xf32>
    %1606 = vector.multi_reduction <add>, %1605, %cst_315 [1] : vector<8x32xf32> to vector<8xf32>
    %1607 = vector.shape_cast %1606 : vector<8xf32> to vector<8x1xf32>
    %cst_316 = arith.constant 3.200000e+01 : f32
    %1608 = vector.broadcast %cst_316 : f32 to vector<8x1xf32>
    %1609 = arith.divf %1607, %1608 : vector<8x1xf32>
    %1610 = vector.broadcast %1602 : vector<8x1xf32> to vector<8x32xf32>
    %1611 = arith.subf %1592, %1610 : vector<8x32xf32>
    %cst_317 = arith.constant 9.99999974E-6 : f32
    %1612 = vector.broadcast %cst_317 : f32 to vector<8x1xf32>
    %1613 = arith.addf %1609, %1612 : vector<8x1xf32>
    %1614 = math.rsqrt %1613 : vector<8x1xf32>
    %1615 = vector.broadcast %1614 : vector<8x1xf32> to vector<8x32xf32>
    %1616 = arith.mulf %1611, %1615 : vector<8x32xf32>
    %1617 = vector.broadcast %1595 : vector<1x32xf32> to vector<8x32xf32>
    %1618 = arith.mulf %1616, %1617 : vector<8x32xf32>
    %1619 = vector.broadcast %1598 : vector<1x32xf32> to vector<8x32xf32>
    %1620 = arith.addf %1618, %1619 : vector<8x32xf32>
    %1621 = arith.negf %1620 : vector<8x32xf32>
    %1622 = math.exp %1621 : vector<8x32xf32>
    %cst_318 = arith.constant 1.000000e+00 : f32
    %1623 = vector.broadcast %cst_318 : f32 to vector<8x32xf32>
    %1624 = arith.addf %1623, %1622 : vector<8x32xf32>
    %1625 = arith.divf %1623, %1624 : vector<8x32xf32>
    %1626 = vector.extract_strided_slice %1557 {offsets = [0, 64], sizes = [8, 32], strides = [1, 1]} : vector<8x96xf32> to vector<8x32xf32>
    %1627 = vector.extract_strided_slice %11 {offsets = [0, 0, 0], sizes = [1, 1, 32], strides = [1, 1, 1]} : vector<2x1x32xf32> to vector<1x1x32xf32>
    %1628 = vector.shape_cast %1627 : vector<1x1x32xf32> to vector<1x32xf32>
    %1629 = vector.broadcast %1628 : vector<1x32xf32> to vector<8x32xf32>
    %1630 = arith.addf %1626, %1629 : vector<8x32xf32>
    %1631 = arith.mulf %1591, %1630 : vector<8x32xf32>
    %1632 = math.tanh %1631 : vector<8x32xf32>
    %cst_319 = arith.constant 1.000000e+00 : f32
    %1633 = vector.broadcast %cst_319 : f32 to vector<8x32xf32>
    %1634 = arith.subf %1633, %1625 : vector<8x32xf32>
    %1635 = arith.mulf %1634, %1632 : vector<8x32xf32>
    %1636 = arith.mulf %1625, %1554 : vector<8x32xf32>
    %1637 = arith.addf %1635, %1636 : vector<8x32xf32>
    %1638 = vector.extract_strided_slice %8 {offsets = [1, 0, 0], sizes = [1, 32, 96], strides = [1, 1, 1]} : vector<2x32x96xf32> to vector<1x32x96xf32>
    %1639 = vector.shape_cast %1638 : vector<1x32x96xf32> to vector<32x96xf32>
    %cst_320 = arith.constant dense<0.000000e+00> : vector<8x96xf32>
    %1640 = tpu.matmul %1637, %1639, %cst_320 {dimension_numbers = #tpu.dot_dimension_numbers<[1], [0], [0], [1], [0, 0, 1, 1], [], []>} : vector<8x32xf32>, vector<32x96xf32>, vector<8x96xf32> -> vector<8x96xf32>
    %1641 = vector.extract_strided_slice %1640 {offsets = [0, 0], sizes = [8, 32], strides = [1, 1]} : vector<8x96xf32> to vector<8x32xf32>
    %1642 = vector.extract_strided_slice %9 {offsets = [1, 0, 0], sizes = [1, 1, 64], strides = [1, 1, 1]} : vector<2x1x64xf32> to vector<1x1x64xf32>
    %1643 = vector.shape_cast %1642 : vector<1x1x64xf32> to vector<1x64xf32>
    %1644 = vector.extract_strided_slice %1643 {offsets = [0, 0], sizes = [1, 32], strides = [1, 1]} : vector<1x64xf32> to vector<1x32xf32>
    %1645 = vector.extract_strided_slice %10 {offsets = [1, 0, 0], sizes = [1, 1, 64], strides = [1, 1, 1]} : vector<2x1x64xf32> to vector<1x1x64xf32>
    %1646 = vector.shape_cast %1645 : vector<1x1x64xf32> to vector<1x64xf32>
    %1647 = vector.extract_strided_slice %1646 {offsets = [0, 0], sizes = [1, 32], strides = [1, 1]} : vector<1x64xf32> to vector<1x32xf32>
    %cst_321 = arith.constant dense<0.000000e+00> : vector<8xf32>
    %1648 = vector.multi_reduction <add>, %1641, %cst_321 [1] : vector<8x32xf32> to vector<8xf32>
    %1649 = vector.shape_cast %1648 : vector<8xf32> to vector<8x1xf32>
    %cst_322 = arith.constant 3.200000e+01 : f32
    %1650 = vector.broadcast %cst_322 : f32 to vector<8x1xf32>
    %1651 = arith.divf %1649, %1650 : vector<8x1xf32>
    %1652 = vector.broadcast %1651 : vector<8x1xf32> to vector<8x32xf32>
    %1653 = arith.subf %1641, %1652 : vector<8x32xf32>
    %1654 = arith.mulf %1653, %1653 : vector<8x32xf32>
    %cst_323 = arith.constant dense<0.000000e+00> : vector<8xf32>
    %1655 = vector.multi_reduction <add>, %1654, %cst_323 [1] : vector<8x32xf32> to vector<8xf32>
    %1656 = vector.shape_cast %1655 : vector<8xf32> to vector<8x1xf32>
    %cst_324 = arith.constant 3.200000e+01 : f32
    %1657 = vector.broadcast %cst_324 : f32 to vector<8x1xf32>
    %1658 = arith.divf %1656, %1657 : vector<8x1xf32>
    %1659 = vector.broadcast %1651 : vector<8x1xf32> to vector<8x32xf32>
    %1660 = arith.subf %1641, %1659 : vector<8x32xf32>
    %cst_325 = arith.constant 9.99999974E-6 : f32
    %1661 = vector.broadcast %cst_325 : f32 to vector<8x1xf32>
    %1662 = arith.addf %1658, %1661 : vector<8x1xf32>
    %1663 = math.rsqrt %1662 : vector<8x1xf32>
    %1664 = vector.broadcast %1663 : vector<8x1xf32> to vector<8x32xf32>
    %1665 = arith.mulf %1660, %1664 : vector<8x32xf32>
    %1666 = vector.broadcast %1644 : vector<1x32xf32> to vector<8x32xf32>
    %1667 = arith.mulf %1665, %1666 : vector<8x32xf32>
    %1668 = vector.broadcast %1647 : vector<1x32xf32> to vector<8x32xf32>
    %1669 = arith.addf %1667, %1668 : vector<8x32xf32>
    %1670 = arith.negf %1669 : vector<8x32xf32>
    %1671 = math.exp %1670 : vector<8x32xf32>
    %cst_326 = arith.constant 1.000000e+00 : f32
    %1672 = vector.broadcast %cst_326 : f32 to vector<8x32xf32>
    %1673 = arith.addf %1672, %1671 : vector<8x32xf32>
    %1674 = arith.divf %1672, %1673 : vector<8x32xf32>
    %1675 = vector.extract_strided_slice %1640 {offsets = [0, 32], sizes = [8, 32], strides = [1, 1]} : vector<8x96xf32> to vector<8x32xf32>
    %1676 = vector.extract_strided_slice %9 {offsets = [1, 0, 0], sizes = [1, 1, 64], strides = [1, 1, 1]} : vector<2x1x64xf32> to vector<1x1x64xf32>
    %1677 = vector.shape_cast %1676 : vector<1x1x64xf32> to vector<1x64xf32>
    %1678 = vector.extract_strided_slice %1677 {offsets = [0, 32], sizes = [1, 32], strides = [1, 1]} : vector<1x64xf32> to vector<1x32xf32>
    %1679 = vector.extract_strided_slice %10 {offsets = [1, 0, 0], sizes = [1, 1, 64], strides = [1, 1, 1]} : vector<2x1x64xf32> to vector<1x1x64xf32>
    %1680 = vector.shape_cast %1679 : vector<1x1x64xf32> to vector<1x64xf32>
    %1681 = vector.extract_strided_slice %1680 {offsets = [0, 32], sizes = [1, 32], strides = [1, 1]} : vector<1x64xf32> to vector<1x32xf32>
    %cst_327 = arith.constant dense<0.000000e+00> : vector<8xf32>
    %1682 = vector.multi_reduction <add>, %1675, %cst_327 [1] : vector<8x32xf32> to vector<8xf32>
    %1683 = vector.shape_cast %1682 : vector<8xf32> to vector<8x1xf32>
    %cst_328 = arith.constant 3.200000e+01 : f32
    %1684 = vector.broadcast %cst_328 : f32 to vector<8x1xf32>
    %1685 = arith.divf %1683, %1684 : vector<8x1xf32>
    %1686 = vector.broadcast %1685 : vector<8x1xf32> to vector<8x32xf32>
    %1687 = arith.subf %1675, %1686 : vector<8x32xf32>
    %1688 = arith.mulf %1687, %1687 : vector<8x32xf32>
    %cst_329 = arith.constant dense<0.000000e+00> : vector<8xf32>
    %1689 = vector.multi_reduction <add>, %1688, %cst_329 [1] : vector<8x32xf32> to vector<8xf32>
    %1690 = vector.shape_cast %1689 : vector<8xf32> to vector<8x1xf32>
    %cst_330 = arith.constant 3.200000e+01 : f32
    %1691 = vector.broadcast %cst_330 : f32 to vector<8x1xf32>
    %1692 = arith.divf %1690, %1691 : vector<8x1xf32>
    %1693 = vector.broadcast %1685 : vector<8x1xf32> to vector<8x32xf32>
    %1694 = arith.subf %1675, %1693 : vector<8x32xf32>
    %cst_331 = arith.constant 9.99999974E-6 : f32
    %1695 = vector.broadcast %cst_331 : f32 to vector<8x1xf32>
    %1696 = arith.addf %1692, %1695 : vector<8x1xf32>
    %1697 = math.rsqrt %1696 : vector<8x1xf32>
    %1698 = vector.broadcast %1697 : vector<8x1xf32> to vector<8x32xf32>
    %1699 = arith.mulf %1694, %1698 : vector<8x32xf32>
    %1700 = vector.broadcast %1678 : vector<1x32xf32> to vector<8x32xf32>
    %1701 = arith.mulf %1699, %1700 : vector<8x32xf32>
    %1702 = vector.broadcast %1681 : vector<1x32xf32> to vector<8x32xf32>
    %1703 = arith.addf %1701, %1702 : vector<8x32xf32>
    %1704 = arith.negf %1703 : vector<8x32xf32>
    %1705 = math.exp %1704 : vector<8x32xf32>
    %cst_332 = arith.constant 1.000000e+00 : f32
    %1706 = vector.broadcast %cst_332 : f32 to vector<8x32xf32>
    %1707 = arith.addf %1706, %1705 : vector<8x32xf32>
    %1708 = arith.divf %1706, %1707 : vector<8x32xf32>
    %1709 = vector.extract_strided_slice %1640 {offsets = [0, 64], sizes = [8, 32], strides = [1, 1]} : vector<8x96xf32> to vector<8x32xf32>
    %1710 = vector.extract_strided_slice %11 {offsets = [1, 0, 0], sizes = [1, 1, 32], strides = [1, 1, 1]} : vector<2x1x32xf32> to vector<1x1x32xf32>
    %1711 = vector.shape_cast %1710 : vector<1x1x32xf32> to vector<1x32xf32>
    %1712 = vector.broadcast %1711 : vector<1x32xf32> to vector<8x32xf32>
    %1713 = arith.addf %1709, %1712 : vector<8x32xf32>
    %1714 = arith.mulf %1674, %1713 : vector<8x32xf32>
    %1715 = math.tanh %1714 : vector<8x32xf32>
    %cst_333 = arith.constant 1.000000e+00 : f32
    %1716 = vector.broadcast %cst_333 : f32 to vector<8x32xf32>
    %1717 = arith.subf %1716, %1708 : vector<8x32xf32>
    %1718 = arith.mulf %1717, %1715 : vector<8x32xf32>
    %1719 = arith.mulf %1708, %1637 : vector<8x32xf32>
    %1720 = arith.addf %1718, %1719 : vector<8x32xf32>
    %1721 = arith.index_cast %1439 : i32 to index
    %c0_334 = arith.constant 0 : index
    %1722 = vector.load %arg11[%1721, %c0_334] : memref<64x32xf32, #tpu.memory_space<vmem>>, vector<8x32xf32>
    tpu.vector_store %arg11[%1721, %c0_334], %1720 {strides = array<i32>} : memref<64x32xf32, #tpu.memory_space<vmem>>, vector<8x32xf32>,
    %c6_i32 = arith.constant 6 : i32
    %c8_i32_335 = arith.constant 8 : i32
    %1723 = arith.muli %c6_i32, %c8_i32_335 : i32
    %1724 = tpu.assume_multiple %1723, 8 : i32
    %1725 = arith.index_cast %1724 : i32 to index
    %c0_336 = arith.constant 0 : index
    %1726 = vector.load %arg1[%1725, %c0_336] : memref<64x16xf32, #tpu.memory_space<vmem>>, vector<8x16xf32>
    %cst_337 = arith.constant dense<0.000000e+00> : vector<8x160xf32>
    %1727 = tpu.matmul %1726, %3, %cst_337 {dimension_numbers = #tpu.dot_dimension_numbers<[1], [0], [0], [1], [0, 0, 1, 1], [], []>} : vector<8x16xf32>, vector<16x160xf32>, vector<8x160xf32> -> vector<8x160xf32>
    %cst_338 = arith.constant dense<0.000000e+00> : vector<8x128xf32>
    %1728 = tpu.matmul %1720, %4, %cst_338 {dimension_numbers = #tpu.dot_dimension_numbers<[1], [0], [0], [1], [0, 0, 1, 1], [], []>} : vector<8x32xf32>, vector<32x128xf32>, vector<8x128xf32> -> vector<8x128xf32>
    %1729 = vector.extract_strided_slice %1727 {offsets = [0, 0], sizes = [8, 32], strides = [1, 1]} : vector<8x160xf32> to vector<8x32xf32>
    %1730 = vector.extract_strided_slice %1728 {offsets = [0, 0], sizes = [8, 32], strides = [1, 1]} : vector<8x128xf32> to vector<8x32xf32>
    %1731 = arith.addf %1729, %1730 : vector<8x32xf32>
    %1732 = vector.extract_strided_slice %5 {offsets = [0, 0], sizes = [1, 32], strides = [1, 1]} : vector<1x96xf32> to vector<1x32xf32>
    %1733 = vector.extract_strided_slice %6 {offsets = [0, 0], sizes = [1, 32], strides = [1, 1]} : vector<1x96xf32> to vector<1x32xf32>
    %cst_339 = arith.constant dense<0.000000e+00> : vector<8xf32>
    %1734 = vector.multi_reduction <add>, %1731, %cst_339 [1] : vector<8x32xf32> to vector<8xf32>
    %1735 = vector.shape_cast %1734 : vector<8xf32> to vector<8x1xf32>
    %cst_340 = arith.constant 3.200000e+01 : f32
    %1736 = vector.broadcast %cst_340 : f32 to vector<8x1xf32>
    %1737 = arith.divf %1735, %1736 : vector<8x1xf32>
    %1738 = vector.broadcast %1737 : vector<8x1xf32> to vector<8x32xf32>
    %1739 = arith.subf %1731, %1738 : vector<8x32xf32>
    %1740 = arith.mulf %1739, %1739 : vector<8x32xf32>
    %cst_341 = arith.constant dense<0.000000e+00> : vector<8xf32>
    %1741 = vector.multi_reduction <add>, %1740, %cst_341 [1] : vector<8x32xf32> to vector<8xf32>
    %1742 = vector.shape_cast %1741 : vector<8xf32> to vector<8x1xf32>
    %cst_342 = arith.constant 3.200000e+01 : f32
    %1743 = vector.broadcast %cst_342 : f32 to vector<8x1xf32>
    %1744 = arith.divf %1742, %1743 : vector<8x1xf32>
    %1745 = vector.broadcast %1737 : vector<8x1xf32> to vector<8x32xf32>
    %1746 = arith.subf %1731, %1745 : vector<8x32xf32>
    %cst_343 = arith.constant 9.99999974E-6 : f32
    %1747 = vector.broadcast %cst_343 : f32 to vector<8x1xf32>
    %1748 = arith.addf %1744, %1747 : vector<8x1xf32>
    %1749 = math.rsqrt %1748 : vector<8x1xf32>
    %1750 = vector.broadcast %1749 : vector<8x1xf32> to vector<8x32xf32>
    %1751 = arith.mulf %1746, %1750 : vector<8x32xf32>
    %1752 = vector.broadcast %1732 : vector<1x32xf32> to vector<8x32xf32>
    %1753 = arith.mulf %1751, %1752 : vector<8x32xf32>
    %1754 = vector.broadcast %1733 : vector<1x32xf32> to vector<8x32xf32>
    %1755 = arith.addf %1753, %1754 : vector<8x32xf32>
    %1756 = arith.negf %1755 : vector<8x32xf32>
    %1757 = math.exp %1756 : vector<8x32xf32>
    %cst_344 = arith.constant 1.000000e+00 : f32
    %1758 = vector.broadcast %cst_344 : f32 to vector<8x32xf32>
    %1759 = arith.addf %1758, %1757 : vector<8x32xf32>
    %1760 = arith.divf %1758, %1759 : vector<8x32xf32>
    %1761 = vector.extract_strided_slice %1727 {offsets = [0, 32], sizes = [8, 32], strides = [1, 1]} : vector<8x160xf32> to vector<8x32xf32>
    %1762 = vector.extract_strided_slice %1728 {offsets = [0, 32], sizes = [8, 32], strides = [1, 1]} : vector<8x128xf32> to vector<8x32xf32>
    %1763 = arith.addf %1761, %1762 : vector<8x32xf32>
    %1764 = vector.extract_strided_slice %5 {offsets = [0, 32], sizes = [1, 32], strides = [1, 1]} : vector<1x96xf32> to vector<1x32xf32>
    %1765 = vector.extract_strided_slice %6 {offsets = [0, 32], sizes = [1, 32], strides = [1, 1]} : vector<1x96xf32> to vector<1x32xf32>
    %cst_345 = arith.constant dense<0.000000e+00> : vector<8xf32>
    %1766 = vector.multi_reduction <add>, %1763, %cst_345 [1] : vector<8x32xf32> to vector<8xf32>
    %1767 = vector.shape_cast %1766 : vector<8xf32> to vector<8x1xf32>
    %cst_346 = arith.constant 3.200000e+01 : f32
    %1768 = vector.broadcast %cst_346 : f32 to vector<8x1xf32>
    %1769 = arith.divf %1767, %1768 : vector<8x1xf32>
    %1770 = vector.broadcast %1769 : vector<8x1xf32> to vector<8x32xf32>
    %1771 = arith.subf %1763, %1770 : vector<8x32xf32>
    %1772 = arith.mulf %1771, %1771 : vector<8x32xf32>
    %cst_347 = arith.constant dense<0.000000e+00> : vector<8xf32>
    %1773 = vector.multi_reduction <add>, %1772, %cst_347 [1] : vector<8x32xf32> to vector<8xf32>
    %1774 = vector.shape_cast %1773 : vector<8xf32> to vector<8x1xf32>
    %cst_348 = arith.constant 3.200000e+01 : f32
    %1775 = vector.broadcast %cst_348 : f32 to vector<8x1xf32>
    %1776 = arith.divf %1774, %1775 : vector<8x1xf32>
    %1777 = vector.broadcast %1769 : vector<8x1xf32> to vector<8x32xf32>
    %1778 = arith.subf %1763, %1777 : vector<8x32xf32>
    %cst_349 = arith.constant 9.99999974E-6 : f32
    %1779 = vector.broadcast %cst_349 : f32 to vector<8x1xf32>
    %1780 = arith.addf %1776, %1779 : vector<8x1xf32>
    %1781 = math.rsqrt %1780 : vector<8x1xf32>
    %1782 = vector.broadcast %1781 : vector<8x1xf32> to vector<8x32xf32>
    %1783 = arith.mulf %1778, %1782 : vector<8x32xf32>
    %1784 = vector.broadcast %1764 : vector<1x32xf32> to vector<8x32xf32>
    %1785 = arith.mulf %1783, %1784 : vector<8x32xf32>
    %1786 = vector.broadcast %1765 : vector<1x32xf32> to vector<8x32xf32>
    %1787 = arith.addf %1785, %1786 : vector<8x32xf32>
    %1788 = arith.negf %1787 : vector<8x32xf32>
    %1789 = math.exp %1788 : vector<8x32xf32>
    %cst_350 = arith.constant 1.000000e+00 : f32
    %1790 = vector.broadcast %cst_350 : f32 to vector<8x32xf32>
    %1791 = arith.addf %1790, %1789 : vector<8x32xf32>
    %1792 = arith.divf %1790, %1791 : vector<8x32xf32>
    %1793 = vector.extract_strided_slice %1727 {offsets = [0, 64], sizes = [8, 32], strides = [1, 1]} : vector<8x160xf32> to vector<8x32xf32>
    %1794 = vector.extract_strided_slice %1728 {offsets = [0, 64], sizes = [8, 32], strides = [1, 1]} : vector<8x128xf32> to vector<8x32xf32>
    %1795 = arith.addf %1793, %1794 : vector<8x32xf32>
    %1796 = vector.extract_strided_slice %5 {offsets = [0, 64], sizes = [1, 32], strides = [1, 1]} : vector<1x96xf32> to vector<1x32xf32>
    %1797 = vector.extract_strided_slice %6 {offsets = [0, 64], sizes = [1, 32], strides = [1, 1]} : vector<1x96xf32> to vector<1x32xf32>
    %cst_351 = arith.constant dense<0.000000e+00> : vector<8xf32>
    %1798 = vector.multi_reduction <add>, %1795, %cst_351 [1] : vector<8x32xf32> to vector<8xf32>
    %1799 = vector.shape_cast %1798 : vector<8xf32> to vector<8x1xf32>
    %cst_352 = arith.constant 3.200000e+01 : f32
    %1800 = vector.broadcast %cst_352 : f32 to vector<8x1xf32>
    %1801 = arith.divf %1799, %1800 : vector<8x1xf32>
    %1802 = vector.broadcast %1801 : vector<8x1xf32> to vector<8x32xf32>
    %1803 = arith.subf %1795, %1802 : vector<8x32xf32>
    %1804 = arith.mulf %1803, %1803 : vector<8x32xf32>
    %cst_353 = arith.constant dense<0.000000e+00> : vector<8xf32>
    %1805 = vector.multi_reduction <add>, %1804, %cst_353 [1] : vector<8x32xf32> to vector<8xf32>
    %1806 = vector.shape_cast %1805 : vector<8xf32> to vector<8x1xf32>
    %cst_354 = arith.constant 3.200000e+01 : f32
    %1807 = vector.broadcast %cst_354 : f32 to vector<8x1xf32>
    %1808 = arith.divf %1806, %1807 : vector<8x1xf32>
    %1809 = vector.broadcast %1801 : vector<8x1xf32> to vector<8x32xf32>
    %1810 = arith.subf %1795, %1809 : vector<8x32xf32>
    %cst_355 = arith.constant 9.99999974E-6 : f32
    %1811 = vector.broadcast %cst_355 : f32 to vector<8x1xf32>
    %1812 = arith.addf %1808, %1811 : vector<8x1xf32>
    %1813 = math.rsqrt %1812 : vector<8x1xf32>
    %1814 = vector.broadcast %1813 : vector<8x1xf32> to vector<8x32xf32>
    %1815 = arith.mulf %1810, %1814 : vector<8x32xf32>
    %1816 = vector.broadcast %1796 : vector<1x32xf32> to vector<8x32xf32>
    %1817 = arith.mulf %1815, %1816 : vector<8x32xf32>
    %1818 = vector.broadcast %1797 : vector<1x32xf32> to vector<8x32xf32>
    %1819 = arith.addf %1817, %1818 : vector<8x32xf32>
    %1820 = arith.negf %1819 : vector<8x32xf32>
    %1821 = math.exp %1820 : vector<8x32xf32>
    %cst_356 = arith.constant 1.000000e+00 : f32
    %1822 = vector.broadcast %cst_356 : f32 to vector<8x32xf32>
    %1823 = arith.addf %1822, %1821 : vector<8x32xf32>
    %1824 = arith.divf %1822, %1823 : vector<8x32xf32>
    %1825 = vector.extract_strided_slice %1727 {offsets = [0, 96], sizes = [8, 32], strides = [1, 1]} : vector<8x160xf32> to vector<8x32xf32>
    %1826 = vector.extract_strided_slice %1728 {offsets = [0, 96], sizes = [8, 32], strides = [1, 1]} : vector<8x128xf32> to vector<8x32xf32>
    %1827 = vector.broadcast %7 : vector<1x32xf32> to vector<8x32xf32>
    %1828 = arith.addf %1826, %1827 : vector<8x32xf32>
    %1829 = arith.mulf %1760, %1828 : vector<8x32xf32>
    %1830 = arith.addf %1825, %1829 : vector<8x32xf32>
    %1831 = math.tanh %1830 : vector<8x32xf32>
    %1832 = vector.extract_strided_slice %1727 {offsets = [0, 128], sizes = [8, 32], strides = [1, 1]} : vector<8x160xf32> to vector<8x32xf32>
    %1833 = arith.mulf %1824, %1832 : vector<8x32xf32>
    %1834 = arith.addf %1831, %1833 : vector<8x32xf32>
    %cst_357 = arith.constant 1.000000e+00 : f32
    %1835 = vector.broadcast %cst_357 : f32 to vector<8x32xf32>
    %1836 = arith.subf %1835, %1792 : vector<8x32xf32>
    %1837 = arith.mulf %1836, %1720 : vector<8x32xf32>
    %1838 = arith.mulf %1792, %1834 : vector<8x32xf32>
    %1839 = arith.addf %1837, %1838 : vector<8x32xf32>
    %1840 = vector.extract_strided_slice %8 {offsets = [0, 0, 0], sizes = [1, 32, 96], strides = [1, 1, 1]} : vector<2x32x96xf32> to vector<1x32x96xf32>
    %1841 = vector.shape_cast %1840 : vector<1x32x96xf32> to vector<32x96xf32>
    %cst_358 = arith.constant dense<0.000000e+00> : vector<8x96xf32>
    %1842 = tpu.matmul %1839, %1841, %cst_358 {dimension_numbers = #tpu.dot_dimension_numbers<[1], [0], [0], [1], [0, 0, 1, 1], [], []>} : vector<8x32xf32>, vector<32x96xf32>, vector<8x96xf32> -> vector<8x96xf32>
    %1843 = vector.extract_strided_slice %1842 {offsets = [0, 0], sizes = [8, 32], strides = [1, 1]} : vector<8x96xf32> to vector<8x32xf32>
    %1844 = vector.extract_strided_slice %9 {offsets = [0, 0, 0], sizes = [1, 1, 64], strides = [1, 1, 1]} : vector<2x1x64xf32> to vector<1x1x64xf32>
    %1845 = vector.shape_cast %1844 : vector<1x1x64xf32> to vector<1x64xf32>
    %1846 = vector.extract_strided_slice %1845 {offsets = [0, 0], sizes = [1, 32], strides = [1, 1]} : vector<1x64xf32> to vector<1x32xf32>
    %1847 = vector.extract_strided_slice %10 {offsets = [0, 0, 0], sizes = [1, 1, 64], strides = [1, 1, 1]} : vector<2x1x64xf32> to vector<1x1x64xf32>
    %1848 = vector.shape_cast %1847 : vector<1x1x64xf32> to vector<1x64xf32>
    %1849 = vector.extract_strided_slice %1848 {offsets = [0, 0], sizes = [1, 32], strides = [1, 1]} : vector<1x64xf32> to vector<1x32xf32>
    %cst_359 = arith.constant dense<0.000000e+00> : vector<8xf32>
    %1850 = vector.multi_reduction <add>, %1843, %cst_359 [1] : vector<8x32xf32> to vector<8xf32>
    %1851 = vector.shape_cast %1850 : vector<8xf32> to vector<8x1xf32>
    %cst_360 = arith.constant 3.200000e+01 : f32
    %1852 = vector.broadcast %cst_360 : f32 to vector<8x1xf32>
    %1853 = arith.divf %1851, %1852 : vector<8x1xf32>
    %1854 = vector.broadcast %1853 : vector<8x1xf32> to vector<8x32xf32>
    %1855 = arith.subf %1843, %1854 : vector<8x32xf32>
    %1856 = arith.mulf %1855, %1855 : vector<8x32xf32>
    %cst_361 = arith.constant dense<0.000000e+00> : vector<8xf32>
    %1857 = vector.multi_reduction <add>, %1856, %cst_361 [1] : vector<8x32xf32> to vector<8xf32>
    %1858 = vector.shape_cast %1857 : vector<8xf32> to vector<8x1xf32>
    %cst_362 = arith.constant 3.200000e+01 : f32
    %1859 = vector.broadcast %cst_362 : f32 to vector<8x1xf32>
    %1860 = arith.divf %1858, %1859 : vector<8x1xf32>
    %1861 = vector.broadcast %1853 : vector<8x1xf32> to vector<8x32xf32>
    %1862 = arith.subf %1843, %1861 : vector<8x32xf32>
    %cst_363 = arith.constant 9.99999974E-6 : f32
    %1863 = vector.broadcast %cst_363 : f32 to vector<8x1xf32>
    %1864 = arith.addf %1860, %1863 : vector<8x1xf32>
    %1865 = math.rsqrt %1864 : vector<8x1xf32>
    %1866 = vector.broadcast %1865 : vector<8x1xf32> to vector<8x32xf32>
    %1867 = arith.mulf %1862, %1866 : vector<8x32xf32>
    %1868 = vector.broadcast %1846 : vector<1x32xf32> to vector<8x32xf32>
    %1869 = arith.mulf %1867, %1868 : vector<8x32xf32>
    %1870 = vector.broadcast %1849 : vector<1x32xf32> to vector<8x32xf32>
    %1871 = arith.addf %1869, %1870 : vector<8x32xf32>
    %1872 = arith.negf %1871 : vector<8x32xf32>
    %1873 = math.exp %1872 : vector<8x32xf32>
    %cst_364 = arith.constant 1.000000e+00 : f32
    %1874 = vector.broadcast %cst_364 : f32 to vector<8x32xf32>
    %1875 = arith.addf %1874, %1873 : vector<8x32xf32>
    %1876 = arith.divf %1874, %1875 : vector<8x32xf32>
    %1877 = vector.extract_strided_slice %1842 {offsets = [0, 32], sizes = [8, 32], strides = [1, 1]} : vector<8x96xf32> to vector<8x32xf32>
    %1878 = vector.extract_strided_slice %9 {offsets = [0, 0, 0], sizes = [1, 1, 64], strides = [1, 1, 1]} : vector<2x1x64xf32> to vector<1x1x64xf32>
    %1879 = vector.shape_cast %1878 : vector<1x1x64xf32> to vector<1x64xf32>
    %1880 = vector.extract_strided_slice %1879 {offsets = [0, 32], sizes = [1, 32], strides = [1, 1]} : vector<1x64xf32> to vector<1x32xf32>
    %1881 = vector.extract_strided_slice %10 {offsets = [0, 0, 0], sizes = [1, 1, 64], strides = [1, 1, 1]} : vector<2x1x64xf32> to vector<1x1x64xf32>
    %1882 = vector.shape_cast %1881 : vector<1x1x64xf32> to vector<1x64xf32>
    %1883 = vector.extract_strided_slice %1882 {offsets = [0, 32], sizes = [1, 32], strides = [1, 1]} : vector<1x64xf32> to vector<1x32xf32>
    %cst_365 = arith.constant dense<0.000000e+00> : vector<8xf32>
    %1884 = vector.multi_reduction <add>, %1877, %cst_365 [1] : vector<8x32xf32> to vector<8xf32>
    %1885 = vector.shape_cast %1884 : vector<8xf32> to vector<8x1xf32>
    %cst_366 = arith.constant 3.200000e+01 : f32
    %1886 = vector.broadcast %cst_366 : f32 to vector<8x1xf32>
    %1887 = arith.divf %1885, %1886 : vector<8x1xf32>
    %1888 = vector.broadcast %1887 : vector<8x1xf32> to vector<8x32xf32>
    %1889 = arith.subf %1877, %1888 : vector<8x32xf32>
    %1890 = arith.mulf %1889, %1889 : vector<8x32xf32>
    %cst_367 = arith.constant dense<0.000000e+00> : vector<8xf32>
    %1891 = vector.multi_reduction <add>, %1890, %cst_367 [1] : vector<8x32xf32> to vector<8xf32>
    %1892 = vector.shape_cast %1891 : vector<8xf32> to vector<8x1xf32>
    %cst_368 = arith.constant 3.200000e+01 : f32
    %1893 = vector.broadcast %cst_368 : f32 to vector<8x1xf32>
    %1894 = arith.divf %1892, %1893 : vector<8x1xf32>
    %1895 = vector.broadcast %1887 : vector<8x1xf32> to vector<8x32xf32>
    %1896 = arith.subf %1877, %1895 : vector<8x32xf32>
    %cst_369 = arith.constant 9.99999974E-6 : f32
    %1897 = vector.broadcast %cst_369 : f32 to vector<8x1xf32>
    %1898 = arith.addf %1894, %1897 : vector<8x1xf32>
    %1899 = math.rsqrt %1898 : vector<8x1xf32>
    %1900 = vector.broadcast %1899 : vector<8x1xf32> to vector<8x32xf32>
    %1901 = arith.mulf %1896, %1900 : vector<8x32xf32>
    %1902 = vector.broadcast %1880 : vector<1x32xf32> to vector<8x32xf32>
    %1903 = arith.mulf %1901, %1902 : vector<8x32xf32>
    %1904 = vector.broadcast %1883 : vector<1x32xf32> to vector<8x32xf32>
    %1905 = arith.addf %1903, %1904 : vector<8x32xf32>
    %1906 = arith.negf %1905 : vector<8x32xf32>
    %1907 = math.exp %1906 : vector<8x32xf32>
    %cst_370 = arith.constant 1.000000e+00 : f32
    %1908 = vector.broadcast %cst_370 : f32 to vector<8x32xf32>
    %1909 = arith.addf %1908, %1907 : vector<8x32xf32>
    %1910 = arith.divf %1908, %1909 : vector<8x32xf32>
    %1911 = vector.extract_strided_slice %1842 {offsets = [0, 64], sizes = [8, 32], strides = [1, 1]} : vector<8x96xf32> to vector<8x32xf32>
    %1912 = vector.extract_strided_slice %11 {offsets = [0, 0, 0], sizes = [1, 1, 32], strides = [1, 1, 1]} : vector<2x1x32xf32> to vector<1x1x32xf32>
    %1913 = vector.shape_cast %1912 : vector<1x1x32xf32> to vector<1x32xf32>
    %1914 = vector.broadcast %1913 : vector<1x32xf32> to vector<8x32xf32>
    %1915 = arith.addf %1911, %1914 : vector<8x32xf32>
    %1916 = arith.mulf %1876, %1915 : vector<8x32xf32>
    %1917 = math.tanh %1916 : vector<8x32xf32>
    %cst_371 = arith.constant 1.000000e+00 : f32
    %1918 = vector.broadcast %cst_371 : f32 to vector<8x32xf32>
    %1919 = arith.subf %1918, %1910 : vector<8x32xf32>
    %1920 = arith.mulf %1919, %1917 : vector<8x32xf32>
    %1921 = arith.mulf %1910, %1839 : vector<8x32xf32>
    %1922 = arith.addf %1920, %1921 : vector<8x32xf32>
    %1923 = vector.extract_strided_slice %8 {offsets = [1, 0, 0], sizes = [1, 32, 96], strides = [1, 1, 1]} : vector<2x32x96xf32> to vector<1x32x96xf32>
    %1924 = vector.shape_cast %1923 : vector<1x32x96xf32> to vector<32x96xf32>
    %cst_372 = arith.constant dense<0.000000e+00> : vector<8x96xf32>
    %1925 = tpu.matmul %1922, %1924, %cst_372 {dimension_numbers = #tpu.dot_dimension_numbers<[1], [0], [0], [1], [0, 0, 1, 1], [], []>} : vector<8x32xf32>, vector<32x96xf32>, vector<8x96xf32> -> vector<8x96xf32>
    %1926 = vector.extract_strided_slice %1925 {offsets = [0, 0], sizes = [8, 32], strides = [1, 1]} : vector<8x96xf32> to vector<8x32xf32>
    %1927 = vector.extract_strided_slice %9 {offsets = [1, 0, 0], sizes = [1, 1, 64], strides = [1, 1, 1]} : vector<2x1x64xf32> to vector<1x1x64xf32>
    %1928 = vector.shape_cast %1927 : vector<1x1x64xf32> to vector<1x64xf32>
    %1929 = vector.extract_strided_slice %1928 {offsets = [0, 0], sizes = [1, 32], strides = [1, 1]} : vector<1x64xf32> to vector<1x32xf32>
    %1930 = vector.extract_strided_slice %10 {offsets = [1, 0, 0], sizes = [1, 1, 64], strides = [1, 1, 1]} : vector<2x1x64xf32> to vector<1x1x64xf32>
    %1931 = vector.shape_cast %1930 : vector<1x1x64xf32> to vector<1x64xf32>
    %1932 = vector.extract_strided_slice %1931 {offsets = [0, 0], sizes = [1, 32], strides = [1, 1]} : vector<1x64xf32> to vector<1x32xf32>
    %cst_373 = arith.constant dense<0.000000e+00> : vector<8xf32>
    %1933 = vector.multi_reduction <add>, %1926, %cst_373 [1] : vector<8x32xf32> to vector<8xf32>
    %1934 = vector.shape_cast %1933 : vector<8xf32> to vector<8x1xf32>
    %cst_374 = arith.constant 3.200000e+01 : f32
    %1935 = vector.broadcast %cst_374 : f32 to vector<8x1xf32>
    %1936 = arith.divf %1934, %1935 : vector<8x1xf32>
    %1937 = vector.broadcast %1936 : vector<8x1xf32> to vector<8x32xf32>
    %1938 = arith.subf %1926, %1937 : vector<8x32xf32>
    %1939 = arith.mulf %1938, %1938 : vector<8x32xf32>
    %cst_375 = arith.constant dense<0.000000e+00> : vector<8xf32>
    %1940 = vector.multi_reduction <add>, %1939, %cst_375 [1] : vector<8x32xf32> to vector<8xf32>
    %1941 = vector.shape_cast %1940 : vector<8xf32> to vector<8x1xf32>
    %cst_376 = arith.constant 3.200000e+01 : f32
    %1942 = vector.broadcast %cst_376 : f32 to vector<8x1xf32>
    %1943 = arith.divf %1941, %1942 : vector<8x1xf32>
    %1944 = vector.broadcast %1936 : vector<8x1xf32> to vector<8x32xf32>
    %1945 = arith.subf %1926, %1944 : vector<8x32xf32>
    %cst_377 = arith.constant 9.99999974E-6 : f32
    %1946 = vector.broadcast %cst_377 : f32 to vector<8x1xf32>
    %1947 = arith.addf %1943, %1946 : vector<8x1xf32>
    %1948 = math.rsqrt %1947 : vector<8x1xf32>
    %1949 = vector.broadcast %1948 : vector<8x1xf32> to vector<8x32xf32>
    %1950 = arith.mulf %1945, %1949 : vector<8x32xf32>
    %1951 = vector.broadcast %1929 : vector<1x32xf32> to vector<8x32xf32>
    %1952 = arith.mulf %1950, %1951 : vector<8x32xf32>
    %1953 = vector.broadcast %1932 : vector<1x32xf32> to vector<8x32xf32>
    %1954 = arith.addf %1952, %1953 : vector<8x32xf32>
    %1955 = arith.negf %1954 : vector<8x32xf32>
    %1956 = math.exp %1955 : vector<8x32xf32>
    %cst_378 = arith.constant 1.000000e+00 : f32
    %1957 = vector.broadcast %cst_378 : f32 to vector<8x32xf32>
    %1958 = arith.addf %1957, %1956 : vector<8x32xf32>
    %1959 = arith.divf %1957, %1958 : vector<8x32xf32>
    %1960 = vector.extract_strided_slice %1925 {offsets = [0, 32], sizes = [8, 32], strides = [1, 1]} : vector<8x96xf32> to vector<8x32xf32>
    %1961 = vector.extract_strided_slice %9 {offsets = [1, 0, 0], sizes = [1, 1, 64], strides = [1, 1, 1]} : vector<2x1x64xf32> to vector<1x1x64xf32>
    %1962 = vector.shape_cast %1961 : vector<1x1x64xf32> to vector<1x64xf32>
    %1963 = vector.extract_strided_slice %1962 {offsets = [0, 32], sizes = [1, 32], strides = [1, 1]} : vector<1x64xf32> to vector<1x32xf32>
    %1964 = vector.extract_strided_slice %10 {offsets = [1, 0, 0], sizes = [1, 1, 64], strides = [1, 1, 1]} : vector<2x1x64xf32> to vector<1x1x64xf32>
    %1965 = vector.shape_cast %1964 : vector<1x1x64xf32> to vector<1x64xf32>
    %1966 = vector.extract_strided_slice %1965 {offsets = [0, 32], sizes = [1, 32], strides = [1, 1]} : vector<1x64xf32> to vector<1x32xf32>
    %cst_379 = arith.constant dense<0.000000e+00> : vector<8xf32>
    %1967 = vector.multi_reduction <add>, %1960, %cst_379 [1] : vector<8x32xf32> to vector<8xf32>
    %1968 = vector.shape_cast %1967 : vector<8xf32> to vector<8x1xf32>
    %cst_380 = arith.constant 3.200000e+01 : f32
    %1969 = vector.broadcast %cst_380 : f32 to vector<8x1xf32>
    %1970 = arith.divf %1968, %1969 : vector<8x1xf32>
    %1971 = vector.broadcast %1970 : vector<8x1xf32> to vector<8x32xf32>
    %1972 = arith.subf %1960, %1971 : vector<8x32xf32>
    %1973 = arith.mulf %1972, %1972 : vector<8x32xf32>
    %cst_381 = arith.constant dense<0.000000e+00> : vector<8xf32>
    %1974 = vector.multi_reduction <add>, %1973, %cst_381 [1] : vector<8x32xf32> to vector<8xf32>
    %1975 = vector.shape_cast %1974 : vector<8xf32> to vector<8x1xf32>
    %cst_382 = arith.constant 3.200000e+01 : f32
    %1976 = vector.broadcast %cst_382 : f32 to vector<8x1xf32>
    %1977 = arith.divf %1975, %1976 : vector<8x1xf32>
    %1978 = vector.broadcast %1970 : vector<8x1xf32> to vector<8x32xf32>
    %1979 = arith.subf %1960, %1978 : vector<8x32xf32>
    %cst_383 = arith.constant 9.99999974E-6 : f32
    %1980 = vector.broadcast %cst_383 : f32 to vector<8x1xf32>
    %1981 = arith.addf %1977, %1980 : vector<8x1xf32>
    %1982 = math.rsqrt %1981 : vector<8x1xf32>
    %1983 = vector.broadcast %1982 : vector<8x1xf32> to vector<8x32xf32>
    %1984 = arith.mulf %1979, %1983 : vector<8x32xf32>
    %1985 = vector.broadcast %1963 : vector<1x32xf32> to vector<8x32xf32>
    %1986 = arith.mulf %1984, %1985 : vector<8x32xf32>
    %1987 = vector.broadcast %1966 : vector<1x32xf32> to vector<8x32xf32>
    %1988 = arith.addf %1986, %1987 : vector<8x32xf32>
    %1989 = arith.negf %1988 : vector<8x32xf32>
    %1990 = math.exp %1989 : vector<8x32xf32>
    %cst_384 = arith.constant 1.000000e+00 : f32
    %1991 = vector.broadcast %cst_384 : f32 to vector<8x32xf32>
    %1992 = arith.addf %1991, %1990 : vector<8x32xf32>
    %1993 = arith.divf %1991, %1992 : vector<8x32xf32>
    %1994 = vector.extract_strided_slice %1925 {offsets = [0, 64], sizes = [8, 32], strides = [1, 1]} : vector<8x96xf32> to vector<8x32xf32>
    %1995 = vector.extract_strided_slice %11 {offsets = [1, 0, 0], sizes = [1, 1, 32], strides = [1, 1, 1]} : vector<2x1x32xf32> to vector<1x1x32xf32>
    %1996 = vector.shape_cast %1995 : vector<1x1x32xf32> to vector<1x32xf32>
    %1997 = vector.broadcast %1996 : vector<1x32xf32> to vector<8x32xf32>
    %1998 = arith.addf %1994, %1997 : vector<8x32xf32>
    %1999 = arith.mulf %1959, %1998 : vector<8x32xf32>
    %2000 = math.tanh %1999 : vector<8x32xf32>
    %cst_385 = arith.constant 1.000000e+00 : f32
    %2001 = vector.broadcast %cst_385 : f32 to vector<8x32xf32>
    %2002 = arith.subf %2001, %1993 : vector<8x32xf32>
    %2003 = arith.mulf %2002, %2000 : vector<8x32xf32>
    %2004 = arith.mulf %1993, %1922 : vector<8x32xf32>
    %2005 = arith.addf %2003, %2004 : vector<8x32xf32>
    %2006 = arith.index_cast %1724 : i32 to index
    %c0_386 = arith.constant 0 : index
    %2007 = vector.load %arg11[%2006, %c0_386] : memref<64x32xf32, #tpu.memory_space<vmem>>, vector<8x32xf32>
    tpu.vector_store %arg11[%2006, %c0_386], %2005 {strides = array<i32>} : memref<64x32xf32, #tpu.memory_space<vmem>>, vector<8x32xf32>,
    %c7_i32 = arith.constant 7 : i32
    %c8_i32_387 = arith.constant 8 : i32
    %2008 = arith.muli %c7_i32, %c8_i32_387 : i32
    %2009 = tpu.assume_multiple %2008, 8 : i32
    %2010 = arith.index_cast %2009 : i32 to index
    %c0_388 = arith.constant 0 : index
    %2011 = vector.load %arg1[%2010, %c0_388] : memref<64x16xf32, #tpu.memory_space<vmem>>, vector<8x16xf32>
    %cst_389 = arith.constant dense<0.000000e+00> : vector<8x160xf32>
    %2012 = tpu.matmul %2011, %3, %cst_389 {dimension_numbers = #tpu.dot_dimension_numbers<[1], [0], [0], [1], [0, 0, 1, 1], [], []>} : vector<8x16xf32>, vector<16x160xf32>, vector<8x160xf32> -> vector<8x160xf32>
    %cst_390 = arith.constant dense<0.000000e+00> : vector<8x128xf32>
    %2013 = tpu.matmul %2005, %4, %cst_390 {dimension_numbers = #tpu.dot_dimension_numbers<[1], [0], [0], [1], [0, 0, 1, 1], [], []>} : vector<8x32xf32>, vector<32x128xf32>, vector<8x128xf32> -> vector<8x128xf32>
    %2014 = vector.extract_strided_slice %2012 {offsets = [0, 0], sizes = [8, 32], strides = [1, 1]} : vector<8x160xf32> to vector<8x32xf32>
    %2015 = vector.extract_strided_slice %2013 {offsets = [0, 0], sizes = [8, 32], strides = [1, 1]} : vector<8x128xf32> to vector<8x32xf32>
    %2016 = arith.addf %2014, %2015 : vector<8x32xf32>
    %2017 = vector.extract_strided_slice %5 {offsets = [0, 0], sizes = [1, 32], strides = [1, 1]} : vector<1x96xf32> to vector<1x32xf32>
    %2018 = vector.extract_strided_slice %6 {offsets = [0, 0], sizes = [1, 32], strides = [1, 1]} : vector<1x96xf32> to vector<1x32xf32>
    %cst_391 = arith.constant dense<0.000000e+00> : vector<8xf32>
    %2019 = vector.multi_reduction <add>, %2016, %cst_391 [1] : vector<8x32xf32> to vector<8xf32>
    %2020 = vector.shape_cast %2019 : vector<8xf32> to vector<8x1xf32>
    %cst_392 = arith.constant 3.200000e+01 : f32
    %2021 = vector.broadcast %cst_392 : f32 to vector<8x1xf32>
    %2022 = arith.divf %2020, %2021 : vector<8x1xf32>
    %2023 = vector.broadcast %2022 : vector<8x1xf32> to vector<8x32xf32>
    %2024 = arith.subf %2016, %2023 : vector<8x32xf32>
    %2025 = arith.mulf %2024, %2024 : vector<8x32xf32>
    %cst_393 = arith.constant dense<0.000000e+00> : vector<8xf32>
    %2026 = vector.multi_reduction <add>, %2025, %cst_393 [1] : vector<8x32xf32> to vector<8xf32>
    %2027 = vector.shape_cast %2026 : vector<8xf32> to vector<8x1xf32>
    %cst_394 = arith.constant 3.200000e+01 : f32
    %2028 = vector.broadcast %cst_394 : f32 to vector<8x1xf32>
    %2029 = arith.divf %2027, %2028 : vector<8x1xf32>
    %2030 = vector.broadcast %2022 : vector<8x1xf32> to vector<8x32xf32>
    %2031 = arith.subf %2016, %2030 : vector<8x32xf32>
    %cst_395 = arith.constant 9.99999974E-6 : f32
    %2032 = vector.broadcast %cst_395 : f32 to vector<8x1xf32>
    %2033 = arith.addf %2029, %2032 : vector<8x1xf32>
    %2034 = math.rsqrt %2033 : vector<8x1xf32>
    %2035 = vector.broadcast %2034 : vector<8x1xf32> to vector<8x32xf32>
    %2036 = arith.mulf %2031, %2035 : vector<8x32xf32>
    %2037 = vector.broadcast %2017 : vector<1x32xf32> to vector<8x32xf32>
    %2038 = arith.mulf %2036, %2037 : vector<8x32xf32>
    %2039 = vector.broadcast %2018 : vector<1x32xf32> to vector<8x32xf32>
    %2040 = arith.addf %2038, %2039 : vector<8x32xf32>
    %2041 = arith.negf %2040 : vector<8x32xf32>
    %2042 = math.exp %2041 : vector<8x32xf32>
    %cst_396 = arith.constant 1.000000e+00 : f32
    %2043 = vector.broadcast %cst_396 : f32 to vector<8x32xf32>
    %2044 = arith.addf %2043, %2042 : vector<8x32xf32>
    %2045 = arith.divf %2043, %2044 : vector<8x32xf32>
    %2046 = vector.extract_strided_slice %2012 {offsets = [0, 32], sizes = [8, 32], strides = [1, 1]} : vector<8x160xf32> to vector<8x32xf32>
    %2047 = vector.extract_strided_slice %2013 {offsets = [0, 32], sizes = [8, 32], strides = [1, 1]} : vector<8x128xf32> to vector<8x32xf32>
    %2048 = arith.addf %2046, %2047 : vector<8x32xf32>
    %2049 = vector.extract_strided_slice %5 {offsets = [0, 32], sizes = [1, 32], strides = [1, 1]} : vector<1x96xf32> to vector<1x32xf32>
    %2050 = vector.extract_strided_slice %6 {offsets = [0, 32], sizes = [1, 32], strides = [1, 1]} : vector<1x96xf32> to vector<1x32xf32>
    %cst_397 = arith.constant dense<0.000000e+00> : vector<8xf32>
    %2051 = vector.multi_reduction <add>, %2048, %cst_397 [1] : vector<8x32xf32> to vector<8xf32>
    %2052 = vector.shape_cast %2051 : vector<8xf32> to vector<8x1xf32>
    %cst_398 = arith.constant 3.200000e+01 : f32
    %2053 = vector.broadcast %cst_398 : f32 to vector<8x1xf32>
    %2054 = arith.divf %2052, %2053 : vector<8x1xf32>
    %2055 = vector.broadcast %2054 : vector<8x1xf32> to vector<8x32xf32>
    %2056 = arith.subf %2048, %2055 : vector<8x32xf32>
    %2057 = arith.mulf %2056, %2056 : vector<8x32xf32>
    %cst_399 = arith.constant dense<0.000000e+00> : vector<8xf32>
    %2058 = vector.multi_reduction <add>, %2057, %cst_399 [1] : vector<8x32xf32> to vector<8xf32>
    %2059 = vector.shape_cast %2058 : vector<8xf32> to vector<8x1xf32>
    %cst_400 = arith.constant 3.200000e+01 : f32
    %2060 = vector.broadcast %cst_400 : f32 to vector<8x1xf32>
    %2061 = arith.divf %2059, %2060 : vector<8x1xf32>
    %2062 = vector.broadcast %2054 : vector<8x1xf32> to vector<8x32xf32>
    %2063 = arith.subf %2048, %2062 : vector<8x32xf32>
    %cst_401 = arith.constant 9.99999974E-6 : f32
    %2064 = vector.broadcast %cst_401 : f32 to vector<8x1xf32>
    %2065 = arith.addf %2061, %2064 : vector<8x1xf32>
    %2066 = math.rsqrt %2065 : vector<8x1xf32>
    %2067 = vector.broadcast %2066 : vector<8x1xf32> to vector<8x32xf32>
    %2068 = arith.mulf %2063, %2067 : vector<8x32xf32>
    %2069 = vector.broadcast %2049 : vector<1x32xf32> to vector<8x32xf32>
    %2070 = arith.mulf %2068, %2069 : vector<8x32xf32>
    %2071 = vector.broadcast %2050 : vector<1x32xf32> to vector<8x32xf32>
    %2072 = arith.addf %2070, %2071 : vector<8x32xf32>
    %2073 = arith.negf %2072 : vector<8x32xf32>
    %2074 = math.exp %2073 : vector<8x32xf32>
    %cst_402 = arith.constant 1.000000e+00 : f32
    %2075 = vector.broadcast %cst_402 : f32 to vector<8x32xf32>
    %2076 = arith.addf %2075, %2074 : vector<8x32xf32>
    %2077 = arith.divf %2075, %2076 : vector<8x32xf32>
    %2078 = vector.extract_strided_slice %2012 {offsets = [0, 64], sizes = [8, 32], strides = [1, 1]} : vector<8x160xf32> to vector<8x32xf32>
    %2079 = vector.extract_strided_slice %2013 {offsets = [0, 64], sizes = [8, 32], strides = [1, 1]} : vector<8x128xf32> to vector<8x32xf32>
    %2080 = arith.addf %2078, %2079 : vector<8x32xf32>
    %2081 = vector.extract_strided_slice %5 {offsets = [0, 64], sizes = [1, 32], strides = [1, 1]} : vector<1x96xf32> to vector<1x32xf32>
    %2082 = vector.extract_strided_slice %6 {offsets = [0, 64], sizes = [1, 32], strides = [1, 1]} : vector<1x96xf32> to vector<1x32xf32>
    %cst_403 = arith.constant dense<0.000000e+00> : vector<8xf32>
    %2083 = vector.multi_reduction <add>, %2080, %cst_403 [1] : vector<8x32xf32> to vector<8xf32>
    %2084 = vector.shape_cast %2083 : vector<8xf32> to vector<8x1xf32>
    %cst_404 = arith.constant 3.200000e+01 : f32
    %2085 = vector.broadcast %cst_404 : f32 to vector<8x1xf32>
    %2086 = arith.divf %2084, %2085 : vector<8x1xf32>
    %2087 = vector.broadcast %2086 : vector<8x1xf32> to vector<8x32xf32>
    %2088 = arith.subf %2080, %2087 : vector<8x32xf32>
    %2089 = arith.mulf %2088, %2088 : vector<8x32xf32>
    %cst_405 = arith.constant dense<0.000000e+00> : vector<8xf32>
    %2090 = vector.multi_reduction <add>, %2089, %cst_405 [1] : vector<8x32xf32> to vector<8xf32>
    %2091 = vector.shape_cast %2090 : vector<8xf32> to vector<8x1xf32>
    %cst_406 = arith.constant 3.200000e+01 : f32
    %2092 = vector.broadcast %cst_406 : f32 to vector<8x1xf32>
    %2093 = arith.divf %2091, %2092 : vector<8x1xf32>
    %2094 = vector.broadcast %2086 : vector<8x1xf32> to vector<8x32xf32>
    %2095 = arith.subf %2080, %2094 : vector<8x32xf32>
    %cst_407 = arith.constant 9.99999974E-6 : f32
    %2096 = vector.broadcast %cst_407 : f32 to vector<8x1xf32>
    %2097 = arith.addf %2093, %2096 : vector<8x1xf32>
    %2098 = math.rsqrt %2097 : vector<8x1xf32>
    %2099 = vector.broadcast %2098 : vector<8x1xf32> to vector<8x32xf32>
    %2100 = arith.mulf %2095, %2099 : vector<8x32xf32>
    %2101 = vector.broadcast %2081 : vector<1x32xf32> to vector<8x32xf32>
    %2102 = arith.mulf %2100, %2101 : vector<8x32xf32>
    %2103 = vector.broadcast %2082 : vector<1x32xf32> to vector<8x32xf32>
    %2104 = arith.addf %2102, %2103 : vector<8x32xf32>
    %2105 = arith.negf %2104 : vector<8x32xf32>
    %2106 = math.exp %2105 : vector<8x32xf32>
    %cst_408 = arith.constant 1.000000e+00 : f32
    %2107 = vector.broadcast %cst_408 : f32 to vector<8x32xf32>
    %2108 = arith.addf %2107, %2106 : vector<8x32xf32>
    %2109 = arith.divf %2107, %2108 : vector<8x32xf32>
    %2110 = vector.extract_strided_slice %2012 {offsets = [0, 96], sizes = [8, 32], strides = [1, 1]} : vector<8x160xf32> to vector<8x32xf32>
    %2111 = vector.extract_strided_slice %2013 {offsets = [0, 96], sizes = [8, 32], strides = [1, 1]} : vector<8x128xf32> to vector<8x32xf32>
    %2112 = vector.broadcast %7 : vector<1x32xf32> to vector<8x32xf32>
    %2113 = arith.addf %2111, %2112 : vector<8x32xf32>
    %2114 = arith.mulf %2045, %2113 : vector<8x32xf32>
    %2115 = arith.addf %2110, %2114 : vector<8x32xf32>
    %2116 = math.tanh %2115 : vector<8x32xf32>
    %2117 = vector.extract_strided_slice %2012 {offsets = [0, 128], sizes = [8, 32], strides = [1, 1]} : vector<8x160xf32> to vector<8x32xf32>
    %2118 = arith.mulf %2109, %2117 : vector<8x32xf32>
    %2119 = arith.addf %2116, %2118 : vector<8x32xf32>
    %cst_409 = arith.constant 1.000000e+00 : f32
    %2120 = vector.broadcast %cst_409 : f32 to vector<8x32xf32>
    %2121 = arith.subf %2120, %2077 : vector<8x32xf32>
    %2122 = arith.mulf %2121, %2005 : vector<8x32xf32>
    %2123 = arith.mulf %2077, %2119 : vector<8x32xf32>
    %2124 = arith.addf %2122, %2123 : vector<8x32xf32>
    %2125 = vector.extract_strided_slice %8 {offsets = [0, 0, 0], sizes = [1, 32, 96], strides = [1, 1, 1]} : vector<2x32x96xf32> to vector<1x32x96xf32>
    %2126 = vector.shape_cast %2125 : vector<1x32x96xf32> to vector<32x96xf32>
    %cst_410 = arith.constant dense<0.000000e+00> : vector<8x96xf32>
    %2127 = tpu.matmul %2124, %2126, %cst_410 {dimension_numbers = #tpu.dot_dimension_numbers<[1], [0], [0], [1], [0, 0, 1, 1], [], []>} : vector<8x32xf32>, vector<32x96xf32>, vector<8x96xf32> -> vector<8x96xf32>
    %2128 = vector.extract_strided_slice %2127 {offsets = [0, 0], sizes = [8, 32], strides = [1, 1]} : vector<8x96xf32> to vector<8x32xf32>
    %2129 = vector.extract_strided_slice %9 {offsets = [0, 0, 0], sizes = [1, 1, 64], strides = [1, 1, 1]} : vector<2x1x64xf32> to vector<1x1x64xf32>
    %2130 = vector.shape_cast %2129 : vector<1x1x64xf32> to vector<1x64xf32>
    %2131 = vector.extract_strided_slice %2130 {offsets = [0, 0], sizes = [1, 32], strides = [1, 1]} : vector<1x64xf32> to vector<1x32xf32>
    %2132 = vector.extract_strided_slice %10 {offsets = [0, 0, 0], sizes = [1, 1, 64], strides = [1, 1, 1]} : vector<2x1x64xf32> to vector<1x1x64xf32>
    %2133 = vector.shape_cast %2132 : vector<1x1x64xf32> to vector<1x64xf32>
    %2134 = vector.extract_strided_slice %2133 {offsets = [0, 0], sizes = [1, 32], strides = [1, 1]} : vector<1x64xf32> to vector<1x32xf32>
    %cst_411 = arith.constant dense<0.000000e+00> : vector<8xf32>
    %2135 = vector.multi_reduction <add>, %2128, %cst_411 [1] : vector<8x32xf32> to vector<8xf32>
    %2136 = vector.shape_cast %2135 : vector<8xf32> to vector<8x1xf32>
    %cst_412 = arith.constant 3.200000e+01 : f32
    %2137 = vector.broadcast %cst_412 : f32 to vector<8x1xf32>
    %2138 = arith.divf %2136, %2137 : vector<8x1xf32>
    %2139 = vector.broadcast %2138 : vector<8x1xf32> to vector<8x32xf32>
    %2140 = arith.subf %2128, %2139 : vector<8x32xf32>
    %2141 = arith.mulf %2140, %2140 : vector<8x32xf32>
    %cst_413 = arith.constant dense<0.000000e+00> : vector<8xf32>
    %2142 = vector.multi_reduction <add>, %2141, %cst_413 [1] : vector<8x32xf32> to vector<8xf32>
    %2143 = vector.shape_cast %2142 : vector<8xf32> to vector<8x1xf32>
    %cst_414 = arith.constant 3.200000e+01 : f32
    %2144 = vector.broadcast %cst_414 : f32 to vector<8x1xf32>
    %2145 = arith.divf %2143, %2144 : vector<8x1xf32>
    %2146 = vector.broadcast %2138 : vector<8x1xf32> to vector<8x32xf32>
    %2147 = arith.subf %2128, %2146 : vector<8x32xf32>
    %cst_415 = arith.constant 9.99999974E-6 : f32
    %2148 = vector.broadcast %cst_415 : f32 to vector<8x1xf32>
    %2149 = arith.addf %2145, %2148 : vector<8x1xf32>
    %2150 = math.rsqrt %2149 : vector<8x1xf32>
    %2151 = vector.broadcast %2150 : vector<8x1xf32> to vector<8x32xf32>
    %2152 = arith.mulf %2147, %2151 : vector<8x32xf32>
    %2153 = vector.broadcast %2131 : vector<1x32xf32> to vector<8x32xf32>
    %2154 = arith.mulf %2152, %2153 : vector<8x32xf32>
    %2155 = vector.broadcast %2134 : vector<1x32xf32> to vector<8x32xf32>
    %2156 = arith.addf %2154, %2155 : vector<8x32xf32>
    %2157 = arith.negf %2156 : vector<8x32xf32>
    %2158 = math.exp %2157 : vector<8x32xf32>
    %cst_416 = arith.constant 1.000000e+00 : f32
    %2159 = vector.broadcast %cst_416 : f32 to vector<8x32xf32>
    %2160 = arith.addf %2159, %2158 : vector<8x32xf32>
    %2161 = arith.divf %2159, %2160 : vector<8x32xf32>
    %2162 = vector.extract_strided_slice %2127 {offsets = [0, 32], sizes = [8, 32], strides = [1, 1]} : vector<8x96xf32> to vector<8x32xf32>
    %2163 = vector.extract_strided_slice %9 {offsets = [0, 0, 0], sizes = [1, 1, 64], strides = [1, 1, 1]} : vector<2x1x64xf32> to vector<1x1x64xf32>
    %2164 = vector.shape_cast %2163 : vector<1x1x64xf32> to vector<1x64xf32>
    %2165 = vector.extract_strided_slice %2164 {offsets = [0, 32], sizes = [1, 32], strides = [1, 1]} : vector<1x64xf32> to vector<1x32xf32>
    %2166 = vector.extract_strided_slice %10 {offsets = [0, 0, 0], sizes = [1, 1, 64], strides = [1, 1, 1]} : vector<2x1x64xf32> to vector<1x1x64xf32>
    %2167 = vector.shape_cast %2166 : vector<1x1x64xf32> to vector<1x64xf32>
    %2168 = vector.extract_strided_slice %2167 {offsets = [0, 32], sizes = [1, 32], strides = [1, 1]} : vector<1x64xf32> to vector<1x32xf32>
    %cst_417 = arith.constant dense<0.000000e+00> : vector<8xf32>
    %2169 = vector.multi_reduction <add>, %2162, %cst_417 [1] : vector<8x32xf32> to vector<8xf32>
    %2170 = vector.shape_cast %2169 : vector<8xf32> to vector<8x1xf32>
    %cst_418 = arith.constant 3.200000e+01 : f32
    %2171 = vector.broadcast %cst_418 : f32 to vector<8x1xf32>
    %2172 = arith.divf %2170, %2171 : vector<8x1xf32>
    %2173 = vector.broadcast %2172 : vector<8x1xf32> to vector<8x32xf32>
    %2174 = arith.subf %2162, %2173 : vector<8x32xf32>
    %2175 = arith.mulf %2174, %2174 : vector<8x32xf32>
    %cst_419 = arith.constant dense<0.000000e+00> : vector<8xf32>
    %2176 = vector.multi_reduction <add>, %2175, %cst_419 [1] : vector<8x32xf32> to vector<8xf32>
    %2177 = vector.shape_cast %2176 : vector<8xf32> to vector<8x1xf32>
    %cst_420 = arith.constant 3.200000e+01 : f32
    %2178 = vector.broadcast %cst_420 : f32 to vector<8x1xf32>
    %2179 = arith.divf %2177, %2178 : vector<8x1xf32>
    %2180 = vector.broadcast %2172 : vector<8x1xf32> to vector<8x32xf32>
    %2181 = arith.subf %2162, %2180 : vector<8x32xf32>
    %cst_421 = arith.constant 9.99999974E-6 : f32
    %2182 = vector.broadcast %cst_421 : f32 to vector<8x1xf32>
    %2183 = arith.addf %2179, %2182 : vector<8x1xf32>
    %2184 = math.rsqrt %2183 : vector<8x1xf32>
    %2185 = vector.broadcast %2184 : vector<8x1xf32> to vector<8x32xf32>
    %2186 = arith.mulf %2181, %2185 : vector<8x32xf32>
    %2187 = vector.broadcast %2165 : vector<1x32xf32> to vector<8x32xf32>
    %2188 = arith.mulf %2186, %2187 : vector<8x32xf32>
    %2189 = vector.broadcast %2168 : vector<1x32xf32> to vector<8x32xf32>
    %2190 = arith.addf %2188, %2189 : vector<8x32xf32>
    %2191 = arith.negf %2190 : vector<8x32xf32>
    %2192 = math.exp %2191 : vector<8x32xf32>
    %cst_422 = arith.constant 1.000000e+00 : f32
    %2193 = vector.broadcast %cst_422 : f32 to vector<8x32xf32>
    %2194 = arith.addf %2193, %2192 : vector<8x32xf32>
    %2195 = arith.divf %2193, %2194 : vector<8x32xf32>
    %2196 = vector.extract_strided_slice %2127 {offsets = [0, 64], sizes = [8, 32], strides = [1, 1]} : vector<8x96xf32> to vector<8x32xf32>
    %2197 = vector.extract_strided_slice %11 {offsets = [0, 0, 0], sizes = [1, 1, 32], strides = [1, 1, 1]} : vector<2x1x32xf32> to vector<1x1x32xf32>
    %2198 = vector.shape_cast %2197 : vector<1x1x32xf32> to vector<1x32xf32>
    %2199 = vector.broadcast %2198 : vector<1x32xf32> to vector<8x32xf32>
    %2200 = arith.addf %2196, %2199 : vector<8x32xf32>
    %2201 = arith.mulf %2161, %2200 : vector<8x32xf32>
    %2202 = math.tanh %2201 : vector<8x32xf32>
    %cst_423 = arith.constant 1.000000e+00 : f32
    %2203 = vector.broadcast %cst_423 : f32 to vector<8x32xf32>
    %2204 = arith.subf %2203, %2195 : vector<8x32xf32>
    %2205 = arith.mulf %2204, %2202 : vector<8x32xf32>
    %2206 = arith.mulf %2195, %2124 : vector<8x32xf32>
    %2207 = arith.addf %2205, %2206 : vector<8x32xf32>
    %2208 = vector.extract_strided_slice %8 {offsets = [1, 0, 0], sizes = [1, 32, 96], strides = [1, 1, 1]} : vector<2x32x96xf32> to vector<1x32x96xf32>
    %2209 = vector.shape_cast %2208 : vector<1x32x96xf32> to vector<32x96xf32>
    %cst_424 = arith.constant dense<0.000000e+00> : vector<8x96xf32>
    %2210 = tpu.matmul %2207, %2209, %cst_424 {dimension_numbers = #tpu.dot_dimension_numbers<[1], [0], [0], [1], [0, 0, 1, 1], [], []>} : vector<8x32xf32>, vector<32x96xf32>, vector<8x96xf32> -> vector<8x96xf32>
    %2211 = vector.extract_strided_slice %2210 {offsets = [0, 0], sizes = [8, 32], strides = [1, 1]} : vector<8x96xf32> to vector<8x32xf32>
    %2212 = vector.extract_strided_slice %9 {offsets = [1, 0, 0], sizes = [1, 1, 64], strides = [1, 1, 1]} : vector<2x1x64xf32> to vector<1x1x64xf32>
    %2213 = vector.shape_cast %2212 : vector<1x1x64xf32> to vector<1x64xf32>
    %2214 = vector.extract_strided_slice %2213 {offsets = [0, 0], sizes = [1, 32], strides = [1, 1]} : vector<1x64xf32> to vector<1x32xf32>
    %2215 = vector.extract_strided_slice %10 {offsets = [1, 0, 0], sizes = [1, 1, 64], strides = [1, 1, 1]} : vector<2x1x64xf32> to vector<1x1x64xf32>
    %2216 = vector.shape_cast %2215 : vector<1x1x64xf32> to vector<1x64xf32>
    %2217 = vector.extract_strided_slice %2216 {offsets = [0, 0], sizes = [1, 32], strides = [1, 1]} : vector<1x64xf32> to vector<1x32xf32>
    %cst_425 = arith.constant dense<0.000000e+00> : vector<8xf32>
    %2218 = vector.multi_reduction <add>, %2211, %cst_425 [1] : vector<8x32xf32> to vector<8xf32>
    %2219 = vector.shape_cast %2218 : vector<8xf32> to vector<8x1xf32>
    %cst_426 = arith.constant 3.200000e+01 : f32
    %2220 = vector.broadcast %cst_426 : f32 to vector<8x1xf32>
    %2221 = arith.divf %2219, %2220 : vector<8x1xf32>
    %2222 = vector.broadcast %2221 : vector<8x1xf32> to vector<8x32xf32>
    %2223 = arith.subf %2211, %2222 : vector<8x32xf32>
    %2224 = arith.mulf %2223, %2223 : vector<8x32xf32>
    %cst_427 = arith.constant dense<0.000000e+00> : vector<8xf32>
    %2225 = vector.multi_reduction <add>, %2224, %cst_427 [1] : vector<8x32xf32> to vector<8xf32>
    %2226 = vector.shape_cast %2225 : vector<8xf32> to vector<8x1xf32>
    %cst_428 = arith.constant 3.200000e+01 : f32
    %2227 = vector.broadcast %cst_428 : f32 to vector<8x1xf32>
    %2228 = arith.divf %2226, %2227 : vector<8x1xf32>
    %2229 = vector.broadcast %2221 : vector<8x1xf32> to vector<8x32xf32>
    %2230 = arith.subf %2211, %2229 : vector<8x32xf32>
    %cst_429 = arith.constant 9.99999974E-6 : f32
    %2231 = vector.broadcast %cst_429 : f32 to vector<8x1xf32>
    %2232 = arith.addf %2228, %2231 : vector<8x1xf32>
    %2233 = math.rsqrt %2232 : vector<8x1xf32>
    %2234 = vector.broadcast %2233 : vector<8x1xf32> to vector<8x32xf32>
    %2235 = arith.mulf %2230, %2234 : vector<8x32xf32>
    %2236 = vector.broadcast %2214 : vector<1x32xf32> to vector<8x32xf32>
    %2237 = arith.mulf %2235, %2236 : vector<8x32xf32>
    %2238 = vector.broadcast %2217 : vector<1x32xf32> to vector<8x32xf32>
    %2239 = arith.addf %2237, %2238 : vector<8x32xf32>
    %2240 = arith.negf %2239 : vector<8x32xf32>
    %2241 = math.exp %2240 : vector<8x32xf32>
    %cst_430 = arith.constant 1.000000e+00 : f32
    %2242 = vector.broadcast %cst_430 : f32 to vector<8x32xf32>
    %2243 = arith.addf %2242, %2241 : vector<8x32xf32>
    %2244 = arith.divf %2242, %2243 : vector<8x32xf32>
    %2245 = vector.extract_strided_slice %2210 {offsets = [0, 32], sizes = [8, 32], strides = [1, 1]} : vector<8x96xf32> to vector<8x32xf32>
    %2246 = vector.extract_strided_slice %9 {offsets = [1, 0, 0], sizes = [1, 1, 64], strides = [1, 1, 1]} : vector<2x1x64xf32> to vector<1x1x64xf32>
    %2247 = vector.shape_cast %2246 : vector<1x1x64xf32> to vector<1x64xf32>
    %2248 = vector.extract_strided_slice %2247 {offsets = [0, 32], sizes = [1, 32], strides = [1, 1]} : vector<1x64xf32> to vector<1x32xf32>
    %2249 = vector.extract_strided_slice %10 {offsets = [1, 0, 0], sizes = [1, 1, 64], strides = [1, 1, 1]} : vector<2x1x64xf32> to vector<1x1x64xf32>
    %2250 = vector.shape_cast %2249 : vector<1x1x64xf32> to vector<1x64xf32>
    %2251 = vector.extract_strided_slice %2250 {offsets = [0, 32], sizes = [1, 32], strides = [1, 1]} : vector<1x64xf32> to vector<1x32xf32>
    %cst_431 = arith.constant dense<0.000000e+00> : vector<8xf32>
    %2252 = vector.multi_reduction <add>, %2245, %cst_431 [1] : vector<8x32xf32> to vector<8xf32>
    %2253 = vector.shape_cast %2252 : vector<8xf32> to vector<8x1xf32>
    %cst_432 = arith.constant 3.200000e+01 : f32
    %2254 = vector.broadcast %cst_432 : f32 to vector<8x1xf32>
    %2255 = arith.divf %2253, %2254 : vector<8x1xf32>
    %2256 = vector.broadcast %2255 : vector<8x1xf32> to vector<8x32xf32>
    %2257 = arith.subf %2245, %2256 : vector<8x32xf32>
    %2258 = arith.mulf %2257, %2257 : vector<8x32xf32>
    %cst_433 = arith.constant dense<0.000000e+00> : vector<8xf32>
    %2259 = vector.multi_reduction <add>, %2258, %cst_433 [1] : vector<8x32xf32> to vector<8xf32>
    %2260 = vector.shape_cast %2259 : vector<8xf32> to vector<8x1xf32>
    %cst_434 = arith.constant 3.200000e+01 : f32
    %2261 = vector.broadcast %cst_434 : f32 to vector<8x1xf32>
    %2262 = arith.divf %2260, %2261 : vector<8x1xf32>
    %2263 = vector.broadcast %2255 : vector<8x1xf32> to vector<8x32xf32>
    %2264 = arith.subf %2245, %2263 : vector<8x32xf32>
    %cst_435 = arith.constant 9.99999974E-6 : f32
    %2265 = vector.broadcast %cst_435 : f32 to vector<8x1xf32>
    %2266 = arith.addf %2262, %2265 : vector<8x1xf32>
    %2267 = math.rsqrt %2266 : vector<8x1xf32>
    %2268 = vector.broadcast %2267 : vector<8x1xf32> to vector<8x32xf32>
    %2269 = arith.mulf %2264, %2268 : vector<8x32xf32>
    %2270 = vector.broadcast %2248 : vector<1x32xf32> to vector<8x32xf32>
    %2271 = arith.mulf %2269, %2270 : vector<8x32xf32>
    %2272 = vector.broadcast %2251 : vector<1x32xf32> to vector<8x32xf32>
    %2273 = arith.addf %2271, %2272 : vector<8x32xf32>
    %2274 = arith.negf %2273 : vector<8x32xf32>
    %2275 = math.exp %2274 : vector<8x32xf32>
    %cst_436 = arith.constant 1.000000e+00 : f32
    %2276 = vector.broadcast %cst_436 : f32 to vector<8x32xf32>
    %2277 = arith.addf %2276, %2275 : vector<8x32xf32>
    %2278 = arith.divf %2276, %2277 : vector<8x32xf32>
    %2279 = vector.extract_strided_slice %2210 {offsets = [0, 64], sizes = [8, 32], strides = [1, 1]} : vector<8x96xf32> to vector<8x32xf32>
    %2280 = vector.extract_strided_slice %11 {offsets = [1, 0, 0], sizes = [1, 1, 32], strides = [1, 1, 1]} : vector<2x1x32xf32> to vector<1x1x32xf32>
    %2281 = vector.shape_cast %2280 : vector<1x1x32xf32> to vector<1x32xf32>
    %2282 = vector.broadcast %2281 : vector<1x32xf32> to vector<8x32xf32>
    %2283 = arith.addf %2279, %2282 : vector<8x32xf32>
    %2284 = arith.mulf %2244, %2283 : vector<8x32xf32>
    %2285 = math.tanh %2284 : vector<8x32xf32>
    %cst_437 = arith.constant 1.000000e+00 : f32
    %2286 = vector.broadcast %cst_437 : f32 to vector<8x32xf32>
    %2287 = arith.subf %2286, %2278 : vector<8x32xf32>
    %2288 = arith.mulf %2287, %2285 : vector<8x32xf32>
    %2289 = arith.mulf %2278, %2207 : vector<8x32xf32>
    %2290 = arith.addf %2288, %2289 : vector<8x32xf32>
    %2291 = arith.index_cast %2009 : i32 to index
    %c0_438 = arith.constant 0 : index
    %2292 = vector.load %arg11[%2291, %c0_438] : memref<64x32xf32, #tpu.memory_space<vmem>>, vector<8x32xf32>
    tpu.vector_store %arg11[%2291, %c0_438], %2290 {strides = array<i32>} : memref<64x32xf32, #tpu.memory_space<vmem>>, vector<8x32xf32>,
    %c8_i32_439 = arith.constant 8 : i32
    %c0_440 = arith.constant 0 : index
    %c0_441 = arith.constant 0 : index
    %2293 = vector.load %arg12[%c0_440, %c0_441] : memref<8x32xf32, #tpu.memory_space<vmem>>, vector<8x32xf32>
    tpu.vector_store %arg12[%c0_440, %c0_441], %2290 {strides = array<i32>} : memref<8x32xf32, #tpu.memory_space<vmem>>, vector<8x32xf32>,
    return
  }
  func.func @transform_0(%arg0: i32) -> (i32, i32) {
    %c0_i32 = arith.constant 0 : i32
    %c0_i32_0 = arith.constant 0 : i32
    return %arg0, %c0_i32 : i32, i32
  }
  func.func @transform_1(%arg0: i32) -> (i32, i32) {
    %c0_i32 = arith.constant 0 : i32
    %c0_i32_0 = arith.constant 0 : i32
    %c0_i32_1 = arith.constant 0 : i32
    return %c0_i32, %c0_i32_0 : i32, i32
  }
  func.func @transform_2(%arg0: i32) -> (i32, i32) {
    %c0_i32 = arith.constant 0 : i32
    %c0_i32_0 = arith.constant 0 : i32
    %c0_i32_1 = arith.constant 0 : i32
    return %c0_i32, %c0_i32_0 : i32, i32
  }
  func.func @transform_3(%arg0: i32) -> (i32, i32) {
    %c0_i32 = arith.constant 0 : i32
    %c0_i32_0 = arith.constant 0 : i32
    %c0_i32_1 = arith.constant 0 : i32
    return %c0_i32, %c0_i32_0 : i32, i32
  }
  func.func @transform_4(%arg0: i32) -> (i32, i32) {
    %c0_i32 = arith.constant 0 : i32
    %c0_i32_0 = arith.constant 0 : i32
    %c0_i32_1 = arith.constant 0 : i32
    return %c0_i32, %c0_i32_0 : i32, i32
  }
  func.func @transform_5(%arg0: i32) -> (i32, i32) {
    %c0_i32 = arith.constant 0 : i32
    %c0_i32_0 = arith.constant 0 : i32
    %c0_i32_1 = arith.constant 0 : i32
    return %c0_i32, %c0_i32_0 : i32, i32
  }
  func.func @transform_6(%arg0: i32) -> (i32, i32, i32) {
    %c0_i32 = arith.constant 0 : i32
    %c0_i32_0 = arith.constant 0 : i32
    %c0_i32_1 = arith.constant 0 : i32
    %c0_i32_2 = arith.constant 0 : i32
    return %c0_i32, %c0_i32_0, %c0_i32_1 : i32, i32, i32
  }
  func.func @transform_7(%arg0: i32) -> (i32, i32, i32) {
    %c0_i32 = arith.constant 0 : i32
    %c0_i32_0 = arith.constant 0 : i32
    %c0_i32_1 = arith.constant 0 : i32
    %c0_i32_2 = arith.constant 0 : i32
    return %c0_i32, %c0_i32_0, %c0_i32_1 : i32, i32, i32
  }
  func.func @transform_8(%arg0: i32) -> (i32, i32, i32) {
    %c0_i32 = arith.constant 0 : i32
    %c0_i32_0 = arith.constant 0 : i32
    %c0_i32_1 = arith.constant 0 : i32
    %c0_i32_2 = arith.constant 0 : i32
    return %c0_i32, %c0_i32_0, %c0_i32_1 : i32, i32, i32
  }
  func.func @transform_9(%arg0: i32) -> (i32, i32, i32) {
    %c0_i32 = arith.constant 0 : i32
    %c0_i32_0 = arith.constant 0 : i32
    %c0_i32_1 = arith.constant 0 : i32
    %c0_i32_2 = arith.constant 0 : i32
    return %c0_i32, %c0_i32_0, %c0_i32_1 : i32, i32, i32
  }
  func.func @transform_10(%arg0: i32) -> (i32, i32) {
    %c0_i32 = arith.constant 0 : i32
    %c0_i32_0 = arith.constant 0 : i32
    return %arg0, %c0_i32 : i32, i32
  }
}

</mosaic_0001>

<llo_original>
// kernel: tpu_custom_call.1
$region0: #{tpu_custom_call.1}
  #allocation0 [shape = 'u32[]', space=smem, size = 0x4, offset = 0x4, fixed_abs, tag = 'smem constant byte address 0x4 - core index']
  #allocation1 [shape = 'u32[72,128]{1,0:T(1,128)}', space=vmem, size = 0x9000, scoped, tag = 'internal scratch']
  #allocation2 [shape = 'f32[8,32]{1,0:T(8,128)}', space=vmem, size = 0x1000, scoped, tag = 'scratch operand']
  %s0 = inlined_call_operand.vmem [shape: f32[256,16], index: 0, kind: input, shape index: {}]
  %s1 = inlined_call_operand.vmem [shape: f32[16,160], index: 1, kind: input, shape index: {}]
  %s2 = inlined_call_operand.vmem [shape: f32[32,128], index: 2, kind: input, shape index: {}]
  %s3 = inlined_call_operand.vmem [shape: f32[1,96], index: 3, kind: input, shape index: {}]
  %s4 = inlined_call_operand.vmem [shape: f32[1,96], index: 4, kind: input, shape index: {}]
  %s5 = inlined_call_operand.vmem [shape: f32[1,32], index: 5, kind: input, shape index: {}]
  %s6 = inlined_call_operand.vmem [shape: f32[2,32,96], index: 6, kind: input, shape index: {}]
  %s7 = inlined_call_operand.vmem [shape: f32[2,1,64], index: 7, kind: input, shape index: {}]
  %s8 = inlined_call_operand.vmem [shape: f32[2,1,64], index: 8, kind: input, shape index: {}]
  %s9 = inlined_call_operand.vmem [shape: f32[2,1,32], index: 9, kind: input, shape index: {}]
  %s10 = inlined_call_operand.vmem [shape: f32[256,32], index: 10, kind: output, shape index: {}]
  %s11 = sld [smem:[#allocation0]]
  $region77: #{tpu_custom_call.1} parent=0
    _
  %s13 = ssub.s32 1, %s11
  %s14 = scalar_select 0, %s13, %s11
  loop: start=0, step=1, limit=6
  $region2: #{tpu_custom_call.1} parent=0 // loop_pre_header
    _
  $region3: #{tpu_custom_call.1} parent=0 // loop_header
    %s16 = sphi 0, %s20
    %p17 = scmp.ge.s32.totalorder %s16, 6
    %s26 = sphi 0, %s28
    %s29 = sphi 0, %s26
    %s30 = sphi 0, %s29
    %s46 = sphi 0, %s30
    %s50 = sphi 0, %s50
    %s52 = sphi 0, %s50
    %s53 = sphi 0, %s52
    %s67 = sphi 0, %s53
    %s71 = sphi 0, %s71
    %s73 = sphi 0, %s71
    %s74 = sphi 0, %s73
    %s88 = sphi 0, %s74
    %s92 = sphi 0, %s92
    %s94 = sphi 0, %s92
    %s95 = sphi 0, %s94
    %s109 = sphi 0, %s95
    %s113 = sphi 0, %s113
    %s115 = sphi 0, %s113
    %s116 = sphi 0, %s115
    %s130 = sphi 0, %s116
    %s134 = sphi 0, %s134
    %s136 = sphi 0, %s134
    %s137 = sphi 0, %s136
    %s151 = sphi 0, %s137
    %s155 = sphi 0, %s155
    %s157 = sphi 0, %s155
    %s158 = sphi 0, %s157
    %s172 = sphi 0, %s158
    %s176 = sphi 0, %s176
    %s178 = sphi 0, %s176
    %s179 = sphi 0, %s178
    %s193 = sphi 0, %s179
    %s197 = sphi 0, %s197
    %s199 = sphi 0, %s197
    %s200 = sphi 0, %s199
    %s214 = sphi 0, %s200
    %s218 = sphi 0, %s218
    %s220 = sphi 0, %s218
    %s221 = sphi 0, %s220
    %s235 = sphi 0, %s221
    %s241 = sphi 0, %s243
    %s244 = sphi 0, %s241
    %s245 = sphi 0, %s244
    %s261 = sphi 0, %s245
  $region4: #{tpu_custom_call.1} parent=0 // loop_header_branch
    %19 = sbr.rel (%p17) target = $region8
  $region5: #{tpu_custom_call.1} parent=0 // loop_body
    %s21 = ssub.s32 %s16, 1
    %s22 = ssub.s32 %s16, 2
    %s23 = sadd.s32 %s16, 1
    %s24 = ssub.s32 %s16, %s23
    %p25 = scmp.eq.s32.totalorder %s24, 0
    %s27 = sadd.s32 %s26, 1
    %s28 = scalar_select %p25, %s26, %s27
    %p31 = pneg %p25
    %p32 = scmp.eq.s32.totalorder %s16, 3
    %p33 = por %p31, %p32
    %p34 = scmp.ne.s32.totalorder %s26, %s29
    %p35 = scmp.eq.s32.totalorder %s16, 0
    %p36 = por %p34, %p35
    %p37 = scmp.ne.s32.totalorder %s26, %s29
    %p38 = scmp.eq.s32.totalorder %s21, 3
    %p39 = por %p37, %p38
    %p40 = scmp.ne.s32.totalorder %s29, %s30
    %p41 = scmp.eq.s32.totalorder %s21, 0
    %p42 = por %p40, %p41
    %p43 = scmp.ne.s32.totalorder %s29, %s30
    %p44 = scmp.eq.s32.totalorder %s22, 3
    %p45 = por %p43, %p44
    %p47 = scmp.ne.s32.totalorder %s30, %s46
    %p48 = scmp.eq.s32.totalorder %s22, 0
    %p49 = por %p47, %p48
    %s51 = sadd.s32 %s50, 1
    %p54 = scmp.eq.s32.totalorder %s16, 3
    %p55 = scmp.ne.s32.totalorder %s50, %s52
    %p56 = scmp.eq.s32.totalorder %s16, 0
    %p57 = por %p55, %p56
    %p58 = scmp.ne.s32.totalorder %s50, %s52
    %p59 = scmp.eq.s32.totalorder %s21, 3
    %p60 = por %p58, %p59
    %p61 = scmp.ne.s32.totalorder %s52, %s53
    %p62 = scmp.eq.s32.totalorder %s21, 0
    %p63 = por %p61, %p62
    %p64 = scmp.ne.s32.totalorder %s52, %s53
    %p65 = scmp.eq.s32.totalorder %s22, 3
    %p66 = por %p64, %p65
    %p68 = scmp.ne.s32.totalorder %s53, %s67
    %p69 = scmp.eq.s32.totalorder %s22, 0
    %p70 = por %p68, %p69
    %s72 = sadd.s32 %s71, 1
    %p75 = scmp.eq.s32.totalorder %s16, 3
    %p76 = scmp.ne.s32.totalorder %s71, %s73
    %p77 = scmp.eq.s32.totalorder %s16, 0
    %p78 = por %p76, %p77
    %p79 = scmp.ne.s32.totalorder %s71, %s73
    %p80 = scmp.eq.s32.totalorder %s21, 3
    %p81 = por %p79, %p80
    %p82 = scmp.ne.s32.totalorder %s73, %s74
    %p83 = scmp.eq.s32.totalorder %s21, 0
    %p84 = por %p82, %p83
    %p85 = scmp.ne.s32.totalorder %s73, %s74
    %p86 = scmp.eq.s32.totalorder %s22, 3
    %p87 = por %p85, %p86
    %p89 = scmp.ne.s32.totalorder %s74, %s88
    %p90 = scmp.eq.s32.totalorder %s22, 0
    %p91 = por %p89, %p90
    %s93 = sadd.s32 %s92, 1
    %p96 = scmp.eq.s32.totalorder %s16, 3
    %p97 = scmp.ne.s32.totalorder %s92, %s94
    %p98 = scmp.eq.s32.totalorder %s16, 0
    %p99 = por %p97, %p98
    %p100 = scmp.ne.s32.totalorder %s92, %s94
    %p101 = scmp.eq.s32.totalorder %s21, 3
    %p102 = por %p100, %p101
    %p103 = scmp.ne.s32.totalorder %s94, %s95
    %p104 = scmp.eq.s32.totalorder %s21, 0
    %p105 = por %p103, %p104
    %p106 = scmp.ne.s32.totalorder %s94, %s95
    %p107 = scmp.eq.s32.totalorder %s22, 3
    %p108 = por %p106, %p107
    %p110 = scmp.ne.s32.totalorder %s95, %s109
    %p111 = scmp.eq.s32.totalorder %s22, 0
    %p112 = por %p110, %p111
    %s114 = sadd.s32 %s113, 1
    %p117 = scmp.eq.s32.totalorder %s16, 3
    %p118 = scmp.ne.s32.totalorder %s113, %s115
    %p119 = scmp.eq.s32.totalorder %s16, 0
    %p120 = por %p118, %p119
    %p121 = scmp.ne.s32.totalorder %s113, %s115
    %p122 = scmp.eq.s32.totalorder %s21, 3
    %p123 = por %p121, %p122
    %p124 = scmp.ne.s32.totalorder %s115, %s116
    %p125 = scmp.eq.s32.totalorder %s21, 0
    %p126 = por %p124, %p125
    %p127 = scmp.ne.s32.totalorder %s115, %s116
    %p128 = scmp.eq.s32.totalorder %s22, 3
    %p129 = por %p127, %p128
    %p131 = scmp.ne.s32.totalorder %s116, %s130
    %p132 = scmp.eq.s32.totalorder %s22, 0
    %p133 = por %p131, %p132
    %s135 = sadd.s32 %s134, 1
    %p138 = scmp.eq.s32.totalorder %s16, 3
    %p139 = scmp.ne.s32.totalorder %s134, %s136
    %p140 = scmp.eq.s32.totalorder %s16, 0
    %p141 = por %p139, %p140
    %p142 = scmp.ne.s32.totalorder %s134, %s136
    %p143 = scmp.eq.s32.totalorder %s21, 3
    %p144 = por %p142, %p143
    %p145 = scmp.ne.s32.totalorder %s136, %s137
    %p146 = scmp.eq.s32.totalorder %s21, 0
    %p147 = por %p145, %p146
    %p148 = scmp.ne.s32.totalorder %s136, %s137
    %p149 = scmp.eq.s32.totalorder %s22, 3
    %p150 = por %p148, %p149
    %p152 = scmp.ne.s32.totalorder %s137, %s151
    %p153 = scmp.eq.s32.totalorder %s22, 0
    %p154 = por %p152, %p153
    %s156 = sadd.s32 %s155, 1
    %p159 = scmp.eq.s32.totalorder %s16, 3
    %p160 = scmp.ne.s32.totalorder %s155, %s157
    %p161 = scmp.eq.s32.totalorder %s16, 0
    %p162 = por %p160, %p161
    %p163 = scmp.ne.s32.totalorder %s155, %s157
    %p164 = scmp.eq.s32.totalorder %s21, 3
    %p165 = por %p163, %p164
    %p166 = scmp.ne.s32.totalorder %s157, %s158
    %p167 = scmp.eq.s32.totalorder %s21, 0
    %p168 = por %p166, %p167
    %p169 = scmp.ne.s32.totalorder %s157, %s158
    %p170 = scmp.eq.s32.totalorder %s22, 3
    %p171 = por %p169, %p170
    %p173 = scmp.ne.s32.totalorder %s158, %s172
    %p174 = scmp.eq.s32.totalorder %s22, 0
    %p175 = por %p173, %p174
    %s177 = sadd.s32 %s176, 1
    %p180 = scmp.eq.s32.totalorder %s16, 3
    %p181 = scmp.ne.s32.totalorder %s176, %s178
    %p182 = scmp.eq.s32.totalorder %s16, 0
    %p183 = por %p181, %p182
    %p184 = scmp.ne.s32.totalorder %s176, %s178
    %p185 = scmp.eq.s32.totalorder %s21, 3
    %p186 = por %p184, %p185
    %p187 = scmp.ne.s32.totalorder %s178, %s179
    %p188 = scmp.eq.s32.totalorder %s21, 0
    %p189 = por %p187, %p188
    %p190 = scmp.ne.s32.totalorder %s178, %s179
    %p191 = scmp.eq.s32.totalorder %s22, 3
    %p192 = por %p190, %p191
    %p194 = scmp.ne.s32.totalorder %s179, %s193
    %p195 = scmp.eq.s32.totalorder %s22, 0
    %p196 = por %p194, %p195
    %s198 = sadd.s32 %s197, 1
    %p201 = scmp.eq.s32.totalorder %s16, 3
    %p202 = scmp.ne.s32.totalorder %s197, %s199
    %p203 = scmp.eq.s32.totalorder %s16, 0
    %p204 = por %p202, %p203
    %p205 = scmp.ne.s32.totalorder %s197, %s199
    %p206 = scmp.eq.s32.totalorder %s21, 3
    %p207 = por %p205, %p206
    %p208 = scmp.ne.s32.totalorder %s199, %s200
    %p209 = scmp.eq.s32.totalorder %s21, 0
    %p210 = por %p208, %p209
    %p211 = scmp.ne.s32.totalorder %s199, %s200
    %p212 = scmp.eq.s32.totalorder %s22, 3
    %p213 = por %p211, %p212
    %p215 = scmp.ne.s32.totalorder %s200, %s214
    %p216 = scmp.eq.s32.totalorder %s22, 0
    %p217 = por %p215, %p216
    %s219 = sadd.s32 %s218, 1
    %p222 = scmp.eq.s32.totalorder %s16, 3
    %p223 = scmp.ne.s32.totalorder %s218, %s220
    %p224 = scmp.eq.s32.totalorder %s16, 0
    %p225 = por %p223, %p224
    %p226 = scmp.ne.s32.totalorder %s218, %s220
    %p227 = scmp.eq.s32.totalorder %s21, 3
    %p228 = por %p226, %p227
    %p229 = scmp.ne.s32.totalorder %s220, %s221
    %p230 = scmp.eq.s32.totalorder %s21, 0
    %p231 = por %p229, %p230
    %p232 = scmp.ne.s32.totalorder %s220, %s221
    %p233 = scmp.eq.s32.totalorder %s22, 3
    %p234 = por %p232, %p233
    %p236 = scmp.ne.s32.totalorder %s221, %s235
    %p237 = scmp.eq.s32.totalorder %s22, 0
    %p238 = por %p236, %p237
    %s239 = ssub.s32 %s16, %s23
    %p240 = scmp.eq.s32.totalorder %s239, 0
    %s242 = sadd.s32 %s241, 1
    %s243 = scalar_select %p240, %s241, %s242
    %p246 = pneg %p240
    %p247 = scmp.eq.s32.totalorder %s16, 3
    %p248 = por %p246, %p247
    %p249 = scmp.ne.s32.totalorder %s241, %s244
    %p250 = scmp.eq.s32.totalorder %s16, 0
    %p251 = por %p249, %p250
    %p252 = scmp.ne.s32.totalorder %s241, %s244
    %p253 = scmp.eq.s32.totalorder %s21, 3
    %p254 = por %p252, %p253
    %p255 = scmp.ne.s32.totalorder %s244, %s245
    %p256 = scmp.eq.s32.totalorder %s21, 0
    %p257 = por %p255, %p256
    %p258 = scmp.ne.s32.totalorder %s244, %s245
    %p259 = scmp.eq.s32.totalorder %s22, 3
    %p260 = por %p258, %p259
    %p262 = scmp.ne.s32.totalorder %s245, %s261
    %p263 = scmp.eq.s32.totalorder %s22, 0
    %p264 = por %p262, %p263
    %p265 = scmp.le.s32.totalorder 1, %s16
    %p266 = scmp.lt.s32.totalorder %s16, 5
    %p267 = pnand %p265, %p266
    %p268 = pneg %p267
    // Predicated region
    $region9: #{tpu_custom_call.1} parent=5 // pred_check
      _
    $region10: #{tpu_custom_call.1} parent=5 // pred_check_branch
      %270 = sbr.rel (%p267) target = $region12
    $region11: #{tpu_custom_call.1} parent=5 // pred_region
      %s271 = ssub.s32 %s16, 1
      // Predicated region
      $region13: #{tpu_custom_call.1} parent=11 // pred_check
        %p272 = pneg %p63
      $region14: #{tpu_custom_call.1} parent=11 // pred_check_branch
        %274 = sbr.rel (%p272) target = $region16
      $region15: #{tpu_custom_call.1} parent=11 // pred_region
        _
      $region16: #{tpu_custom_call.1} parent=11 // pred_fallthru
        _
      // Predicated region
      $region17: #{tpu_custom_call.1} parent=11 // pred_check
        %p275 = pneg %p84
      $region18: #{tpu_custom_call.1} parent=11 // pred_check_branch
        %277 = sbr.rel (%p275) target = $region20
      $region19: #{tpu_custom_call.1} parent=11 // pred_region
        _
      $region20: #{tpu_custom_call.1} parent=11 // pred_fallthru
        _
      // Predicated region
      $region21: #{tpu_custom_call.1} parent=11 // pred_check
        %p278 = pneg %p105
      $region22: #{tpu_custom_call.1} parent=11 // pred_check_branch
        %280 = sbr.rel (%p278) target = $region24
      $region23: #{tpu_custom_call.1} parent=11 // pred_region
        _
      $region24: #{tpu_custom_call.1} parent=11 // pred_fallthru
        _
      // Predicated region
      $region25: #{tpu_custom_call.1} parent=11 // pred_check
        %p281 = pneg %p126
      $region26: #{tpu_custom_call.1} parent=11 // pred_check_branch
        %283 = sbr.rel (%p281) target = $region28
      $region27: #{tpu_custom_call.1} parent=11 // pred_region
        _
      $region28: #{tpu_custom_call.1} parent=11 // pred_fallthru
        _
      // Predicated region
      $region29: #{tpu_custom_call.1} parent=11 // pred_check
        %p284 = pneg %p147
      $region30: #{tpu_custom_call.1} parent=11 // pred_check_branch
        %286 = sbr.rel (%p284) target = $region32
      $region31: #{tpu_custom_call.1} parent=11 // pred_region
        _
      $region32: #{tpu_custom_call.1} parent=11 // pred_fallthru
        _
      // Predicated region
      $region33: #{tpu_custom_call.1} parent=11 // pred_check
        %p287 = pneg %p168
      $region34: #{tpu_custom_call.1} parent=11 // pred_check_branch
        %289 = sbr.rel (%p287) target = $region36
      $region35: #{tpu_custom_call.1} parent=11 // pred_region
        _
      $region36: #{tpu_custom_call.1} parent=11 // pred_fallthru
        _
      // Predicated region
      $region37: #{tpu_custom_call.1} parent=11 // pred_check
        %p290 = pneg %p189
      $region38: #{tpu_custom_call.1} parent=11 // pred_check_branch
        %292 = sbr.rel (%p290) target = $region40
      $region39: #{tpu_custom_call.1} parent=11 // pred_region
        _
      $region40: #{tpu_custom_call.1} parent=11 // pred_fallthru
        _
      // Predicated region
      $region41: #{tpu_custom_call.1} parent=11 // pred_check
        %p293 = pneg %p210
      $region42: #{tpu_custom_call.1} parent=11 // pred_check_branch
        %295 = sbr.rel (%p293) target = $region44
      $region43: #{tpu_custom_call.1} parent=11 // pred_region
        _
      $region44: #{tpu_custom_call.1} parent=11 // pred_fallthru
        _
      // Predicated region
      $region45: #{tpu_custom_call.1} parent=11 // pred_check
        %p296 = pneg %p231
      $region46: #{tpu_custom_call.1} parent=11 // pred_check_branch
        %298 = sbr.rel (%p296) target = $region48
      $region47: #{tpu_custom_call.1} parent=11 // pred_region
        _
      $region48: #{tpu_custom_call.1} parent=11 // pred_fallthru
        _
    $region12: #{tpu_custom_call.1} parent=5 // pred_fallthru
      _
    %p299 = scmp.lt.s32.totalorder %s16, 4
    // Predicated region
    $region49: #{tpu_custom_call.1} parent=5 // pred_check
      %p300 = pneg %p299
    $region50: #{tpu_custom_call.1} parent=5 // pred_check_branch
      %302 = sbr.rel (%p300) target = $region52
    $region51: #{tpu_custom_call.1} parent=5 // pred_region
      // Predicated region
      $region53: #{tpu_custom_call.1} parent=51 // pred_check
        %p303 = pneg %p36
      $region54: #{tpu_custom_call.1} parent=51 // pred_check_branch
        %305 = sbr.rel (%p303) target = $region56
      $region55: #{tpu_custom_call.1} parent=51 // pred_region
        %s306 = smul.u32 8, %s16
        %p307 = scmp.lt.s32.totalorder %s306, 31
        %s308 = scalar_select %p307, %s306, 31
        %s309 = smul.addr %s308, 8
        %s310 = scalar_lea.vmem %s0, %s309
        %s311 = smul.u32 8, %s16
      $region56: #{tpu_custom_call.1} parent=51 // pred_fallthru
        _
    $region52: #{tpu_custom_call.1} parent=5 // pred_fallthru
      _
    %p312 = scmp.le.s32.totalorder 1, %s16
    %p313 = scmp.lt.s32.totalorder %s16, 5
    %p314 = pnand %p312, %p313
    %p315 = pneg %p314
    // Predicated region
    $region57: #{tpu_custom_call.1} parent=5 // pred_check
      _
    $region58: #{tpu_custom_call.1} parent=5 // pred_check_branch
      %317 = sbr.rel (%p314) target = $region60
    $region59: #{tpu_custom_call.1} parent=5 // pred_region
      %s318 = ssub.s32 %s16, 1
      %s319 = smul.u32 8, %s21
      %p320 = scmp.lt.s32.totalorder %s319, 31
      %s321 = scalar_select %p320, %s319, 31
      %s322 = smul.addr %s321, 8
      %s323 = scalar_lea.vmem %s0, %s322
      %p324 = pneg %p42
      %p325 = pneg %p39
      %p326 = pneg %p63
      %p327 = pneg %p60
      %p328 = pneg %p84
      %p329 = pneg %p81
      %p330 = pneg %p105
      %p331 = pneg %p102
      %p332 = pneg %p126
      %p333 = pneg %p123
      %p334 = pneg %p147
      %p335 = pneg %p144
      %p336 = pneg %p168
      %p337 = pneg %p165
      %p338 = pneg %p189
      %p339 = pneg %p186
      %p340 = pneg %p210
      %p341 = pneg %p207
      %p342 = pneg %p231
      %p343 = pneg %p228
      %p344 = pneg %p257
      %p345 = pneg %p254
      %s346 = smul.u32 8, %s21
      %p347 = scmp.lt.s32.totalorder %s346, 31
      %s348 = scalar_select %p347, %s346, 31
      %s349 = smul.addr %s348, 8
      %s350 = scalar_lea.vmem %s10, %s349
      %s351 = smul.u32 8, %s21
      %p352 = scmp.lt.s32.totalorder %s351, 31
      %s353 = scalar_select %p352, %s351, 31
      %s354 = smul.addr %s353, 8
      %s355 = scalar_lea.vmem %s0, %s354
      %s356 = smul.u32 8, %s21
      %s357 = smul.u32 8, %s21
      %p358 = scmp.lt.s32.totalorder %s357, 31
      %s359 = scalar_select %p358, %s357, 31
      %s360 = smul.addr %s359, 8
      %s361 = scalar_lea.vmem %s10, %s360
      %s362 = smul.u32 8, %s21
      %p363 = scmp.eq.s32.totalorder %s21, 0
      // Predicated region
      $region61: #{tpu_custom_call.1} parent=59 // pred_check
        %p364 = pneg %p363
      $region62: #{tpu_custom_call.1} parent=59 // pred_check_branch
        %366 = sbr.rel (%p364) target = $region64
      $region63: #{tpu_custom_call.1} parent=59 // pred_region
        %vm367 = vcmask 261120
        %368 = vst.msk [vmem:[#allocation2] sm:$0xff] %vm367, 0.0
      $region64: #{tpu_custom_call.1} parent=59 // pred_fallthru
        _
      %v369 = vld [vmem:[%s1] sm:$0xff]
      %v370 = vld [vmem:[%s1 + $0x8] sm:$0xff]
      %v371 = vld [vmem:[%s1 + $0x10] sm:$0xff]
      %v372 = vld [vmem:[%s1 + $0x18] sm:$0xff]
      %v373 = vld [vmem:[%s2] sm:$0xff]
      %v374 = vld [vmem:[%s2 + $0x8] sm:$0xff]
      %v375 = vld [vmem:[%s2 + $0x10] sm:$0xff]
      %v376 = vld [vmem:[%s2 + $0x18] sm:$0xff]
      %v377 = vld [vmem:[%s3] sm:$0x1]
      %v378 = vld [vmem:[%s4] sm:$0x1]
      %v379 = vld [vmem:[%s5] sm:$0x1]
      %v380 = vld [vmem:[%s6] sm:$0xff]
      %v381 = vld [vmem:[%s6 + $0x8] sm:$0xff]
      %v382 = vld [vmem:[%s6 + $0x10] sm:$0xff]
      %v383 = vld [vmem:[%s6 + $0x18] sm:$0xff]
      %v384 = vld [vmem:[%s6 + $0x20] sm:$0xff]
      %v385 = vld [vmem:[%s6 + $0x28] sm:$0xff]
      %v386 = vld [vmem:[%s6 + $0x30] sm:$0xff]
      %v387 = vld [vmem:[%s6 + $0x38] sm:$0xff]
      %v388 = vld [vmem:[%s7] sm:$0x1]
      %v389 = vld [vmem:[%s7 + $0x1] sm:$0x1]
      %v390 = vld [vmem:[%s8] sm:$0x1]
      %v391 = vld [vmem:[%s8 + $0x1] sm:$0x1]
      %v392 = vld [vmem:[%s9] sm:$0x1]
      %v393 = vld [vmem:[%s9 + $0x1] sm:$0x1]
      %v394 = vld [vmem:[#allocation2] sm:$0xff]
      %v395 = vld [vmem:[%s355] sm:$0xff]
      %vm396 = vcmask 130048
      %v398 = vsel %vm396, %v395, 0
      %400 = vmatpush.msra.mxu0 0.0
      %401 = vmatpush.msra.mxu0 0.0
      %402 = vmatpush.msra.mxu0 0.0
      %403 = vmatpush.msra.mxu0 0.0
      %404 = vmatpush.msra.mxu0 0.0
      %405 = vmatpush.msra.mxu0 0.0
      %406 = vmatpush.msra.mxu0 0.0
      %407 = vmatpush.msra.mxu0 0.0
      %408 = vmatpush.msra.mxu0 0.0
      %409 = vmatpush.msra.mxu0 0.0
      %410 = vmatpush.msra.mxu0 0.0
      %411 = vmatpush.msra.mxu0 0.0
      %412 = vmatpush.msra.mxu0 0.0
      %413 = vmatpush.msra.mxu0 0.0
      %414 = vmatpush.msra.mxu0 %v371
      %415 = vmatpush.msra.mxu0 %v369
      %416 = vmatmul.f32.gmra.mxu0 %v398
      %v417 = vpop.f32.mrf.mxu0
      %v418 = vadd.f32 0.0, %v417
      %419 = vdwg.mxu0
      %420 = vmatpush.msra.mxu0 0.0
      %421 = vmatpush.msra.mxu0 0.0
      %422 = vmatpush.msra.mxu0 0.0
      %423 = vmatpush.msra.mxu0 0.0
      %424 = vmatpush.msra.mxu0 0.0
      %425 = vmatpush.msra.mxu0 0.0
      %426 = vmatpush.msra.mxu0 0.0
      %427 = vmatpush.msra.mxu0 0.0
      %428 = vmatpush.msra.mxu0 0.0
      %429 = vmatpush.msra.mxu0 0.0
      %430 = vmatpush.msra.mxu0 0.0
      %431 = vmatpush.msra.mxu0 0.0
      %432 = vmatpush.msra.mxu0 0.0
      %433 = vmatpush.msra.mxu0 0.0
      %434 = vmatpush.msra.mxu0 %v372
      %435 = vmatpush.msra.mxu0 %v370
      %436 = vmatmul.f32.gmra.mxu0 %v398
      %v437 = vpop.f32.mrf.mxu0
      %v438 = vadd.f32 0.0, %v437
      %439 = vdwg.mxu0
      %vm440 = vcmask 261120
      %v442 = vsel %vm440, %v394, 0
      %444 = vmatpush.msra.mxu0 0.0
      %445 = vmatpush.msra.mxu0 0.0
      %446 = vmatpush.msra.mxu0 0.0
      %447 = vmatpush.msra.mxu0 0.0
      %448 = vmatpush.msra.mxu0 0.0
      %449 = vmatpush.msra.mxu0 0.0
      %450 = vmatpush.msra.mxu0 0.0
      %451 = vmatpush.msra.mxu0 0.0
      %452 = vmatpush.msra.mxu0 0.0
      %453 = vmatpush.msra.mxu0 0.0
      %454 = vmatpush.msra.mxu0 0.0
      %455 = vmatpush.msra.mxu0 0.0
      %456 = vmatpush.msra.mxu0 %v376
      %457 = vmatpush.msra.mxu0 %v375
      %458 = vmatpush.msra.mxu0 %v374
      %459 = vmatpush.msra.mxu0 %v373
      %460 = vmatmul.f32.gmra.mxu0 %v442
      %v461 = vpop.f32.mrf.mxu0
      %v462 = vadd.f32 0.0, %v461
      %463 = vdwg.mxu0
      %v464 = vadd.f32 %v418, %v462
      %v465 = vsel %vm440, %v464, 0.0
      %466 = vadd.xlane.f32.xlu0 %v465
      %v467 = vpop.xlane.xlu0 %466
      %v468 = vrcp.pop 32.0
      %v469 = vmul.f32 32.0, %v468
      %v470 = vsub.f32 1.0, %v469
      %v471 = vmul.f32 %v468, %v470
      %v472 = vadd.f32 %v468, %v471
      %vm473 = vweird.f32 %v468
      %v474 = vsel %vm473, %v468, %v472
      %v475 = vmul.f32 %v467, %v474
      %v476 = vsub.f32 %v464, %v475
      %v477 = vmul.f32 %v476, %v476
      %v478 = vsel %vm440, %v477, 0.0
      %479 = vadd.xlane.f32.xlu0 %v478
      %v480 = vpop.xlane.xlu0 %479
      %v481 = vmul.f32 %v480, %v474
      %v482 = vadd.f32 %v481, 1e-05
      %v483 = vrsqrt.pop %v482
      %v484 = vmul.f32 %v483, %v482
      %v485 = vmul.f32 %v484, %v483
      %v486 = vmul.f32 0.5, %v485
      %v487 = vsub.f32 1.5, %v486
      %v488 = vmul.f32 %v483, %v487
      %vm489 = vweird.f32 %v482
      %vm490 = vweird.f32 %v483
      %vm491 = vmor %vm489, %vm490
      %v492 = vsel %vm491, %v483, %v488
      %v493 = vmul.f32 %v476, %v492
      %v495 = vperm.slane %v377, 0
      %v497 = vmul.f32 %v493, %v495
      %v499 = vperm.slane %v378, 0
      %v501 = vadd.f32 %v497, %v499
      %v502 = vxor.u32 %v501, 2147483648
      %v503 = vmul.f32 %v502, 1.442695
      %v504 = vpow.pop %v503
      %v505 = vadd.f32 %v504, 1.0
      %v506 = vrcp.pop %v505
      %v507 = vmul.f32 %v505, %v506
      %v508 = vsub.f32 1.0, %v507
      %v509 = vmul.f32 %v506, %v508
      %v510 = vadd.f32 %v506, %v509
      %vm511 = vweird.f32 %v505
      %vm512 = vweird.f32 %v506
      %vm513 = vmor %vm511, %vm512
      %v514 = vsel %vm513, %v506, %v510
      %v515 = vand.u32 2147483647, %v505
      %vm516 = vcmp.eq.f32.partialorder %v515, 8.507059e+37
      %v517 = vand.u32 %v505, 2147483648
      %v518 = vor.u32 1.1754944e-38, %v517
      %v519 = vsel %vm516, %v518, %v514
      %v520 = vmul.f32 1.0, %v519
      %522 = vrot.lane.b32.xlu0 %v464, 96
      %v523 = vpop.permute.xlu0 %522
      %v525 = vsel %vm440, %v523, 0.0
      %526 = vadd.xlane.f32.xlu0 %v525
      %v527 = vpop.xlane.xlu0 %526
      %v528 = vmul.f32 %v527, %v474
      %v529 = vsub.f32 %v464, %v528
      %v530 = vmul.f32 %v529, %v529
      %532 = vrot.lane.b32.xlu0 %v530, 96
      %v533 = vpop.permute.xlu0 %532
      %v535 = vsel %vm440, %v533, 0.0
      %536 = vadd.xlane.f32.xlu0 %v535
      %v537 = vpop.xlane.xlu0 %536
      %v538 = vmul.f32 %v537, %v474
      %v539 = vadd.f32 %v538, 1e-05
      %v540 = vrsqrt.pop %v539
      %v541 = vmul.f32 %v540, %v539
      %v542 = vmul.f32 %v541, %v540
      %v543 = vmul.f32 0.5, %v542
      %v544 = vsub.f32 1.5, %v543
      %v545 = vmul.f32 %v540, %v544
      %vm546 = vweird.f32 %v539
      %vm547 = vweird.f32 %v540
      %vm548 = vmor %vm546, %vm547
      %v549 = vsel %vm548, %v540, %v545
      %v550 = vmul.f32 %v529, %v549
      %v551 = vmul.f32 %v550, %v495
      %v552 = vadd.f32 %v551, %v499
      %v553 = vxor.u32 %v552, 2147483648
      %v554 = vmul.f32 %v553, 1.442695
      %v555 = vpow.pop %v554
      %v556 = vadd.f32 %v555, 1.0
      %v557 = vrcp.pop %v556
      %v558 = vmul.f32 %v556, %v557
      %v559 = vsub.f32 1.0, %v558
      %v560 = vmul.f32 %v557, %v559
      %v561 = vadd.f32 %v557, %v560
      %vm562 = vweird.f32 %v556
      %vm563 = vweird.f32 %v557
      %vm564 = vmor %vm562, %vm563
      %v565 = vsel %vm564, %v557, %v561
      %v566 = vand.u32 2147483647, %v556
      %vm567 = vcmp.eq.f32.partialorder %v566, 8.507059e+37
      %v568 = vand.u32 %v556, 2147483648
      %v569 = vor.u32 1.1754944e-38, %v568
      %v570 = vsel %vm567, %v569, %v565
      %v571 = vmul.f32 1.0, %v570
      %572 = vrot.lane.b32.xlu0 %v464, 64
      %v573 = vpop.permute.xlu0 %572
      %v575 = vsel %vm440, %v573, 0.0
      %576 = vadd.xlane.f32.xlu0 %v575
      %v577 = vpop.xlane.xlu0 %576
      %v578 = vmul.f32 %v577, %v474
      %v579 = vsub.f32 %v464, %v578
      %v580 = vmul.f32 %v579, %v579
      %582 = vrot.lane.b32.xlu0 %v580, 64
      %v583 = vpop.permute.xlu0 %582
      %v585 = vsel %vm440, %v583, 0.0
      %586 = vadd.xlane.f32.xlu0 %v585
      %v587 = vpop.xlane.xlu0 %586
      %v588 = vmul.f32 %v587, %v474
      %v589 = vadd.f32 %v588, 1e-05
      %v590 = vrsqrt.pop %v589
      %v591 = vmul.f32 %v590, %v589
      %v592 = vmul.f32 %v591, %v590
      %v593 = vmul.f32 0.5, %v592
      %v594 = vsub.f32 1.5, %v593
      %v595 = vmul.f32 %v590, %v594
      %vm596 = vweird.f32 %v589
      %vm597 = vweird.f32 %v590
      %vm598 = vmor %vm596, %vm597
      %v599 = vsel %vm598, %v590, %v595
      %v600 = vmul.f32 %v579, %v599
      %v601 = vmul.f32 %v600, %v495
      %v602 = vadd.f32 %v601, %v499
      %v603 = vxor.u32 %v602, 2147483648
      %v604 = vmul.f32 %v603, 1.442695
      %v605 = vpow.pop %v604
      %v606 = vadd.f32 %v605, 1.0
      %v607 = vrcp.pop %v606
      %v608 = vmul.f32 %v606, %v607
      %v609 = vsub.f32 1.0, %v608
      %v610 = vmul.f32 %v607, %v609
      %v611 = vadd.f32 %v607, %v610
      %vm612 = vweird.f32 %v606
      %vm613 = vweird.f32 %v607
      %vm614 = vmor %vm612, %vm613
      %v615 = vsel %vm614, %v607, %v611
      %v616 = vand.u32 2147483647, %v606
      %vm617 = vcmp.eq.f32.partialorder %v616, 8.507059e+37
      %v618 = vand.u32 %v606, 2147483648
      %v619 = vor.u32 1.1754944e-38, %v618
      %v620 = vsel %vm617, %v619, %v615
      %v621 = vmul.f32 1.0, %v620
      %v623 = vperm.slane %v379, 0
      %624 = vrot.lane.b32.xlu0 %v623, 96
      %v625 = vpop.permute.xlu0 %624
      %v627 = vadd.f32 %v462, %v625
      %629 = vrot.lane.b32.xlu0 %v627, 32
      %v630 = vpop.permute.xlu0 %629
      %v632 = vmul.f32 %v520, %v630
      %634 = vrot.lane.b32.xlu0 %v632, 96
      %v635 = vpop.permute.xlu0 %634
      %v637 = vadd.f32 %v418, %v635
      %v638 = vtanh.pop %v637
      %640 = vrot.lane.b32.xlu0 %v438, 64
      %v641 = vpop.permute.xlu0 %640
      %v643 = vmul.f32 %v621, %v641
      %645 = vrot.lane.b32.xlu0 %v643, 32
      %v646 = vpop.permute.xlu0 %645
      %v648 = vadd.f32 %v638, %v646
      %v649 = vsub.f32 1.0, %v571
      %650 = vrot.lane.b32.xlu0 %v394, 32
      %v651 = vpop.permute.xlu0 %650
      %v653 = vmul.f32 %v649, %v651
      %655 = vrot.lane.b32.xlu0 %v648, 64
      %v656 = vpop.permute.xlu0 %655
      %v658 = vmul.f32 %v571, %v656
      %v659 = vadd.f32 %v653, %v658
      %661 = vrot.lane.b32.xlu0 %v659, 96
      %v662 = vpop.permute.xlu0 %661
      %v663 = vsel %vm440, %v662, 0
      %665 = vmatpush.msra.mxu0 0.0
      %666 = vmatpush.msra.mxu0 0.0
      %667 = vmatpush.msra.mxu0 0.0
      %668 = vmatpush.msra.mxu0 0.0
      %669 = vmatpush.msra.mxu0 0.0
      %670 = vmatpush.msra.mxu0 0.0
      %671 = vmatpush.msra.mxu0 0.0
      %672 = vmatpush.msra.mxu0 0.0
      %673 = vmatpush.msra.mxu0 0.0
      %674 = vmatpush.msra.mxu0 0.0
      %675 = vmatpush.msra.mxu0 0.0
      %676 = vmatpush.msra.mxu0 0.0
      %677 = vmatpush.msra.mxu0 %v383
      %678 = vmatpush.msra.mxu0 %v382
      %679 = vmatpush.msra.mxu0 %v381
      %680 = vmatpush.msra.mxu0 %v380
      %681 = vmatmul.f32.gmra.mxu0 %v663
      %v682 = vpop.f32.mrf.mxu0
      %v683 = vadd.f32 0.0, %v682
      %684 = vdwg.mxu0
      %v685 = vsel %vm440, %v683, 0.0
      %686 = vadd.xlane.f32.xlu0 %v685
      %v687 = vpop.xlane.xlu0 %686
      %v688 = vmul.f32 %v687, %v474
      %v689 = vsub.f32 %v683, %v688
      %v690 = vmul.f32 %v689, %v689
      %v691 = vsel %vm440, %v690, 0.0
      %692 = vadd.xlane.f32.xlu0 %v691
      %v693 = vpop.xlane.xlu0 %692
      %v694 = vmul.f32 %v693, %v474
      %v695 = vadd.f32 %v694, 1e-05
      %v696 = vrsqrt.pop %v695
      %v697 = vmul.f32 %v696, %v695
      %v698 = vmul.f32 %v697, %v696
      %v699 = vmul.f32 0.5, %v698
      %v700 = vsub.f32 1.5, %v699
      %v701 = vmul.f32 %v696, %v700
      %vm702 = vweird.f32 %v695
      %vm703 = vweird.f32 %v696
      %vm704 = vmor %vm702, %vm703
      %v705 = vsel %vm704, %v696, %v701
      %v706 = vmul.f32 %v689, %v705
      %v708 = vperm.slane %v388, 0
      %v710 = vmul.f32 %v706, %v708
      %v712 = vperm.slane %v390, 0
      %v714 = vadd.f32 %v710, %v712
      %v715 = vxor.u32 %v714, 2147483648
      %v716 = vmul.f32 %v715, 1.442695
      %v717 = vpow.pop %v716
      %v718 = vadd.f32 %v717, 1.0
      %v719 = vrcp.pop %v718
      %v720 = vmul.f32 %v718, %v719
      %v721 = vsub.f32 1.0, %v720
      %v722 = vmul.f32 %v719, %v721
      %v723 = vadd.f32 %v719, %v722
      %vm724 = vweird.f32 %v718
      %vm725 = vweird.f32 %v719
      %vm726 = vmor %vm724, %vm725
      %v727 = vsel %vm726, %v719, %v723
      %v728 = vand.u32 2147483647, %v718
      %vm729 = vcmp.eq.f32.partialorder %v728, 8.507059e+37
      %v730 = vand.u32 %v718, 2147483648
      %v731 = vor.u32 1.1754944e-38, %v730
      %v732 = vsel %vm729, %v731, %v727
      %v733 = vmul.f32 1.0, %v732
      %735 = vrot.lane.b32.xlu0 %v683, 96
      %v736 = vpop.permute.xlu0 %735
      %v738 = vsel %vm440, %v736, 0.0
      %739 = vadd.xlane.f32.xlu0 %v738
      %v740 = vpop.xlane.xlu0 %739
      %v741 = vmul.f32 %v740, %v474
      %v742 = vsub.f32 %v683, %v741
      %v743 = vmul.f32 %v742, %v742
      %745 = vrot.lane.b32.xlu0 %v743, 96
      %v746 = vpop.permute.xlu0 %745
      %v748 = vsel %vm440, %v746, 0.0
      %749 = vadd.xlane.f32.xlu0 %v748
      %v750 = vpop.xlane.xlu0 %749
      %v751 = vmul.f32 %v750, %v474
      %v752 = vadd.f32 %v751, 1e-05
      %v753 = vrsqrt.pop %v752
      %v754 = vmul.f32 %v753, %v752
      %v755 = vmul.f32 %v754, %v753
      %v756 = vmul.f32 0.5, %v755
      %v757 = vsub.f32 1.5, %v756
      %v758 = vmul.f32 %v753, %v757
      %vm759 = vweird.f32 %v752
      %vm760 = vweird.f32 %v753
      %vm761 = vmor %vm759, %vm760
      %v762 = vsel %vm761, %v753, %v758
      %v763 = vmul.f32 %v742, %v762
      %v764 = vmul.f32 %v763, %v708
      %v765 = vadd.f32 %v764, %v712
      %v766 = vxor.u32 %v765, 2147483648
      %v767 = vmul.f32 %v766, 1.442695
      %v768 = vpow.pop %v767
      %v769 = vadd.f32 %v768, 1.0
      %v770 = vrcp.pop %v769
      %v771 = vmul.f32 %v769, %v770
      %v772 = vsub.f32 1.0, %v771
      %v773 = vmul.f32 %v770, %v772
      %v774 = vadd.f32 %v770, %v773
      %vm775 = vweird.f32 %v769
      %vm776 = vweird.f32 %v770
      %vm777 = vmor %vm775, %vm776
      %v778 = vsel %vm777, %v770, %v774
      %v779 = vand.u32 2147483647, %v769
      %vm780 = vcmp.eq.f32.partialorder %v779, 8.507059e+37
      %v781 = vand.u32 %v769, 2147483648
      %v782 = vor.u32 1.1754944e-38, %v781
      %v783 = vsel %vm780, %v782, %v778
      %v784 = vmul.f32 1.0, %v783
      %v786 = vperm.slane %v392, 0
      %787 = vrot.lane.b32.xlu0 %v786, 64
      %v788 = vpop.permute.xlu0 %787
      %v790 = vadd.f32 %v683, %v788
      %792 = vrot.lane.b32.xlu0 %v790, 64
      %v793 = vpop.permute.xlu0 %792
      %v795 = vmul.f32 %v733, %v793
      %v796 = vtanh.pop %v795
      %v797 = vsub.f32 1.0, %v784
      %799 = vrot.lane.b32.xlu0 %v796, 32
      %v800 = vpop.permute.xlu0 %799
      %v802 = vmul.f32 %v797, %v800
      %v803 = vmul.f32 %v784, %v659
      %v804 = vadd.f32 %v802, %v803
      %806 = vrot.lane.b32.xlu0 %v804, 96
      %v807 = vpop.permute.xlu0 %806
      %v808 = vsel %vm440, %v807, 0
      %810 = vmatpush.msra.mxu0 0.0
      %811 = vmatpush.msra.mxu0 0.0
      %812 = vmatpush.msra.mxu0 0.0
      %813 = vmatpush.msra.mxu0 0.0
      %814 = vmatpush.msra.mxu0 0.0
      %815 = vmatpush.msra.mxu0 0.0
      %816 = vmatpush.msra.mxu0 0.0
      %817 = vmatpush.msra.mxu0 0.0
      %818 = vmatpush.msra.mxu0 0.0
      %819 = vmatpush.msra.mxu0 0.0
      %820 = vmatpush.msra.mxu0 0.0
      %821 = vmatpush.msra.mxu0 0.0
      %822 = vmatpush.msra.mxu0 %v387
      %823 = vmatpush.msra.mxu0 %v386
      %824 = vmatpush.msra.mxu0 %v385
      %825 = vmatpush.msra.mxu0 %v384
      %826 = vmatmul.f32.gmra.mxu0 %v808
      %v827 = vpop.f32.mrf.mxu0
      %v828 = vadd.f32 0.0, %v827
      %829 = vdwg.mxu0
      %v830 = vsel %vm440, %v828, 0.0
      %831 = vadd.xlane.f32.xlu0 %v830
      %v832 = vpop.xlane.xlu0 %831
      %v833 = vmul.f32 %v832, %v474
      %v834 = vsub.f32 %v828, %v833
      %v835 = vmul.f32 %v834, %v834
      %v836 = vsel %vm440, %v835, 0.0
      %837 = vadd.xlane.f32.xlu0 %v836
      %v838 = vpop.xlane.xlu0 %837
      %v839 = vmul.f32 %v838, %v474
      %v840 = vadd.f32 %v839, 1e-05
      %v841 = vrsqrt.pop %v840
      %v842 = vmul.f32 %v841, %v840
      %v843 = vmul.f32 %v842, %v841
      %v844 = vmul.f32 0.5, %v843
      %v845 = vsub.f32 1.5, %v844
      %v846 = vmul.f32 %v841, %v845
      %vm847 = vweird.f32 %v840
      %vm848 = vweird.f32 %v841
      %vm849 = vmor %vm847, %vm848
      %v850 = vsel %vm849, %v841, %v846
      %v851 = vmul.f32 %v834, %v850
      %v853 = vperm.slane %v389, 0
      %v855 = vmul.f32 %v851, %v853
      %v857 = vperm.slane %v391, 0
      %v859 = vadd.f32 %v855, %v857
      %v860 = vxor.u32 %v859, 2147483648
      %v861 = vmul.f32 %v860, 1.442695
      %v862 = vpow.pop %v861
      %v863 = vadd.f32 %v862, 1.0
      %v864 = vrcp.pop %v863
      %v865 = vmul.f32 %v863, %v864
      %v866 = vsub.f32 1.0, %v865
      %v867 = vmul.f32 %v864, %v866
      %v868 = vadd.f32 %v864, %v867
      %vm869 = vweird.f32 %v863
      %vm870 = vweird.f32 %v864
      %vm871 = vmor %vm869, %vm870
      %v872 = vsel %vm871, %v864, %v868
      %v873 = vand.u32 2147483647, %v863
      %vm874 = vcmp.eq.f32.partialorder %v873, 8.507059e+37
      %v875 = vand.u32 %v863, 2147483648
      %v876 = vor.u32 1.1754944e-38, %v875
      %v877 = vsel %vm874, %v876, %v872
      %v878 = vmul.f32 1.0, %v877
      %880 = vrot.lane.b32.xlu0 %v828, 96
      %v881 = vpop.permute.xlu0 %880
      %v883 = vsel %vm440, %v881, 0.0
      %884 = vadd.xlane.f32.xlu0 %v883
      %v885 = vpop.xlane.xlu0 %884
      %v886 = vmul.f32 %v885, %v474
      %v887 = vsub.f32 %v828, %v886
      %v888 = vmul.f32 %v887, %v887
      %890 = vrot.lane.b32.xlu0 %v888, 96
      %v891 = vpop.permute.xlu0 %890
      %v893 = vsel %vm440, %v891, 0.0
      %894 = vadd.xlane.f32.xlu0 %v893
      %v895 = vpop.xlane.xlu0 %894
      %v896 = vmul.f32 %v895, %v474
      %v897 = vadd.f32 %v896, 1e-05
      %v898 = vrsqrt.pop %v897
      %v899 = vmul.f32 %v898, %v897
      %v900 = vmul.f32 %v899, %v898
      %v901 = vmul.f32 0.5, %v900
      %v902 = vsub.f32 1.5, %v901
      %v903 = vmul.f32 %v898, %v902
      %vm904 = vweird.f32 %v897
      %vm905 = vweird.f32 %v898
      %vm906 = vmor %vm904, %vm905
      %v907 = vsel %vm906, %v898, %v903
      %v908 = vmul.f32 %v887, %v907
      %v909 = vmul.f32 %v908, %v853
      %v910 = vadd.f32 %v909, %v857
      %v911 = vxor.u32 %v910, 2147483648
      %v912 = vmul.f32 %v911, 1.442695
      %v913 = vpow.pop %v912
      %v914 = vadd.f32 %v913, 1.0
      %v915 = vrcp.pop %v914
      %v916 = vmul.f32 %v914, %v915
      %v917 = vsub.f32 1.0, %v916
      %v918 = vmul.f32 %v915, %v917
      %v919 = vadd.f32 %v915, %v918
      %vm920 = vweird.f32 %v914
      %vm921 = vweird.f32 %v915
      %vm922 = vmor %vm920, %vm921
      %v923 = vsel %vm922, %v915, %v919
      %v924 = vand.u32 2147483647, %v914
      %vm925 = vcmp.eq.f32.partialorder %v924, 8.507059e+37
      %v926 = vand.u32 %v914, 2147483648
      %v927 = vor.u32 1.1754944e-38, %v926
      %v928 = vsel %vm925, %v927, %v923
      %v929 = vmul.f32 1.0, %v928
      %v931 = vperm.slane %v393, 0
      %932 = vrot.lane.b32.xlu0 %v931, 64
      %v933 = vpop.permute.xlu0 %932
      %v935 = vadd.f32 %v828, %v933
      %937 = vrot.lane.b32.xlu0 %v935, 64
      %v938 = vpop.permute.xlu0 %937
      %v940 = vmul.f32 %v878, %v938
      %v941 = vtanh.pop %v940
      %v942 = vsub.f32 1.0, %v929
      %944 = vrot.lane.b32.xlu0 %v941, 32
      %v945 = vpop.permute.xlu0 %944
      %v947 = vmul.f32 %v942, %v945
      %v948 = vmul.f32 %v929, %v804
      %v949 = vadd.f32 %v947, %v948
      %951 = vrot.lane.b32.xlu0 %v949, 96
      %v952 = vpop.permute.xlu0 %951
      %954 = vst.msk [vmem:[%s361] sm:$0xff] %vm440, %v952
      %s955 = scalar_lea.vmem %s355, 8
      %v956 = vld [vmem:[%s955] sm:$0xff]
      %v958 = vsel %vm396, %v956, 0
      %960 = vmatpush.msra.mxu0 0.0
      %961 = vmatpush.msra.mxu0 0.0
      %962 = vmatpush.msra.mxu0 0.0
      %963 = vmatpush.msra.mxu0 0.0
      %964 = vmatpush.msra.mxu0 0.0
      %965 = vmatpush.msra.mxu0 0.0
      %966 = vmatpush.msra.mxu0 0.0
      %967 = vmatpush.msra.mxu0 0.0
      %968 = vmatpush.msra.mxu0 0.0
      %969 = vmatpush.msra.mxu0 0.0
      %970 = vmatpush.msra.mxu0 0.0
      %971 = vmatpush.msra.mxu0 0.0
      %972 = vmatpush.msra.mxu0 0.0
      %973 = vmatpush.msra.mxu0 0.0
      %974 = vmatpush.msra.mxu0 %v371
      %975 = vmatpush.msra.mxu0 %v369
      %976 = vmatmul.f32.gmra.mxu0 %v958
      %v977 = vpop.f32.mrf.mxu0
      %v978 = vadd.f32 0.0, %v977
      %979 = vdwg.mxu0
      %980 = vmatpush.msra.mxu0 0.0
      %981 = vmatpush.msra.mxu0 0.0
      %982 = vmatpush.msra.mxu0 0.0
      %983 = vmatpush.msra.mxu0 0.0
      %984 = vmatpush.msra.mxu0 0.0
      %985 = vmatpush.msra.mxu0 0.0
      %986 = vmatpush.msra.mxu0 0.0
      %987 = vmatpush.msra.mxu0 0.0
      %988 = vmatpush.msra.mxu0 0.0
      %989 = vmatpush.msra.mxu0 0.0
      %990 = vmatpush.msra.mxu0 0.0
      %991 = vmatpush.msra.mxu0 0.0
      %992 = vmatpush.msra.mxu0 0.0
      %993 = vmatpush.msra.mxu0 0.0
      %994 = vmatpush.msra.mxu0 %v372
      %995 = vmatpush.msra.mxu0 %v370
      %996 = vmatmul.f32.gmra.mxu0 %v958
      %v997 = vpop.f32.mrf.mxu0
      %v998 = vadd.f32 0.0, %v997
      %999 = vdwg.mxu0
      %v1000 = vsel %vm440, %v952, 0
      %1002 = vmatpush.msra.mxu0 0.0
      %1003 = vmatpush.msra.mxu0 0.0
      %1004 = vmatpush.msra.mxu0 0.0
      %1005 = vmatpush.msra.mxu0 0.0
      %1006 = vmatpush.msra.mxu0 0.0
      %1007 = vmatpush.msra.mxu0 0.0
      %1008 = vmatpush.msra.mxu0 0.0
      %1009 = vmatpush.msra.mxu0 0.0
      %1010 = vmatpush.msra.mxu0 0.0
      %1011 = vmatpush.msra.mxu0 0.0
      %1012 = vmatpush.msra.mxu0 0.0
      %1013 = vmatpush.msra.mxu0 0.0
      %1014 = vmatpush.msra.mxu0 %v376
      %1015 = vmatpush.msra.mxu0 %v375
      %1016 = vmatpush.msra.mxu0 %v374
      %1017 = vmatpush.msra.mxu0 %v373
      %1018 = vmatmul.f32.gmra.mxu0 %v1000
      %v1019 = vpop.f32.mrf.mxu0
      %v1020 = vadd.f32 0.0, %v1019
      %1021 = vdwg.mxu0
      %v1022 = vadd.f32 %v978, %v1020
      %v1023 = vsel %vm440, %v1022, 0.0
      %1024 = vadd.xlane.f32.xlu0 %v1023
      %v1025 = vpop.xlane.xlu0 %1024
      %v1026 = vmul.f32 %v1025, %v474
      %v1027 = vsub.f32 %v1022, %v1026
      %v1028 = vmul.f32 %v1027, %v1027
      %v1029 = vsel %vm440, %v1028, 0.0
      %1030 = vadd.xlane.f32.xlu0 %v1029
      %v1031 = vpop.xlane.xlu0 %1030
      %v1032 = vmul.f32 %v1031, %v474
      %v1033 = vadd.f32 %v1032, 1e-05
      %v1034 = vrsqrt.pop %v1033
      %v1035 = vmul.f32 %v1034, %v1033
      %v1036 = vmul.f32 %v1035, %v1034
      %v1037 = vmul.f32 0.5, %v1036
      %v1038 = vsub.f32 1.5, %v1037
      %v1039 = vmul.f32 %v1034, %v1038
      %vm1040 = vweird.f32 %v1033
      %vm1041 = vweird.f32 %v1034
      %vm1042 = vmor %vm1040, %vm1041
      %v1043 = vsel %vm1042, %v1034, %v1039
      %v1044 = vmul.f32 %v1027, %v1043
      %v1045 = vmul.f32 %v1044, %v495
      %v1046 = vadd.f32 %v1045, %v499
      %v1047 = vxor.u32 %v1046, 2147483648
      %v1048 = vmul.f32 %v1047, 1.442695
      %v1049 = vpow.pop %v1048
      %v1050 = vadd.f32 %v1049, 1.0
      %v1051 = vrcp.pop %v1050
      %v1052 = vmul.f32 %v1050, %v1051
      %v1053 = vsub.f32 1.0, %v1052
      %v1054 = vmul.f32 %v1051, %v1053
      %v1055 = vadd.f32 %v1051, %v1054
      %vm1056 = vweird.f32 %v1050
      %vm1057 = vweird.f32 %v1051
      %vm1058 = vmor %vm1056, %vm1057
      %v1059 = vsel %vm1058, %v1051, %v1055
      %v1060 = vand.u32 2147483647, %v1050
      %vm1061 = vcmp.eq.f32.partialorder %v1060, 8.507059e+37
      %v1062 = vand.u32 %v1050, 2147483648
      %v1063 = vor.u32 1.1754944e-38, %v1062
      %v1064 = vsel %vm1061, %v1063, %v1059
      %v1065 = vmul.f32 1.0, %v1064
      %1067 = vrot.lane.b32.xlu0 %v1022, 96
      %v1068 = vpop.permute.xlu0 %1067
      %v1070 = vsel %vm440, %v1068, 0.0
      %1071 = vadd.xlane.f32.xlu0 %v1070
      %v1072 = vpop.xlane.xlu0 %1071
      %v1073 = vmul.f32 %v1072, %v474
      %v1074 = vsub.f32 %v1022, %v1073
      %v1075 = vmul.f32 %v1074, %v1074
      %1077 = vrot.lane.b32.xlu0 %v1075, 96
      %v1078 = vpop.permute.xlu0 %1077
      %v1080 = vsel %vm440, %v1078, 0.0
      %1081 = vadd.xlane.f32.xlu0 %v1080
      %v1082 = vpop.xlane.xlu0 %1081
      %v1083 = vmul.f32 %v1082, %v474
      %v1084 = vadd.f32 %v1083, 1e-05
      %v1085 = vrsqrt.pop %v1084
      %v1086 = vmul.f32 %v1085, %v1084
      %v1087 = vmul.f32 %v1086, %v1085
      %v1088 = vmul.f32 0.5, %v1087
      %v1089 = vsub.f32 1.5, %v1088
      %v1090 = vmul.f32 %v1085, %v1089
      %vm1091 = vweird.f32 %v1084
      %vm1092 = vweird.f32 %v1085
      %vm1093 = vmor %vm1091, %vm1092
      %v1094 = vsel %vm1093, %v1085, %v1090
      %v1095 = vmul.f32 %v1074, %v1094
      %v1096 = vmul.f32 %v1095, %v495
      %v1097 = vadd.f32 %v1096, %v499
      %v1098 = vxor.u32 %v1097, 2147483648
      %v1099 = vmul.f32 %v1098, 1.442695
      %v1100 = vpow.pop %v1099
      %v1101 = vadd.f32 %v1100, 1.0
      %v1102 = vrcp.pop %v1101
      %v1103 = vmul.f32 %v1101, %v1102
      %v1104 = vsub.f32 1.0, %v1103
      %v1105 = vmul.f32 %v1102, %v1104
      %v1106 = vadd.f32 %v1102, %v1105
      %vm1107 = vweird.f32 %v1101
      %vm1108 = vweird.f32 %v1102
      %vm1109 = vmor %vm1107, %vm1108
      %v1110 = vsel %vm1109, %v1102, %v1106
      %v1111 = vand.u32 2147483647, %v1101
      %vm1112 = vcmp.eq.f32.partialorder %v1111, 8.507059e+37
      %v1113 = vand.u32 %v1101, 2147483648
      %v1114 = vor.u32 1.1754944e-38, %v1113
      %v1115 = vsel %vm1112, %v1114, %v1110
      %v1116 = vmul.f32 1.0, %v1115
      %1117 = vrot.lane.b32.xlu0 %v1022, 64
      %v1118 = vpop.permute.xlu0 %1117
      %v1120 = vsel %vm440, %v1118, 0.0
      %1121 = vadd.xlane.f32.xlu0 %v1120
      %v1122 = vpop.xlane.xlu0 %1121
      %v1123 = vmul.f32 %v1122, %v474
      %v1124 = vsub.f32 %v1022, %v1123
      %v1125 = vmul.f32 %v1124, %v1124
      %1127 = vrot.lane.b32.xlu0 %v1125, 64
      %v1128 = vpop.permute.xlu0 %1127
      %v1130 = vsel %vm440, %v1128, 0.0
      %1131 = vadd.xlane.f32.xlu0 %v1130
      %v1132 = vpop.xlane.xlu0 %1131
      %v1133 = vmul.f32 %v1132, %v474
      %v1134 = vadd.f32 %v1133, 1e-05
      %v1135 = vrsqrt.pop %v1134
      %v1136 = vmul.f32 %v1135, %v1134
      %v1137 = vmul.f32 %v1136, %v1135
      %v1138 = vmul.f32 0.5, %v1137
      %v1139 = vsub.f32 1.5, %v1138
      %v1140 = vmul.f32 %v1135, %v1139
      %vm1141 = vweird.f32 %v1134
      %vm1142 = vweird.f32 %v1135
      %vm1143 = vmor %vm1141, %vm1142
      %v1144 = vsel %vm1143, %v1135, %v1140
      %v1145 = vmul.f32 %v1124, %v1144
      %v1146 = vmul.f32 %v1145, %v495
      %v1147 = vadd.f32 %v1146, %v499
      %v1148 = vxor.u32 %v1147, 2147483648
      %v1149 = vmul.f32 %v1148, 1.442695
      %v1150 = vpow.pop %v1149
      %v1151 = vadd.f32 %v1150, 1.0
      %v1152 = vrcp.pop %v1151
      %v1153 = vmul.f32 %v1151, %v1152
      %v1154 = vsub.f32 1.0, %v1153
      %v1155 = vmul.f32 %v1152, %v1154
      %v1156 = vadd.f32 %v1152, %v1155
      %vm1157 = vweird.f32 %v1151
      %vm1158 = vweird.f32 %v1152
      %vm1159 = vmor %vm1157, %vm1158
      %v1160 = vsel %vm1159, %v1152, %v1156
      %v1161 = vand.u32 2147483647, %v1151
      %vm1162 = vcmp.eq.f32.partialorder %v1161, 8.507059e+37
      %v1163 = vand.u32 %v1151, 2147483648
      %v1164 = vor.u32 1.1754944e-38, %v1163
      %v1165 = vsel %vm1162, %v1164, %v1160
      %v1166 = vmul.f32 1.0, %v1165
      %v1167 = vadd.f32 %v1020, %v625
      %1169 = vrot.lane.b32.xlu0 %v1167, 32
      %v1170 = vpop.permute.xlu0 %1169
      %v1172 = vmul.f32 %v1065, %v1170
      %1174 = vrot.lane.b32.xlu0 %v1172, 96
      %v1175 = vpop.permute.xlu0 %1174
      %v1177 = vadd.f32 %v978, %v1175
      %v1178 = vtanh.pop %v1177
      %1180 = vrot.lane.b32.xlu0 %v998, 64
      %v1181 = vpop.permute.xlu0 %1180
      %v1183 = vmul.f32 %v1166, %v1181
      %1185 = vrot.lane.b32.xlu0 %v1183, 32
      %v1186 = vpop.permute.xlu0 %1185
      %v1188 = vadd.f32 %v1178, %v1186
      %v1189 = vsub.f32 1.0, %v1116
      %v1190 = vmul.f32 %v1189, %v949
      %1192 = vrot.lane.b32.xlu0 %v1188, 64
      %v1193 = vpop.permute.xlu0 %1192
      %v1195 = vmul.f32 %v1116, %v1193
      %v1196 = vadd.f32 %v1190, %v1195
      %1198 = vrot.lane.b32.xlu0 %v1196, 96
      %v1199 = vpop.permute.xlu0 %1198
      %v1200 = vsel %vm440, %v1199, 0
      %1202 = vmatpush.msra.mxu0 0.0
      %1203 = vmatpush.msra.mxu0 0.0
      %1204 = vmatpush.msra.mxu0 0.0
      %1205 = vmatpush.msra.mxu0 0.0
      %1206 = vmatpush.msra.mxu0 0.0
      %1207 = vmatpush.msra.mxu0 0.0
      %1208 = vmatpush.msra.mxu0 0.0
      %1209 = vmatpush.msra.mxu0 0.0
      %1210 = vmatpush.msra.mxu0 0.0
      %1211 = vmatpush.msra.mxu0 0.0
      %1212 = vmatpush.msra.mxu0 0.0
      %1213 = vmatpush.msra.mxu0 0.0
      %1214 = vmatpush.msra.mxu0 %v383
      %1215 = vmatpush.msra.mxu0 %v382
      %1216 = vmatpush.msra.mxu0 %v381
      %1217 = vmatpush.msra.mxu0 %v380
      %1218 = vmatmul.f32.gmra.mxu0 %v1200
      %v1219 = vpop.f32.mrf.mxu0
      %v1220 = vadd.f32 0.0, %v1219
      %1221 = vdwg.mxu0
      %v1222 = vsel %vm440, %v1220, 0.0
      %1223 = vadd.xlane.f32.xlu0 %v1222
      %v1224 = vpop.xlane.xlu0 %1223
      %v1225 = vmul.f32 %v1224, %v474
      %v1226 = vsub.f32 %v1220, %v1225
      %v1227 = vmul.f32 %v1226, %v1226
      %v1228 = vsel %vm440, %v1227, 0.0
      %1229 = vadd.xlane.f32.xlu0 %v1228
      %v1230 = vpop.xlane.xlu0 %1229
      %v1231 = vmul.f32 %v1230, %v474
      %v1232 = vadd.f32 %v1231, 1e-05
      %v1233 = vrsqrt.pop %v1232
      %v1234 = vmul.f32 %v1233, %v1232
      %v1235 = vmul.f32 %v1234, %v1233
      %v1236 = vmul.f32 0.5, %v1235
      %v1237 = vsub.f32 1.5, %v1236
      %v1238 = vmul.f32 %v1233, %v1237
      %vm1239 = vweird.f32 %v1232
      %vm1240 = vweird.f32 %v1233
      %vm1241 = vmor %vm1239, %vm1240
      %v1242 = vsel %vm1241, %v1233, %v1238
      %v1243 = vmul.f32 %v1226, %v1242
      %v1244 = vmul.f32 %v1243, %v708
      %v1245 = vadd.f32 %v1244, %v712
      %v1246 = vxor.u32 %v1245, 2147483648
      %v1247 = vmul.f32 %v1246, 1.442695
      %v1248 = vpow.pop %v1247
      %v1249 = vadd.f32 %v1248, 1.0
      %v1250 = vrcp.pop %v1249
      %v1251 = vmul.f32 %v1249, %v1250
      %v1252 = vsub.f32 1.0, %v1251
      %v1253 = vmul.f32 %v1250, %v1252
      %v1254 = vadd.f32 %v1250, %v1253
      %vm1255 = vweird.f32 %v1249
      %vm1256 = vweird.f32 %v1250
      %vm1257 = vmor %vm1255, %vm1256
      %v1258 = vsel %vm1257, %v1250, %v1254
      %v1259 = vand.u32 2147483647, %v1249
      %vm1260 = vcmp.eq.f32.partialorder %v1259, 8.507059e+37
      %v1261 = vand.u32 %v1249, 2147483648
      %v1262 = vor.u32 1.1754944e-38, %v1261
      %v1263 = vsel %vm1260, %v1262, %v1258
      %v1264 = vmul.f32 1.0, %v1263
      %1266 = vrot.lane.b32.xlu0 %v1220, 96
      %v1267 = vpop.permute.xlu0 %1266
      %v1269 = vsel %vm440, %v1267, 0.0
      %1270 = vadd.xlane.f32.xlu0 %v1269
      %v1271 = vpop.xlane.xlu0 %1270
      %v1272 = vmul.f32 %v1271, %v474
      %v1273 = vsub.f32 %v1220, %v1272
      %v1274 = vmul.f32 %v1273, %v1273
      %1276 = vrot.lane.b32.xlu0 %v1274, 96
      %v1277 = vpop.permute.xlu0 %1276
      %v1279 = vsel %vm440, %v1277, 0.0
      %1280 = vadd.xlane.f32.xlu0 %v1279
      %v1281 = vpop.xlane.xlu0 %1280
      %v1282 = vmul.f32 %v1281, %v474
      %v1283 = vadd.f32 %v1282, 1e-05
      %v1284 = vrsqrt.pop %v1283
      %v1285 = vmul.f32 %v1284, %v1283
      %v1286 = vmul.f32 %v1285, %v1284
      %v1287 = vmul.f32 0.5, %v1286
      %v1288 = vsub.f32 1.5, %v1287
      %v1289 = vmul.f32 %v1284, %v1288
      %vm1290 = vweird.f32 %v1283
      %vm1291 = vweird.f32 %v1284
      %vm1292 = vmor %vm1290, %vm1291
      %v1293 = vsel %vm1292, %v1284, %v1289
      %v1294 = vmul.f32 %v1273, %v1293
      %v1295 = vmul.f32 %v1294, %v708
      %v1296 = vadd.f32 %v1295, %v712
      %v1297 = vxor.u32 %v1296, 2147483648
      %v1298 = vmul.f32 %v1297, 1.442695
      %v1299 = vpow.pop %v1298
      %v1300 = vadd.f32 %v1299, 1.0
      %v1301 = vrcp.pop %v1300
      %v1302 = vmul.f32 %v1300, %v1301
      %v1303 = vsub.f32 1.0, %v1302
      %v1304 = vmul.f32 %v1301, %v1303
      %v1305 = vadd.f32 %v1301, %v1304
      %vm1306 = vweird.f32 %v1300
      %vm1307 = vweird.f32 %v1301
      %vm1308 = vmor %vm1306, %vm1307
      %v1309 = vsel %vm1308, %v1301, %v1305
      %v1310 = vand.u32 2147483647, %v1300
      %vm1311 = vcmp.eq.f32.partialorder %v1310, 8.507059e+37
      %v1312 = vand.u32 %v1300, 2147483648
      %v1313 = vor.u32 1.1754944e-38, %v1312
      %v1314 = vsel %vm1311, %v1313, %v1309
      %v1315 = vmul.f32 1.0, %v1314
      %v1316 = vadd.f32 %v1220, %v788
      %1318 = vrot.lane.b32.xlu0 %v1316, 64
      %v1319 = vpop.permute.xlu0 %1318
      %v1321 = vmul.f32 %v1264, %v1319
      %v1322 = vtanh.pop %v1321
      %v1323 = vsub.f32 1.0, %v1315
      %1325 = vrot.lane.b32.xlu0 %v1322, 32
      %v1326 = vpop.permute.xlu0 %1325
      %v1328 = vmul.f32 %v1323, %v1326
      %v1329 = vmul.f32 %v1315, %v1196
      %v1330 = vadd.f32 %v1328, %v1329
      %1332 = vrot.lane.b32.xlu0 %v1330, 96
      %v1333 = vpop.permute.xlu0 %1332
      %v1334 = vsel %vm440, %v1333, 0
      %1336 = vmatpush.msra.mxu0 0.0
      %1337 = vmatpush.msra.mxu0 0.0
      %1338 = vmatpush.msra.mxu0 0.0
      %1339 = vmatpush.msra.mxu0 0.0
      %1340 = vmatpush.msra.mxu0 0.0
      %1341 = vmatpush.msra.mxu0 0.0
      %1342 = vmatpush.msra.mxu0 0.0
      %1343 = vmatpush.msra.mxu0 0.0
      %1344 = vmatpush.msra.mxu0 0.0
      %1345 = vmatpush.msra.mxu0 0.0
      %1346 = vmatpush.msra.mxu0 0.0
      %1347 = vmatpush.msra.mxu0 0.0
      %1348 = vmatpush.msra.mxu0 %v387
      %1349 = vmatpush.msra.mxu0 %v386
      %1350 = vmatpush.msra.mxu0 %v385
      %1351 = vmatpush.msra.mxu0 %v384
      %1352 = vmatmul.f32.gmra.mxu0 %v1334
      %v1353 = vpop.f32.mrf.mxu0
      %v1354 = vadd.f32 0.0, %v1353
      %1355 = vdwg.mxu0
      %v1356 = vsel %vm440, %v1354, 0.0
      %1357 = vadd.xlane.f32.xlu0 %v1356
      %v1358 = vpop.xlane.xlu0 %1357
      %v1359 = vmul.f32 %v1358, %v474
      %v1360 = vsub.f32 %v1354, %v1359
      %v1361 = vmul.f32 %v1360, %v1360
      %v1362 = vsel %vm440, %v1361, 0.0
      %1363 = vadd.xlane.f32.xlu0 %v1362
      %v1364 = vpop.xlane.xlu0 %1363
      %v1365 = vmul.f32 %v1364, %v474
      %v1366 = vadd.f32 %v1365, 1e-05
      %v1367 = vrsqrt.pop %v1366
      %v1368 = vmul.f32 %v1367, %v1366
      %v1369 = vmul.f32 %v1368, %v1367
      %v1370 = vmul.f32 0.5, %v1369
      %v1371 = vsub.f32 1.5, %v1370
      %v1372 = vmul.f32 %v1367, %v1371
      %vm1373 = vweird.f32 %v1366
      %vm1374 = vweird.f32 %v1367
      %vm1375 = vmor %vm1373, %vm1374
      %v1376 = vsel %vm1375, %v1367, %v1372
      %v1377 = vmul.f32 %v1360, %v1376
      %v1378 = vmul.f32 %v1377, %v853
      %v1379 = vadd.f32 %v1378, %v857
      %v1380 = vxor.u32 %v1379, 2147483648
      %v1381 = vmul.f32 %v1380, 1.442695
      %v1382 = vpow.pop %v1381
      %v1383 = vadd.f32 %v1382, 1.0
      %v1384 = vrcp.pop %v1383
      %v1385 = vmul.f32 %v1383, %v1384
      %v1386 = vsub.f32 1.0, %v1385
      %v1387 = vmul.f32 %v1384, %v1386
      %v1388 = vadd.f32 %v1384, %v1387
      %vm1389 = vweird.f32 %v1383
      %vm1390 = vweird.f32 %v1384
      %vm1391 = vmor %vm1389, %vm1390
      %v1392 = vsel %vm1391, %v1384, %v1388
      %v1393 = vand.u32 2147483647, %v1383
      %vm1394 = vcmp.eq.f32.partialorder %v1393, 8.507059e+37
      %v1395 = vand.u32 %v1383, 2147483648
      %v1396 = vor.u32 1.1754944e-38, %v1395
      %v1397 = vsel %vm1394, %v1396, %v1392
      %v1398 = vmul.f32 1.0, %v1397
      %1400 = vrot.lane.b32.xlu0 %v1354, 96
      %v1401 = vpop.permute.xlu0 %1400
      %v1403 = vsel %vm440, %v1401, 0.0
      %1404 = vadd.xlane.f32.xlu0 %v1403
      %v1405 = vpop.xlane.xlu0 %1404
      %v1406 = vmul.f32 %v1405, %v474
      %v1407 = vsub.f32 %v1354, %v1406
      %v1408 = vmul.f32 %v1407, %v1407
      %1410 = vrot.lane.b32.xlu0 %v1408, 96
      %v1411 = vpop.permute.xlu0 %1410
      %v1413 = vsel %vm440, %v1411, 0.0
      %1414 = vadd.xlane.f32.xlu0 %v1413
      %v1415 = vpop.xlane.xlu0 %1414
      %v1416 = vmul.f32 %v1415, %v474
      %v1417 = vadd.f32 %v1416, 1e-05
      %v1418 = vrsqrt.pop %v1417
      %v1419 = vmul.f32 %v1418, %v1417
      %v1420 = vmul.f32 %v1419, %v1418
      %v1421 = vmul.f32 0.5, %v1420
      %v1422 = vsub.f32 1.5, %v1421
      %v1423 = vmul.f32 %v1418, %v1422
      %vm1424 = vweird.f32 %v1417
      %vm1425 = vweird.f32 %v1418
      %vm1426 = vmor %vm1424, %vm1425
      %v1427 = vsel %vm1426, %v1418, %v1423
      %v1428 = vmul.f32 %v1407, %v1427
      %v1429 = vmul.f32 %v1428, %v853
      %v1430 = vadd.f32 %v1429, %v857
      %v1431 = vxor.u32 %v1430, 2147483648
      %v1432 = vmul.f32 %v1431, 1.442695
      %v1433 = vpow.pop %v1432
      %v1434 = vadd.f32 %v1433, 1.0
      %v1435 = vrcp.pop %v1434
      %v1436 = vmul.f32 %v1434, %v1435
      %v1437 = vsub.f32 1.0, %v1436
      %v1438 = vmul.f32 %v1435, %v1437
      %v1439 = vadd.f32 %v1435, %v1438
      %vm1440 = vweird.f32 %v1434
      %vm1441 = vweird.f32 %v1435
      %vm1442 = vmor %vm1440, %vm1441
      %v1443 = vsel %vm1442, %v1435, %v1439
      %v1444 = vand.u32 2147483647, %v1434
      %vm1445 = vcmp.eq.f32.partialorder %v1444, 8.507059e+37
      %v1446 = vand.u32 %v1434, 2147483648
      %v1447 = vor.u32 1.1754944e-38, %v1446
      %v1448 = vsel %vm1445, %v1447, %v1443
      %v1449 = vmul.f32 1.0, %v1448
      %v1450 = vadd.f32 %v1354, %v933
      %1452 = vrot.lane.b32.xlu0 %v1450, 64
      %v1453 = vpop.permute.xlu0 %1452
      %v1455 = vmul.f32 %v1398, %v1453
      %v1456 = vtanh.pop %v1455
      %v1457 = vsub.f32 1.0, %v1449
      %1459 = vrot.lane.b32.xlu0 %v1456, 32
      %v1460 = vpop.permute.xlu0 %1459
      %v1462 = vmul.f32 %v1457, %v1460
      %v1463 = vmul.f32 %v1449, %v1330
      %v1464 = vadd.f32 %v1462, %v1463
      %1466 = vrot.lane.b32.xlu0 %v1464, 96
      %v1467 = vpop.permute.xlu0 %1466
      %s1469 = scalar_lea.vmem %s361, 8
      %1470 = vst.msk [vmem:[%s1469] sm:$0xff] %vm440, %v1467
      %s1471 = scalar_lea.vmem %s355, 16
      %v1472 = vld [vmem:[%s1471] sm:$0xff]
      %v1474 = vsel %vm396, %v1472, 0
      %1476 = vmatpush.msra.mxu0 0.0
      %1477 = vmatpush.msra.mxu0 0.0
      %1478 = vmatpush.msra.mxu0 0.0
      %1479 = vmatpush.msra.mxu0 0.0
      %1480 = vmatpush.msra.mxu0 0.0
      %1481 = vmatpush.msra.mxu0 0.0
      %1482 = vmatpush.msra.mxu0 0.0
      %1483 = vmatpush.msra.mxu0 0.0
      %1484 = vmatpush.msra.mxu0 0.0
      %1485 = vmatpush.msra.mxu0 0.0
      %1486 = vmatpush.msra.mxu0 0.0
      %1487 = vmatpush.msra.mxu0 0.0
      %1488 = vmatpush.msra.mxu0 0.0
      %1489 = vmatpush.msra.mxu0 0.0
      %1490 = vmatpush.msra.mxu0 %v371
      %1491 = vmatpush.msra.mxu0 %v369
      %1492 = vmatmul.f32.gmra.mxu0 %v1474
      %v1493 = vpop.f32.mrf.mxu0
      %v1494 = vadd.f32 0.0, %v1493
      %1495 = vdwg.mxu0
      %1496 = vmatpush.msra.mxu0 0.0
      %1497 = vmatpush.msra.mxu0 0.0
      %1498 = vmatpush.msra.mxu0 0.0
      %1499 = vmatpush.msra.mxu0 0.0
      %1500 = vmatpush.msra.mxu0 0.0
      %1501 = vmatpush.msra.mxu0 0.0
      %1502 = vmatpush.msra.mxu0 0.0
      %1503 = vmatpush.msra.mxu0 0.0
      %1504 = vmatpush.msra.mxu0 0.0
      %1505 = vmatpush.msra.mxu0 0.0
      %1506 = vmatpush.msra.mxu0 0.0
      %1507 = vmatpush.msra.mxu0 0.0
      %1508 = vmatpush.msra.mxu0 0.0
      %1509 = vmatpush.msra.mxu0 0.0
      %1510 = vmatpush.msra.mxu0 %v372
      %1511 = vmatpush.msra.mxu0 %v370
      %1512 = vmatmul.f32.gmra.mxu0 %v1474
      %v1513 = vpop.f32.mrf.mxu0
      %v1514 = vadd.f32 0.0, %v1513
      %1515 = vdwg.mxu0
      %v1516 = vsel %vm440, %v1467, 0
      %1518 = vmatpush.msra.mxu0 0.0
      %1519 = vmatpush.msra.mxu0 0.0
      %1520 = vmatpush.msra.mxu0 0.0
      %1521 = vmatpush.msra.mxu0 0.0
      %1522 = vmatpush.msra.mxu0 0.0
      %1523 = vmatpush.msra.mxu0 0.0
      %1524 = vmatpush.msra.mxu0 0.0
      %1525 = vmatpush.msra.mxu0 0.0
      %1526 = vmatpush.msra.mxu0 0.0
      %1527 = vmatpush.msra.mxu0 0.0
      %1528 = vmatpush.msra.mxu0 0.0
      %1529 = vmatpush.msra.mxu0 0.0
      %1530 = vmatpush.msra.mxu0 %v376
      %1531 = vmatpush.msra.mxu0 %v375
      %1532 = vmatpush.msra.mxu0 %v374
      %1533 = vmatpush.msra.mxu0 %v373
      %1534 = vmatmul.f32.gmra.mxu0 %v1516
      %v1535 = vpop.f32.mrf.mxu0
      %v1536 = vadd.f32 0.0, %v1535
      %1537 = vdwg.mxu0
      %v1538 = vadd.f32 %v1494, %v1536
      %v1539 = vsel %vm440, %v1538, 0.0
      %1540 = vadd.xlane.f32.xlu0 %v1539
      %v1541 = vpop.xlane.xlu0 %1540
      %v1542 = vmul.f32 %v1541, %v474
      %v1543 = vsub.f32 %v1538, %v1542
      %v1544 = vmul.f32 %v1543, %v1543
      %v1545 = vsel %vm440, %v1544, 0.0
      %1546 = vadd.xlane.f32.xlu0 %v1545
      %v1547 = vpop.xlane.xlu0 %1546
      %v1548 = vmul.f32 %v1547, %v474
      %v1549 = vadd.f32 %v1548, 1e-05
      %v1550 = vrsqrt.pop %v1549
      %v1551 = vmul.f32 %v1550, %v1549
      %v1552 = vmul.f32 %v1551, %v1550
      %v1553 = vmul.f32 0.5, %v1552
      %v1554 = vsub.f32 1.5, %v1553
      %v1555 = vmul.f32 %v1550, %v1554
      %vm1556 = vweird.f32 %v1549
      %vm1557 = vweird.f32 %v1550
      %vm1558 = vmor %vm1556, %vm1557
      %v1559 = vsel %vm1558, %v1550, %v1555
      %v1560 = vmul.f32 %v1543, %v1559
      %v1561 = vmul.f32 %v1560, %v495
      %v1562 = vadd.f32 %v1561, %v499
      %v1563 = vxor.u32 %v1562, 2147483648
      %v1564 = vmul.f32 %v1563, 1.442695
      %v1565 = vpow.pop %v1564
      %v1566 = vadd.f32 %v1565, 1.0
      %v1567 = vrcp.pop %v1566
      %v1568 = vmul.f32 %v1566, %v1567
      %v1569 = vsub.f32 1.0, %v1568
      %v1570 = vmul.f32 %v1567, %v1569
      %v1571 = vadd.f32 %v1567, %v1570
      %vm1572 = vweird.f32 %v1566
      %vm1573 = vweird.f32 %v1567
      %vm1574 = vmor %vm1572, %vm1573
      %v1575 = vsel %vm1574, %v1567, %v1571
      %v1576 = vand.u32 2147483647, %v1566
      %vm1577 = vcmp.eq.f32.partialorder %v1576, 8.507059e+37
      %v1578 = vand.u32 %v1566, 2147483648
      %v1579 = vor.u32 1.1754944e-38, %v1578
      %v1580 = vsel %vm1577, %v1579, %v1575
      %v1581 = vmul.f32 1.0, %v1580
      %1583 = vrot.lane.b32.xlu0 %v1538, 96
      %v1584 = vpop.permute.xlu0 %1583
      %v1586 = vsel %vm440, %v1584, 0.0
      %1587 = vadd.xlane.f32.xlu0 %v1586
      %v1588 = vpop.xlane.xlu0 %1587
      %v1589 = vmul.f32 %v1588, %v474
      %v1590 = vsub.f32 %v1538, %v1589
      %v1591 = vmul.f32 %v1590, %v1590
      %1593 = vrot.lane.b32.xlu0 %v1591, 96
      %v1594 = vpop.permute.xlu0 %1593
      %v1596 = vsel %vm440, %v1594, 0.0
      %1597 = vadd.xlane.f32.xlu0 %v1596
      %v1598 = vpop.xlane.xlu0 %1597
      %v1599 = vmul.f32 %v1598, %v474
      %v1600 = vadd.f32 %v1599, 1e-05
      %v1601 = vrsqrt.pop %v1600
      %v1602 = vmul.f32 %v1601, %v1600
      %v1603 = vmul.f32 %v1602, %v1601
      %v1604 = vmul.f32 0.5, %v1603
      %v1605 = vsub.f32 1.5, %v1604
      %v1606 = vmul.f32 %v1601, %v1605
      %vm1607 = vweird.f32 %v1600
      %vm1608 = vweird.f32 %v1601
      %vm1609 = vmor %vm1607, %vm1608
      %v1610 = vsel %vm1609, %v1601, %v1606
      %v1611 = vmul.f32 %v1590, %v1610
      %v1612 = vmul.f32 %v1611, %v495
      %v1613 = vadd.f32 %v1612, %v499
      %v1614 = vxor.u32 %v1613, 2147483648
      %v1615 = vmul.f32 %v1614, 1.442695
      %v1616 = vpow.pop %v1615
      %v1617 = vadd.f32 %v1616, 1.0
      %v1618 = vrcp.pop %v1617
      %v1619 = vmul.f32 %v1617, %v1618
      %v1620 = vsub.f32 1.0, %v1619
      %v1621 = vmul.f32 %v1618, %v1620
      %v1622 = vadd.f32 %v1618, %v1621
      %vm1623 = vweird.f32 %v1617
      %vm1624 = vweird.f32 %v1618
      %vm1625 = vmor %vm1623, %vm1624
      %v1626 = vsel %vm1625, %v1618, %v1622
      %v1627 = vand.u32 2147483647, %v1617
      %vm1628 = vcmp.eq.f32.partialorder %v1627, 8.507059e+37
      %v1629 = vand.u32 %v1617, 2147483648
      %v1630 = vor.u32 1.1754944e-38, %v1629
      %v1631 = vsel %vm1628, %v1630, %v1626
      %v1632 = vmul.f32 1.0, %v1631
      %1633 = vrot.lane.b32.xlu0 %v1538, 64
      %v1634 = vpop.permute.xlu0 %1633
      %v1636 = vsel %vm440, %v1634, 0.0
      %1637 = vadd.xlane.f32.xlu0 %v1636
      %v1638 = vpop.xlane.xlu0 %1637
      %v1639 = vmul.f32 %v1638, %v474
      %v1640 = vsub.f32 %v1538, %v1639
      %v1641 = vmul.f32 %v1640, %v1640
      %1643 = vrot.lane.b32.xlu0 %v1641, 64
      %v1644 = vpop.permute.xlu0 %1643
      %v1646 = vsel %vm440, %v1644, 0.0
      %1647 = vadd.xlane.f32.xlu0 %v1646
      %v1648 = vpop.xlane.xlu0 %1647
      %v1649 = vmul.f32 %v1648, %v474
      %v1650 = vadd.f32 %v1649, 1e-05
      %v1651 = vrsqrt.pop %v1650
      %v1652 = vmul.f32 %v1651, %v1650
      %v1653 = vmul.f32 %v1652, %v1651
      %v1654 = vmul.f32 0.5, %v1653
      %v1655 = vsub.f32 1.5, %v1654
      %v1656 = vmul.f32 %v1651, %v1655
      %vm1657 = vweird.f32 %v1650
      %vm1658 = vweird.f32 %v1651
      %vm1659 = vmor %vm1657, %vm1658
      %v1660 = vsel %vm1659, %v1651, %v1656
      %v1661 = vmul.f32 %v1640, %v1660
      %v1662 = vmul.f32 %v1661, %v495
      %v1663 = vadd.f32 %v1662, %v499
      %v1664 = vxor.u32 %v1663, 2147483648
      %v1665 = vmul.f32 %v1664, 1.442695
      %v1666 = vpow.pop %v1665
      %v1667 = vadd.f32 %v1666, 1.0
      %v1668 = vrcp.pop %v1667
      %v1669 = vmul.f32 %v1667, %v1668
      %v1670 = vsub.f32 1.0, %v1669
      %v1671 = vmul.f32 %v1668, %v1670
      %v1672 = vadd.f32 %v1668, %v1671
      %vm1673 = vweird.f32 %v1667
      %vm1674 = vweird.f32 %v1668
      %vm1675 = vmor %vm1673, %vm1674
      %v1676 = vsel %vm1675, %v1668, %v1672
      %v1677 = vand.u32 2147483647, %v1667
      %vm1678 = vcmp.eq.f32.partialorder %v1677, 8.507059e+37
      %v1679 = vand.u32 %v1667, 2147483648
      %v1680 = vor.u32 1.1754944e-38, %v1679
      %v1681 = vsel %vm1678, %v1680, %v1676
      %v1682 = vmul.f32 1.0, %v1681
      %v1683 = vadd.f32 %v1536, %v625
      %1685 = vrot.lane.b32.xlu0 %v1683, 32
      %v1686 = vpop.permute.xlu0 %1685
      %v1688 = vmul.f32 %v1581, %v1686
      %1690 = vrot.lane.b32.xlu0 %v1688, 96
      %v1691 = vpop.permute.xlu0 %1690
      %v1693 = vadd.f32 %v1494, %v1691
      %v1694 = vtanh.pop %v1693
      %1696 = vrot.lane.b32.xlu0 %v1514, 64
      %v1697 = vpop.permute.xlu0 %1696
      %v1699 = vmul.f32 %v1682, %v1697
      %1701 = vrot.lane.b32.xlu0 %v1699, 32
      %v1702 = vpop.permute.xlu0 %1701
      %v1704 = vadd.f32 %v1694, %v1702
      %v1705 = vsub.f32 1.0, %v1632
      %v1706 = vmul.f32 %v1705, %v1464
      %1708 = vrot.lane.b32.xlu0 %v1704, 64
      %v1709 = vpop.permute.xlu0 %1708
      %v1711 = vmul.f32 %v1632, %v1709
      %v1712 = vadd.f32 %v1706, %v1711
      %1714 = vrot.lane.b32.xlu0 %v1712, 96
      %v1715 = vpop.permute.xlu0 %1714
      %v1716 = vsel %vm440, %v1715, 0
      %1718 = vmatpush.msra.mxu0 0.0
      %1719 = vmatpush.msra.mxu0 0.0
      %1720 = vmatpush.msra.mxu0 0.0
      %1721 = vmatpush.msra.mxu0 0.0
      %1722 = vmatpush.msra.mxu0 0.0
      %1723 = vmatpush.msra.mxu0 0.0
      %1724 = vmatpush.msra.mxu0 0.0
      %1725 = vmatpush.msra.mxu0 0.0
      %1726 = vmatpush.msra.mxu0 0.0
      %1727 = vmatpush.msra.mxu0 0.0
      %1728 = vmatpush.msra.mxu0 0.0
      %1729 = vmatpush.msra.mxu0 0.0
      %1730 = vmatpush.msra.mxu0 %v383
      %1731 = vmatpush.msra.mxu0 %v382
      %1732 = vmatpush.msra.mxu0 %v381
      %1733 = vmatpush.msra.mxu0 %v380
      %1734 = vmatmul.f32.gmra.mxu0 %v1716
      %v1735 = vpop.f32.mrf.mxu0
      %v1736 = vadd.f32 0.0, %v1735
      %1737 = vdwg.mxu0
      %v1738 = vsel %vm440, %v1736, 0.0
      %1739 = vadd.xlane.f32.xlu0 %v1738
      %v1740 = vpop.xlane.xlu0 %1739
      %v1741 = vmul.f32 %v1740, %v474
      %v1742 = vsub.f32 %v1736, %v1741
      %v1743 = vmul.f32 %v1742, %v1742
      %v1744 = vsel %vm440, %v1743, 0.0
      %1745 = vadd.xlane.f32.xlu0 %v1744
      %v1746 = vpop.xlane.xlu0 %1745
      %v1747 = vmul.f32 %v1746, %v474
      %v1748 = vadd.f32 %v1747, 1e-05
      %v1749 = vrsqrt.pop %v1748
      %v1750 = vmul.f32 %v1749, %v1748
      %v1751 = vmul.f32 %v1750, %v1749
      %v1752 = vmul.f32 0.5, %v1751
      %v1753 = vsub.f32 1.5, %v1752
      %v1754 = vmul.f32 %v1749, %v1753
      %vm1755 = vweird.f32 %v1748
      %vm1756 = vweird.f32 %v1749
      %vm1757 = vmor %vm1755, %vm1756
      %v1758 = vsel %vm1757, %v1749, %v1754
      %v1759 = vmul.f32 %v1742, %v1758
      %v1760 = vmul.f32 %v1759, %v708
      %v1761 = vadd.f32 %v1760, %v712
      %v1762 = vxor.u32 %v1761, 2147483648
      %v1763 = vmul.f32 %v1762, 1.442695
      %v1764 = vpow.pop %v1763
      %v1765 = vadd.f32 %v1764, 1.0
      %v1766 = vrcp.pop %v1765
      %v1767 = vmul.f32 %v1765, %v1766
      %v1768 = vsub.f32 1.0, %v1767
      %v1769 = vmul.f32 %v1766, %v1768
      %v1770 = vadd.f32 %v1766, %v1769
      %vm1771 = vweird.f32 %v1765
      %vm1772 = vweird.f32 %v1766
      %vm1773 = vmor %vm1771, %vm1772
      %v1774 = vsel %vm1773, %v1766, %v1770
      %v1775 = vand.u32 2147483647, %v1765
      %vm1776 = vcmp.eq.f32.partialorder %v1775, 8.507059e+37
      %v1777 = vand.u32 %v1765, 2147483648
      %v1778 = vor.u32 1.1754944e-38, %v1777
      %v1779 = vsel %vm1776, %v1778, %v1774
      %v1780 = vmul.f32 1.0, %v1779
      %1782 = vrot.lane.b32.xlu0 %v1736, 96
      %v1783 = vpop.permute.xlu0 %1782
      %v1785 = vsel %vm440, %v1783, 0.0
      %1786 = vadd.xlane.f32.xlu0 %v1785
      %v1787 = vpop.xlane.xlu0 %1786
      %v1788 = vmul.f32 %v1787, %v474
      %v1789 = vsub.f32 %v1736, %v1788
      %v1790 = vmul.f32 %v1789, %v1789
      %1792 = vrot.lane.b32.xlu0 %v1790, 96
      %v1793 = vpop.permute.xlu0 %1792
      %v1795 = vsel %vm440, %v1793, 0.0
      %1796 = vadd.xlane.f32.xlu0 %v1795
      %v1797 = vpop.xlane.xlu0 %1796
      %v1798 = vmul.f32 %v1797, %v474
      %v1799 = vadd.f32 %v1798, 1e-05
      %v1800 = vrsqrt.pop %v1799
      %v1801 = vmul.f32 %v1800, %v1799
      %v1802 = vmul.f32 %v1801, %v1800
      %v1803 = vmul.f32 0.5, %v1802
      %v1804 = vsub.f32 1.5, %v1803
      %v1805 = vmul.f32 %v1800, %v1804
      %vm1806 = vweird.f32 %v1799
      %vm1807 = vweird.f32 %v1800
      %vm1808 = vmor %vm1806, %vm1807
      %v1809 = vsel %vm1808, %v1800, %v1805
      %v1810 = vmul.f32 %v1789, %v1809
      %v1811 = vmul.f32 %v1810, %v708
      %v1812 = vadd.f32 %v1811, %v712
      %v1813 = vxor.u32 %v1812, 2147483648
      %v1814 = vmul.f32 %v1813, 1.442695
      %v1815 = vpow.pop %v1814
      %v1816 = vadd.f32 %v1815, 1.0
      %v1817 = vrcp.pop %v1816
      %v1818 = vmul.f32 %v1816, %v1817
      %v1819 = vsub.f32 1.0, %v1818
      %v1820 = vmul.f32 %v1817, %v1819
      %v1821 = vadd.f32 %v1817, %v1820
      %vm1822 = vweird.f32 %v1816
      %vm1823 = vweird.f32 %v1817
      %vm1824 = vmor %vm1822, %vm1823
      %v1825 = vsel %vm1824, %v1817, %v1821
      %v1826 = vand.u32 2147483647, %v1816
      %vm1827 = vcmp.eq.f32.partialorder %v1826, 8.507059e+37
      %v1828 = vand.u32 %v1816, 2147483648
      %v1829 = vor.u32 1.1754944e-38, %v1828
      %v1830 = vsel %vm1827, %v1829, %v1825
      %v1831 = vmul.f32 1.0, %v1830
      %v1832 = vadd.f32 %v1736, %v788
      %1834 = vrot.lane.b32.xlu0 %v1832, 64
      %v1835 = vpop.permute.xlu0 %1834
      %v1837 = vmul.f32 %v1780, %v1835
      %v1838 = vtanh.pop %v1837
      %v1839 = vsub.f32 1.0, %v1831
      %1841 = vrot.lane.b32.xlu0 %v1838, 32
      %v1842 = vpop.permute.xlu0 %1841
      %v1844 = vmul.f32 %v1839, %v1842
      %v1845 = vmul.f32 %v1831, %v1712
      %v1846 = vadd.f32 %v1844, %v1845
      %1848 = vrot.lane.b32.xlu0 %v1846, 96
      %v1849 = vpop.permute.xlu0 %1848
      %v1850 = vsel %vm440, %v1849, 0
      %1852 = vmatpush.msra.mxu0 0.0
      %1853 = vmatpush.msra.mxu0 0.0
      %1854 = vmatpush.msra.mxu0 0.0
      %1855 = vmatpush.msra.mxu0 0.0
      %1856 = vmatpush.msra.mxu0 0.0
      %1857 = vmatpush.msra.mxu0 0.0
      %1858 = vmatpush.msra.mxu0 0.0
      %1859 = vmatpush.msra.mxu0 0.0
      %1860 = vmatpush.msra.mxu0 0.0
      %1861 = vmatpush.msra.mxu0 0.0
      %1862 = vmatpush.msra.mxu0 0.0
      %1863 = vmatpush.msra.mxu0 0.0
      %1864 = vmatpush.msra.mxu0 %v387
      %1865 = vmatpush.msra.mxu0 %v386
      %1866 = vmatpush.msra.mxu0 %v385
      %1867 = vmatpush.msra.mxu0 %v384
      %1868 = vmatmul.f32.gmra.mxu0 %v1850
      %v1869 = vpop.f32.mrf.mxu0
      %v1870 = vadd.f32 0.0, %v1869
      %1871 = vdwg.mxu0
      %v1872 = vsel %vm440, %v1870, 0.0
      %1873 = vadd.xlane.f32.xlu0 %v1872
      %v1874 = vpop.xlane.xlu0 %1873
      %v1875 = vmul.f32 %v1874, %v474
      %v1876 = vsub.f32 %v1870, %v1875
      %v1877 = vmul.f32 %v1876, %v1876
      %v1878 = vsel %vm440, %v1877, 0.0
      %1879 = vadd.xlane.f32.xlu0 %v1878
      %v1880 = vpop.xlane.xlu0 %1879
      %v1881 = vmul.f32 %v1880, %v474
      %v1882 = vadd.f32 %v1881, 1e-05
      %v1883 = vrsqrt.pop %v1882
      %v1884 = vmul.f32 %v1883, %v1882
      %v1885 = vmul.f32 %v1884, %v1883
      %v1886 = vmul.f32 0.5, %v1885
      %v1887 = vsub.f32 1.5, %v1886
      %v1888 = vmul.f32 %v1883, %v1887
      %vm1889 = vweird.f32 %v1882
      %vm1890 = vweird.f32 %v1883
      %vm1891 = vmor %vm1889, %vm1890
      %v1892 = vsel %vm1891, %v1883, %v1888
      %v1893 = vmul.f32 %v1876, %v1892
      %v1894 = vmul.f32 %v1893, %v853
      %v1895 = vadd.f32 %v1894, %v857
      %v1896 = vxor.u32 %v1895, 2147483648
      %v1897 = vmul.f32 %v1896, 1.442695
      %v1898 = vpow.pop %v1897
      %v1899 = vadd.f32 %v1898, 1.0
      %v1900 = vrcp.pop %v1899
      %v1901 = vmul.f32 %v1899, %v1900
      %v1902 = vsub.f32 1.0, %v1901
      %v1903 = vmul.f32 %v1900, %v1902
      %v1904 = vadd.f32 %v1900, %v1903
      %vm1905 = vweird.f32 %v1899
      %vm1906 = vweird.f32 %v1900
      %vm1907 = vmor %vm1905, %vm1906
      %v1908 = vsel %vm1907, %v1900, %v1904
      %v1909 = vand.u32 2147483647, %v1899
      %vm1910 = vcmp.eq.f32.partialorder %v1909, 8.507059e+37
      %v1911 = vand.u32 %v1899, 2147483648
      %v1912 = vor.u32 1.1754944e-38, %v1911
      %v1913 = vsel %vm1910, %v1912, %v1908
      %v1914 = vmul.f32 1.0, %v1913
      %1916 = vrot.lane.b32.xlu0 %v1870, 96
      %v1917 = vpop.permute.xlu0 %1916
      %v1919 = vsel %vm440, %v1917, 0.0
      %1920 = vadd.xlane.f32.xlu0 %v1919
      %v1921 = vpop.xlane.xlu0 %1920
      %v1922 = vmul.f32 %v1921, %v474
      %v1923 = vsub.f32 %v1870, %v1922
      %v1924 = vmul.f32 %v1923, %v1923
      %1926 = vrot.lane.b32.xlu0 %v1924, 96
      %v1927 = vpop.permute.xlu0 %1926
      %v1929 = vsel %vm440, %v1927, 0.0
      %1930 = vadd.xlane.f32.xlu0 %v1929
      %v1931 = vpop.xlane.xlu0 %1930
      %v1932 = vmul.f32 %v1931, %v474
      %v1933 = vadd.f32 %v1932, 1e-05
      %v1934 = vrsqrt.pop %v1933
      %v1935 = vmul.f32 %v1934, %v1933
      %v1936 = vmul.f32 %v1935, %v1934
      %v1937 = vmul.f32 0.5, %v1936
      %v1938 = vsub.f32 1.5, %v1937
      %v1939 = vmul.f32 %v1934, %v1938
      %vm1940 = vweird.f32 %v1933
      %vm1941 = vweird.f32 %v1934
      %vm1942 = vmor %vm1940, %vm1941
      %v1943 = vsel %vm1942, %v1934, %v1939
      %v1944 = vmul.f32 %v1923, %v1943
      %v1945 = vmul.f32 %v1944, %v853
      %v1946 = vadd.f32 %v1945, %v857
      %v1947 = vxor.u32 %v1946, 2147483648
      %v1948 = vmul.f32 %v1947, 1.442695
      %v1949 = vpow.pop %v1948
      %v1950 = vadd.f32 %v1949, 1.0
      %v1951 = vrcp.pop %v1950
      %v1952 = vmul.f32 %v1950, %v1951
      %v1953 = vsub.f32 1.0, %v1952
      %v1954 = vmul.f32 %v1951, %v1953
      %v1955 = vadd.f32 %v1951, %v1954
      %vm1956 = vweird.f32 %v1950
      %vm1957 = vweird.f32 %v1951
      %vm1958 = vmor %vm1956, %vm1957
      %v1959 = vsel %vm1958, %v1951, %v1955
      %v1960 = vand.u32 2147483647, %v1950
      %vm1961 = vcmp.eq.f32.partialorder %v1960, 8.507059e+37
      %v1962 = vand.u32 %v1950, 2147483648
      %v1963 = vor.u32 1.1754944e-38, %v1962
      %v1964 = vsel %vm1961, %v1963, %v1959
      %v1965 = vmul.f32 1.0, %v1964
      %v1966 = vadd.f32 %v1870, %v933
      %1968 = vrot.lane.b32.xlu0 %v1966, 64
      %v1969 = vpop.permute.xlu0 %1968
      %v1971 = vmul.f32 %v1914, %v1969
      %v1972 = vtanh.pop %v1971
      %v1973 = vsub.f32 1.0, %v1965
      %1975 = vrot.lane.b32.xlu0 %v1972, 32
      %v1976 = vpop.permute.xlu0 %1975
      %v1978 = vmul.f32 %v1973, %v1976
      %v1979 = vmul.f32 %v1965, %v1846
      %v1980 = vadd.f32 %v1978, %v1979
      %1982 = vrot.lane.b32.xlu0 %v1980, 96
      %v1983 = vpop.permute.xlu0 %1982
      %s1985 = scalar_lea.vmem %s361, 16
      %1986 = vst.msk [vmem:[%s1985] sm:$0xff] %vm440, %v1983
      %s1987 = scalar_lea.vmem %s355, 24
      %v1988 = vld [vmem:[%s1987] sm:$0xff]
      %v1990 = vsel %vm396, %v1988, 0
      %1992 = vmatpush.msra.mxu0 0.0
      %1993 = vmatpush.msra.mxu0 0.0
      %1994 = vmatpush.msra.mxu0 0.0
      %1995 = vmatpush.msra.mxu0 0.0
      %1996 = vmatpush.msra.mxu0 0.0
      %1997 = vmatpush.msra.mxu0 0.0
      %1998 = vmatpush.msra.mxu0 0.0
      %1999 = vmatpush.msra.mxu0 0.0
      %2000 = vmatpush.msra.mxu0 0.0
      %2001 = vmatpush.msra.mxu0 0.0
      %2002 = vmatpush.msra.mxu0 0.0
      %2003 = vmatpush.msra.mxu0 0.0
      %2004 = vmatpush.msra.mxu0 0.0
      %2005 = vmatpush.msra.mxu0 0.0
      %2006 = vmatpush.msra.mxu0 %v371
      %2007 = vmatpush.msra.mxu0 %v369
      %2008 = vmatmul.f32.gmra.mxu0 %v1990
      %v2009 = vpop.f32.mrf.mxu0
      %v2010 = vadd.f32 0.0, %v2009
      %2011 = vdwg.mxu0
      %2012 = vmatpush.msra.mxu0 0.0
      %2013 = vmatpush.msra.mxu0 0.0
      %2014 = vmatpush.msra.mxu0 0.0
      %2015 = vmatpush.msra.mxu0 0.0
      %2016 = vmatpush.msra.mxu0 0.0
      %2017 = vmatpush.msra.mxu0 0.0
      %2018 = vmatpush.msra.mxu0 0.0
      %2019 = vmatpush.msra.mxu0 0.0
      %2020 = vmatpush.msra.mxu0 0.0
      %2021 = vmatpush.msra.mxu0 0.0
      %2022 = vmatpush.msra.mxu0 0.0
      %2023 = vmatpush.msra.mxu0 0.0
      %2024 = vmatpush.msra.mxu0 0.0
      %2025 = vmatpush.msra.mxu0 0.0
      %2026 = vmatpush.msra.mxu0 %v372
      %2027 = vmatpush.msra.mxu0 %v370
      %2028 = vmatmul.f32.gmra.mxu0 %v1990
      %v2029 = vpop.f32.mrf.mxu0
      %v2030 = vadd.f32 0.0, %v2029
      %2031 = vdwg.mxu0
      %v2032 = vsel %vm440, %v1983, 0
      %2034 = vmatpush.msra.mxu0 0.0
      %2035 = vmatpush.msra.mxu0 0.0
      %2036 = vmatpush.msra.mxu0 0.0
      %2037 = vmatpush.msra.mxu0 0.0
      %2038 = vmatpush.msra.mxu0 0.0
      %2039 = vmatpush.msra.mxu0 0.0
      %2040 = vmatpush.msra.mxu0 0.0
      %2041 = vmatpush.msra.mxu0 0.0
      %2042 = vmatpush.msra.mxu0 0.0
      %2043 = vmatpush.msra.mxu0 0.0
      %2044 = vmatpush.msra.mxu0 0.0
      %2045 = vmatpush.msra.mxu0 0.0
      %2046 = vmatpush.msra.mxu0 %v376
      %2047 = vmatpush.msra.mxu0 %v375
      %2048 = vmatpush.msra.mxu0 %v374
      %2049 = vmatpush.msra.mxu0 %v373
      %2050 = vmatmul.f32.gmra.mxu0 %v2032
      %v2051 = vpop.f32.mrf.mxu0
      %v2052 = vadd.f32 0.0, %v2051
      %2053 = vdwg.mxu0
      %v2054 = vadd.f32 %v2010, %v2052
      %v2055 = vsel %vm440, %v2054, 0.0
      %2056 = vadd.xlane.f32.xlu0 %v2055
      %v2057 = vpop.xlane.xlu0 %2056
      %v2058 = vmul.f32 %v2057, %v474
      %v2059 = vsub.f32 %v2054, %v2058
      %v2060 = vmul.f32 %v2059, %v2059
      %v2061 = vsel %vm440, %v2060, 0.0
      %2062 = vadd.xlane.f32.xlu0 %v2061
      %v2063 = vpop.xlane.xlu0 %2062
      %v2064 = vmul.f32 %v2063, %v474
      %v2065 = vadd.f32 %v2064, 1e-05
      %v2066 = vrsqrt.pop %v2065
      %v2067 = vmul.f32 %v2066, %v2065
      %v2068 = vmul.f32 %v2067, %v2066
      %v2069 = vmul.f32 0.5, %v2068
      %v2070 = vsub.f32 1.5, %v2069
      %v2071 = vmul.f32 %v2066, %v2070
      %vm2072 = vweird.f32 %v2065
      %vm2073 = vweird.f32 %v2066
      %vm2074 = vmor %vm2072, %vm2073
      %v2075 = vsel %vm2074, %v2066, %v2071
      %v2076 = vmul.f32 %v2059, %v2075
      %v2077 = vmul.f32 %v2076, %v495
      %v2078 = vadd.f32 %v2077, %v499
      %v2079 = vxor.u32 %v2078, 2147483648
      %v2080 = vmul.f32 %v2079, 1.442695
      %v2081 = vpow.pop %v2080
      %v2082 = vadd.f32 %v2081, 1.0
      %v2083 = vrcp.pop %v2082
      %v2084 = vmul.f32 %v2082, %v2083
      %v2085 = vsub.f32 1.0, %v2084
      %v2086 = vmul.f32 %v2083, %v2085
      %v2087 = vadd.f32 %v2083, %v2086
      %vm2088 = vweird.f32 %v2082
      %vm2089 = vweird.f32 %v2083
      %vm2090 = vmor %vm2088, %vm2089
      %v2091 = vsel %vm2090, %v2083, %v2087
      %v2092 = vand.u32 2147483647, %v2082
      %vm2093 = vcmp.eq.f32.partialorder %v2092, 8.507059e+37
      %v2094 = vand.u32 %v2082, 2147483648
      %v2095 = vor.u32 1.1754944e-38, %v2094
      %v2096 = vsel %vm2093, %v2095, %v2091
      %v2097 = vmul.f32 1.0, %v2096
      %2099 = vrot.lane.b32.xlu0 %v2054, 96
      %v2100 = vpop.permute.xlu0 %2099
      %v2102 = vsel %vm440, %v2100, 0.0
      %2103 = vadd.xlane.f32.xlu0 %v2102
      %v2104 = vpop.xlane.xlu0 %2103
      %v2105 = vmul.f32 %v2104, %v474
      %v2106 = vsub.f32 %v2054, %v2105
      %v2107 = vmul.f32 %v2106, %v2106
      %2109 = vrot.lane.b32.xlu0 %v2107, 96
      %v2110 = vpop.permute.xlu0 %2109
      %v2112 = vsel %vm440, %v2110, 0.0
      %2113 = vadd.xlane.f32.xlu0 %v2112
      %v2114 = vpop.xlane.xlu0 %2113
      %v2115 = vmul.f32 %v2114, %v474
      %v2116 = vadd.f32 %v2115, 1e-05
      %v2117 = vrsqrt.pop %v2116
      %v2118 = vmul.f32 %v2117, %v2116
      %v2119 = vmul.f32 %v2118, %v2117
      %v2120 = vmul.f32 0.5, %v2119
      %v2121 = vsub.f32 1.5, %v2120
      %v2122 = vmul.f32 %v2117, %v2121
      %vm2123 = vweird.f32 %v2116
      %vm2124 = vweird.f32 %v2117
      %vm2125 = vmor %vm2123, %vm2124
      %v2126 = vsel %vm2125, %v2117, %v2122
      %v2127 = vmul.f32 %v2106, %v2126
      %v2128 = vmul.f32 %v2127, %v495
      %v2129 = vadd.f32 %v2128, %v499
      %v2130 = vxor.u32 %v2129, 2147483648
      %v2131 = vmul.f32 %v2130, 1.442695
      %v2132 = vpow.pop %v2131
      %v2133 = vadd.f32 %v2132, 1.0
      %v2134 = vrcp.pop %v2133
      %v2135 = vmul.f32 %v2133, %v2134
      %v2136 = vsub.f32 1.0, %v2135
      %v2137 = vmul.f32 %v2134, %v2136
      %v2138 = vadd.f32 %v2134, %v2137
      %vm2139 = vweird.f32 %v2133
      %vm2140 = vweird.f32 %v2134
      %vm2141 = vmor %vm2139, %vm2140
      %v2142 = vsel %vm2141, %v2134, %v2138
      %v2143 = vand.u32 2147483647, %v2133
      %vm2144 = vcmp.eq.f32.partialorder %v2143, 8.507059e+37
      %v2145 = vand.u32 %v2133, 2147483648
      %v2146 = vor.u32 1.1754944e-38, %v2145
      %v2147 = vsel %vm2144, %v2146, %v2142
      %v2148 = vmul.f32 1.0, %v2147
      %2149 = vrot.lane.b32.xlu0 %v2054, 64
      %v2150 = vpop.permute.xlu0 %2149
      %v2152 = vsel %vm440, %v2150, 0.0
      %2153 = vadd.xlane.f32.xlu0 %v2152
      %v2154 = vpop.xlane.xlu0 %2153
      %v2155 = vmul.f32 %v2154, %v474
      %v2156 = vsub.f32 %v2054, %v2155
      %v2157 = vmul.f32 %v2156, %v2156
      %2159 = vrot.lane.b32.xlu0 %v2157, 64
      %v2160 = vpop.permute.xlu0 %2159
      %v2162 = vsel %vm440, %v2160, 0.0
      %2163 = vadd.xlane.f32.xlu0 %v2162
      %v2164 = vpop.xlane.xlu0 %2163
      %v2165 = vmul.f32 %v2164, %v474
      %v2166 = vadd.f32 %v2165, 1e-05
      %v2167 = vrsqrt.pop %v2166
      %v2168 = vmul.f32 %v2167, %v2166
      %v2169 = vmul.f32 %v2168, %v2167
      %v2170 = vmul.f32 0.5, %v2169
      %v2171 = vsub.f32 1.5, %v2170
      %v2172 = vmul.f32 %v2167, %v2171
      %vm2173 = vweird.f32 %v2166
      %vm2174 = vweird.f32 %v2167
      %vm2175 = vmor %vm2173, %vm2174
      %v2176 = vsel %vm2175, %v2167, %v2172
      %v2177 = vmul.f32 %v2156, %v2176
      %v2178 = vmul.f32 %v2177, %v495
      %v2179 = vadd.f32 %v2178, %v499
      %v2180 = vxor.u32 %v2179, 2147483648
      %v2181 = vmul.f32 %v2180, 1.442695
      %v2182 = vpow.pop %v2181
      %v2183 = vadd.f32 %v2182, 1.0
      %v2184 = vrcp.pop %v2183
      %v2185 = vmul.f32 %v2183, %v2184
      %v2186 = vsub.f32 1.0, %v2185
      %v2187 = vmul.f32 %v2184, %v2186
      %v2188 = vadd.f32 %v2184, %v2187
      %vm2189 = vweird.f32 %v2183
      %vm2190 = vweird.f32 %v2184
      %vm2191 = vmor %vm2189, %vm2190
      %v2192 = vsel %vm2191, %v2184, %v2188
      %v2193 = vand.u32 2147483647, %v2183
      %vm2194 = vcmp.eq.f32.partialorder %v2193, 8.507059e+37
      %v2195 = vand.u32 %v2183, 2147483648
      %v2196 = vor.u32 1.1754944e-38, %v2195
      %v2197 = vsel %vm2194, %v2196, %v2192
      %v2198 = vmul.f32 1.0, %v2197
      %v2199 = vadd.f32 %v2052, %v625
      %2201 = vrot.lane.b32.xlu0 %v2199, 32
      %v2202 = vpop.permute.xlu0 %2201
      %v2204 = vmul.f32 %v2097, %v2202
      %2206 = vrot.lane.b32.xlu0 %v2204, 96
      %v2207 = vpop.permute.xlu0 %2206
      %v2209 = vadd.f32 %v2010, %v2207
      %v2210 = vtanh.pop %v2209
      %2212 = vrot.lane.b32.xlu0 %v2030, 64
      %v2213 = vpop.permute.xlu0 %2212
      %v2215 = vmul.f32 %v2198, %v2213
      %2217 = vrot.lane.b32.xlu0 %v2215, 32
      %v2218 = vpop.permute.xlu0 %2217
      %v2220 = vadd.f32 %v2210, %v2218
      %v2221 = vsub.f32 1.0, %v2148
      %v2222 = vmul.f32 %v2221, %v1980
      %2224 = vrot.lane.b32.xlu0 %v2220, 64
      %v2225 = vpop.permute.xlu0 %2224
      %v2227 = vmul.f32 %v2148, %v2225
      %v2228 = vadd.f32 %v2222, %v2227
      %2230 = vrot.lane.b32.xlu0 %v2228, 96
      %v2231 = vpop.permute.xlu0 %2230
      %v2232 = vsel %vm440, %v2231, 0
      %2234 = vmatpush.msra.mxu0 0.0
      %2235 = vmatpush.msra.mxu0 0.0
      %2236 = vmatpush.msra.mxu0 0.0
      %2237 = vmatpush.msra.mxu0 0.0
      %2238 = vmatpush.msra.mxu0 0.0
      %2239 = vmatpush.msra.mxu0 0.0
      %2240 = vmatpush.msra.mxu0 0.0
      %2241 = vmatpush.msra.mxu0 0.0
      %2242 = vmatpush.msra.mxu0 0.0
      %2243 = vmatpush.msra.mxu0 0.0
      %2244 = vmatpush.msra.mxu0 0.0
      %2245 = vmatpush.msra.mxu0 0.0
      %2246 = vmatpush.msra.mxu0 %v383
      %2247 = vmatpush.msra.mxu0 %v382
      %2248 = vmatpush.msra.mxu0 %v381
      %2249 = vmatpush.msra.mxu0 %v380
      %2250 = vmatmul.f32.gmra.mxu0 %v2232
      %v2251 = vpop.f32.mrf.mxu0
      %v2252 = vadd.f32 0.0, %v2251
      %2253 = vdwg.mxu0
      %v2254 = vsel %vm440, %v2252, 0.0
      %2255 = vadd.xlane.f32.xlu0 %v2254
      %v2256 = vpop.xlane.xlu0 %2255
      %v2257 = vmul.f32 %v2256, %v474
      %v2258 = vsub.f32 %v2252, %v2257
      %v2259 = vmul.f32 %v2258, %v2258
      %v2260 = vsel %vm440, %v2259, 0.0
      %2261 = vadd.xlane.f32.xlu0 %v2260
      %v2262 = vpop.xlane.xlu0 %2261
      %v2263 = vmul.f32 %v2262, %v474
      %v2264 = vadd.f32 %v2263, 1e-05
      %v2265 = vrsqrt.pop %v2264
      %v2266 = vmul.f32 %v2265, %v2264
      %v2267 = vmul.f32 %v2266, %v2265
      %v2268 = vmul.f32 0.5, %v2267
      %v2269 = vsub.f32 1.5, %v2268
      %v2270 = vmul.f32 %v2265, %v2269
      %vm2271 = vweird.f32 %v2264
      %vm2272 = vweird.f32 %v2265
      %vm2273 = vmor %vm2271, %vm2272
      %v2274 = vsel %vm2273, %v2265, %v2270
      %v2275 = vmul.f32 %v2258, %v2274
      %v2276 = vmul.f32 %v2275, %v708
      %v2277 = vadd.f32 %v2276, %v712
      %v2278 = vxor.u32 %v2277, 2147483648
      %v2279 = vmul.f32 %v2278, 1.442695
      %v2280 = vpow.pop %v2279
      %v2281 = vadd.f32 %v2280, 1.0
      %v2282 = vrcp.pop %v2281
      %v2283 = vmul.f32 %v2281, %v2282
      %v2284 = vsub.f32 1.0, %v2283
      %v2285 = vmul.f32 %v2282, %v2284
      %v2286 = vadd.f32 %v2282, %v2285
      %vm2287 = vweird.f32 %v2281
      %vm2288 = vweird.f32 %v2282
      %vm2289 = vmor %vm2287, %vm2288
      %v2290 = vsel %vm2289, %v2282, %v2286
      %v2291 = vand.u32 2147483647, %v2281
      %vm2292 = vcmp.eq.f32.partialorder %v2291, 8.507059e+37
      %v2293 = vand.u32 %v2281, 2147483648
      %v2294 = vor.u32 1.1754944e-38, %v2293
      %v2295 = vsel %vm2292, %v2294, %v2290
      %v2296 = vmul.f32 1.0, %v2295
      %2298 = vrot.lane.b32.xlu0 %v2252, 96
      %v2299 = vpop.permute.xlu0 %2298
      %v2301 = vsel %vm440, %v2299, 0.0
      %2302 = vadd.xlane.f32.xlu0 %v2301
      %v2303 = vpop.xlane.xlu0 %2302
      %v2304 = vmul.f32 %v2303, %v474
      %v2305 = vsub.f32 %v2252, %v2304
      %v2306 = vmul.f32 %v2305, %v2305
      %2308 = vrot.lane.b32.xlu0 %v2306, 96
      %v2309 = vpop.permute.xlu0 %2308
      %v2311 = vsel %vm440, %v2309, 0.0
      %2312 = vadd.xlane.f32.xlu0 %v2311
      %v2313 = vpop.xlane.xlu0 %2312
      %v2314 = vmul.f32 %v2313, %v474
      %v2315 = vadd.f32 %v2314, 1e-05
      %v2316 = vrsqrt.pop %v2315
      %v2317 = vmul.f32 %v2316, %v2315
      %v2318 = vmul.f32 %v2317, %v2316
      %v2319 = vmul.f32 0.5, %v2318
      %v2320 = vsub.f32 1.5, %v2319
      %v2321 = vmul.f32 %v2316, %v2320
      %vm2322 = vweird.f32 %v2315
      %vm2323 = vweird.f32 %v2316
      %vm2324 = vmor %vm2322, %vm2323
      %v2325 = vsel %vm2324, %v2316, %v2321
      %v2326 = vmul.f32 %v2305, %v2325
      %v2327 = vmul.f32 %v2326, %v708
      %v2328 = vadd.f32 %v2327, %v712
      %v2329 = vxor.u32 %v2328, 2147483648
      %v2330 = vmul.f32 %v2329, 1.442695
      %v2331 = vpow.pop %v2330
      %v2332 = vadd.f32 %v2331, 1.0
      %v2333 = vrcp.pop %v2332
      %v2334 = vmul.f32 %v2332, %v2333
      %v2335 = vsub.f32 1.0, %v2334
      %v2336 = vmul.f32 %v2333, %v2335
      %v2337 = vadd.f32 %v2333, %v2336
      %vm2338 = vweird.f32 %v2332
      %vm2339 = vweird.f32 %v2333
      %vm2340 = vmor %vm2338, %vm2339
      %v2341 = vsel %vm2340, %v2333, %v2337
      %v2342 = vand.u32 2147483647, %v2332
      %vm2343 = vcmp.eq.f32.partialorder %v2342, 8.507059e+37
      %v2344 = vand.u32 %v2332, 2147483648
      %v2345 = vor.u32 1.1754944e-38, %v2344
      %v2346 = vsel %vm2343, %v2345, %v2341
      %v2347 = vmul.f32 1.0, %v2346
      %v2348 = vadd.f32 %v2252, %v788
      %2350 = vrot.lane.b32.xlu0 %v2348, 64
      %v2351 = vpop.permute.xlu0 %2350
      %v2353 = vmul.f32 %v2296, %v2351
      %v2354 = vtanh.pop %v2353
      %v2355 = vsub.f32 1.0, %v2347
      %2357 = vrot.lane.b32.xlu0 %v2354, 32
      %v2358 = vpop.permute.xlu0 %2357
      %v2360 = vmul.f32 %v2355, %v2358
      %v2361 = vmul.f32 %v2347, %v2228
      %v2362 = vadd.f32 %v2360, %v2361
      %2364 = vrot.lane.b32.xlu0 %v2362, 96
      %v2365 = vpop.permute.xlu0 %2364
      %v2366 = vsel %vm440, %v2365, 0
      %2368 = vmatpush.msra.mxu0 0.0
      %2369 = vmatpush.msra.mxu0 0.0
      %2370 = vmatpush.msra.mxu0 0.0
      %2371 = vmatpush.msra.mxu0 0.0
      %2372 = vmatpush.msra.mxu0 0.0
      %2373 = vmatpush.msra.mxu0 0.0
      %2374 = vmatpush.msra.mxu0 0.0
      %2375 = vmatpush.msra.mxu0 0.0
      %2376 = vmatpush.msra.mxu0 0.0
      %2377 = vmatpush.msra.mxu0 0.0
      %2378 = vmatpush.msra.mxu0 0.0
      %2379 = vmatpush.msra.mxu0 0.0
      %2380 = vmatpush.msra.mxu0 %v387
      %2381 = vmatpush.msra.mxu0 %v386
      %2382 = vmatpush.msra.mxu0 %v385
      %2383 = vmatpush.msra.mxu0 %v384
      %2384 = vmatmul.f32.gmra.mxu0 %v2366
      %v2385 = vpop.f32.mrf.mxu0
      %v2386 = vadd.f32 0.0, %v2385
      %2387 = vdwg.mxu0
      %v2388 = vsel %vm440, %v2386, 0.0
      %2389 = vadd.xlane.f32.xlu0 %v2388
      %v2390 = vpop.xlane.xlu0 %2389
      %v2391 = vmul.f32 %v2390, %v474
      %v2392 = vsub.f32 %v2386, %v2391
      %v2393 = vmul.f32 %v2392, %v2392
      %v2394 = vsel %vm440, %v2393, 0.0
      %2395 = vadd.xlane.f32.xlu0 %v2394
      %v2396 = vpop.xlane.xlu0 %2395
      %v2397 = vmul.f32 %v2396, %v474
      %v2398 = vadd.f32 %v2397, 1e-05
      %v2399 = vrsqrt.pop %v2398
      %v2400 = vmul.f32 %v2399, %v2398
      %v2401 = vmul.f32 %v2400, %v2399
      %v2402 = vmul.f32 0.5, %v2401
      %v2403 = vsub.f32 1.5, %v2402
      %v2404 = vmul.f32 %v2399, %v2403
      %vm2405 = vweird.f32 %v2398
      %vm2406 = vweird.f32 %v2399
      %vm2407 = vmor %vm2405, %vm2406
      %v2408 = vsel %vm2407, %v2399, %v2404
      %v2409 = vmul.f32 %v2392, %v2408
      %v2410 = vmul.f32 %v2409, %v853
      %v2411 = vadd.f32 %v2410, %v857
      %v2412 = vxor.u32 %v2411, 2147483648
      %v2413 = vmul.f32 %v2412, 1.442695
      %v2414 = vpow.pop %v2413
      %v2415 = vadd.f32 %v2414, 1.0
      %v2416 = vrcp.pop %v2415
      %v2417 = vmul.f32 %v2415, %v2416
      %v2418 = vsub.f32 1.0, %v2417
      %v2419 = vmul.f32 %v2416, %v2418
      %v2420 = vadd.f32 %v2416, %v2419
      %vm2421 = vweird.f32 %v2415
      %vm2422 = vweird.f32 %v2416
      %vm2423 = vmor %vm2421, %vm2422
      %v2424 = vsel %vm2423, %v2416, %v2420
      %v2425 = vand.u32 2147483647, %v2415
      %vm2426 = vcmp.eq.f32.partialorder %v2425, 8.507059e+37
      %v2427 = vand.u32 %v2415, 2147483648
      %v2428 = vor.u32 1.1754944e-38, %v2427
      %v2429 = vsel %vm2426, %v2428, %v2424
      %v2430 = vmul.f32 1.0, %v2429
      %2432 = vrot.lane.b32.xlu0 %v2386, 96
      %v2433 = vpop.permute.xlu0 %2432
      %v2435 = vsel %vm440, %v2433, 0.0
      %2436 = vadd.xlane.f32.xlu0 %v2435
      %v2437 = vpop.xlane.xlu0 %2436
      %v2438 = vmul.f32 %v2437, %v474
      %v2439 = vsub.f32 %v2386, %v2438
      %v2440 = vmul.f32 %v2439, %v2439
      %2442 = vrot.lane.b32.xlu0 %v2440, 96
      %v2443 = vpop.permute.xlu0 %2442
      %v2445 = vsel %vm440, %v2443, 0.0
      %2446 = vadd.xlane.f32.xlu0 %v2445
      %v2447 = vpop.xlane.xlu0 %2446
      %v2448 = vmul.f32 %v2447, %v474
      %v2449 = vadd.f32 %v2448, 1e-05
      %v2450 = vrsqrt.pop %v2449
      %v2451 = vmul.f32 %v2450, %v2449
      %v2452 = vmul.f32 %v2451, %v2450
      %v2453 = vmul.f32 0.5, %v2452
      %v2454 = vsub.f32 1.5, %v2453
      %v2455 = vmul.f32 %v2450, %v2454
      %vm2456 = vweird.f32 %v2449
      %vm2457 = vweird.f32 %v2450
      %vm2458 = vmor %vm2456, %vm2457
      %v2459 = vsel %vm2458, %v2450, %v2455
      %v2460 = vmul.f32 %v2439, %v2459
      %v2461 = vmul.f32 %v2460, %v853
      %v2462 = vadd.f32 %v2461, %v857
      %v2463 = vxor.u32 %v2462, 2147483648
      %v2464 = vmul.f32 %v2463, 1.442695
      %v2465 = vpow.pop %v2464
      %v2466 = vadd.f32 %v2465, 1.0
      %v2467 = vrcp.pop %v2466
      %v2468 = vmul.f32 %v2466, %v2467
      %v2469 = vsub.f32 1.0, %v2468
      %v2470 = vmul.f32 %v2467, %v2469
      %v2471 = vadd.f32 %v2467, %v2470
      %vm2472 = vweird.f32 %v2466
      %vm2473 = vweird.f32 %v2467
      %vm2474 = vmor %vm2472, %vm2473
      %v2475 = vsel %vm2474, %v2467, %v2471
      %v2476 = vand.u32 2147483647, %v2466
      %vm2477 = vcmp.eq.f32.partialorder %v2476, 8.507059e+37
      %v2478 = vand.u32 %v2466, 2147483648
      %v2479 = vor.u32 1.1754944e-38, %v2478
      %v2480 = vsel %vm2477, %v2479, %v2475
      %v2481 = vmul.f32 1.0, %v2480
      %v2482 = vadd.f32 %v2386, %v933
      %2484 = vrot.lane.b32.xlu0 %v2482, 64
      %v2485 = vpop.permute.xlu0 %2484
      %v2487 = vmul.f32 %v2430, %v2485
      %v2488 = vtanh.pop %v2487
      %v2489 = vsub.f32 1.0, %v2481
      %2491 = vrot.lane.b32.xlu0 %v2488, 32
      %v2492 = vpop.permute.xlu0 %2491
      %v2494 = vmul.f32 %v2489, %v2492
      %v2495 = vmul.f32 %v2481, %v2362
      %v2496 = vadd.f32 %v2494, %v2495
      %2498 = vrot.lane.b32.xlu0 %v2496, 96
      %v2499 = vpop.permute.xlu0 %2498
      %s2501 = scalar_lea.vmem %s361, 24
      %2502 = vst.msk [vmem:[%s2501] sm:$0xff] %vm440, %v2499
      %s2503 = scalar_lea.vmem %s355, 32
      %v2504 = vld [vmem:[%s2503] sm:$0xff]
      %v2506 = vsel %vm396, %v2504, 0
      %2508 = vmatpush.msra.mxu0 0.0
      %2509 = vmatpush.msra.mxu0 0.0
      %2510 = vmatpush.msra.mxu0 0.0
      %2511 = vmatpush.msra.mxu0 0.0
      %2512 = vmatpush.msra.mxu0 0.0
      %2513 = vmatpush.msra.mxu0 0.0
      %2514 = vmatpush.msra.mxu0 0.0
      %2515 = vmatpush.msra.mxu0 0.0
      %2516 = vmatpush.msra.mxu0 0.0
      %2517 = vmatpush.msra.mxu0 0.0
      %2518 = vmatpush.msra.mxu0 0.0
      %2519 = vmatpush.msra.mxu0 0.0
      %2520 = vmatpush.msra.mxu0 0.0
      %2521 = vmatpush.msra.mxu0 0.0
      %2522 = vmatpush.msra.mxu0 %v371
      %2523 = vmatpush.msra.mxu0 %v369
      %2524 = vmatmul.f32.gmra.mxu0 %v2506
      %v2525 = vpop.f32.mrf.mxu0
      %v2526 = vadd.f32 0.0, %v2525
      %2527 = vdwg.mxu0
      %2528 = vmatpush.msra.mxu0 0.0
      %2529 = vmatpush.msra.mxu0 0.0
      %2530 = vmatpush.msra.mxu0 0.0
      %2531 = vmatpush.msra.mxu0 0.0
      %2532 = vmatpush.msra.mxu0 0.0
      %2533 = vmatpush.msra.mxu0 0.0
      %2534 = vmatpush.msra.mxu0 0.0
      %2535 = vmatpush.msra.mxu0 0.0
      %2536 = vmatpush.msra.mxu0 0.0
      %2537 = vmatpush.msra.mxu0 0.0
      %2538 = vmatpush.msra.mxu0 0.0
      %2539 = vmatpush.msra.mxu0 0.0
      %2540 = vmatpush.msra.mxu0 0.0
      %2541 = vmatpush.msra.mxu0 0.0
      %2542 = vmatpush.msra.mxu0 %v372
      %2543 = vmatpush.msra.mxu0 %v370
      %2544 = vmatmul.f32.gmra.mxu0 %v2506
      %v2545 = vpop.f32.mrf.mxu0
      %v2546 = vadd.f32 0.0, %v2545
      %2547 = vdwg.mxu0
      %v2548 = vsel %vm440, %v2499, 0
      %2550 = vmatpush.msra.mxu0 0.0
      %2551 = vmatpush.msra.mxu0 0.0
      %2552 = vmatpush.msra.mxu0 0.0
      %2553 = vmatpush.msra.mxu0 0.0
      %2554 = vmatpush.msra.mxu0 0.0
      %2555 = vmatpush.msra.mxu0 0.0
      %2556 = vmatpush.msra.mxu0 0.0
      %2557 = vmatpush.msra.mxu0 0.0
      %2558 = vmatpush.msra.mxu0 0.0
      %2559 = vmatpush.msra.mxu0 0.0
      %2560 = vmatpush.msra.mxu0 0.0
      %2561 = vmatpush.msra.mxu0 0.0
      %2562 = vmatpush.msra.mxu0 %v376
      %2563 = vmatpush.msra.mxu0 %v375
      %2564 = vmatpush.msra.mxu0 %v374
      %2565 = vmatpush.msra.mxu0 %v373
      %2566 = vmatmul.f32.gmra.mxu0 %v2548
      %v2567 = vpop.f32.mrf.mxu0
      %v2568 = vadd.f32 0.0, %v2567
      %2569 = vdwg.mxu0
      %v2570 = vadd.f32 %v2526, %v2568
      %v2571 = vsel %vm440, %v2570, 0.0
      %2572 = vadd.xlane.f32.xlu0 %v2571
      %v2573 = vpop.xlane.xlu0 %2572
      %v2574 = vmul.f32 %v2573, %v474
      %v2575 = vsub.f32 %v2570, %v2574
      %v2576 = vmul.f32 %v2575, %v2575
      %v2577 = vsel %vm440, %v2576, 0.0
      %2578 = vadd.xlane.f32.xlu0 %v2577
      %v2579 = vpop.xlane.xlu0 %2578
      %v2580 = vmul.f32 %v2579, %v474
      %v2581 = vadd.f32 %v2580, 1e-05
      %v2582 = vrsqrt.pop %v2581
      %v2583 = vmul.f32 %v2582, %v2581
      %v2584 = vmul.f32 %v2583, %v2582
      %v2585 = vmul.f32 0.5, %v2584
      %v2586 = vsub.f32 1.5, %v2585
      %v2587 = vmul.f32 %v2582, %v2586
      %vm2588 = vweird.f32 %v2581
      %vm2589 = vweird.f32 %v2582
      %vm2590 = vmor %vm2588, %vm2589
      %v2591 = vsel %vm2590, %v2582, %v2587
      %v2592 = vmul.f32 %v2575, %v2591
      %v2593 = vmul.f32 %v2592, %v495
      %v2594 = vadd.f32 %v2593, %v499
      %v2595 = vxor.u32 %v2594, 2147483648
      %v2596 = vmul.f32 %v2595, 1.442695
      %v2597 = vpow.pop %v2596
      %v2598 = vadd.f32 %v2597, 1.0
      %v2599 = vrcp.pop %v2598
      %v2600 = vmul.f32 %v2598, %v2599
      %v2601 = vsub.f32 1.0, %v2600
      %v2602 = vmul.f32 %v2599, %v2601
      %v2603 = vadd.f32 %v2599, %v2602
      %vm2604 = vweird.f32 %v2598
      %vm2605 = vweird.f32 %v2599
      %vm2606 = vmor %vm2604, %vm2605
      %v2607 = vsel %vm2606, %v2599, %v2603
      %v2608 = vand.u32 2147483647, %v2598
      %vm2609 = vcmp.eq.f32.partialorder %v2608, 8.507059e+37
      %v2610 = vand.u32 %v2598, 2147483648
      %v2611 = vor.u32 1.1754944e-38, %v2610
      %v2612 = vsel %vm2609, %v2611, %v2607
      %v2613 = vmul.f32 1.0, %v2612
      %2615 = vrot.lane.b32.xlu0 %v2570, 96
      %v2616 = vpop.permute.xlu0 %2615
      %v2618 = vsel %vm440, %v2616, 0.0
      %2619 = vadd.xlane.f32.xlu0 %v2618
      %v2620 = vpop.xlane.xlu0 %2619
      %v2621 = vmul.f32 %v2620, %v474
      %v2622 = vsub.f32 %v2570, %v2621
      %v2623 = vmul.f32 %v2622, %v2622
      %2625 = vrot.lane.b32.xlu0 %v2623, 96
      %v2626 = vpop.permute.xlu0 %2625
      %v2628 = vsel %vm440, %v2626, 0.0
      %2629 = vadd.xlane.f32.xlu0 %v2628
      %v2630 = vpop.xlane.xlu0 %2629
      %v2631 = vmul.f32 %v2630, %v474
      %v2632 = vadd.f32 %v2631, 1e-05
      %v2633 = vrsqrt.pop %v2632
      %v2634 = vmul.f32 %v2633, %v2632
      %v2635 = vmul.f32 %v2634, %v2633
      %v2636 = vmul.f32 0.5, %v2635
      %v2637 = vsub.f32 1.5, %v2636
      %v2638 = vmul.f32 %v2633, %v2637
      %vm2639 = vweird.f32 %v2632
      %vm2640 = vweird.f32 %v2633
      %vm2641 = vmor %vm2639, %vm2640
      %v2642 = vsel %vm2641, %v2633, %v2638
      %v2643 = vmul.f32 %v2622, %v2642
      %v2644 = vmul.f32 %v2643, %v495
      %v2645 = vadd.f32 %v2644, %v499
      %v2646 = vxor.u32 %v2645, 2147483648
      %v2647 = vmul.f32 %v2646, 1.442695
      %v2648 = vpow.pop %v2647
      %v2649 = vadd.f32 %v2648, 1.0
      %v2650 = vrcp.pop %v2649
      %v2651 = vmul.f32 %v2649, %v2650
      %v2652 = vsub.f32 1.0, %v2651
      %v2653 = vmul.f32 %v2650, %v2652
      %v2654 = vadd.f32 %v2650, %v2653
      %vm2655 = vweird.f32 %v2649
      %vm2656 = vweird.f32 %v2650
      %vm2657 = vmor %vm2655, %vm2656
      %v2658 = vsel %vm2657, %v2650, %v2654
      %v2659 = vand.u32 2147483647, %v2649
      %vm2660 = vcmp.eq.f32.partialorder %v2659, 8.507059e+37
      %v2661 = vand.u32 %v2649, 2147483648
      %v2662 = vor.u32 1.1754944e-38, %v2661
      %v2663 = vsel %vm2660, %v2662, %v2658
      %v2664 = vmul.f32 1.0, %v2663
      %2665 = vrot.lane.b32.xlu0 %v2570, 64
      %v2666 = vpop.permute.xlu0 %2665
      %v2668 = vsel %vm440, %v2666, 0.0
      %2669 = vadd.xlane.f32.xlu0 %v2668
      %v2670 = vpop.xlane.xlu0 %2669
      %v2671 = vmul.f32 %v2670, %v474
      %v2672 = vsub.f32 %v2570, %v2671
      %v2673 = vmul.f32 %v2672, %v2672
      %2675 = vrot.lane.b32.xlu0 %v2673, 64
      %v2676 = vpop.permute.xlu0 %2675
      %v2678 = vsel %vm440, %v2676, 0.0
      %2679 = vadd.xlane.f32.xlu0 %v2678
      %v2680 = vpop.xlane.xlu0 %2679
      %v2681 = vmul.f32 %v2680, %v474
      %v2682 = vadd.f32 %v2681, 1e-05
      %v2683 = vrsqrt.pop %v2682
      %v2684 = vmul.f32 %v2683, %v2682
      %v2685 = vmul.f32 %v2684, %v2683
      %v2686 = vmul.f32 0.5, %v2685
      %v2687 = vsub.f32 1.5, %v2686
      %v2688 = vmul.f32 %v2683, %v2687
      %vm2689 = vweird.f32 %v2682
      %vm2690 = vweird.f32 %v2683
      %vm2691 = vmor %vm2689, %vm2690
      %v2692 = vsel %vm2691, %v2683, %v2688
      %v2693 = vmul.f32 %v2672, %v2692
      %v2694 = vmul.f32 %v2693, %v495
      %v2695 = vadd.f32 %v2694, %v499
      %v2696 = vxor.u32 %v2695, 2147483648
      %v2697 = vmul.f32 %v2696, 1.442695
      %v2698 = vpow.pop %v2697
      %v2699 = vadd.f32 %v2698, 1.0
      %v2700 = vrcp.pop %v2699
      %v2701 = vmul.f32 %v2699, %v2700
      %v2702 = vsub.f32 1.0, %v2701
      %v2703 = vmul.f32 %v2700, %v2702
      %v2704 = vadd.f32 %v2700, %v2703
      %vm2705 = vweird.f32 %v2699
      %vm2706 = vweird.f32 %v2700
      %vm2707 = vmor %vm2705, %vm2706
      %v2708 = vsel %vm2707, %v2700, %v2704
      %v2709 = vand.u32 2147483647, %v2699
      %vm2710 = vcmp.eq.f32.partialorder %v2709, 8.507059e+37
      %v2711 = vand.u32 %v2699, 2147483648
      %v2712 = vor.u32 1.1754944e-38, %v2711
      %v2713 = vsel %vm2710, %v2712, %v2708
      %v2714 = vmul.f32 1.0, %v2713
      %v2715 = vadd.f32 %v2568, %v625
      %2717 = vrot.lane.b32.xlu0 %v2715, 32
      %v2718 = vpop.permute.xlu0 %2717
      %v2720 = vmul.f32 %v2613, %v2718
      %2722 = vrot.lane.b32.xlu0 %v2720, 96
      %v2723 = vpop.permute.xlu0 %2722
      %v2725 = vadd.f32 %v2526, %v2723
      %v2726 = vtanh.pop %v2725
      %2728 = vrot.lane.b32.xlu0 %v2546, 64
      %v2729 = vpop.permute.xlu0 %2728
      %v2731 = vmul.f32 %v2714, %v2729
      %2733 = vrot.lane.b32.xlu0 %v2731, 32
      %v2734 = vpop.permute.xlu0 %2733
      %v2736 = vadd.f32 %v2726, %v2734
      %v2737 = vsub.f32 1.0, %v2664
      %v2738 = vmul.f32 %v2737, %v2496
      %2740 = vrot.lane.b32.xlu0 %v2736, 64
      %v2741 = vpop.permute.xlu0 %2740
      %v2743 = vmul.f32 %v2664, %v2741
      %v2744 = vadd.f32 %v2738, %v2743
      %2746 = vrot.lane.b32.xlu0 %v2744, 96
      %v2747 = vpop.permute.xlu0 %2746
      %v2748 = vsel %vm440, %v2747, 0
      %2750 = vmatpush.msra.mxu0 0.0
      %2751 = vmatpush.msra.mxu0 0.0
      %2752 = vmatpush.msra.mxu0 0.0
      %2753 = vmatpush.msra.mxu0 0.0
      %2754 = vmatpush.msra.mxu0 0.0
      %2755 = vmatpush.msra.mxu0 0.0
      %2756 = vmatpush.msra.mxu0 0.0
      %2757 = vmatpush.msra.mxu0 0.0
      %2758 = vmatpush.msra.mxu0 0.0
      %2759 = vmatpush.msra.mxu0 0.0
      %2760 = vmatpush.msra.mxu0 0.0
      %2761 = vmatpush.msra.mxu0 0.0
      %2762 = vmatpush.msra.mxu0 %v383
      %2763 = vmatpush.msra.mxu0 %v382
      %2764 = vmatpush.msra.mxu0 %v381
      %2765 = vmatpush.msra.mxu0 %v380
      %2766 = vmatmul.f32.gmra.mxu0 %v2748
      %v2767 = vpop.f32.mrf.mxu0
      %v2768 = vadd.f32 0.0, %v2767
      %2769 = vdwg.mxu0
      %v2770 = vsel %vm440, %v2768, 0.0
      %2771 = vadd.xlane.f32.xlu0 %v2770
      %v2772 = vpop.xlane.xlu0 %2771
      %v2773 = vmul.f32 %v2772, %v474
      %v2774 = vsub.f32 %v2768, %v2773
      %v2775 = vmul.f32 %v2774, %v2774
      %v2776 = vsel %vm440, %v2775, 0.0
      %2777 = vadd.xlane.f32.xlu0 %v2776
      %v2778 = vpop.xlane.xlu0 %2777
      %v2779 = vmul.f32 %v2778, %v474
      %v2780 = vadd.f32 %v2779, 1e-05
      %v2781 = vrsqrt.pop %v2780
      %v2782 = vmul.f32 %v2781, %v2780
      %v2783 = vmul.f32 %v2782, %v2781
      %v2784 = vmul.f32 0.5, %v2783
      %v2785 = vsub.f32 1.5, %v2784
      %v2786 = vmul.f32 %v2781, %v2785
      %vm2787 = vweird.f32 %v2780
      %vm2788 = vweird.f32 %v2781
      %vm2789 = vmor %vm2787, %vm2788
      %v2790 = vsel %vm2789, %v2781, %v2786
      %v2791 = vmul.f32 %v2774, %v2790
      %v2792 = vmul.f32 %v2791, %v708
      %v2793 = vadd.f32 %v2792, %v712
      %v2794 = vxor.u32 %v2793, 2147483648
      %v2795 = vmul.f32 %v2794, 1.442695
      %v2796 = vpow.pop %v2795
      %v2797 = vadd.f32 %v2796, 1.0
      %v2798 = vrcp.pop %v2797
      %v2799 = vmul.f32 %v2797, %v2798
      %v2800 = vsub.f32 1.0, %v2799
      %v2801 = vmul.f32 %v2798, %v2800
      %v2802 = vadd.f32 %v2798, %v2801
      %vm2803 = vweird.f32 %v2797
      %vm2804 = vweird.f32 %v2798
      %vm2805 = vmor %vm2803, %vm2804
      %v2806 = vsel %vm2805, %v2798, %v2802
      %v2807 = vand.u32 2147483647, %v2797
      %vm2808 = vcmp.eq.f32.partialorder %v2807, 8.507059e+37
      %v2809 = vand.u32 %v2797, 2147483648
      %v2810 = vor.u32 1.1754944e-38, %v2809
      %v2811 = vsel %vm2808, %v2810, %v2806
      %v2812 = vmul.f32 1.0, %v2811
      %2814 = vrot.lane.b32.xlu0 %v2768, 96
      %v2815 = vpop.permute.xlu0 %2814
      %v2817 = vsel %vm440, %v2815, 0.0
      %2818 = vadd.xlane.f32.xlu0 %v2817
      %v2819 = vpop.xlane.xlu0 %2818
      %v2820 = vmul.f32 %v2819, %v474
      %v2821 = vsub.f32 %v2768, %v2820
      %v2822 = vmul.f32 %v2821, %v2821
      %2824 = vrot.lane.b32.xlu0 %v2822, 96
      %v2825 = vpop.permute.xlu0 %2824
      %v2827 = vsel %vm440, %v2825, 0.0
      %2828 = vadd.xlane.f32.xlu0 %v2827
      %v2829 = vpop.xlane.xlu0 %2828
      %v2830 = vmul.f32 %v2829, %v474
      %v2831 = vadd.f32 %v2830, 1e-05
      %v2832 = vrsqrt.pop %v2831
      %v2833 = vmul.f32 %v2832, %v2831
      %v2834 = vmul.f32 %v2833, %v2832
      %v2835 = vmul.f32 0.5, %v2834
      %v2836 = vsub.f32 1.5, %v2835
      %v2837 = vmul.f32 %v2832, %v2836
      %vm2838 = vweird.f32 %v2831
      %vm2839 = vweird.f32 %v2832
      %vm2840 = vmor %vm2838, %vm2839
      %v2841 = vsel %vm2840, %v2832, %v2837
      %v2842 = vmul.f32 %v2821, %v2841
      %v2843 = vmul.f32 %v2842, %v708
      %v2844 = vadd.f32 %v2843, %v712
      %v2845 = vxor.u32 %v2844, 2147483648
      %v2846 = vmul.f32 %v2845, 1.442695
      %v2847 = vpow.pop %v2846
      %v2848 = vadd.f32 %v2847, 1.0
      %v2849 = vrcp.pop %v2848
      %v2850 = vmul.f32 %v2848, %v2849
      %v2851 = vsub.f32 1.0, %v2850
      %v2852 = vmul.f32 %v2849, %v2851
      %v2853 = vadd.f32 %v2849, %v2852
      %vm2854 = vweird.f32 %v2848
      %vm2855 = vweird.f32 %v2849
      %vm2856 = vmor %vm2854, %vm2855
      %v2857 = vsel %vm2856, %v2849, %v2853
      %v2858 = vand.u32 2147483647, %v2848
      %vm2859 = vcmp.eq.f32.partialorder %v2858, 8.507059e+37
      %v2860 = vand.u32 %v2848, 2147483648
      %v2861 = vor.u32 1.1754944e-38, %v2860
      %v2862 = vsel %vm2859, %v2861, %v2857
      %v2863 = vmul.f32 1.0, %v2862
      %v2864 = vadd.f32 %v2768, %v788
      %2866 = vrot.lane.b32.xlu0 %v2864, 64
      %v2867 = vpop.permute.xlu0 %2866
      %v2869 = vmul.f32 %v2812, %v2867
      %v2870 = vtanh.pop %v2869
      %v2871 = vsub.f32 1.0, %v2863
      %2873 = vrot.lane.b32.xlu0 %v2870, 32
      %v2874 = vpop.permute.xlu0 %2873
      %v2876 = vmul.f32 %v2871, %v2874
      %v2877 = vmul.f32 %v2863, %v2744
      %v2878 = vadd.f32 %v2876, %v2877
      %2880 = vrot.lane.b32.xlu0 %v2878, 96
      %v2881 = vpop.permute.xlu0 %2880
      %v2882 = vsel %vm440, %v2881, 0
      %2884 = vmatpush.msra.mxu0 0.0
      %2885 = vmatpush.msra.mxu0 0.0
      %2886 = vmatpush.msra.mxu0 0.0
      %2887 = vmatpush.msra.mxu0 0.0
      %2888 = vmatpush.msra.mxu0 0.0
      %2889 = vmatpush.msra.mxu0 0.0
      %2890 = vmatpush.msra.mxu0 0.0
      %2891 = vmatpush.msra.mxu0 0.0
      %2892 = vmatpush.msra.mxu0 0.0
      %2893 = vmatpush.msra.mxu0 0.0
      %2894 = vmatpush.msra.mxu0 0.0
      %2895 = vmatpush.msra.mxu0 0.0
      %2896 = vmatpush.msra.mxu0 %v387
      %2897 = vmatpush.msra.mxu0 %v386
      %2898 = vmatpush.msra.mxu0 %v385
      %2899 = vmatpush.msra.mxu0 %v384
      %2900 = vmatmul.f32.gmra.mxu0 %v2882
      %v2901 = vpop.f32.mrf.mxu0
      %v2902 = vadd.f32 0.0, %v2901
      %2903 = vdwg.mxu0
      %v2904 = vsel %vm440, %v2902, 0.0
      %2905 = vadd.xlane.f32.xlu0 %v2904
      %v2906 = vpop.xlane.xlu0 %2905
      %v2907 = vmul.f32 %v2906, %v474
      %v2908 = vsub.f32 %v2902, %v2907
      %v2909 = vmul.f32 %v2908, %v2908
      %v2910 = vsel %vm440, %v2909, 0.0
      %2911 = vadd.xlane.f32.xlu0 %v2910
      %v2912 = vpop.xlane.xlu0 %2911
      %v2913 = vmul.f32 %v2912, %v474
      %v2914 = vadd.f32 %v2913, 1e-05
      %v2915 = vrsqrt.pop %v2914
      %v2916 = vmul.f32 %v2915, %v2914
      %v2917 = vmul.f32 %v2916, %v2915
      %v2918 = vmul.f32 0.5, %v2917
      %v2919 = vsub.f32 1.5, %v2918
      %v2920 = vmul.f32 %v2915, %v2919
      %vm2921 = vweird.f32 %v2914
      %vm2922 = vweird.f32 %v2915
      %vm2923 = vmor %vm2921, %vm2922
      %v2924 = vsel %vm2923, %v2915, %v2920
      %v2925 = vmul.f32 %v2908, %v2924
      %v2926 = vmul.f32 %v2925, %v853
      %v2927 = vadd.f32 %v2926, %v857
      %v2928 = vxor.u32 %v2927, 2147483648
      %v2929 = vmul.f32 %v2928, 1.442695
      %v2930 = vpow.pop %v2929
      %v2931 = vadd.f32 %v2930, 1.0
      %v2932 = vrcp.pop %v2931
      %v2933 = vmul.f32 %v2931, %v2932
      %v2934 = vsub.f32 1.0, %v2933
      %v2935 = vmul.f32 %v2932, %v2934
      %v2936 = vadd.f32 %v2932, %v2935
      %vm2937 = vweird.f32 %v2931
      %vm2938 = vweird.f32 %v2932
      %vm2939 = vmor %vm2937, %vm2938
      %v2940 = vsel %vm2939, %v2932, %v2936
      %v2941 = vand.u32 2147483647, %v2931
      %vm2942 = vcmp.eq.f32.partialorder %v2941, 8.507059e+37
      %v2943 = vand.u32 %v2931, 2147483648
      %v2944 = vor.u32 1.1754944e-38, %v2943
      %v2945 = vsel %vm2942, %v2944, %v2940
      %v2946 = vmul.f32 1.0, %v2945
      %2948 = vrot.lane.b32.xlu0 %v2902, 96
      %v2949 = vpop.permute.xlu0 %2948
      %v2951 = vsel %vm440, %v2949, 0.0
      %2952 = vadd.xlane.f32.xlu0 %v2951
      %v2953 = vpop.xlane.xlu0 %2952
      %v2954 = vmul.f32 %v2953, %v474
      %v2955 = vsub.f32 %v2902, %v2954
      %v2956 = vmul.f32 %v2955, %v2955
      %2958 = vrot.lane.b32.xlu0 %v2956, 96
      %v2959 = vpop.permute.xlu0 %2958
      %v2961 = vsel %vm440, %v2959, 0.0
      %2962 = vadd.xlane.f32.xlu0 %v2961
      %v2963 = vpop.xlane.xlu0 %2962
      %v2964 = vmul.f32 %v2963, %v474
      %v2965 = vadd.f32 %v2964, 1e-05
      %v2966 = vrsqrt.pop %v2965
      %v2967 = vmul.f32 %v2966, %v2965
      %v2968 = vmul.f32 %v2967, %v2966
      %v2969 = vmul.f32 0.5, %v2968
      %v2970 = vsub.f32 1.5, %v2969
      %v2971 = vmul.f32 %v2966, %v2970
      %vm2972 = vweird.f32 %v2965
      %vm2973 = vweird.f32 %v2966
      %vm2974 = vmor %vm2972, %vm2973
      %v2975 = vsel %vm2974, %v2966, %v2971
      %v2976 = vmul.f32 %v2955, %v2975
      %v2977 = vmul.f32 %v2976, %v853
      %v2978 = vadd.f32 %v2977, %v857
      %v2979 = vxor.u32 %v2978, 2147483648
      %v2980 = vmul.f32 %v2979, 1.442695
      %v2981 = vpow.pop %v2980
      %v2982 = vadd.f32 %v2981, 1.0
      %v2983 = vrcp.pop %v2982
      %v2984 = vmul.f32 %v2982, %v2983
      %v2985 = vsub.f32 1.0, %v2984
      %v2986 = vmul.f32 %v2983, %v2985
      %v2987 = vadd.f32 %v2983, %v2986
      %vm2988 = vweird.f32 %v2982
      %vm2989 = vweird.f32 %v2983
      %vm2990 = vmor %vm2988, %vm2989
      %v2991 = vsel %vm2990, %v2983, %v2987
      %v2992 = vand.u32 2147483647, %v2982
      %vm2993 = vcmp.eq.f32.partialorder %v2992, 8.507059e+37
      %v2994 = vand.u32 %v2982, 2147483648
      %v2995 = vor.u32 1.1754944e-38, %v2994
      %v2996 = vsel %vm2993, %v2995, %v2991
      %v2997 = vmul.f32 1.0, %v2996
      %v2998 = vadd.f32 %v2902, %v933
      %3000 = vrot.lane.b32.xlu0 %v2998, 64
      %v3001 = vpop.permute.xlu0 %3000
      %v3003 = vmul.f32 %v2946, %v3001
      %v3004 = vtanh.pop %v3003
      %v3005 = vsub.f32 1.0, %v2997
      %3007 = vrot.lane.b32.xlu0 %v3004, 32
      %v3008 = vpop.permute.xlu0 %3007
      %v3010 = vmul.f32 %v3005, %v3008
      %v3011 = vmul.f32 %v2997, %v2878
      %v3012 = vadd.f32 %v3010, %v3011
      %3014 = vrot.lane.b32.xlu0 %v3012, 96
      %v3015 = vpop.permute.xlu0 %3014
      %s3017 = scalar_lea.vmem %s361, 32
      %3018 = vst.msk [vmem:[%s3017] sm:$0xff] %vm440, %v3015
      %s3019 = scalar_lea.vmem %s355, 40
      %v3020 = vld [vmem:[%s3019] sm:$0xff]
      %v3022 = vsel %vm396, %v3020, 0
      %3024 = vmatpush.msra.mxu0 0.0
      %3025 = vmatpush.msra.mxu0 0.0
      %3026 = vmatpush.msra.mxu0 0.0
      %3027 = vmatpush.msra.mxu0 0.0
      %3028 = vmatpush.msra.mxu0 0.0
      %3029 = vmatpush.msra.mxu0 0.0
      %3030 = vmatpush.msra.mxu0 0.0
      %3031 = vmatpush.msra.mxu0 0.0
      %3032 = vmatpush.msra.mxu0 0.0
      %3033 = vmatpush.msra.mxu0 0.0
      %3034 = vmatpush.msra.mxu0 0.0
      %3035 = vmatpush.msra.mxu0 0.0
      %3036 = vmatpush.msra.mxu0 0.0
      %3037 = vmatpush.msra.mxu0 0.0
      %3038 = vmatpush.msra.mxu0 %v371
      %3039 = vmatpush.msra.mxu0 %v369
      %3040 = vmatmul.f32.gmra.mxu0 %v3022
      %v3041 = vpop.f32.mrf.mxu0
      %v3042 = vadd.f32 0.0, %v3041
      %3043 = vdwg.mxu0
      %3044 = vmatpush.msra.mxu0 0.0
      %3045 = vmatpush.msra.mxu0 0.0
      %3046 = vmatpush.msra.mxu0 0.0
      %3047 = vmatpush.msra.mxu0 0.0
      %3048 = vmatpush.msra.mxu0 0.0
      %3049 = vmatpush.msra.mxu0 0.0
      %3050 = vmatpush.msra.mxu0 0.0
      %3051 = vmatpush.msra.mxu0 0.0
      %3052 = vmatpush.msra.mxu0 0.0
      %3053 = vmatpush.msra.mxu0 0.0
      %3054 = vmatpush.msra.mxu0 0.0
      %3055 = vmatpush.msra.mxu0 0.0
      %3056 = vmatpush.msra.mxu0 0.0
      %3057 = vmatpush.msra.mxu0 0.0
      %3058 = vmatpush.msra.mxu0 %v372
      %3059 = vmatpush.msra.mxu0 %v370
      %3060 = vmatmul.f32.gmra.mxu0 %v3022
      %v3061 = vpop.f32.mrf.mxu0
      %v3062 = vadd.f32 0.0, %v3061
      %3063 = vdwg.mxu0
      %v3064 = vsel %vm440, %v3015, 0
      %3066 = vmatpush.msra.mxu0 0.0
      %3067 = vmatpush.msra.mxu0 0.0
      %3068 = vmatpush.msra.mxu0 0.0
      %3069 = vmatpush.msra.mxu0 0.0
      %3070 = vmatpush.msra.mxu0 0.0
      %3071 = vmatpush.msra.mxu0 0.0
      %3072 = vmatpush.msra.mxu0 0.0
      %3073 = vmatpush.msra.mxu0 0.0
      %3074 = vmatpush.msra.mxu0 0.0
      %3075 = vmatpush.msra.mxu0 0.0
      %3076 = vmatpush.msra.mxu0 0.0
      %3077 = vmatpush.msra.mxu0 0.0
      %3078 = vmatpush.msra.mxu0 %v376
      %3079 = vmatpush.msra.mxu0 %v375
      %3080 = vmatpush.msra.mxu0 %v374
      %3081 = vmatpush.msra.mxu0 %v373
      %3082 = vmatmul.f32.gmra.mxu0 %v3064
      %v3083 = vpop.f32.mrf.mxu0
      %v3084 = vadd.f32 0.0, %v3083
      %3085 = vdwg.mxu0
      %v3086 = vadd.f32 %v3042, %v3084
      %v3087 = vsel %vm440, %v3086, 0.0
      %3088 = vadd.xlane.f32.xlu0 %v3087
      %v3089 = vpop.xlane.xlu0 %3088
      %v3090 = vmul.f32 %v3089, %v474
      %v3091 = vsub.f32 %v3086, %v3090
      %v3092 = vmul.f32 %v3091, %v3091
      %v3093 = vsel %vm440, %v3092, 0.0
      %3094 = vadd.xlane.f32.xlu0 %v3093
      %v3095 = vpop.xlane.xlu0 %3094
      %v3096 = vmul.f32 %v3095, %v474
      %v3097 = vadd.f32 %v3096, 1e-05
      %v3098 = vrsqrt.pop %v3097
      %v3099 = vmul.f32 %v3098, %v3097
      %v3100 = vmul.f32 %v3099, %v3098
      %v3101 = vmul.f32 0.5, %v3100
      %v3102 = vsub.f32 1.5, %v3101
      %v3103 = vmul.f32 %v3098, %v3102
      %vm3104 = vweird.f32 %v3097
      %vm3105 = vweird.f32 %v3098
      %vm3106 = vmor %vm3104, %vm3105
      %v3107 = vsel %vm3106, %v3098, %v3103
      %v3108 = vmul.f32 %v3091, %v3107
      %v3109 = vmul.f32 %v3108, %v495
      %v3110 = vadd.f32 %v3109, %v499
      %v3111 = vxor.u32 %v3110, 2147483648
      %v3112 = vmul.f32 %v3111, 1.442695
      %v3113 = vpow.pop %v3112
      %v3114 = vadd.f32 %v3113, 1.0
      %v3115 = vrcp.pop %v3114
      %v3116 = vmul.f32 %v3114, %v3115
      %v3117 = vsub.f32 1.0, %v3116
      %v3118 = vmul.f32 %v3115, %v3117
      %v3119 = vadd.f32 %v3115, %v3118
      %vm3120 = vweird.f32 %v3114
      %vm3121 = vweird.f32 %v3115
      %vm3122 = vmor %vm3120, %vm3121
      %v3123 = vsel %vm3122, %v3115, %v3119
      %v3124 = vand.u32 2147483647, %v3114
      %vm3125 = vcmp.eq.f32.partialorder %v3124, 8.507059e+37
      %v3126 = vand.u32 %v3114, 2147483648
      %v3127 = vor.u32 1.1754944e-38, %v3126
      %v3128 = vsel %vm3125, %v3127, %v3123
      %v3129 = vmul.f32 1.0, %v3128
      %3131 = vrot.lane.b32.xlu0 %v3086, 96
      %v3132 = vpop.permute.xlu0 %3131
      %v3134 = vsel %vm440, %v3132, 0.0
      %3135 = vadd.xlane.f32.xlu0 %v3134
      %v3136 = vpop.xlane.xlu0 %3135
      %v3137 = vmul.f32 %v3136, %v474
      %v3138 = vsub.f32 %v3086, %v3137
      %v3139 = vmul.f32 %v3138, %v3138
      %3141 = vrot.lane.b32.xlu0 %v3139, 96
      %v3142 = vpop.permute.xlu0 %3141
      %v3144 = vsel %vm440, %v3142, 0.0
      %3145 = vadd.xlane.f32.xlu0 %v3144
      %v3146 = vpop.xlane.xlu0 %3145
      %v3147 = vmul.f32 %v3146, %v474
      %v3148 = vadd.f32 %v3147, 1e-05
      %v3149 = vrsqrt.pop %v3148
      %v3150 = vmul.f32 %v3149, %v3148
      %v3151 = vmul.f32 %v3150, %v3149
      %v3152 = vmul.f32 0.5, %v3151
      %v3153 = vsub.f32 1.5, %v3152
      %v3154 = vmul.f32 %v3149, %v3153
      %vm3155 = vweird.f32 %v3148
      %vm3156 = vweird.f32 %v3149
      %vm3157 = vmor %vm3155, %vm3156
      %v3158 = vsel %vm3157, %v3149, %v3154
      %v3159 = vmul.f32 %v3138, %v3158
      %v3160 = vmul.f32 %v3159, %v495
      %v3161 = vadd.f32 %v3160, %v499
      %v3162 = vxor.u32 %v3161, 2147483648
      %v3163 = vmul.f32 %v3162, 1.442695
      %v3164 = vpow.pop %v3163
      %v3165 = vadd.f32 %v3164, 1.0
      %v3166 = vrcp.pop %v3165
      %v3167 = vmul.f32 %v3165, %v3166
      %v3168 = vsub.f32 1.0, %v3167
      %v3169 = vmul.f32 %v3166, %v3168
      %v3170 = vadd.f32 %v3166, %v3169
      %vm3171 = vweird.f32 %v3165
      %vm3172 = vweird.f32 %v3166
      %vm3173 = vmor %vm3171, %vm3172
      %v3174 = vsel %vm3173, %v3166, %v3170
      %v3175 = vand.u32 2147483647, %v3165
      %vm3176 = vcmp.eq.f32.partialorder %v3175, 8.507059e+37
      %v3177 = vand.u32 %v3165, 2147483648
      %v3178 = vor.u32 1.1754944e-38, %v3177
      %v3179 = vsel %vm3176, %v3178, %v3174
      %v3180 = vmul.f32 1.0, %v3179
      %3181 = vrot.lane.b32.xlu0 %v3086, 64
      %v3182 = vpop.permute.xlu0 %3181
      %v3184 = vsel %vm440, %v3182, 0.0
      %3185 = vadd.xlane.f32.xlu0 %v3184
      %v3186 = vpop.xlane.xlu0 %3185
      %v3187 = vmul.f32 %v3186, %v474
      %v3188 = vsub.f32 %v3086, %v3187
      %v3189 = vmul.f32 %v3188, %v3188
      %3191 = vrot.lane.b32.xlu0 %v3189, 64
      %v3192 = vpop.permute.xlu0 %3191
      %v3194 = vsel %vm440, %v3192, 0.0
      %3195 = vadd.xlane.f32.xlu0 %v3194
      %v3196 = vpop.xlane.xlu0 %3195
      %v3197 = vmul.f32 %v3196, %v474
      %v3198 = vadd.f32 %v3197, 1e-05
      %v3199 = vrsqrt.pop %v3198
      %v3200 = vmul.f32 %v3199, %v3198
      %v3201 = vmul.f32 %v3200, %v3199
      %v3202 = vmul.f32 0.5, %v3201
      %v3203 = vsub.f32 1.5, %v3202
      %v3204 = vmul.f32 %v3199, %v3203
      %vm3205 = vweird.f32 %v3198
      %vm3206 = vweird.f32 %v3199
      %vm3207 = vmor %vm3205, %vm3206
      %v3208 = vsel %vm3207, %v3199, %v3204
      %v3209 = vmul.f32 %v3188, %v3208
      %v3210 = vmul.f32 %v3209, %v495
      %v3211 = vadd.f32 %v3210, %v499
      %v3212 = vxor.u32 %v3211, 2147483648
      %v3213 = vmul.f32 %v3212, 1.442695
      %v3214 = vpow.pop %v3213
      %v3215 = vadd.f32 %v3214, 1.0
      %v3216 = vrcp.pop %v3215
      %v3217 = vmul.f32 %v3215, %v3216
      %v3218 = vsub.f32 1.0, %v3217
      %v3219 = vmul.f32 %v3216, %v3218
      %v3220 = vadd.f32 %v3216, %v3219
      %vm3221 = vweird.f32 %v3215
      %vm3222 = vweird.f32 %v3216
      %vm3223 = vmor %vm3221, %vm3222
      %v3224 = vsel %vm3223, %v3216, %v3220
      %v3225 = vand.u32 2147483647, %v3215
      %vm3226 = vcmp.eq.f32.partialorder %v3225, 8.507059e+37
      %v3227 = vand.u32 %v3215, 2147483648
      %v3228 = vor.u32 1.1754944e-38, %v3227
      %v3229 = vsel %vm3226, %v3228, %v3224
      %v3230 = vmul.f32 1.0, %v3229
      %v3231 = vadd.f32 %v3084, %v625
      %3233 = vrot.lane.b32.xlu0 %v3231, 32
      %v3234 = vpop.permute.xlu0 %3233
      %v3236 = vmul.f32 %v3129, %v3234
      %3238 = vrot.lane.b32.xlu0 %v3236, 96
      %v3239 = vpop.permute.xlu0 %3238
      %v3241 = vadd.f32 %v3042, %v3239
      %v3242 = vtanh.pop %v3241
      %3244 = vrot.lane.b32.xlu0 %v3062, 64
      %v3245 = vpop.permute.xlu0 %3244
      %v3247 = vmul.f32 %v3230, %v3245
      %3249 = vrot.lane.b32.xlu0 %v3247, 32
      %v3250 = vpop.permute.xlu0 %3249
      %v3252 = vadd.f32 %v3242, %v3250
      %v3253 = vsub.f32 1.0, %v3180
      %v3254 = vmul.f32 %v3253, %v3012
      %3256 = vrot.lane.b32.xlu0 %v3252, 64
      %v3257 = vpop.permute.xlu0 %3256
      %v3259 = vmul.f32 %v3180, %v3257
      %v3260 = vadd.f32 %v3254, %v3259
      %3262 = vrot.lane.b32.xlu0 %v3260, 96
      %v3263 = vpop.permute.xlu0 %3262
      %v3264 = vsel %vm440, %v3263, 0
      %3266 = vmatpush.msra.mxu0 0.0
      %3267 = vmatpush.msra.mxu0 0.0
      %3268 = vmatpush.msra.mxu0 0.0
      %3269 = vmatpush.msra.mxu0 0.0
      %3270 = vmatpush.msra.mxu0 0.0
      %3271 = vmatpush.msra.mxu0 0.0
      %3272 = vmatpush.msra.mxu0 0.0
      %3273 = vmatpush.msra.mxu0 0.0
      %3274 = vmatpush.msra.mxu0 0.0
      %3275 = vmatpush.msra.mxu0 0.0
      %3276 = vmatpush.msra.mxu0 0.0
      %3277 = vmatpush.msra.mxu0 0.0
      %3278 = vmatpush.msra.mxu0 %v383
      %3279 = vmatpush.msra.mxu0 %v382
      %3280 = vmatpush.msra.mxu0 %v381
      %3281 = vmatpush.msra.mxu0 %v380
      %3282 = vmatmul.f32.gmra.mxu0 %v3264
      %v3283 = vpop.f32.mrf.mxu0
      %v3284 = vadd.f32 0.0, %v3283
      %3285 = vdwg.mxu0
      %v3286 = vsel %vm440, %v3284, 0.0
      %3287 = vadd.xlane.f32.xlu0 %v3286
      %v3288 = vpop.xlane.xlu0 %3287
      %v3289 = vmul.f32 %v3288, %v474
      %v3290 = vsub.f32 %v3284, %v3289
      %v3291 = vmul.f32 %v3290, %v3290
      %v3292 = vsel %vm440, %v3291, 0.0
      %3293 = vadd.xlane.f32.xlu0 %v3292
      %v3294 = vpop.xlane.xlu0 %3293
      %v3295 = vmul.f32 %v3294, %v474
      %v3296 = vadd.f32 %v3295, 1e-05
      %v3297 = vrsqrt.pop %v3296
      %v3298 = vmul.f32 %v3297, %v3296
      %v3299 = vmul.f32 %v3298, %v3297
      %v3300 = vmul.f32 0.5, %v3299
      %v3301 = vsub.f32 1.5, %v3300
      %v3302 = vmul.f32 %v3297, %v3301
      %vm3303 = vweird.f32 %v3296
      %vm3304 = vweird.f32 %v3297
      %vm3305 = vmor %vm3303, %vm3304
      %v3306 = vsel %vm3305, %v3297, %v3302
      %v3307 = vmul.f32 %v3290, %v3306
      %v3308 = vmul.f32 %v3307, %v708
      %v3309 = vadd.f32 %v3308, %v712
      %v3310 = vxor.u32 %v3309, 2147483648
      %v3311 = vmul.f32 %v3310, 1.442695
      %v3312 = vpow.pop %v3311
      %v3313 = vadd.f32 %v3312, 1.0
      %v3314 = vrcp.pop %v3313
      %v3315 = vmul.f32 %v3313, %v3314
      %v3316 = vsub.f32 1.0, %v3315
      %v3317 = vmul.f32 %v3314, %v3316
      %v3318 = vadd.f32 %v3314, %v3317
      %vm3319 = vweird.f32 %v3313
      %vm3320 = vweird.f32 %v3314
      %vm3321 = vmor %vm3319, %vm3320
      %v3322 = vsel %vm3321, %v3314, %v3318
      %v3323 = vand.u32 2147483647, %v3313
      %vm3324 = vcmp.eq.f32.partialorder %v3323, 8.507059e+37
      %v3325 = vand.u32 %v3313, 2147483648
      %v3326 = vor.u32 1.1754944e-38, %v3325
      %v3327 = vsel %vm3324, %v3326, %v3322
      %v3328 = vmul.f32 1.0, %v3327
      %3330 = vrot.lane.b32.xlu0 %v3284, 96
      %v3331 = vpop.permute.xlu0 %3330
      %v3333 = vsel %vm440, %v3331, 0.0
      %3334 = vadd.xlane.f32.xlu0 %v3333
      %v3335 = vpop.xlane.xlu0 %3334
      %v3336 = vmul.f32 %v3335, %v474
      %v3337 = vsub.f32 %v3284, %v3336
      %v3338 = vmul.f32 %v3337, %v3337
      %3340 = vrot.lane.b32.xlu0 %v3338, 96
      %v3341 = vpop.permute.xlu0 %3340
      %v3343 = vsel %vm440, %v3341, 0.0
      %3344 = vadd.xlane.f32.xlu0 %v3343
      %v3345 = vpop.xlane.xlu0 %3344
      %v3346 = vmul.f32 %v3345, %v474
      %v3347 = vadd.f32 %v3346, 1e-05
      %v3348 = vrsqrt.pop %v3347
      %v3349 = vmul.f32 %v3348, %v3347
      %v3350 = vmul.f32 %v3349, %v3348
      %v3351 = vmul.f32 0.5, %v3350
      %v3352 = vsub.f32 1.5, %v3351
      %v3353 = vmul.f32 %v3348, %v3352
      %vm3354 = vweird.f32 %v3347
      %vm3355 = vweird.f32 %v3348
      %vm3356 = vmor %vm3354, %vm3355
      %v3357 = vsel %vm3356, %v3348, %v3353
      %v3358 = vmul.f32 %v3337, %v3357
      %v3359 = vmul.f32 %v3358, %v708
      %v3360 = vadd.f32 %v3359, %v712
      %v3361 = vxor.u32 %v3360, 2147483648
      %v3362 = vmul.f32 %v3361, 1.442695
      %v3363 = vpow.pop %v3362
      %v3364 = vadd.f32 %v3363, 1.0
      %v3365 = vrcp.pop %v3364
      %v3366 = vmul.f32 %v3364, %v3365
      %v3367 = vsub.f32 1.0, %v3366
      %v3368 = vmul.f32 %v3365, %v3367
      %v3369 = vadd.f32 %v3365, %v3368
      %vm3370 = vweird.f32 %v3364
      %vm3371 = vweird.f32 %v3365
      %vm3372 = vmor %vm3370, %vm3371
      %v3373 = vsel %vm3372, %v3365, %v3369
      %v3374 = vand.u32 2147483647, %v3364
      %vm3375 = vcmp.eq.f32.partialorder %v3374, 8.507059e+37
      %v3376 = vand.u32 %v3364, 2147483648
      %v3377 = vor.u32 1.1754944e-38, %v3376
      %v3378 = vsel %vm3375, %v3377, %v3373
      %v3379 = vmul.f32 1.0, %v3378
      %v3380 = vadd.f32 %v3284, %v788
      %3382 = vrot.lane.b32.xlu0 %v3380, 64
      %v3383 = vpop.permute.xlu0 %3382
      %v3385 = vmul.f32 %v3328, %v3383
      %v3386 = vtanh.pop %v3385
      %v3387 = vsub.f32 1.0, %v3379
      %3389 = vrot.lane.b32.xlu0 %v3386, 32
      %v3390 = vpop.permute.xlu0 %3389
      %v3392 = vmul.f32 %v3387, %v3390
      %v3393 = vmul.f32 %v3379, %v3260
      %v3394 = vadd.f32 %v3392, %v3393
      %3396 = vrot.lane.b32.xlu0 %v3394, 96
      %v3397 = vpop.permute.xlu0 %3396
      %v3398 = vsel %vm440, %v3397, 0
      %3400 = vmatpush.msra.mxu0 0.0
      %3401 = vmatpush.msra.mxu0 0.0
      %3402 = vmatpush.msra.mxu0 0.0
      %3403 = vmatpush.msra.mxu0 0.0
      %3404 = vmatpush.msra.mxu0 0.0
      %3405 = vmatpush.msra.mxu0 0.0
      %3406 = vmatpush.msra.mxu0 0.0
      %3407 = vmatpush.msra.mxu0 0.0
      %3408 = vmatpush.msra.mxu0 0.0
      %3409 = vmatpush.msra.mxu0 0.0
      %3410 = vmatpush.msra.mxu0 0.0
      %3411 = vmatpush.msra.mxu0 0.0
      %3412 = vmatpush.msra.mxu0 %v387
      %3413 = vmatpush.msra.mxu0 %v386
      %3414 = vmatpush.msra.mxu0 %v385
      %3415 = vmatpush.msra.mxu0 %v384
      %3416 = vmatmul.f32.gmra.mxu0 %v3398
      %v3417 = vpop.f32.mrf.mxu0
      %v3418 = vadd.f32 0.0, %v3417
      %3419 = vdwg.mxu0
      %v3420 = vsel %vm440, %v3418, 0.0
      %3421 = vadd.xlane.f32.xlu0 %v3420
      %v3422 = vpop.xlane.xlu0 %3421
      %v3423 = vmul.f32 %v3422, %v474
      %v3424 = vsub.f32 %v3418, %v3423
      %v3425 = vmul.f32 %v3424, %v3424
      %v3426 = vsel %vm440, %v3425, 0.0
      %3427 = vadd.xlane.f32.xlu0 %v3426
      %v3428 = vpop.xlane.xlu0 %3427
      %v3429 = vmul.f32 %v3428, %v474
      %v3430 = vadd.f32 %v3429, 1e-05
      %v3431 = vrsqrt.pop %v3430
      %v3432 = vmul.f32 %v3431, %v3430
      %v3433 = vmul.f32 %v3432, %v3431
      %v3434 = vmul.f32 0.5, %v3433
      %v3435 = vsub.f32 1.5, %v3434
      %v3436 = vmul.f32 %v3431, %v3435
      %vm3437 = vweird.f32 %v3430
      %vm3438 = vweird.f32 %v3431
      %vm3439 = vmor %vm3437, %vm3438
      %v3440 = vsel %vm3439, %v3431, %v3436
      %v3441 = vmul.f32 %v3424, %v3440
      %v3442 = vmul.f32 %v3441, %v853
      %v3443 = vadd.f32 %v3442, %v857
      %v3444 = vxor.u32 %v3443, 2147483648
      %v3445 = vmul.f32 %v3444, 1.442695
      %v3446 = vpow.pop %v3445
      %v3447 = vadd.f32 %v3446, 1.0
      %v3448 = vrcp.pop %v3447
      %v3449 = vmul.f32 %v3447, %v3448
      %v3450 = vsub.f32 1.0, %v3449
      %v3451 = vmul.f32 %v3448, %v3450
      %v3452 = vadd.f32 %v3448, %v3451
      %vm3453 = vweird.f32 %v3447
      %vm3454 = vweird.f32 %v3448
      %vm3455 = vmor %vm3453, %vm3454
      %v3456 = vsel %vm3455, %v3448, %v3452
      %v3457 = vand.u32 2147483647, %v3447
      %vm3458 = vcmp.eq.f32.partialorder %v3457, 8.507059e+37
      %v3459 = vand.u32 %v3447, 2147483648
      %v3460 = vor.u32 1.1754944e-38, %v3459
      %v3461 = vsel %vm3458, %v3460, %v3456
      %v3462 = vmul.f32 1.0, %v3461
      %3464 = vrot.lane.b32.xlu0 %v3418, 96
      %v3465 = vpop.permute.xlu0 %3464
      %v3467 = vsel %vm440, %v3465, 0.0
      %3468 = vadd.xlane.f32.xlu0 %v3467
      %v3469 = vpop.xlane.xlu0 %3468
      %v3470 = vmul.f32 %v3469, %v474
      %v3471 = vsub.f32 %v3418, %v3470
      %v3472 = vmul.f32 %v3471, %v3471
      %3474 = vrot.lane.b32.xlu0 %v3472, 96
      %v3475 = vpop.permute.xlu0 %3474
      %v3477 = vsel %vm440, %v3475, 0.0
      %3478 = vadd.xlane.f32.xlu0 %v3477
      %v3479 = vpop.xlane.xlu0 %3478
      %v3480 = vmul.f32 %v3479, %v474
      %v3481 = vadd.f32 %v3480, 1e-05
      %v3482 = vrsqrt.pop %v3481
      %v3483 = vmul.f32 %v3482, %v3481
      %v3484 = vmul.f32 %v3483, %v3482
      %v3485 = vmul.f32 0.5, %v3484
      %v3486 = vsub.f32 1.5, %v3485
      %v3487 = vmul.f32 %v3482, %v3486
      %vm3488 = vweird.f32 %v3481
      %vm3489 = vweird.f32 %v3482
      %vm3490 = vmor %vm3488, %vm3489
      %v3491 = vsel %vm3490, %v3482, %v3487
      %v3492 = vmul.f32 %v3471, %v3491
      %v3493 = vmul.f32 %v3492, %v853
      %v3494 = vadd.f32 %v3493, %v857
      %v3495 = vxor.u32 %v3494, 2147483648
      %v3496 = vmul.f32 %v3495, 1.442695
      %v3497 = vpow.pop %v3496
      %v3498 = vadd.f32 %v3497, 1.0
      %v3499 = vrcp.pop %v3498
      %v3500 = vmul.f32 %v3498, %v3499
      %v3501 = vsub.f32 1.0, %v3500
      %v3502 = vmul.f32 %v3499, %v3501
      %v3503 = vadd.f32 %v3499, %v3502
      %vm3504 = vweird.f32 %v3498
      %vm3505 = vweird.f32 %v3499
      %vm3506 = vmor %vm3504, %vm3505
      %v3507 = vsel %vm3506, %v3499, %v3503
      %v3508 = vand.u32 2147483647, %v3498
      %vm3509 = vcmp.eq.f32.partialorder %v3508, 8.507059e+37
      %v3510 = vand.u32 %v3498, 2147483648
      %v3511 = vor.u32 1.1754944e-38, %v3510
      %v3512 = vsel %vm3509, %v3511, %v3507
      %v3513 = vmul.f32 1.0, %v3512
      %v3514 = vadd.f32 %v3418, %v933
      %3516 = vrot.lane.b32.xlu0 %v3514, 64
      %v3517 = vpop.permute.xlu0 %3516
      %v3519 = vmul.f32 %v3462, %v3517
      %v3520 = vtanh.pop %v3519
      %v3521 = vsub.f32 1.0, %v3513
      %3523 = vrot.lane.b32.xlu0 %v3520, 32
      %v3524 = vpop.permute.xlu0 %3523
      %v3526 = vmul.f32 %v3521, %v3524
      %v3527 = vmul.f32 %v3513, %v3394
      %v3528 = vadd.f32 %v3526, %v3527
      %3530 = vrot.lane.b32.xlu0 %v3528, 96
      %v3531 = vpop.permute.xlu0 %3530
      %s3533 = scalar_lea.vmem %s361, 40
      %3534 = vst.msk [vmem:[%s3533] sm:$0xff] %vm440, %v3531
      %s3535 = scalar_lea.vmem %s355, 48
      %v3536 = vld [vmem:[%s3535] sm:$0xff]
      %v3538 = vsel %vm396, %v3536, 0
      %3540 = vmatpush.msra.mxu0 0.0
      %3541 = vmatpush.msra.mxu0 0.0
      %3542 = vmatpush.msra.mxu0 0.0
      %3543 = vmatpush.msra.mxu0 0.0
      %3544 = vmatpush.msra.mxu0 0.0
      %3545 = vmatpush.msra.mxu0 0.0
      %3546 = vmatpush.msra.mxu0 0.0
      %3547 = vmatpush.msra.mxu0 0.0
      %3548 = vmatpush.msra.mxu0 0.0
      %3549 = vmatpush.msra.mxu0 0.0
      %3550 = vmatpush.msra.mxu0 0.0
      %3551 = vmatpush.msra.mxu0 0.0
      %3552 = vmatpush.msra.mxu0 0.0
      %3553 = vmatpush.msra.mxu0 0.0
      %3554 = vmatpush.msra.mxu0 %v371
      %3555 = vmatpush.msra.mxu0 %v369
      %3556 = vmatmul.f32.gmra.mxu0 %v3538
      %v3557 = vpop.f32.mrf.mxu0
      %v3558 = vadd.f32 0.0, %v3557
      %3559 = vdwg.mxu0
      %3560 = vmatpush.msra.mxu0 0.0
      %3561 = vmatpush.msra.mxu0 0.0
      %3562 = vmatpush.msra.mxu0 0.0
      %3563 = vmatpush.msra.mxu0 0.0
      %3564 = vmatpush.msra.mxu0 0.0
      %3565 = vmatpush.msra.mxu0 0.0
      %3566 = vmatpush.msra.mxu0 0.0
      %3567 = vmatpush.msra.mxu0 0.0
      %3568 = vmatpush.msra.mxu0 0.0
      %3569 = vmatpush.msra.mxu0 0.0
      %3570 = vmatpush.msra.mxu0 0.0
      %3571 = vmatpush.msra.mxu0 0.0
      %3572 = vmatpush.msra.mxu0 0.0
      %3573 = vmatpush.msra.mxu0 0.0
      %3574 = vmatpush.msra.mxu0 %v372
      %3575 = vmatpush.msra.mxu0 %v370
      %3576 = vmatmul.f32.gmra.mxu0 %v3538
      %v3577 = vpop.f32.mrf.mxu0
      %v3578 = vadd.f32 0.0, %v3577
      %3579 = vdwg.mxu0
      %v3580 = vsel %vm440, %v3531, 0
      %3582 = vmatpush.msra.mxu0 0.0
      %3583 = vmatpush.msra.mxu0 0.0
      %3584 = vmatpush.msra.mxu0 0.0
      %3585 = vmatpush.msra.mxu0 0.0
      %3586 = vmatpush.msra.mxu0 0.0
      %3587 = vmatpush.msra.mxu0 0.0
      %3588 = vmatpush.msra.mxu0 0.0
      %3589 = vmatpush.msra.mxu0 0.0
      %3590 = vmatpush.msra.mxu0 0.0
      %3591 = vmatpush.msra.mxu0 0.0
      %3592 = vmatpush.msra.mxu0 0.0
      %3593 = vmatpush.msra.mxu0 0.0
      %3594 = vmatpush.msra.mxu0 %v376
      %3595 = vmatpush.msra.mxu0 %v375
      %3596 = vmatpush.msra.mxu0 %v374
      %3597 = vmatpush.msra.mxu0 %v373
      %3598 = vmatmul.f32.gmra.mxu0 %v3580
      %v3599 = vpop.f32.mrf.mxu0
      %v3600 = vadd.f32 0.0, %v3599
      %3601 = vdwg.mxu0
      %v3602 = vadd.f32 %v3558, %v3600
      %v3603 = vsel %vm440, %v3602, 0.0
      %3604 = vadd.xlane.f32.xlu0 %v3603
      %v3605 = vpop.xlane.xlu0 %3604
      %v3606 = vmul.f32 %v3605, %v474
      %v3607 = vsub.f32 %v3602, %v3606
      %v3608 = vmul.f32 %v3607, %v3607
      %v3609 = vsel %vm440, %v3608, 0.0
      %3610 = vadd.xlane.f32.xlu0 %v3609
      %v3611 = vpop.xlane.xlu0 %3610
      %v3612 = vmul.f32 %v3611, %v474
      %v3613 = vadd.f32 %v3612, 1e-05
      %v3614 = vrsqrt.pop %v3613
      %v3615 = vmul.f32 %v3614, %v3613
      %v3616 = vmul.f32 %v3615, %v3614
      %v3617 = vmul.f32 0.5, %v3616
      %v3618 = vsub.f32 1.5, %v3617
      %v3619 = vmul.f32 %v3614, %v3618
      %vm3620 = vweird.f32 %v3613
      %vm3621 = vweird.f32 %v3614
      %vm3622 = vmor %vm3620, %vm3621
      %v3623 = vsel %vm3622, %v3614, %v3619
      %v3624 = vmul.f32 %v3607, %v3623
      %v3625 = vmul.f32 %v3624, %v495
      %v3626 = vadd.f32 %v3625, %v499
      %v3627 = vxor.u32 %v3626, 2147483648
      %v3628 = vmul.f32 %v3627, 1.442695
      %v3629 = vpow.pop %v3628
      %v3630 = vadd.f32 %v3629, 1.0
      %v3631 = vrcp.pop %v3630
      %v3632 = vmul.f32 %v3630, %v3631
      %v3633 = vsub.f32 1.0, %v3632
      %v3634 = vmul.f32 %v3631, %v3633
      %v3635 = vadd.f32 %v3631, %v3634
      %vm3636 = vweird.f32 %v3630
      %vm3637 = vweird.f32 %v3631
      %vm3638 = vmor %vm3636, %vm3637
      %v3639 = vsel %vm3638, %v3631, %v3635
      %v3640 = vand.u32 2147483647, %v3630
      %vm3641 = vcmp.eq.f32.partialorder %v3640, 8.507059e+37
      %v3642 = vand.u32 %v3630, 2147483648
      %v3643 = vor.u32 1.1754944e-38, %v3642
      %v3644 = vsel %vm3641, %v3643, %v3639
      %v3645 = vmul.f32 1.0, %v3644
      %3647 = vrot.lane.b32.xlu0 %v3602, 96
      %v3648 = vpop.permute.xlu0 %3647
      %v3650 = vsel %vm440, %v3648, 0.0
      %3651 = vadd.xlane.f32.xlu0 %v3650
      %v3652 = vpop.xlane.xlu0 %3651
      %v3653 = vmul.f32 %v3652, %v474
      %v3654 = vsub.f32 %v3602, %v3653
      %v3655 = vmul.f32 %v3654, %v3654
      %3657 = vrot.lane.b32.xlu0 %v3655, 96
      %v3658 = vpop.permute.xlu0 %3657
      %v3660 = vsel %vm440, %v3658, 0.0
      %3661 = vadd.xlane.f32.xlu0 %v3660
      %v3662 = vpop.xlane.xlu0 %3661
      %v3663 = vmul.f32 %v3662, %v474
      %v3664 = vadd.f32 %v3663, 1e-05
      %v3665 = vrsqrt.pop %v3664
      %v3666 = vmul.f32 %v3665, %v3664
      %v3667 = vmul.f32 %v3666, %v3665
      %v3668 = vmul.f32 0.5, %v3667
      %v3669 = vsub.f32 1.5, %v3668
      %v3670 = vmul.f32 %v3665, %v3669
      %vm3671 = vweird.f32 %v3664
      %vm3672 = vweird.f32 %v3665
      %vm3673 = vmor %vm3671, %vm3672
      %v3674 = vsel %vm3673, %v3665, %v3670
      %v3675 = vmul.f32 %v3654, %v3674
      %v3676 = vmul.f32 %v3675, %v495
      %v3677 = vadd.f32 %v3676, %v499
      %v3678 = vxor.u32 %v3677, 2147483648
      %v3679 = vmul.f32 %v3678, 1.442695
      %v3680 = vpow.pop %v3679
      %v3681 = vadd.f32 %v3680, 1.0
      %v3682 = vrcp.pop %v3681
      %v3683 = vmul.f32 %v3681, %v3682
      %v3684 = vsub.f32 1.0, %v3683
      %v3685 = vmul.f32 %v3682, %v3684
      %v3686 = vadd.f32 %v3682, %v3685
      %vm3687 = vweird.f32 %v3681
      %vm3688 = vweird.f32 %v3682
      %vm3689 = vmor %vm3687, %vm3688
      %v3690 = vsel %vm3689, %v3682, %v3686
      %v3691 = vand.u32 2147483647, %v3681
      %vm3692 = vcmp.eq.f32.partialorder %v3691, 8.507059e+37
      %v3693 = vand.u32 %v3681, 2147483648
      %v3694 = vor.u32 1.1754944e-38, %v3693
      %v3695 = vsel %vm3692, %v3694, %v3690
      %v3696 = vmul.f32 1.0, %v3695
      %3697 = vrot.lane.b32.xlu0 %v3602, 64
      %v3698 = vpop.permute.xlu0 %3697
      %v3700 = vsel %vm440, %v3698, 0.0
      %3701 = vadd.xlane.f32.xlu0 %v3700
      %v3702 = vpop.xlane.xlu0 %3701
      %v3703 = vmul.f32 %v3702, %v474
      %v3704 = vsub.f32 %v3602, %v3703
      %v3705 = vmul.f32 %v3704, %v3704
      %3707 = vrot.lane.b32.xlu0 %v3705, 64
      %v3708 = vpop.permute.xlu0 %3707
      %v3710 = vsel %vm440, %v3708, 0.0
      %3711 = vadd.xlane.f32.xlu0 %v3710
      %v3712 = vpop.xlane.xlu0 %3711
      %v3713 = vmul.f32 %v3712, %v474
      %v3714 = vadd.f32 %v3713, 1e-05
      %v3715 = vrsqrt.pop %v3714
      %v3716 = vmul.f32 %v3715, %v3714
      %v3717 = vmul.f32 %v3716, %v3715
      %v3718 = vmul.f32 0.5, %v3717
      %v3719 = vsub.f32 1.5, %v3718
      %v3720 = vmul.f32 %v3715, %v3719
      %vm3721 = vweird.f32 %v3714
      %vm3722 = vweird.f32 %v3715
      %vm3723 = vmor %vm3721, %vm3722
      %v3724 = vsel %vm3723, %v3715, %v3720
      %v3725 = vmul.f32 %v3704, %v3724
      %v3726 = vmul.f32 %v3725, %v495
      %v3727 = vadd.f32 %v3726, %v499
      %v3728 = vxor.u32 %v3727, 2147483648
      %v3729 = vmul.f32 %v3728, 1.442695
      %v3730 = vpow.pop %v3729
      %v3731 = vadd.f32 %v3730, 1.0
      %v3732 = vrcp.pop %v3731
      %v3733 = vmul.f32 %v3731, %v3732
      %v3734 = vsub.f32 1.0, %v3733
      %v3735 = vmul.f32 %v3732, %v3734
      %v3736 = vadd.f32 %v3732, %v3735
      %vm3737 = vweird.f32 %v3731
      %vm3738 = vweird.f32 %v3732
      %vm3739 = vmor %vm3737, %vm3738
      %v3740 = vsel %vm3739, %v3732, %v3736
      %v3741 = vand.u32 2147483647, %v3731
      %vm3742 = vcmp.eq.f32.partialorder %v3741, 8.507059e+37
      %v3743 = vand.u32 %v3731, 2147483648
      %v3744 = vor.u32 1.1754944e-38, %v3743
      %v3745 = vsel %vm3742, %v3744, %v3740
      %v3746 = vmul.f32 1.0, %v3745
      %v3747 = vadd.f32 %v3600, %v625
      %3749 = vrot.lane.b32.xlu0 %v3747, 32
      %v3750 = vpop.permute.xlu0 %3749
      %v3752 = vmul.f32 %v3645, %v3750
      %3754 = vrot.lane.b32.xlu0 %v3752, 96
      %v3755 = vpop.permute.xlu0 %3754
      %v3757 = vadd.f32 %v3558, %v3755
      %v3758 = vtanh.pop %v3757
      %3760 = vrot.lane.b32.xlu0 %v3578, 64
      %v3761 = vpop.permute.xlu0 %3760
      %v3763 = vmul.f32 %v3746, %v3761
      %3765 = vrot.lane.b32.xlu0 %v3763, 32
      %v3766 = vpop.permute.xlu0 %3765
      %v3768 = vadd.f32 %v3758, %v3766
      %v3769 = vsub.f32 1.0, %v3696
      %v3770 = vmul.f32 %v3769, %v3528
      %3772 = vrot.lane.b32.xlu0 %v3768, 64
      %v3773 = vpop.permute.xlu0 %3772
      %v3775 = vmul.f32 %v3696, %v3773
      %v3776 = vadd.f32 %v3770, %v3775
      %3778 = vrot.lane.b32.xlu0 %v3776, 96
      %v3779 = vpop.permute.xlu0 %3778
      %v3780 = vsel %vm440, %v3779, 0
      %3782 = vmatpush.msra.mxu0 0.0
      %3783 = vmatpush.msra.mxu0 0.0
      %3784 = vmatpush.msra.mxu0 0.0
      %3785 = vmatpush.msra.mxu0 0.0
      %3786 = vmatpush.msra.mxu0 0.0
      %3787 = vmatpush.msra.mxu0 0.0
      %3788 = vmatpush.msra.mxu0 0.0
      %3789 = vmatpush.msra.mxu0 0.0
      %3790 = vmatpush.msra.mxu0 0.0
      %3791 = vmatpush.msra.mxu0 0.0
      %3792 = vmatpush.msra.mxu0 0.0
      %3793 = vmatpush.msra.mxu0 0.0
      %3794 = vmatpush.msra.mxu0 %v383
      %3795 = vmatpush.msra.mxu0 %v382
      %3796 = vmatpush.msra.mxu0 %v381
      %3797 = vmatpush.msra.mxu0 %v380
      %3798 = vmatmul.f32.gmra.mxu0 %v3780
      %v3799 = vpop.f32.mrf.mxu0
      %v3800 = vadd.f32 0.0, %v3799
      %3801 = vdwg.mxu0
      %v3802 = vsel %vm440, %v3800, 0.0
      %3803 = vadd.xlane.f32.xlu0 %v3802
      %v3804 = vpop.xlane.xlu0 %3803
      %v3805 = vmul.f32 %v3804, %v474
      %v3806 = vsub.f32 %v3800, %v3805
      %v3807 = vmul.f32 %v3806, %v3806
      %v3808 = vsel %vm440, %v3807, 0.0
      %3809 = vadd.xlane.f32.xlu0 %v3808
      %v3810 = vpop.xlane.xlu0 %3809
      %v3811 = vmul.f32 %v3810, %v474
      %v3812 = vadd.f32 %v3811, 1e-05
      %v3813 = vrsqrt.pop %v3812
      %v3814 = vmul.f32 %v3813, %v3812
      %v3815 = vmul.f32 %v3814, %v3813
      %v3816 = vmul.f32 0.5, %v3815
      %v3817 = vsub.f32 1.5, %v3816
      %v3818 = vmul.f32 %v3813, %v3817
      %vm3819 = vweird.f32 %v3812
      %vm3820 = vweird.f32 %v3813
      %vm3821 = vmor %vm3819, %vm3820
      %v3822 = vsel %vm3821, %v3813, %v3818
      %v3823 = vmul.f32 %v3806, %v3822
      %v3824 = vmul.f32 %v3823, %v708
      %v3825 = vadd.f32 %v3824, %v712
      %v3826 = vxor.u32 %v3825, 2147483648
      %v3827 = vmul.f32 %v3826, 1.442695
      %v3828 = vpow.pop %v3827
      %v3829 = vadd.f32 %v3828, 1.0
      %v3830 = vrcp.pop %v3829
      %v3831 = vmul.f32 %v3829, %v3830
      %v3832 = vsub.f32 1.0, %v3831
      %v3833 = vmul.f32 %v3830, %v3832
      %v3834 = vadd.f32 %v3830, %v3833
      %vm3835 = vweird.f32 %v3829
      %vm3836 = vweird.f32 %v3830
      %vm3837 = vmor %vm3835, %vm3836
      %v3838 = vsel %vm3837, %v3830, %v3834
      %v3839 = vand.u32 2147483647, %v3829
      %vm3840 = vcmp.eq.f32.partialorder %v3839, 8.507059e+37
      %v3841 = vand.u32 %v3829, 2147483648
      %v3842 = vor.u32 1.1754944e-38, %v3841
      %v3843 = vsel %vm3840, %v3842, %v3838
      %v3844 = vmul.f32 1.0, %v3843
      %3846 = vrot.lane.b32.xlu0 %v3800, 96
      %v3847 = vpop.permute.xlu0 %3846
      %v3849 = vsel %vm440, %v3847, 0.0
      %3850 = vadd.xlane.f32.xlu0 %v3849
      %v3851 = vpop.xlane.xlu0 %3850
      %v3852 = vmul.f32 %v3851, %v474
      %v3853 = vsub.f32 %v3800, %v3852
      %v3854 = vmul.f32 %v3853, %v3853
      %3856 = vrot.lane.b32.xlu0 %v3854, 96
      %v3857 = vpop.permute.xlu0 %3856
      %v3859 = vsel %vm440, %v3857, 0.0
      %3860 = vadd.xlane.f32.xlu0 %v3859
      %v3861 = vpop.xlane.xlu0 %3860
      %v3862 = vmul.f32 %v3861, %v474
      %v3863 = vadd.f32 %v3862, 1e-05
      %v3864 = vrsqrt.pop %v3863
      %v3865 = vmul.f32 %v3864, %v3863
      %v3866 = vmul.f32 %v3865, %v3864
      %v3867 = vmul.f32 0.5, %v3866
      %v3868 = vsub.f32 1.5, %v3867
      %v3869 = vmul.f32 %v3864, %v3868
      %vm3870 = vweird.f32 %v3863
      %vm3871 = vweird.f32 %v3864
      %vm3872 = vmor %vm3870, %vm3871
      %v3873 = vsel %vm3872, %v3864, %v3869
      %v3874 = vmul.f32 %v3853, %v3873
      %v3875 = vmul.f32 %v3874, %v708
      %v3876 = vadd.f32 %v3875, %v712
      %v3877 = vxor.u32 %v3876, 2147483648
      %v3878 = vmul.f32 %v3877, 1.442695
      %v3879 = vpow.pop %v3878
      %v3880 = vadd.f32 %v3879, 1.0
      %v3881 = vrcp.pop %v3880
      %v3882 = vmul.f32 %v3880, %v3881
      %v3883 = vsub.f32 1.0, %v3882
      %v3884 = vmul.f32 %v3881, %v3883
      %v3885 = vadd.f32 %v3881, %v3884
      %vm3886 = vweird.f32 %v3880
      %vm3887 = vweird.f32 %v3881
      %vm3888 = vmor %vm3886, %vm3887
      %v3889 = vsel %vm3888, %v3881, %v3885
      %v3890 = vand.u32 2147483647, %v3880
      %vm3891 = vcmp.eq.f32.partialorder %v3890, 8.507059e+37
      %v3892 = vand.u32 %v3880, 2147483648
      %v3893 = vor.u32 1.1754944e-38, %v3892
      %v3894 = vsel %vm3891, %v3893, %v3889
      %v3895 = vmul.f32 1.0, %v3894
      %v3896 = vadd.f32 %v3800, %v788
      %3898 = vrot.lane.b32.xlu0 %v3896, 64
      %v3899 = vpop.permute.xlu0 %3898
      %v3901 = vmul.f32 %v3844, %v3899
      %v3902 = vtanh.pop %v3901
      %v3903 = vsub.f32 1.0, %v3895
      %3905 = vrot.lane.b32.xlu0 %v3902, 32
      %v3906 = vpop.permute.xlu0 %3905
      %v3908 = vmul.f32 %v3903, %v3906
      %v3909 = vmul.f32 %v3895, %v3776
      %v3910 = vadd.f32 %v3908, %v3909
      %3912 = vrot.lane.b32.xlu0 %v3910, 96
      %v3913 = vpop.permute.xlu0 %3912
      %v3914 = vsel %vm440, %v3913, 0
      %3916 = vmatpush.msra.mxu0 0.0
      %3917 = vmatpush.msra.mxu0 0.0
      %3918 = vmatpush.msra.mxu0 0.0
      %3919 = vmatpush.msra.mxu0 0.0
      %3920 = vmatpush.msra.mxu0 0.0
      %3921 = vmatpush.msra.mxu0 0.0
      %3922 = vmatpush.msra.mxu0 0.0
      %3923 = vmatpush.msra.mxu0 0.0
      %3924 = vmatpush.msra.mxu0 0.0
      %3925 = vmatpush.msra.mxu0 0.0
      %3926 = vmatpush.msra.mxu0 0.0
      %3927 = vmatpush.msra.mxu0 0.0
      %3928 = vmatpush.msra.mxu0 %v387
      %3929 = vmatpush.msra.mxu0 %v386
      %3930 = vmatpush.msra.mxu0 %v385
      %3931 = vmatpush.msra.mxu0 %v384
      %3932 = vmatmul.f32.gmra.mxu0 %v3914
      %v3933 = vpop.f32.mrf.mxu0
      %v3934 = vadd.f32 0.0, %v3933
      %3935 = vdwg.mxu0
      %v3936 = vsel %vm440, %v3934, 0.0
      %3937 = vadd.xlane.f32.xlu0 %v3936
      %v3938 = vpop.xlane.xlu0 %3937
      %v3939 = vmul.f32 %v3938, %v474
      %v3940 = vsub.f32 %v3934, %v3939
      %v3941 = vmul.f32 %v3940, %v3940
      %v3942 = vsel %vm440, %v3941, 0.0
      %3943 = vadd.xlane.f32.xlu0 %v3942
      %v3944 = vpop.xlane.xlu0 %3943
      %v3945 = vmul.f32 %v3944, %v474
      %v3946 = vadd.f32 %v3945, 1e-05
      %v3947 = vrsqrt.pop %v3946
      %v3948 = vmul.f32 %v3947, %v3946
      %v3949 = vmul.f32 %v3948, %v3947
      %v3950 = vmul.f32 0.5, %v3949
      %v3951 = vsub.f32 1.5, %v3950
      %v3952 = vmul.f32 %v3947, %v3951
      %vm3953 = vweird.f32 %v3946
      %vm3954 = vweird.f32 %v3947
      %vm3955 = vmor %vm3953, %vm3954
      %v3956 = vsel %vm3955, %v3947, %v3952
      %v3957 = vmul.f32 %v3940, %v3956
      %v3958 = vmul.f32 %v3957, %v853
      %v3959 = vadd.f32 %v3958, %v857
      %v3960 = vxor.u32 %v3959, 2147483648
      %v3961 = vmul.f32 %v3960, 1.442695
      %v3962 = vpow.pop %v3961
      %v3963 = vadd.f32 %v3962, 1.0
      %v3964 = vrcp.pop %v3963
      %v3965 = vmul.f32 %v3963, %v3964
      %v3966 = vsub.f32 1.0, %v3965
      %v3967 = vmul.f32 %v3964, %v3966
      %v3968 = vadd.f32 %v3964, %v3967
      %vm3969 = vweird.f32 %v3963
      %vm3970 = vweird.f32 %v3964
      %vm3971 = vmor %vm3969, %vm3970
      %v3972 = vsel %vm3971, %v3964, %v3968
      %v3973 = vand.u32 2147483647, %v3963
      %vm3974 = vcmp.eq.f32.partialorder %v3973, 8.507059e+37
      %v3975 = vand.u32 %v3963, 2147483648
      %v3976 = vor.u32 1.1754944e-38, %v3975
      %v3977 = vsel %vm3974, %v3976, %v3972
      %v3978 = vmul.f32 1.0, %v3977
      %3980 = vrot.lane.b32.xlu0 %v3934, 96
      %v3981 = vpop.permute.xlu0 %3980
      %v3983 = vsel %vm440, %v3981, 0.0
      %3984 = vadd.xlane.f32.xlu0 %v3983
      %v3985 = vpop.xlane.xlu0 %3984
      %v3986 = vmul.f32 %v3985, %v474
      %v3987 = vsub.f32 %v3934, %v3986
      %v3988 = vmul.f32 %v3987, %v3987
      %3990 = vrot.lane.b32.xlu0 %v3988, 96
      %v3991 = vpop.permute.xlu0 %3990
      %v3993 = vsel %vm440, %v3991, 0.0
      %3994 = vadd.xlane.f32.xlu0 %v3993
      %v3995 = vpop.xlane.xlu0 %3994
      %v3996 = vmul.f32 %v3995, %v474
      %v3997 = vadd.f32 %v3996, 1e-05
      %v3998 = vrsqrt.pop %v3997
      %v3999 = vmul.f32 %v3998, %v3997
      %v4000 = vmul.f32 %v3999, %v3998
      %v4001 = vmul.f32 0.5, %v4000
      %v4002 = vsub.f32 1.5, %v4001
      %v4003 = vmul.f32 %v3998, %v4002
      %vm4004 = vweird.f32 %v3997
      %vm4005 = vweird.f32 %v3998
      %vm4006 = vmor %vm4004, %vm4005
      %v4007 = vsel %vm4006, %v3998, %v4003
      %v4008 = vmul.f32 %v3987, %v4007
      %v4009 = vmul.f32 %v4008, %v853
      %v4010 = vadd.f32 %v4009, %v857
      %v4011 = vxor.u32 %v4010, 2147483648
      %v4012 = vmul.f32 %v4011, 1.442695
      %v4013 = vpow.pop %v4012
      %v4014 = vadd.f32 %v4013, 1.0
      %v4015 = vrcp.pop %v4014
      %v4016 = vmul.f32 %v4014, %v4015
      %v4017 = vsub.f32 1.0, %v4016
      %v4018 = vmul.f32 %v4015, %v4017
      %v4019 = vadd.f32 %v4015, %v4018
      %vm4020 = vweird.f32 %v4014
      %vm4021 = vweird.f32 %v4015
      %vm4022 = vmor %vm4020, %vm4021
      %v4023 = vsel %vm4022, %v4015, %v4019
      %v4024 = vand.u32 2147483647, %v4014
      %vm4025 = vcmp.eq.f32.partialorder %v4024, 8.507059e+37
      %v4026 = vand.u32 %v4014, 2147483648
      %v4027 = vor.u32 1.1754944e-38, %v4026
      %v4028 = vsel %vm4025, %v4027, %v4023
      %v4029 = vmul.f32 1.0, %v4028
      %v4030 = vadd.f32 %v3934, %v933
      %4032 = vrot.lane.b32.xlu0 %v4030, 64
      %v4033 = vpop.permute.xlu0 %4032
      %v4035 = vmul.f32 %v3978, %v4033
      %v4036 = vtanh.pop %v4035
      %v4037 = vsub.f32 1.0, %v4029
      %4039 = vrot.lane.b32.xlu0 %v4036, 32
      %v4040 = vpop.permute.xlu0 %4039
      %v4042 = vmul.f32 %v4037, %v4040
      %v4043 = vmul.f32 %v4029, %v3910
      %v4044 = vadd.f32 %v4042, %v4043
      %4046 = vrot.lane.b32.xlu0 %v4044, 96
      %v4047 = vpop.permute.xlu0 %4046
      %s4049 = scalar_lea.vmem %s361, 48
      %4050 = vst.msk [vmem:[%s4049] sm:$0xff] %vm440, %v4047
      %s4051 = scalar_lea.vmem %s355, 56
      %v4052 = vld [vmem:[%s4051] sm:$0xff]
      %v4054 = vsel %vm396, %v4052, 0
      %4056 = vmatpush.msra.mxu0 0.0
      %4057 = vmatpush.msra.mxu0 0.0
      %4058 = vmatpush.msra.mxu0 0.0
      %4059 = vmatpush.msra.mxu0 0.0
      %4060 = vmatpush.msra.mxu0 0.0
      %4061 = vmatpush.msra.mxu0 0.0
      %4062 = vmatpush.msra.mxu0 0.0
      %4063 = vmatpush.msra.mxu0 0.0
      %4064 = vmatpush.msra.mxu0 0.0
      %4065 = vmatpush.msra.mxu0 0.0
      %4066 = vmatpush.msra.mxu0 0.0
      %4067 = vmatpush.msra.mxu0 0.0
      %4068 = vmatpush.msra.mxu0 0.0
      %4069 = vmatpush.msra.mxu0 0.0
      %4070 = vmatpush.msra.mxu0 %v371
      %4071 = vmatpush.msra.mxu0 %v369
      %4072 = vmatmul.f32.gmra.mxu0 %v4054
      %v4073 = vpop.f32.mrf.mxu0
      %v4074 = vadd.f32 0.0, %v4073
      %4075 = vdwg.mxu0
      %4076 = vmatpush.msra.mxu0 0.0
      %4077 = vmatpush.msra.mxu0 0.0
      %4078 = vmatpush.msra.mxu0 0.0
      %4079 = vmatpush.msra.mxu0 0.0
      %4080 = vmatpush.msra.mxu0 0.0
      %4081 = vmatpush.msra.mxu0 0.0
      %4082 = vmatpush.msra.mxu0 0.0
      %4083 = vmatpush.msra.mxu0 0.0
      %4084 = vmatpush.msra.mxu0 0.0
      %4085 = vmatpush.msra.mxu0 0.0
      %4086 = vmatpush.msra.mxu0 0.0
      %4087 = vmatpush.msra.mxu0 0.0
      %4088 = vmatpush.msra.mxu0 0.0
      %4089 = vmatpush.msra.mxu0 0.0
      %4090 = vmatpush.msra.mxu0 %v372
      %4091 = vmatpush.msra.mxu0 %v370
      %4092 = vmatmul.f32.gmra.mxu0 %v4054
      %v4093 = vpop.f32.mrf.mxu0
      %v4094 = vadd.f32 0.0, %v4093
      %4095 = vdwg.mxu0
      %v4096 = vsel %vm440, %v4047, 0
      %4098 = vmatpush.msra.mxu0 0.0
      %4099 = vmatpush.msra.mxu0 0.0
      %4100 = vmatpush.msra.mxu0 0.0
      %4101 = vmatpush.msra.mxu0 0.0
      %4102 = vmatpush.msra.mxu0 0.0
      %4103 = vmatpush.msra.mxu0 0.0
      %4104 = vmatpush.msra.mxu0 0.0
      %4105 = vmatpush.msra.mxu0 0.0
      %4106 = vmatpush.msra.mxu0 0.0
      %4107 = vmatpush.msra.mxu0 0.0
      %4108 = vmatpush.msra.mxu0 0.0
      %4109 = vmatpush.msra.mxu0 0.0
      %4110 = vmatpush.msra.mxu0 %v376
      %4111 = vmatpush.msra.mxu0 %v375
      %4112 = vmatpush.msra.mxu0 %v374
      %4113 = vmatpush.msra.mxu0 %v373
      %4114 = vmatmul.f32.gmra.mxu0 %v4096
      %v4115 = vpop.f32.mrf.mxu0
      %v4116 = vadd.f32 0.0, %v4115
      %4117 = vdwg.mxu0
      %v4118 = vadd.f32 %v4074, %v4116
      %v4119 = vsel %vm440, %v4118, 0.0
      %4120 = vadd.xlane.f32.xlu0 %v4119
      %v4121 = vpop.xlane.xlu0 %4120
      %v4122 = vmul.f32 %v4121, %v474
      %v4123 = vsub.f32 %v4118, %v4122
      %v4124 = vmul.f32 %v4123, %v4123
      %v4125 = vsel %vm440, %v4124, 0.0
      %4126 = vadd.xlane.f32.xlu0 %v4125
      %v4127 = vpop.xlane.xlu0 %4126
      %v4128 = vmul.f32 %v4127, %v474
      %v4129 = vadd.f32 %v4128, 1e-05
      %v4130 = vrsqrt.pop %v4129
      %v4131 = vmul.f32 %v4130, %v4129
      %v4132 = vmul.f32 %v4131, %v4130
      %v4133 = vmul.f32 0.5, %v4132
      %v4134 = vsub.f32 1.5, %v4133
      %v4135 = vmul.f32 %v4130, %v4134
      %vm4136 = vweird.f32 %v4129
      %vm4137 = vweird.f32 %v4130
      %vm4138 = vmor %vm4136, %vm4137
      %v4139 = vsel %vm4138, %v4130, %v4135
      %v4140 = vmul.f32 %v4123, %v4139
      %v4141 = vmul.f32 %v4140, %v495
      %v4142 = vadd.f32 %v4141, %v499
      %v4143 = vxor.u32 %v4142, 2147483648
      %v4144 = vmul.f32 %v4143, 1.442695
      %v4145 = vpow.pop %v4144
      %v4146 = vadd.f32 %v4145, 1.0
      %v4147 = vrcp.pop %v4146
      %v4148 = vmul.f32 %v4146, %v4147
      %v4149 = vsub.f32 1.0, %v4148
      %v4150 = vmul.f32 %v4147, %v4149
      %v4151 = vadd.f32 %v4147, %v4150
      %vm4152 = vweird.f32 %v4146
      %vm4153 = vweird.f32 %v4147
      %vm4154 = vmor %vm4152, %vm4153
      %v4155 = vsel %vm4154, %v4147, %v4151
      %v4156 = vand.u32 2147483647, %v4146
      %vm4157 = vcmp.eq.f32.partialorder %v4156, 8.507059e+37
      %v4158 = vand.u32 %v4146, 2147483648
      %v4159 = vor.u32 1.1754944e-38, %v4158
      %v4160 = vsel %vm4157, %v4159, %v4155
      %v4161 = vmul.f32 1.0, %v4160
      %4163 = vrot.lane.b32.xlu0 %v4118, 96
      %v4164 = vpop.permute.xlu0 %4163
      %v4166 = vsel %vm440, %v4164, 0.0
      %4167 = vadd.xlane.f32.xlu0 %v4166
      %v4168 = vpop.xlane.xlu0 %4167
      %v4169 = vmul.f32 %v4168, %v474
      %v4170 = vsub.f32 %v4118, %v4169
      %v4171 = vmul.f32 %v4170, %v4170
      %4173 = vrot.lane.b32.xlu0 %v4171, 96
      %v4174 = vpop.permute.xlu0 %4173
      %v4176 = vsel %vm440, %v4174, 0.0
      %4177 = vadd.xlane.f32.xlu0 %v4176
      %v4178 = vpop.xlane.xlu0 %4177
      %v4179 = vmul.f32 %v4178, %v474
      %v4180 = vadd.f32 %v4179, 1e-05
      %v4181 = vrsqrt.pop %v4180
      %v4182 = vmul.f32 %v4181, %v4180
      %v4183 = vmul.f32 %v4182, %v4181
      %v4184 = vmul.f32 0.5, %v4183
      %v4185 = vsub.f32 1.5, %v4184
      %v4186 = vmul.f32 %v4181, %v4185
      %vm4187 = vweird.f32 %v4180
      %vm4188 = vweird.f32 %v4181
      %vm4189 = vmor %vm4187, %vm4188
      %v4190 = vsel %vm4189, %v4181, %v4186
      %v4191 = vmul.f32 %v4170, %v4190
      %v4192 = vmul.f32 %v4191, %v495
      %v4193 = vadd.f32 %v4192, %v499
      %v4194 = vxor.u32 %v4193, 2147483648
      %v4195 = vmul.f32 %v4194, 1.442695
      %v4196 = vpow.pop %v4195
      %v4197 = vadd.f32 %v4196, 1.0
      %v4198 = vrcp.pop %v4197
      %v4199 = vmul.f32 %v4197, %v4198
      %v4200 = vsub.f32 1.0, %v4199
      %v4201 = vmul.f32 %v4198, %v4200
      %v4202 = vadd.f32 %v4198, %v4201
      %vm4203 = vweird.f32 %v4197
      %vm4204 = vweird.f32 %v4198
      %vm4205 = vmor %vm4203, %vm4204
      %v4206 = vsel %vm4205, %v4198, %v4202
      %v4207 = vand.u32 2147483647, %v4197
      %vm4208 = vcmp.eq.f32.partialorder %v4207, 8.507059e+37
      %v4209 = vand.u32 %v4197, 2147483648
      %v4210 = vor.u32 1.1754944e-38, %v4209
      %v4211 = vsel %vm4208, %v4210, %v4206
      %v4212 = vmul.f32 1.0, %v4211
      %4213 = vrot.lane.b32.xlu0 %v4118, 64
      %v4214 = vpop.permute.xlu0 %4213
      %v4216 = vsel %vm440, %v4214, 0.0
      %4217 = vadd.xlane.f32.xlu0 %v4216
      %v4218 = vpop.xlane.xlu0 %4217
      %v4219 = vmul.f32 %v4218, %v474
      %v4220 = vsub.f32 %v4118, %v4219
      %v4221 = vmul.f32 %v4220, %v4220
      %4223 = vrot.lane.b32.xlu0 %v4221, 64
      %v4224 = vpop.permute.xlu0 %4223
      %v4226 = vsel %vm440, %v4224, 0.0
      %4227 = vadd.xlane.f32.xlu0 %v4226
      %v4228 = vpop.xlane.xlu0 %4227
      %v4229 = vmul.f32 %v4228, %v474
      %v4230 = vadd.f32 %v4229, 1e-05
      %v4231 = vrsqrt.pop %v4230
      %v4232 = vmul.f32 %v4231, %v4230
      %v4233 = vmul.f32 %v4232, %v4231
      %v4234 = vmul.f32 0.5, %v4233
      %v4235 = vsub.f32 1.5, %v4234
      %v4236 = vmul.f32 %v4231, %v4235
      %vm4237 = vweird.f32 %v4230
      %vm4238 = vweird.f32 %v4231
      %vm4239 = vmor %vm4237, %vm4238
      %v4240 = vsel %vm4239, %v4231, %v4236
      %v4241 = vmul.f32 %v4220, %v4240
      %v4242 = vmul.f32 %v4241, %v495
      %v4243 = vadd.f32 %v4242, %v499
      %v4244 = vxor.u32 %v4243, 2147483648
      %v4245 = vmul.f32 %v4244, 1.442695
      %v4246 = vpow.pop %v4245
      %v4247 = vadd.f32 %v4246, 1.0
      %v4248 = vrcp.pop %v4247
      %v4249 = vmul.f32 %v4247, %v4248
      %v4250 = vsub.f32 1.0, %v4249
      %v4251 = vmul.f32 %v4248, %v4250
      %v4252 = vadd.f32 %v4248, %v4251
      %vm4253 = vweird.f32 %v4247
      %vm4254 = vweird.f32 %v4248
      %vm4255 = vmor %vm4253, %vm4254
      %v4256 = vsel %vm4255, %v4248, %v4252
      %v4257 = vand.u32 2147483647, %v4247
      %vm4258 = vcmp.eq.f32.partialorder %v4257, 8.507059e+37
      %v4259 = vand.u32 %v4247, 2147483648
      %v4260 = vor.u32 1.1754944e-38, %v4259
      %v4261 = vsel %vm4258, %v4260, %v4256
      %v4262 = vmul.f32 1.0, %v4261
      %v4263 = vadd.f32 %v4116, %v625
      %4265 = vrot.lane.b32.xlu0 %v4263, 32
      %v4266 = vpop.permute.xlu0 %4265
      %v4268 = vmul.f32 %v4161, %v4266
      %4270 = vrot.lane.b32.xlu0 %v4268, 96
      %v4271 = vpop.permute.xlu0 %4270
      %v4273 = vadd.f32 %v4074, %v4271
      %v4274 = vtanh.pop %v4273
      %4276 = vrot.lane.b32.xlu0 %v4094, 64
      %v4277 = vpop.permute.xlu0 %4276
      %v4279 = vmul.f32 %v4262, %v4277
      %4281 = vrot.lane.b32.xlu0 %v4279, 32
      %v4282 = vpop.permute.xlu0 %4281
      %v4284 = vadd.f32 %v4274, %v4282
      %v4285 = vsub.f32 1.0, %v4212
      %v4286 = vmul.f32 %v4285, %v4044
      %4288 = vrot.lane.b32.xlu0 %v4284, 64
      %v4289 = vpop.permute.xlu0 %4288
      %v4291 = vmul.f32 %v4212, %v4289
      %v4292 = vadd.f32 %v4286, %v4291
      %4294 = vrot.lane.b32.xlu0 %v4292, 96
      %v4295 = vpop.permute.xlu0 %4294
      %v4296 = vsel %vm440, %v4295, 0
      %4298 = vmatpush.msra.mxu0 0.0
      %4299 = vmatpush.msra.mxu0 0.0
      %4300 = vmatpush.msra.mxu0 0.0
      %4301 = vmatpush.msra.mxu0 0.0
      %4302 = vmatpush.msra.mxu0 0.0
      %4303 = vmatpush.msra.mxu0 0.0
      %4304 = vmatpush.msra.mxu0 0.0
      %4305 = vmatpush.msra.mxu0 0.0
      %4306 = vmatpush.msra.mxu0 0.0
      %4307 = vmatpush.msra.mxu0 0.0
      %4308 = vmatpush.msra.mxu0 0.0
      %4309 = vmatpush.msra.mxu0 0.0
      %4310 = vmatpush.msra.mxu0 %v383
      %4311 = vmatpush.msra.mxu0 %v382
      %4312 = vmatpush.msra.mxu0 %v381
      %4313 = vmatpush.msra.mxu0 %v380
      %4314 = vmatmul.f32.gmra.mxu0 %v4296
      %v4315 = vpop.f32.mrf.mxu0
      %v4316 = vadd.f32 0.0, %v4315
      %4317 = vdwg.mxu0
      %v4318 = vsel %vm440, %v4316, 0.0
      %4319 = vadd.xlane.f32.xlu0 %v4318
      %v4320 = vpop.xlane.xlu0 %4319
      %v4321 = vmul.f32 %v4320, %v474
      %v4322 = vsub.f32 %v4316, %v4321
      %v4323 = vmul.f32 %v4322, %v4322
      %v4324 = vsel %vm440, %v4323, 0.0
      %4325 = vadd.xlane.f32.xlu0 %v4324
      %v4326 = vpop.xlane.xlu0 %4325
      %v4327 = vmul.f32 %v4326, %v474
      %v4328 = vadd.f32 %v4327, 1e-05
      %v4329 = vrsqrt.pop %v4328
      %v4330 = vmul.f32 %v4329, %v4328
      %v4331 = vmul.f32 %v4330, %v4329
      %v4332 = vmul.f32 0.5, %v4331
      %v4333 = vsub.f32 1.5, %v4332
      %v4334 = vmul.f32 %v4329, %v4333
      %vm4335 = vweird.f32 %v4328
      %vm4336 = vweird.f32 %v4329
      %vm4337 = vmor %vm4335, %vm4336
      %v4338 = vsel %vm4337, %v4329, %v4334
      %v4339 = vmul.f32 %v4322, %v4338
      %v4340 = vmul.f32 %v4339, %v708
      %v4341 = vadd.f32 %v4340, %v712
      %v4342 = vxor.u32 %v4341, 2147483648
      %v4343 = vmul.f32 %v4342, 1.442695
      %v4344 = vpow.pop %v4343
      %v4345 = vadd.f32 %v4344, 1.0
      %v4346 = vrcp.pop %v4345
      %v4347 = vmul.f32 %v4345, %v4346
      %v4348 = vsub.f32 1.0, %v4347
      %v4349 = vmul.f32 %v4346, %v4348
      %v4350 = vadd.f32 %v4346, %v4349
      %vm4351 = vweird.f32 %v4345
      %vm4352 = vweird.f32 %v4346
      %vm4353 = vmor %vm4351, %vm4352
      %v4354 = vsel %vm4353, %v4346, %v4350
      %v4355 = vand.u32 2147483647, %v4345
      %vm4356 = vcmp.eq.f32.partialorder %v4355, 8.507059e+37
      %v4357 = vand.u32 %v4345, 2147483648
      %v4358 = vor.u32 1.1754944e-38, %v4357
      %v4359 = vsel %vm4356, %v4358, %v4354
      %v4360 = vmul.f32 1.0, %v4359
      %4362 = vrot.lane.b32.xlu0 %v4316, 96
      %v4363 = vpop.permute.xlu0 %4362
      %v4365 = vsel %vm440, %v4363, 0.0
      %4366 = vadd.xlane.f32.xlu0 %v4365
      %v4367 = vpop.xlane.xlu0 %4366
      %v4368 = vmul.f32 %v4367, %v474
      %v4369 = vsub.f32 %v4316, %v4368
      %v4370 = vmul.f32 %v4369, %v4369
      %4372 = vrot.lane.b32.xlu0 %v4370, 96
      %v4373 = vpop.permute.xlu0 %4372
      %v4375 = vsel %vm440, %v4373, 0.0
      %4376 = vadd.xlane.f32.xlu0 %v4375
      %v4377 = vpop.xlane.xlu0 %4376
      %v4378 = vmul.f32 %v4377, %v474
      %v4379 = vadd.f32 %v4378, 1e-05
      %v4380 = vrsqrt.pop %v4379
      %v4381 = vmul.f32 %v4380, %v4379
      %v4382 = vmul.f32 %v4381, %v4380
      %v4383 = vmul.f32 0.5, %v4382
      %v4384 = vsub.f32 1.5, %v4383
      %v4385 = vmul.f32 %v4380, %v4384
      %vm4386 = vweird.f32 %v4379
      %vm4387 = vweird.f32 %v4380
      %vm4388 = vmor %vm4386, %vm4387
      %v4389 = vsel %vm4388, %v4380, %v4385
      %v4390 = vmul.f32 %v4369, %v4389
      %v4391 = vmul.f32 %v4390, %v708
      %v4392 = vadd.f32 %v4391, %v712
      %v4393 = vxor.u32 %v4392, 2147483648
      %v4394 = vmul.f32 %v4393, 1.442695
      %v4395 = vpow.pop %v4394
      %v4396 = vadd.f32 %v4395, 1.0
      %v4397 = vrcp.pop %v4396
      %v4398 = vmul.f32 %v4396, %v4397
      %v4399 = vsub.f32 1.0, %v4398
      %v4400 = vmul.f32 %v4397, %v4399
      %v4401 = vadd.f32 %v4397, %v4400
      %vm4402 = vweird.f32 %v4396
      %vm4403 = vweird.f32 %v4397
      %vm4404 = vmor %vm4402, %vm4403
      %v4405 = vsel %vm4404, %v4397, %v4401
      %v4406 = vand.u32 2147483647, %v4396
      %vm4407 = vcmp.eq.f32.partialorder %v4406, 8.507059e+37
      %v4408 = vand.u32 %v4396, 2147483648
      %v4409 = vor.u32 1.1754944e-38, %v4408
      %v4410 = vsel %vm4407, %v4409, %v4405
      %v4411 = vmul.f32 1.0, %v4410
      %v4412 = vadd.f32 %v4316, %v788
      %4414 = vrot.lane.b32.xlu0 %v4412, 64
      %v4415 = vpop.permute.xlu0 %4414
      %v4417 = vmul.f32 %v4360, %v4415
      %v4418 = vtanh.pop %v4417
      %v4419 = vsub.f32 1.0, %v4411
      %4421 = vrot.lane.b32.xlu0 %v4418, 32
      %v4422 = vpop.permute.xlu0 %4421
      %v4424 = vmul.f32 %v4419, %v4422
      %v4425 = vmul.f32 %v4411, %v4292
      %v4426 = vadd.f32 %v4424, %v4425
      %4428 = vrot.lane.b32.xlu0 %v4426, 96
      %v4429 = vpop.permute.xlu0 %4428
      %v4430 = vsel %vm440, %v4429, 0
      %4432 = vmatpush.msra.mxu0 0.0
      %4433 = vmatpush.msra.mxu0 0.0
      %4434 = vmatpush.msra.mxu0 0.0
      %4435 = vmatpush.msra.mxu0 0.0
      %4436 = vmatpush.msra.mxu0 0.0
      %4437 = vmatpush.msra.mxu0 0.0
      %4438 = vmatpush.msra.mxu0 0.0
      %4439 = vmatpush.msra.mxu0 0.0
      %4440 = vmatpush.msra.mxu0 0.0
      %4441 = vmatpush.msra.mxu0 0.0
      %4442 = vmatpush.msra.mxu0 0.0
      %4443 = vmatpush.msra.mxu0 0.0
      %4444 = vmatpush.msra.mxu0 %v387
      %4445 = vmatpush.msra.mxu0 %v386
      %4446 = vmatpush.msra.mxu0 %v385
      %4447 = vmatpush.msra.mxu0 %v384
      %4448 = vmatmul.f32.gmra.mxu0 %v4430
      %v4449 = vpop.f32.mrf.mxu0
      %v4450 = vadd.f32 0.0, %v4449
      %4451 = vdwg.mxu0
      %v4452 = vsel %vm440, %v4450, 0.0
      %4453 = vadd.xlane.f32.xlu0 %v4452
      %v4454 = vpop.xlane.xlu0 %4453
      %v4455 = vmul.f32 %v4454, %v474
      %v4456 = vsub.f32 %v4450, %v4455
      %v4457 = vmul.f32 %v4456, %v4456
      %v4458 = vsel %vm440, %v4457, 0.0
      %4459 = vadd.xlane.f32.xlu0 %v4458
      %v4460 = vpop.xlane.xlu0 %4459
      %v4461 = vmul.f32 %v4460, %v474
      %v4462 = vadd.f32 %v4461, 1e-05
      %v4463 = vrsqrt.pop %v4462
      %v4464 = vmul.f32 %v4463, %v4462
      %v4465 = vmul.f32 %v4464, %v4463
      %v4466 = vmul.f32 0.5, %v4465
      %v4467 = vsub.f32 1.5, %v4466
      %v4468 = vmul.f32 %v4463, %v4467
      %vm4469 = vweird.f32 %v4462
      %vm4470 = vweird.f32 %v4463
      %vm4471 = vmor %vm4469, %vm4470
      %v4472 = vsel %vm4471, %v4463, %v4468
      %v4473 = vmul.f32 %v4456, %v4472
      %v4474 = vmul.f32 %v4473, %v853
      %v4475 = vadd.f32 %v4474, %v857
      %v4476 = vxor.u32 %v4475, 2147483648
      %v4477 = vmul.f32 %v4476, 1.442695
      %v4478 = vpow.pop %v4477
      %v4479 = vadd.f32 %v4478, 1.0
      %v4480 = vrcp.pop %v4479
      %v4481 = vmul.f32 %v4479, %v4480
      %v4482 = vsub.f32 1.0, %v4481
      %v4483 = vmul.f32 %v4480, %v4482
      %v4484 = vadd.f32 %v4480, %v4483
      %vm4485 = vweird.f32 %v4479
      %vm4486 = vweird.f32 %v4480
      %vm4487 = vmor %vm4485, %vm4486
      %v4488 = vsel %vm4487, %v4480, %v4484
      %v4489 = vand.u32 2147483647, %v4479
      %vm4490 = vcmp.eq.f32.partialorder %v4489, 8.507059e+37
      %v4491 = vand.u32 %v4479, 2147483648
      %v4492 = vor.u32 1.1754944e-38, %v4491
      %v4493 = vsel %vm4490, %v4492, %v4488
      %v4494 = vmul.f32 1.0, %v4493
      %4496 = vrot.lane.b32.xlu0 %v4450, 96
      %v4497 = vpop.permute.xlu0 %4496
      %v4499 = vsel %vm440, %v4497, 0.0
      %4500 = vadd.xlane.f32.xlu0 %v4499
      %v4501 = vpop.xlane.xlu0 %4500
      %v4502 = vmul.f32 %v4501, %v474
      %v4503 = vsub.f32 %v4450, %v4502
      %v4504 = vmul.f32 %v4503, %v4503
      %4506 = vrot.lane.b32.xlu0 %v4504, 96
      %v4507 = vpop.permute.xlu0 %4506
      %v4509 = vsel %vm440, %v4507, 0.0
      %4510 = vadd.xlane.f32.xlu0 %v4509
      %v4511 = vpop.xlane.xlu0 %4510
      %v4512 = vmul.f32 %v4511, %v474
      %v4513 = vadd.f32 %v4512, 1e-05
      %v4514 = vrsqrt.pop %v4513
      %v4515 = vmul.f32 %v4514, %v4513
      %v4516 = vmul.f32 %v4515, %v4514
      %v4517 = vmul.f32 0.5, %v4516
      %v4518 = vsub.f32 1.5, %v4517
      %v4519 = vmul.f32 %v4514, %v4518
      %vm4520 = vweird.f32 %v4513
      %vm4521 = vweird.f32 %v4514
      %vm4522 = vmor %vm4520, %vm4521
      %v4523 = vsel %vm4522, %v4514, %v4519
      %v4524 = vmul.f32 %v4503, %v4523
      %v4525 = vmul.f32 %v4524, %v853
      %v4526 = vadd.f32 %v4525, %v857
      %v4527 = vxor.u32 %v4526, 2147483648
      %v4528 = vmul.f32 %v4527, 1.442695
      %v4529 = vpow.pop %v4528
      %v4530 = vadd.f32 %v4529, 1.0
      %v4531 = vrcp.pop %v4530
      %v4532 = vmul.f32 %v4530, %v4531
      %v4533 = vsub.f32 1.0, %v4532
      %v4534 = vmul.f32 %v4531, %v4533
      %v4535 = vadd.f32 %v4531, %v4534
      %vm4536 = vweird.f32 %v4530
      %vm4537 = vweird.f32 %v4531
      %vm4538 = vmor %vm4536, %vm4537
      %v4539 = vsel %vm4538, %v4531, %v4535
      %v4540 = vand.u32 2147483647, %v4530
      %vm4541 = vcmp.eq.f32.partialorder %v4540, 8.507059e+37
      %v4542 = vand.u32 %v4530, 2147483648
      %v4543 = vor.u32 1.1754944e-38, %v4542
      %v4544 = vsel %vm4541, %v4543, %v4539
      %v4545 = vmul.f32 1.0, %v4544
      %v4546 = vadd.f32 %v4450, %v933
      %4548 = vrot.lane.b32.xlu0 %v4546, 64
      %v4549 = vpop.permute.xlu0 %4548
      %v4551 = vmul.f32 %v4494, %v4549
      %v4552 = vtanh.pop %v4551
      %v4553 = vsub.f32 1.0, %v4545
      %4555 = vrot.lane.b32.xlu0 %v4552, 32
      %v4556 = vpop.permute.xlu0 %4555
      %v4558 = vmul.f32 %v4553, %v4556
      %v4559 = vmul.f32 %v4545, %v4426
      %v4560 = vadd.f32 %v4558, %v4559
      %4562 = vrot.lane.b32.xlu0 %v4560, 96
      %v4563 = vpop.permute.xlu0 %4562
      %s4565 = scalar_lea.vmem %s361, 56
      %4566 = vst.msk [vmem:[%s4565] sm:$0xff] %vm440, %v4563
      %4567 = vst.msk [vmem:[#allocation2] sm:$0xff] %vm440, %v4563
      %s4568 = smul.u32 8, %s21
      %p4569 = scmp.lt.s32.totalorder %s4568, 31
      %s4570 = scalar_select %p4569, %s4568, 31
      %s4571 = smul.addr %s4570, 8
      %s4572 = scalar_lea.vmem %s10, %s4571
      // Predicated region
      $region65: #{tpu_custom_call.1} parent=59 // pred_check
        %p4573 = pneg %p254
      $region66: #{tpu_custom_call.1} parent=59 // pred_check_branch
        %4575 = sbr.rel (%p4573) target = $region68
      $region67: #{tpu_custom_call.1} parent=59 // pred_region
        %s4576 = smul.u32 8, %s21
      $region68: #{tpu_custom_call.1} parent=59 // pred_fallthru
        _
    $region60: #{tpu_custom_call.1} parent=5 // pred_fallthru
      _
    %p4577 = scmp.le.s32.totalorder 2, %s16
    // Predicated region
    $region69: #{tpu_custom_call.1} parent=5 // pred_check
      %p4578 = pneg %p4577
    $region70: #{tpu_custom_call.1} parent=5 // pred_check_branch
      %4580 = sbr.rel (%p4578) target = $region72
    $region71: #{tpu_custom_call.1} parent=5 // pred_region
      %s4581 = ssub.s32 %s16, 2
      // Predicated region
      $region73: #{tpu_custom_call.1} parent=71 // pred_check
        %p4582 = pneg %p260
      $region74: #{tpu_custom_call.1} parent=71 // pred_check_branch
        %4584 = sbr.rel (%p4582) target = $region76
      $region75: #{tpu_custom_call.1} parent=71 // pred_region
        %s4585 = smul.u32 8, %s22
        %p4586 = scmp.lt.s32.totalorder %s4585, 31
        %s4587 = scalar_select %p4586, %s4585, 31
        %s4588 = smul.addr %s4587, 8
        %s4589 = scalar_lea.vmem %s10, %s4588
      $region76: #{tpu_custom_call.1} parent=71 // pred_fallthru
        _
    $region72: #{tpu_custom_call.1} parent=5 // pred_fallthru
      _
  $region6: #{tpu_custom_call.1} parent=0 // loop_footer
    %s20 = sadd.s32 1, %s16
  $region7: #{tpu_custom_call.1} parent=0 // loop_footer_branch
    %15 = sbr.rel target = $region3
  $region8: #{tpu_custom_call.1} parent=0 // loop_exit
    _

</llo_original>
